<compile_context>
chip_gen: v6e
topology: v6e:2x2x1
jax: 0.10.0
libtpu: 0.0.40
codegen_flags: <defaults>
</compile_context>

<pallas_src>
import functools

import jax
import jax.numpy as jnp
from jax.experimental import pallas as pl
from jax.experimental.pallas import tpu as pltpu

INPUT_DIM = 12
MODEL_DIM = 24
NUM_HEADS = 6
HEAD_DIM = MODEL_DIM // NUM_HEADS     # 4
NUM_LAYERS = 4
NUM_CLASSES = 2
FF_DIM = 2048                         # nn.TransformerEncoderLayer default dim_feedforward
FF_CHUNK = 512                        # FFN hidden-dim chunk (bounds vreg live ranges)
LN_EPS = 1e-5
BN_EPS = 1e-5
QKV_STRIDE = 128                      # lane-aligned offsets of q / k / v in the fused proj


def _layer_norm(h, g, b):
    mu = jnp.mean(h, axis=-1, keepdims=True)
    var = jnp.mean((h - mu) ** 2, axis=-1, keepdims=True)
    return (h - mu) * jax.lax.rsqrt(var + LN_EPS) * g + b


def transformer_kernel(
    x_ref,                 # (B*S, 36) f32   diff features
    hm_ref, hmt_ref,       # (24, 6) / (6, 24) constant head-segment masks
    fe_w1_ref,             # (36, 24)
    sq_ref,                # (96, 24)  [fe_w2 ; fc1 mean-half ; fc1 max-half ; fc2 (lanes 0:2)]
    gv_ref,                # (16, 24)  packed global bias / norm vectors
    wqkv_ref,              # (L, 24, 384) fused q/k/v weights (q pre-scaled), 128-lane aligned
    bqkv_ref,              # (L, 1, 384)  fused q/k/v biases
    wo_ref,                # (L, 24, 24)
    lv_ref,                # (L, 8, 24)  [bo ; ln1_g ; ln1_b ; ln2_g ; ln2_b ; ffn_b2]
    w1_ref,                # (L, 24, 2048) bf16
    b1_ref,                # (L, 1, 2048)  f32
    w2_ref,                # (L, 2048, 24) bf16 (natural (K,N) layout -> NN matmul)
    out_ref,               # (B, 2) f32
    *, batch, seq):
    E, H, B, S = MODEL_DIM, NUM_HEADS, batch, seq

    gv = gv_ref[...]
    fe_b1, bn_g, bn_b = gv[0:1], gv[1:2], gv[2:3]
    bn_m, bn_v, fe_b2 = gv[3:4], gv[4:5], gv[5:6]
    lnf_g, lnf_b, fc1_b = gv[6:7], gv[7:8], gv[8:9]
    fc2_b = gv[9:10, 0:NUM_CLASSES]

    # ------------------------------- feature_encoder -------------------------------
    h = jnp.dot(x_ref[...], fe_w1_ref[...], preferred_element_type=jnp.float32) + fe_b1
    h = jnp.maximum(h, 0.0)
    # BatchNorm1d on the flattened (B*S, 24) activation, running stats (eval mode).
    h = (h - bn_m) * jax.lax.rsqrt(bn_v + BN_EPS) * bn_g + bn_b
    fe_w2 = sq_ref[0:E, :]
    h = jnp.dot(h, fe_w2, preferred_element_type=jnp.float32) + fe_b2
    h = jnp.maximum(h, 0.0)                       # Dropout(0.2): identity in eval mode

    head_mask = hm_ref[...]                       # (E, H)
    head_mask_t = hmt_ref[...]                    # (H, E)

    # -------------------- 4 encoder layers, unrolled in-kernel --------------------
    for l in range(NUM_LAYERS):
        lv = lv_ref[l]                                              # (8, 24)
        bo, ln1_g, ln1_b = lv[0:1], lv[1:2], lv[2:3]
        ln2_g, ln2_b, ffn_b2 = lv[3:4], lv[4:5], lv[5:6]

        # Fused Q/K/V projection (one MXU pass). q already carries the 1/sqrt(d) scale.
        qkv = jnp.dot(h, wqkv_ref[l], preferred_element_type=jnp.float32) + bqkv_ref[l]
        q3 = qkv[:, 0:E].reshape(B, S, E)
        k3 = qkv[:, QKV_STRIDE:QKV_STRIDE + E].reshape(B, S, E)
        v3 = qkv[:, 2 * QKV_STRIDE:2 * QKV_STRIDE + E].reshape(B, S, E)

        # batch_first=False misuse semantics: attention mixes rows across the *batch*
        # axis, independently per seq position.  Per-head segment sums via matmul with
        # the constant (E,H) mask (no sub-lane head slicing).
        qk = q3[:, None, :, :] * k3[None, :, :, :]                  # (B, B, S, E)
        scores = jnp.dot(qk.reshape(B * B * S, E), head_mask,
                         preferred_element_type=jnp.float32).reshape(B, B, S, H)
        m = jnp.max(scores, axis=1, keepdims=True)
        p = jnp.exp(scores - m)
        attn = p * pl.reciprocal(jnp.sum(p, axis=1, keepdims=True), approx=True)
        attn_e = jnp.dot(attn.reshape(B * B * S, H), head_mask_t,
                         preferred_element_type=jnp.float32).reshape(B, B, S, E)
        ctx = jnp.sum(attn_e * v3[None, :, :, :], axis=1).reshape(B * S, E)

        attn_out = jnp.dot(ctx, wo_ref[l], preferred_element_type=jnp.float32) + bo
        h1 = _layer_norm(h + attn_out, ln1_g, ln1_b)                # post-norm

        # FFN, chunked over the 2048-wide hidden dim: keeps the f32 intermediate at
        # (16, 512) and interleaves the two matmuls.  bf16 weights, f32 accumulation.
        h1b = h1.astype(jnp.bfloat16)
        ff2 = jnp.zeros((B * S, E), jnp.float32)
        for c in range(0, FF_DIM, FF_CHUNK):
            w1c = w1_ref[l, :, c:c + FF_CHUNK]                      # (24, 512) bf16
            b1c = b1_ref[l, :, c:c + FF_CHUNK]                      # (1, 512)  f32
            ffc = jnp.dot(h1b, w1c, preferred_element_type=jnp.float32) + b1c
            ffc = jnp.maximum(ffc, 0.0).astype(jnp.bfloat16)
            w2c = w2_ref[l, c:c + FF_CHUNK, :]                      # (512, 24) bf16
            ff2 = ff2 + jnp.dot(ffc, w2c, preferred_element_type=jnp.float32)
        ff2 = ff2 + ffn_b2
        h = _layer_norm(h1 + ff2, ln2_g, ln2_b)

    # ------------------- final norm + pooling + classifier -------------------
    hf = _layer_norm(h, lnf_g, lnf_b)                               # TransformerEncoder norm
    h3 = hf.reshape(B, S, E)
    x_mean = jnp.mean(h3, axis=1)                                   # (B, E)
    x_max = jnp.max(h3, axis=1)                                     # (B, E)
    fc1_wm = sq_ref[E:2 * E, :]                                     # mean half of fc[0].weight
    fc1_wx = sq_ref[2 * E:3 * E, :]                                 # max half
    z = (jnp.dot(x_mean, fc1_wm, preferred_element_type=jnp.float32)
         + jnp.dot(x_max, fc1_wx, preferred_element_type=jnp.float32) + fc1_b)
    z = jnp.maximum(z, 0.0)
    fc2_w = sq_ref[3 * E:4 * E, 0:NUM_CLASSES]
    z = jnp.dot(z, fc2_w, preferred_element_type=jnp.float32) + fc2_b
    # Exact softmax for the returned class probabilities (no approximate reciprocal).
    zm = jnp.max(z, axis=-1, keepdims=True)
    ze = jnp.exp(z - zm)
    out_ref[...] = ze / jnp.sum(ze, axis=-1, keepdims=True)


def make_params(key):
    """Random parameters in math (in_features, out_features) layout."""
    L, E, F3 = NUM_LAYERS, MODEL_DIM, 3 * INPUT_DIM
    ks = iter(jax.random.split(key, 32))

    def w(shape, fan_in):
        return jax.random.normal(next(ks), shape, jnp.float32) / jnp.sqrt(jnp.float32(fan_in))

    return dict(
        fe_w1=w((F3, E), F3), fe_b1=w((E,), E),
        bn_g=jnp.ones((E,), jnp.float32), bn_b=jnp.zeros((E,), jnp.float32),
        bn_m=0.1 * jax.random.normal(next(ks), (E,), jnp.float32),
        bn_v=0.5 + jax.random.uniform(next(ks), (E,), jnp.float32),
        fe_w2=w((E, E), E), fe_b2=w((E,), E),
        wq=w((L, E, E), E), bq=w((L, E), E),
        wk=w((L, E, E), E), bk=w((L, E), E),
        wv=w((L, E, E), E), bv=w((L, E), E),
        wo=w((L, E, E), E), bo=w((L, E), E),
        ln1_g=jnp.ones((L, E), jnp.float32), ln1_b=jnp.zeros((L, E), jnp.float32),
        ln2_g=jnp.ones((L, E), jnp.float32), ln2_b=jnp.zeros((L, E), jnp.float32),
        ffn_w1=w((L, E, FF_DIM), E), ffn_b1=w((L, FF_DIM), E),
        ffn_w2=w((L, FF_DIM, E), FF_DIM), ffn_b2=w((L, E), FF_DIM),
        lnf_g=jnp.ones((E,), jnp.float32), lnf_b=jnp.zeros((E,), jnp.float32),
        fc1_w=w((2 * E, E), 2 * E), fc1_b=w((E,), 2 * E),
        fc2_w=w((E, NUM_CLASSES), E), fc2_b=w((NUM_CLASSES,), E),
    )


def pack_params(p):
    """Repack model-layout params into the kernel's DMA-coalesced / lane-aligned layout."""
    L, E, H = NUM_LAYERS, MODEL_DIM, NUM_HEADS
    f32 = jnp.float32
    scale = 1.0 / float(HEAD_DIM) ** 0.5

    # Fused, 128-lane-aligned Q/K/V projection; 1/sqrt(head_dim) folded into q weight/bias.
    wqkv = jnp.zeros((L, E, 3 * QKV_STRIDE), f32)
    wqkv = wqkv.at[:, :, 0:E].set(p["wq"] * scale)
    wqkv = wqkv.at[:, :, QKV_STRIDE:QKV_STRIDE + E].set(p["wk"])
    wqkv = wqkv.at[:, :, 2 * QKV_STRIDE:2 * QKV_STRIDE + E].set(p["wv"])
    bqkv = jnp.zeros((L, 1, 3 * QKV_STRIDE), f32)
    bqkv = bqkv.at[:, 0, 0:E].set(p["bq"] * scale)
    bqkv = bqkv.at[:, 0, QKV_STRIDE:QKV_STRIDE + E].set(p["bk"])
    bqkv = bqkv.at[:, 0, 2 * QKV_STRIDE:2 * QKV_STRIDE + E].set(p["bv"])

    # Per-layer small vectors -> one (L, 8, 24) array (one DMA instead of six).
    lvecs = jnp.zeros((L, 8, E), f32)
    for i, name in enumerate(["bo", "ln1_g", "ln1_b", "ln2_g", "ln2_b", "ffn_b2"]):
        lvecs = lvecs.at[:, i, :].set(p[name])

    # Global square-ish matrices stacked on sublanes (8-aligned row slices in-kernel).
    sq = jnp.zeros((4 * E, E), f32)
    sq = sq.at[0:E, :].set(p["fe_w2"])
    sq = sq.at[E:2 * E, :].set(p["fc1_w"][:E])          # mean half of fc[0].weight
    sq = sq.at[2 * E:3 * E, :].set(p["fc1_w"][E:])      # max half
    sq = sq.at[3 * E:4 * E, 0:NUM_CLASSES].set(p["fc2_w"])

    # Global small vectors -> one (16, 24) array.
    gvecs = jnp.zeros((16, E), f32)
    for i, name in enumerate(["fe_b1", "bn_g", "bn_b", "bn_m", "bn_v",
                              "fe_b2", "lnf_g", "lnf_b", "fc1_b"]):
        gvecs = gvecs.at[i, :].set(p[name])
    gvecs = gvecs.at[9, 0:NUM_CLASSES].set(p["fc2_b"])

    # Constant head-segment masks for the vectorised per-head attention.
    head_ids = jnp.arange(E, dtype=jnp.int32) // HEAD_DIM
    head_mask = (head_ids[:, None] ==
                 jnp.arange(H, dtype=jnp.int32)[None, :]).astype(f32)      # (E, H)

    return (head_mask, head_mask.T, p["fe_w1"], sq, gvecs,
            wqkv, bqkv, p["wo"], lvecs,
            p["ffn_w1"].astype(jnp.bfloat16),            # (L, 24, 2048) bf16
            p["ffn_b1"].reshape(L, 1, FF_DIM),           # (L, 1, 2048)  f32
            p["ffn_w2"].astype(jnp.bfloat16))            # (L, 2048, 24) bf16, natural (K,N)


@jax.jit
def transformer_forward(x, packed):
    # x: (B, S, 12) float32 -- same axis convention as the PyTorch module.
    B, S, F = x.shape
    x = x.astype(jnp.float32)
    zeros = jnp.zeros_like(x[:, :1])
    dx = x - jnp.concatenate([zeros, x[:, :-1]], axis=1)        # torch.diff, prepend zeros
    d2x = dx - jnp.concatenate([zeros, dx[:, :-1]], axis=1)
    x2 = jnp.concatenate([x, dx, d2x], axis=-1).reshape(B * S, 3 * F)   # (B*S, 36)

    args = (x2,) + tuple(packed)

    def full_spec(a):
        nd = a.ndim
        return pl.BlockSpec(a.shape, lambda i, nd=nd: (0,) * nd)

    in_specs = [full_spec(a) for a in args]
    kernel = functools.partial(transformer_kernel, batch=B, seq=S)

    return pl.pallas_call(
        kernel,
        out_shape=jax.ShapeDtypeStruct((B, NUM_CLASSES), jnp.float32),
        grid_spec=pltpu.PrefetchScalarGridSpec(
            num_scalar_prefetch=0,
            grid=(1,),                       # single step: whole model resident in VMEM
            in_specs=in_specs,
            out_specs=pl.BlockSpec((B, NUM_CLASSES), lambda i: (0, 0)),
        ),
        compiler_params=pltpu.CompilerParams(
            dimension_semantics=("arbitrary",),
            vmem_limit_bytes=16 * 1024 * 1024),   # real footprint ~6 MiB; leave headroom
    )(*args)


if __name__ == "__main__":
    key = jax.random.PRNGKey(0)
    kx, kp = jax.random.split(key)
    B, S = 2, 8
    x = jax.random.uniform(kx, (B, S, INPUT_DIM), jnp.float32)
    params = make_params(kp)
    packed = pack_params(params)

    out = jax.block_until_ready(transformer_forward(x, packed))

    assert out.shape == (B, NUM_CLASSES)
    assert bool(jnp.all(jnp.isfinite(out)))
    # each row of the output is a softmax over 2 classes
    row_sums = jnp.sum(out, axis=-1)
    assert bool(jnp.all(jnp.abs(row_sums - 1.0) < 1e-5))
    print("KERNEL_OK")
</pallas_src>

<mosaic_0001>
module attributes {stable_mosaic.version = 11 : i64} {
  func.func @transformer_kernel(%arg0: i32, %arg1: memref<16x36xf32, #tpu.memory_space<vmem>>, %arg2: memref<24x6xf32, #tpu.memory_space<vmem>>, %arg3: memref<6x24xf32, #tpu.memory_space<vmem>>, %arg4: memref<36x24xf32, #tpu.memory_space<vmem>>, %arg5: memref<96x24xf32, #tpu.memory_space<vmem>>, %arg6: memref<16x24xf32, #tpu.memory_space<vmem>>, %arg7: memref<4x24x384xf32, #tpu.memory_space<vmem>>, %arg8: memref<4x1x384xf32, #tpu.memory_space<vmem>>, %arg9: memref<4x24x24xf32, #tpu.memory_space<vmem>>, %arg10: memref<4x8x24xf32, #tpu.memory_space<vmem>>, %arg11: memref<4x24x2048xbf16, #tpu.memory_space<vmem>>, %arg12: memref<4x1x2048xf32, #tpu.memory_space<vmem>>, %arg13: memref<4x2048x24xbf16, #tpu.memory_space<vmem>>, %arg14: memref<2x2xf32, #tpu.memory_space<vmem>>) attributes {dimension_semantics = [#tpu.dimension_semantics<arbitrary>], iteration_bounds = array<i64: 1>, scalar_prefetch = 0 : i64, scratch_operands = 0 : i64, tpu.core_type = #tpu.core_type<tc>, window_params = [{pipeline_mode = #tpu.pipeline_mode<synchronous>, transform_indices = @transform_0, window_bounds = array<i64: 16, 36>}, {pipeline_mode = #tpu.pipeline_mode<synchronous>, transform_indices = @transform_1, window_bounds = array<i64: 24, 6>}, {pipeline_mode = #tpu.pipeline_mode<synchronous>, transform_indices = @transform_2, window_bounds = array<i64: 6, 24>}, {pipeline_mode = #tpu.pipeline_mode<synchronous>, transform_indices = @transform_3, window_bounds = array<i64: 36, 24>}, {pipeline_mode = #tpu.pipeline_mode<synchronous>, transform_indices = @transform_4, window_bounds = array<i64: 96, 24>}, {pipeline_mode = #tpu.pipeline_mode<synchronous>, transform_indices = @transform_5, window_bounds = array<i64: 16, 24>}, {pipeline_mode = #tpu.pipeline_mode<synchronous>, transform_indices = @transform_6, window_bounds = array<i64: 4, 24, 384>}, {pipeline_mode = #tpu.pipeline_mode<synchronous>, transform_indices = @transform_7, window_bounds = array<i64: 4, 1, 384>}, {pipeline_mode = #tpu.pipeline_mode<synchronous>, transform_indices = @transform_8, window_bounds = array<i64: 4, 24, 24>}, {pipeline_mode = #tpu.pipeline_mode<synchronous>, transform_indices = @transform_9, window_bounds = array<i64: 4, 8, 24>}, {pipeline_mode = #tpu.pipeline_mode<synchronous>, transform_indices = @transform_10, window_bounds = array<i64: 4, 24, 2048>}, {pipeline_mode = #tpu.pipeline_mode<synchronous>, transform_indices = @transform_11, window_bounds = array<i64: 4, 1, 2048>}, {pipeline_mode = #tpu.pipeline_mode<synchronous>, transform_indices = @transform_12, window_bounds = array<i64: 4, 2048, 24>}, {pipeline_mode = #tpu.pipeline_mode<synchronous>, transform_indices = @transform_13, window_bounds = array<i64: 2, 2>}]} {
    %c0 = arith.constant 0 : index
    %c0_0 = arith.constant 0 : index
    %0 = vector.load %arg6[%c0, %c0_0] : memref<16x24xf32, #tpu.memory_space<vmem>>, vector<16x24xf32>
    %1 = vector.extract_strided_slice %0 {offsets = [0, 0], sizes = [1, 24], strides = [1, 1]} : vector<16x24xf32> to vector<1x24xf32>
    %2 = vector.extract_strided_slice %0 {offsets = [1, 0], sizes = [1, 24], strides = [1, 1]} : vector<16x24xf32> to vector<1x24xf32>
    %3 = vector.extract_strided_slice %0 {offsets = [2, 0], sizes = [1, 24], strides = [1, 1]} : vector<16x24xf32> to vector<1x24xf32>
    %4 = vector.extract_strided_slice %0 {offsets = [3, 0], sizes = [1, 24], strides = [1, 1]} : vector<16x24xf32> to vector<1x24xf32>
    %5 = vector.extract_strided_slice %0 {offsets = [4, 0], sizes = [1, 24], strides = [1, 1]} : vector<16x24xf32> to vector<1x24xf32>
    %6 = vector.extract_strided_slice %0 {offsets = [5, 0], sizes = [1, 24], strides = [1, 1]} : vector<16x24xf32> to vector<1x24xf32>
    %7 = vector.extract_strided_slice %0 {offsets = [6, 0], sizes = [1, 24], strides = [1, 1]} : vector<16x24xf32> to vector<1x24xf32>
    %8 = vector.extract_strided_slice %0 {offsets = [7, 0], sizes = [1, 24], strides = [1, 1]} : vector<16x24xf32> to vector<1x24xf32>
    %9 = vector.extract_strided_slice %0 {offsets = [8, 0], sizes = [1, 24], strides = [1, 1]} : vector<16x24xf32> to vector<1x24xf32>
    %10 = vector.extract_strided_slice %0 {offsets = [9, 0], sizes = [1, 2], strides = [1, 1]} : vector<16x24xf32> to vector<1x2xf32>
    %c0_1 = arith.constant 0 : index
    %c0_2 = arith.constant 0 : index
    %11 = vector.load %arg1[%c0_1, %c0_2] : memref<16x36xf32, #tpu.memory_space<vmem>>, vector<16x36xf32>
    %c0_3 = arith.constant 0 : index
    %c0_4 = arith.constant 0 : index
    %12 = vector.load %arg4[%c0_3, %c0_4] : memref<36x24xf32, #tpu.memory_space<vmem>>, vector<36x24xf32>
    %cst = arith.constant dense<0.000000e+00> : vector<16x24xf32>
    %13 = tpu.matmul %11, %12, %cst {dimension_numbers = #tpu.dot_dimension_numbers<[1], [0], [0], [1], [0, 0, 1, 1], [], []>} : vector<16x36xf32>, vector<36x24xf32>, vector<16x24xf32> -> vector<16x24xf32>
    %14 = vector.broadcast %1 : vector<1x24xf32> to vector<16x24xf32>
    %15 = arith.addf %13, %14 : vector<16x24xf32>
    %cst_5 = arith.constant 0.000000e+00 : f32
    %16 = vector.broadcast %cst_5 : f32 to vector<16x24xf32>
    %17 = arith.maximumf %15, %16 : vector<16x24xf32>
    %18 = vector.broadcast %4 : vector<1x24xf32> to vector<16x24xf32>
    %19 = arith.subf %17, %18 : vector<16x24xf32>
    %cst_6 = arith.constant 9.99999974E-6 : f32
    %20 = vector.broadcast %cst_6 : f32 to vector<1x24xf32>
    %21 = arith.addf %5, %20 : vector<1x24xf32>
    %22 = math.rsqrt %21 : vector<1x24xf32>
    %23 = vector.broadcast %22 : vector<1x24xf32> to vector<16x24xf32>
    %24 = arith.mulf %19, %23 : vector<16x24xf32>
    %25 = vector.broadcast %2 : vector<1x24xf32> to vector<16x24xf32>
    %26 = arith.mulf %24, %25 : vector<16x24xf32>
    %27 = vector.broadcast %3 : vector<1x24xf32> to vector<16x24xf32>
    %28 = arith.addf %26, %27 : vector<16x24xf32>
    %c0_7 = arith.constant 0 : index
    %c0_8 = arith.constant 0 : index
    %29 = vector.load %arg5[%c0_7, %c0_8] : memref<96x24xf32, #tpu.memory_space<vmem>>, vector<24x24xf32>
    %cst_9 = arith.constant dense<0.000000e+00> : vector<16x24xf32>
    %30 = tpu.matmul %28, %29, %cst_9 {dimension_numbers = #tpu.dot_dimension_numbers<[1], [0], [0], [1], [0, 0, 1, 1], [], []>} : vector<16x24xf32>, vector<24x24xf32>, vector<16x24xf32> -> vector<16x24xf32>
    %31 = vector.broadcast %6 : vector<1x24xf32> to vector<16x24xf32>
    %32 = arith.addf %30, %31 : vector<16x24xf32>
    %cst_10 = arith.constant 0.000000e+00 : f32
    %33 = vector.broadcast %cst_10 : f32 to vector<16x24xf32>
    %34 = arith.maximumf %32, %33 : vector<16x24xf32>
    %c0_11 = arith.constant 0 : index
    %c0_12 = arith.constant 0 : index
    %35 = vector.load %arg2[%c0_11, %c0_12] : memref<24x6xf32, #tpu.memory_space<vmem>>, vector<24x6xf32>
    %c0_13 = arith.constant 0 : index
    %c0_14 = arith.constant 0 : index
    %36 = vector.load %arg3[%c0_13, %c0_14] : memref<6x24xf32, #tpu.memory_space<vmem>>, vector<6x24xf32>
    %c0_15 = arith.constant 0 : index
    %c0_16 = arith.constant 0 : index
    %c0_17 = arith.constant 0 : index
    %37 = vector.load %arg10[%c0_15, %c0_16, %c0_17] : memref<4x8x24xf32, #tpu.memory_space<vmem>>, vector<1x8x24xf32>
    %38 = vector.shape_cast %37 : vector<1x8x24xf32> to vector<8x24xf32>
    %39 = vector.extract_strided_slice %38 {offsets = [0, 0], sizes = [1, 24], strides = [1, 1]} : vector<8x24xf32> to vector<1x24xf32>
    %40 = vector.extract_strided_slice %38 {offsets = [1, 0], sizes = [1, 24], strides = [1, 1]} : vector<8x24xf32> to vector<1x24xf32>
    %41 = vector.extract_strided_slice %38 {offsets = [2, 0], sizes = [1, 24], strides = [1, 1]} : vector<8x24xf32> to vector<1x24xf32>
    %42 = vector.extract_strided_slice %38 {offsets = [3, 0], sizes = [1, 24], strides = [1, 1]} : vector<8x24xf32> to vector<1x24xf32>
    %43 = vector.extract_strided_slice %38 {offsets = [4, 0], sizes = [1, 24], strides = [1, 1]} : vector<8x24xf32> to vector<1x24xf32>
    %44 = vector.extract_strided_slice %38 {offsets = [5, 0], sizes = [1, 24], strides = [1, 1]} : vector<8x24xf32> to vector<1x24xf32>
    %c0_18 = arith.constant 0 : index
    %c0_19 = arith.constant 0 : index
    %c0_20 = arith.constant 0 : index
    %45 = vector.load %arg7[%c0_18, %c0_19, %c0_20] : memref<4x24x384xf32, #tpu.memory_space<vmem>>, vector<1x24x384xf32>
    %46 = vector.shape_cast %45 : vector<1x24x384xf32> to vector<24x384xf32>
    %cst_21 = arith.constant dense<0.000000e+00> : vector<16x384xf32>
    %47 = tpu.matmul %34, %46, %cst_21 {dimension_numbers = #tpu.dot_dimension_numbers<[1], [0], [0], [1], [0, 0, 1, 1], [], []>} : vector<16x24xf32>, vector<24x384xf32>, vector<16x384xf32> -> vector<16x384xf32>
    %c0_22 = arith.constant 0 : index
    %c0_23 = arith.constant 0 : index
    %c0_24 = arith.constant 0 : index
    %48 = vector.load %arg8[%c0_22, %c0_23, %c0_24] : memref<4x1x384xf32, #tpu.memory_space<vmem>>, vector<1x1x384xf32>
    %49 = vector.shape_cast %48 : vector<1x1x384xf32> to vector<1x384xf32>
    %50 = vector.broadcast %49 : vector<1x384xf32> to vector<16x384xf32>
    %51 = arith.addf %47, %50 : vector<16x384xf32>
    %52 = vector.extract_strided_slice %51 {offsets = [0, 0], sizes = [16, 24], strides = [1, 1]} : vector<16x384xf32> to vector<16x24xf32>
    %53 = vector.shape_cast %52 : vector<16x24xf32> to vector<2x8x24xf32>
    %54 = vector.extract_strided_slice %51 {offsets = [0, 128], sizes = [16, 24], strides = [1, 1]} : vector<16x384xf32> to vector<16x24xf32>
    %55 = vector.shape_cast %54 : vector<16x24xf32> to vector<2x8x24xf32>
    %56 = vector.extract_strided_slice %51 {offsets = [0, 256], sizes = [16, 24], strides = [1, 1]} : vector<16x384xf32> to vector<16x24xf32>
    %57 = vector.shape_cast %56 : vector<16x24xf32> to vector<2x8x24xf32>
    %58 = vector.shape_cast %53 : vector<2x8x24xf32> to vector<2x1x8x24xf32>
    %59 = vector.shape_cast %55 : vector<2x8x24xf32> to vector<1x2x8x24xf32>
    %60 = vector.broadcast %58 : vector<2x1x8x24xf32> to vector<2x2x8x24xf32>
    %61 = vector.broadcast %59 : vector<1x2x8x24xf32> to vector<2x2x8x24xf32>
    %62 = arith.mulf %60, %61 : vector<2x2x8x24xf32>
    %63 = vector.shape_cast %62 : vector<2x2x8x24xf32> to vector<32x24xf32>
    %cst_25 = arith.constant dense<0.000000e+00> : vector<32x6xf32>
    %64 = tpu.matmul %63, %35, %cst_25 {dimension_numbers = #tpu.dot_dimension_numbers<[1], [0], [0], [1], [0, 0, 1, 1], [], []>} : vector<32x24xf32>, vector<24x6xf32>, vector<32x6xf32> -> vector<32x6xf32>
    %65 = vector.shape_cast %64 : vector<32x6xf32> to vector<2x2x8x6xf32>
    %cst_26 = arith.constant dense<0xFF800000> : vector<2x8x6xf32>
    %66 = vector.multi_reduction <maximumf>, %65, %cst_26 [1] : vector<2x2x8x6xf32> to vector<2x8x6xf32>
    %67 = vector.shape_cast %66 : vector<2x8x6xf32> to vector<2x1x8x6xf32>
    %68 = vector.broadcast %67 : vector<2x1x8x6xf32> to vector<2x2x8x6xf32>
    %69 = arith.subf %65, %68 : vector<2x2x8x6xf32>
    %70 = math.exp %69 : vector<2x2x8x6xf32>
    %cst_27 = arith.constant dense<0.000000e+00> : vector<2x8x6xf32>
    %71 = vector.multi_reduction <add>, %70, %cst_27 [1] : vector<2x2x8x6xf32> to vector<2x8x6xf32>
    %72 = vector.shape_cast %71 : vector<2x8x6xf32> to vector<2x1x8x6xf32>
    %73 = tpu.reciprocal %72 {approx = true} : vector<2x1x8x6xf32> -> vector<2x1x8x6xf32>
    %74 = vector.broadcast %73 : vector<2x1x8x6xf32> to vector<2x2x8x6xf32>
    %75 = arith.mulf %70, %74 : vector<2x2x8x6xf32>
    %76 = vector.shape_cast %75 : vector<2x2x8x6xf32> to vector<32x6xf32>
    %cst_28 = arith.constant dense<0.000000e+00> : vector<32x24xf32>
    %77 = tpu.matmul %76, %36, %cst_28 {dimension_numbers = #tpu.dot_dimension_numbers<[1], [0], [0], [1], [0, 0, 1, 1], [], []>} : vector<32x6xf32>, vector<6x24xf32>, vector<32x24xf32> -> vector<32x24xf32>
    %78 = vector.shape_cast %77 : vector<32x24xf32> to vector<2x2x8x24xf32>
    %79 = vector.shape_cast %57 : vector<2x8x24xf32> to vector<1x2x8x24xf32>
    %80 = vector.broadcast %79 : vector<1x2x8x24xf32> to vector<2x2x8x24xf32>
    %81 = arith.mulf %78, %80 : vector<2x2x8x24xf32>
    %cst_29 = arith.constant dense<0.000000e+00> : vector<2x8x24xf32>
    %82 = vector.multi_reduction <add>, %81, %cst_29 [1] : vector<2x2x8x24xf32> to vector<2x8x24xf32>
    %83 = vector.shape_cast %82 : vector<2x8x24xf32> to vector<16x24xf32>
    %c0_30 = arith.constant 0 : index
    %c0_31 = arith.constant 0 : index
    %c0_32 = arith.constant 0 : index
    %84 = vector.load %arg9[%c0_30, %c0_31, %c0_32] : memref<4x24x24xf32, #tpu.memory_space<vmem>>, vector<1x24x24xf32>
    %85 = vector.shape_cast %84 : vector<1x24x24xf32> to vector<24x24xf32>
    %cst_33 = arith.constant dense<0.000000e+00> : vector<16x24xf32>
    %86 = tpu.matmul %83, %85, %cst_33 {dimension_numbers = #tpu.dot_dimension_numbers<[1], [0], [0], [1], [0, 0, 1, 1], [], []>} : vector<16x24xf32>, vector<24x24xf32>, vector<16x24xf32> -> vector<16x24xf32>
    %87 = vector.broadcast %39 : vector<1x24xf32> to vector<16x24xf32>
    %88 = arith.addf %86, %87 : vector<16x24xf32>
    %89 = arith.addf %34, %88 : vector<16x24xf32>
    %cst_34 = arith.constant dense<0.000000e+00> : vector<16xf32>
    %90 = vector.multi_reduction <add>, %89, %cst_34 [1] : vector<16x24xf32> to vector<16xf32>
    %91 = vector.shape_cast %90 : vector<16xf32> to vector<16x1xf32>
    %cst_35 = arith.constant 2.400000e+01 : f32
    %92 = vector.broadcast %cst_35 : f32 to vector<16x1xf32>
    %93 = arith.divf %91, %92 : vector<16x1xf32>
    %94 = vector.broadcast %93 : vector<16x1xf32> to vector<16x24xf32>
    %95 = arith.subf %89, %94 : vector<16x24xf32>
    %96 = arith.mulf %95, %95 : vector<16x24xf32>
    %cst_36 = arith.constant dense<0.000000e+00> : vector<16xf32>
    %97 = vector.multi_reduction <add>, %96, %cst_36 [1] : vector<16x24xf32> to vector<16xf32>
    %98 = vector.shape_cast %97 : vector<16xf32> to vector<16x1xf32>
    %cst_37 = arith.constant 2.400000e+01 : f32
    %99 = vector.broadcast %cst_37 : f32 to vector<16x1xf32>
    %100 = arith.divf %98, %99 : vector<16x1xf32>
    %101 = vector.broadcast %93 : vector<16x1xf32> to vector<16x24xf32>
    %102 = arith.subf %89, %101 : vector<16x24xf32>
    %cst_38 = arith.constant 9.99999974E-6 : f32
    %103 = vector.broadcast %cst_38 : f32 to vector<16x1xf32>
    %104 = arith.addf %100, %103 : vector<16x1xf32>
    %105 = math.rsqrt %104 : vector<16x1xf32>
    %106 = vector.broadcast %105 : vector<16x1xf32> to vector<16x24xf32>
    %107 = arith.mulf %102, %106 : vector<16x24xf32>
    %108 = vector.broadcast %40 : vector<1x24xf32> to vector<16x24xf32>
    %109 = arith.mulf %107, %108 : vector<16x24xf32>
    %110 = vector.broadcast %41 : vector<1x24xf32> to vector<16x24xf32>
    %111 = arith.addf %109, %110 : vector<16x24xf32>
    %112 = arith.truncf %111 : vector<16x24xf32> to vector<16x24xbf16>
    %cst_39 = arith.constant 0.000000e+00 : f32
    %113 = vector.broadcast %cst_39 : f32 to vector<16x24xf32>
    %c0_40 = arith.constant 0 : index
    %c0_41 = arith.constant 0 : index
    %c0_42 = arith.constant 0 : index
    %114 = vector.load %arg11[%c0_40, %c0_41, %c0_42] : memref<4x24x2048xbf16, #tpu.memory_space<vmem>>, vector<1x24x512xbf16>
    %115 = vector.shape_cast %114 : vector<1x24x512xbf16> to vector<24x512xbf16>
    %c0_43 = arith.constant 0 : index
    %c0_44 = arith.constant 0 : index
    %c0_45 = arith.constant 0 : index
    %116 = vector.load %arg12[%c0_43, %c0_44, %c0_45] : memref<4x1x2048xf32, #tpu.memory_space<vmem>>, vector<1x1x512xf32>
    %117 = vector.shape_cast %116 : vector<1x1x512xf32> to vector<1x512xf32>
    %cst_46 = arith.constant dense<0.000000e+00> : vector<16x512xf32>
    %118 = tpu.matmul %112, %115, %cst_46 {dimension_numbers = #tpu.dot_dimension_numbers<[1], [0], [0], [1], [0, 0, 1, 1], [], []>} : vector<16x24xbf16>, vector<24x512xbf16>, vector<16x512xf32> -> vector<16x512xf32>
    %119 = vector.broadcast %117 : vector<1x512xf32> to vector<16x512xf32>
    %120 = arith.addf %118, %119 : vector<16x512xf32>
    %cst_47 = arith.constant 0.000000e+00 : f32
    %121 = vector.broadcast %cst_47 : f32 to vector<16x512xf32>
    %122 = arith.maximumf %120, %121 : vector<16x512xf32>
    %123 = arith.truncf %122 : vector<16x512xf32> to vector<16x512xbf16>
    %c0_48 = arith.constant 0 : index
    %c0_49 = arith.constant 0 : index
    %c0_50 = arith.constant 0 : index
    %124 = vector.load %arg13[%c0_48, %c0_49, %c0_50] : memref<4x2048x24xbf16, #tpu.memory_space<vmem>>, vector<1x512x24xbf16>
    %125 = vector.shape_cast %124 : vector<1x512x24xbf16> to vector<512x24xbf16>
    %cst_51 = arith.constant dense<0.000000e+00> : vector<16x24xf32>
    %126 = tpu.matmul %123, %125, %cst_51 {dimension_numbers = #tpu.dot_dimension_numbers<[1], [0], [0], [1], [0, 0, 1, 1], [], []>} : vector<16x512xbf16>, vector<512x24xbf16>, vector<16x24xf32> -> vector<16x24xf32>
    %127 = arith.addf %113, %126 : vector<16x24xf32>
    %c0_52 = arith.constant 0 : index
    %c0_53 = arith.constant 0 : index
    %c512 = arith.constant 512 : index
    %128 = vector.load %arg11[%c0_52, %c0_53, %c512] : memref<4x24x2048xbf16, #tpu.memory_space<vmem>>, vector<1x24x512xbf16>
    %129 = vector.shape_cast %128 : vector<1x24x512xbf16> to vector<24x512xbf16>
    %c0_54 = arith.constant 0 : index
    %c0_55 = arith.constant 0 : index
    %c512_56 = arith.constant 512 : index
    %130 = vector.load %arg12[%c0_54, %c0_55, %c512_56] : memref<4x1x2048xf32, #tpu.memory_space<vmem>>, vector<1x1x512xf32>
    %131 = vector.shape_cast %130 : vector<1x1x512xf32> to vector<1x512xf32>
    %cst_57 = arith.constant dense<0.000000e+00> : vector<16x512xf32>
    %132 = tpu.matmul %112, %129, %cst_57 {dimension_numbers = #tpu.dot_dimension_numbers<[1], [0], [0], [1], [0, 0, 1, 1], [], []>} : vector<16x24xbf16>, vector<24x512xbf16>, vector<16x512xf32> -> vector<16x512xf32>
    %133 = vector.broadcast %131 : vector<1x512xf32> to vector<16x512xf32>
    %134 = arith.addf %132, %133 : vector<16x512xf32>
    %cst_58 = arith.constant 0.000000e+00 : f32
    %135 = vector.broadcast %cst_58 : f32 to vector<16x512xf32>
    %136 = arith.maximumf %134, %135 : vector<16x512xf32>
    %137 = arith.truncf %136 : vector<16x512xf32> to vector<16x512xbf16>
    %c0_59 = arith.constant 0 : index
    %c512_60 = arith.constant 512 : index
    %c0_61 = arith.constant 0 : index
    %138 = vector.load %arg13[%c0_59, %c512_60, %c0_61] : memref<4x2048x24xbf16, #tpu.memory_space<vmem>>, vector<1x512x24xbf16>
    %139 = vector.shape_cast %138 : vector<1x512x24xbf16> to vector<512x24xbf16>
    %cst_62 = arith.constant dense<0.000000e+00> : vector<16x24xf32>
    %140 = tpu.matmul %137, %139, %cst_62 {dimension_numbers = #tpu.dot_dimension_numbers<[1], [0], [0], [1], [0, 0, 1, 1], [], []>} : vector<16x512xbf16>, vector<512x24xbf16>, vector<16x24xf32> -> vector<16x24xf32>
    %141 = arith.addf %127, %140 : vector<16x24xf32>
    %c0_63 = arith.constant 0 : index
    %c0_64 = arith.constant 0 : index
    %c1024 = arith.constant 1024 : index
    %142 = vector.load %arg11[%c0_63, %c0_64, %c1024] : memref<4x24x2048xbf16, #tpu.memory_space<vmem>>, vector<1x24x512xbf16>
    %143 = vector.shape_cast %142 : vector<1x24x512xbf16> to vector<24x512xbf16>
    %c0_65 = arith.constant 0 : index
    %c0_66 = arith.constant 0 : index
    %c1024_67 = arith.constant 1024 : index
    %144 = vector.load %arg12[%c0_65, %c0_66, %c1024_67] : memref<4x1x2048xf32, #tpu.memory_space<vmem>>, vector<1x1x512xf32>
    %145 = vector.shape_cast %144 : vector<1x1x512xf32> to vector<1x512xf32>
    %cst_68 = arith.constant dense<0.000000e+00> : vector<16x512xf32>
    %146 = tpu.matmul %112, %143, %cst_68 {dimension_numbers = #tpu.dot_dimension_numbers<[1], [0], [0], [1], [0, 0, 1, 1], [], []>} : vector<16x24xbf16>, vector<24x512xbf16>, vector<16x512xf32> -> vector<16x512xf32>
    %147 = vector.broadcast %145 : vector<1x512xf32> to vector<16x512xf32>
    %148 = arith.addf %146, %147 : vector<16x512xf32>
    %cst_69 = arith.constant 0.000000e+00 : f32
    %149 = vector.broadcast %cst_69 : f32 to vector<16x512xf32>
    %150 = arith.maximumf %148, %149 : vector<16x512xf32>
    %151 = arith.truncf %150 : vector<16x512xf32> to vector<16x512xbf16>
    %c0_70 = arith.constant 0 : index
    %c1024_71 = arith.constant 1024 : index
    %c0_72 = arith.constant 0 : index
    %152 = vector.load %arg13[%c0_70, %c1024_71, %c0_72] : memref<4x2048x24xbf16, #tpu.memory_space<vmem>>, vector<1x512x24xbf16>
    %153 = vector.shape_cast %152 : vector<1x512x24xbf16> to vector<512x24xbf16>
    %cst_73 = arith.constant dense<0.000000e+00> : vector<16x24xf32>
    %154 = tpu.matmul %151, %153, %cst_73 {dimension_numbers = #tpu.dot_dimension_numbers<[1], [0], [0], [1], [0, 0, 1, 1], [], []>} : vector<16x512xbf16>, vector<512x24xbf16>, vector<16x24xf32> -> vector<16x24xf32>
    %155 = arith.addf %141, %154 : vector<16x24xf32>
    %c0_74 = arith.constant 0 : index
    %c0_75 = arith.constant 0 : index
    %c1536 = arith.constant 1536 : index
    %156 = vector.load %arg11[%c0_74, %c0_75, %c1536] : memref<4x24x2048xbf16, #tpu.memory_space<vmem>>, vector<1x24x512xbf16>
    %157 = vector.shape_cast %156 : vector<1x24x512xbf16> to vector<24x512xbf16>
    %c0_76 = arith.constant 0 : index
    %c0_77 = arith.constant 0 : index
    %c1536_78 = arith.constant 1536 : index
    %158 = vector.load %arg12[%c0_76, %c0_77, %c1536_78] : memref<4x1x2048xf32, #tpu.memory_space<vmem>>, vector<1x1x512xf32>
    %159 = vector.shape_cast %158 : vector<1x1x512xf32> to vector<1x512xf32>
    %cst_79 = arith.constant dense<0.000000e+00> : vector<16x512xf32>
    %160 = tpu.matmul %112, %157, %cst_79 {dimension_numbers = #tpu.dot_dimension_numbers<[1], [0], [0], [1], [0, 0, 1, 1], [], []>} : vector<16x24xbf16>, vector<24x512xbf16>, vector<16x512xf32> -> vector<16x512xf32>
    %161 = vector.broadcast %159 : vector<1x512xf32> to vector<16x512xf32>
    %162 = arith.addf %160, %161 : vector<16x512xf32>
    %cst_80 = arith.constant 0.000000e+00 : f32
    %163 = vector.broadcast %cst_80 : f32 to vector<16x512xf32>
    %164 = arith.maximumf %162, %163 : vector<16x512xf32>
    %165 = arith.truncf %164 : vector<16x512xf32> to vector<16x512xbf16>
    %c0_81 = arith.constant 0 : index
    %c1536_82 = arith.constant 1536 : index
    %c0_83 = arith.constant 0 : index
    %166 = vector.load %arg13[%c0_81, %c1536_82, %c0_83] : memref<4x2048x24xbf16, #tpu.memory_space<vmem>>, vector<1x512x24xbf16>
    %167 = vector.shape_cast %166 : vector<1x512x24xbf16> to vector<512x24xbf16>
    %cst_84 = arith.constant dense<0.000000e+00> : vector<16x24xf32>
    %168 = tpu.matmul %165, %167, %cst_84 {dimension_numbers = #tpu.dot_dimension_numbers<[1], [0], [0], [1], [0, 0, 1, 1], [], []>} : vector<16x512xbf16>, vector<512x24xbf16>, vector<16x24xf32> -> vector<16x24xf32>
    %169 = arith.addf %155, %168 : vector<16x24xf32>
    %170 = vector.broadcast %44 : vector<1x24xf32> to vector<16x24xf32>
    %171 = arith.addf %169, %170 : vector<16x24xf32>
    %172 = arith.addf %111, %171 : vector<16x24xf32>
    %cst_85 = arith.constant dense<0.000000e+00> : vector<16xf32>
    %173 = vector.multi_reduction <add>, %172, %cst_85 [1] : vector<16x24xf32> to vector<16xf32>
    %174 = vector.shape_cast %173 : vector<16xf32> to vector<16x1xf32>
    %cst_86 = arith.constant 2.400000e+01 : f32
    %175 = vector.broadcast %cst_86 : f32 to vector<16x1xf32>
    %176 = arith.divf %174, %175 : vector<16x1xf32>
    %177 = vector.broadcast %176 : vector<16x1xf32> to vector<16x24xf32>
    %178 = arith.subf %172, %177 : vector<16x24xf32>
    %179 = arith.mulf %178, %178 : vector<16x24xf32>
    %cst_87 = arith.constant dense<0.000000e+00> : vector<16xf32>
    %180 = vector.multi_reduction <add>, %179, %cst_87 [1] : vector<16x24xf32> to vector<16xf32>
    %181 = vector.shape_cast %180 : vector<16xf32> to vector<16x1xf32>
    %cst_88 = arith.constant 2.400000e+01 : f32
    %182 = vector.broadcast %cst_88 : f32 to vector<16x1xf32>
    %183 = arith.divf %181, %182 : vector<16x1xf32>
    %184 = vector.broadcast %176 : vector<16x1xf32> to vector<16x24xf32>
    %185 = arith.subf %172, %184 : vector<16x24xf32>
    %cst_89 = arith.constant 9.99999974E-6 : f32
    %186 = vector.broadcast %cst_89 : f32 to vector<16x1xf32>
    %187 = arith.addf %183, %186 : vector<16x1xf32>
    %188 = math.rsqrt %187 : vector<16x1xf32>
    %189 = vector.broadcast %188 : vector<16x1xf32> to vector<16x24xf32>
    %190 = arith.mulf %185, %189 : vector<16x24xf32>
    %191 = vector.broadcast %42 : vector<1x24xf32> to vector<16x24xf32>
    %192 = arith.mulf %190, %191 : vector<16x24xf32>
    %193 = vector.broadcast %43 : vector<1x24xf32> to vector<16x24xf32>
    %194 = arith.addf %192, %193 : vector<16x24xf32>
    %c1 = arith.constant 1 : index
    %c0_90 = arith.constant 0 : index
    %c0_91 = arith.constant 0 : index
    %195 = vector.load %arg10[%c1, %c0_90, %c0_91] : memref<4x8x24xf32, #tpu.memory_space<vmem>>, vector<1x8x24xf32>
    %196 = vector.shape_cast %195 : vector<1x8x24xf32> to vector<8x24xf32>
    %197 = vector.extract_strided_slice %196 {offsets = [0, 0], sizes = [1, 24], strides = [1, 1]} : vector<8x24xf32> to vector<1x24xf32>
    %198 = vector.extract_strided_slice %196 {offsets = [1, 0], sizes = [1, 24], strides = [1, 1]} : vector<8x24xf32> to vector<1x24xf32>
    %199 = vector.extract_strided_slice %196 {offsets = [2, 0], sizes = [1, 24], strides = [1, 1]} : vector<8x24xf32> to vector<1x24xf32>
    %200 = vector.extract_strided_slice %196 {offsets = [3, 0], sizes = [1, 24], strides = [1, 1]} : vector<8x24xf32> to vector<1x24xf32>
    %201 = vector.extract_strided_slice %196 {offsets = [4, 0], sizes = [1, 24], strides = [1, 1]} : vector<8x24xf32> to vector<1x24xf32>
    %202 = vector.extract_strided_slice %196 {offsets = [5, 0], sizes = [1, 24], strides = [1, 1]} : vector<8x24xf32> to vector<1x24xf32>
    %c1_92 = arith.constant 1 : index
    %c0_93 = arith.constant 0 : index
    %c0_94 = arith.constant 0 : index
    %203 = vector.load %arg7[%c1_92, %c0_93, %c0_94] : memref<4x24x384xf32, #tpu.memory_space<vmem>>, vector<1x24x384xf32>
    %204 = vector.shape_cast %203 : vector<1x24x384xf32> to vector<24x384xf32>
    %cst_95 = arith.constant dense<0.000000e+00> : vector<16x384xf32>
    %205 = tpu.matmul %194, %204, %cst_95 {dimension_numbers = #tpu.dot_dimension_numbers<[1], [0], [0], [1], [0, 0, 1, 1], [], []>} : vector<16x24xf32>, vector<24x384xf32>, vector<16x384xf32> -> vector<16x384xf32>
    %c1_96 = arith.constant 1 : index
    %c0_97 = arith.constant 0 : index
    %c0_98 = arith.constant 0 : index
    %206 = vector.load %arg8[%c1_96, %c0_97, %c0_98] : memref<4x1x384xf32, #tpu.memory_space<vmem>>, vector<1x1x384xf32>
    %207 = vector.shape_cast %206 : vector<1x1x384xf32> to vector<1x384xf32>
    %208 = vector.broadcast %207 : vector<1x384xf32> to vector<16x384xf32>
    %209 = arith.addf %205, %208 : vector<16x384xf32>
    %210 = vector.extract_strided_slice %209 {offsets = [0, 0], sizes = [16, 24], strides = [1, 1]} : vector<16x384xf32> to vector<16x24xf32>
    %211 = vector.shape_cast %210 : vector<16x24xf32> to vector<2x8x24xf32>
    %212 = vector.extract_strided_slice %209 {offsets = [0, 128], sizes = [16, 24], strides = [1, 1]} : vector<16x384xf32> to vector<16x24xf32>
    %213 = vector.shape_cast %212 : vector<16x24xf32> to vector<2x8x24xf32>
    %214 = vector.extract_strided_slice %209 {offsets = [0, 256], sizes = [16, 24], strides = [1, 1]} : vector<16x384xf32> to vector<16x24xf32>
    %215 = vector.shape_cast %214 : vector<16x24xf32> to vector<2x8x24xf32>
    %216 = vector.shape_cast %211 : vector<2x8x24xf32> to vector<2x1x8x24xf32>
    %217 = vector.shape_cast %213 : vector<2x8x24xf32> to vector<1x2x8x24xf32>
    %218 = vector.broadcast %216 : vector<2x1x8x24xf32> to vector<2x2x8x24xf32>
    %219 = vector.broadcast %217 : vector<1x2x8x24xf32> to vector<2x2x8x24xf32>
    %220 = arith.mulf %218, %219 : vector<2x2x8x24xf32>
    %221 = vector.shape_cast %220 : vector<2x2x8x24xf32> to vector<32x24xf32>
    %cst_99 = arith.constant dense<0.000000e+00> : vector<32x6xf32>
    %222 = tpu.matmul %221, %35, %cst_99 {dimension_numbers = #tpu.dot_dimension_numbers<[1], [0], [0], [1], [0, 0, 1, 1], [], []>} : vector<32x24xf32>, vector<24x6xf32>, vector<32x6xf32> -> vector<32x6xf32>
    %223 = vector.shape_cast %222 : vector<32x6xf32> to vector<2x2x8x6xf32>
    %cst_100 = arith.constant dense<0xFF800000> : vector<2x8x6xf32>
    %224 = vector.multi_reduction <maximumf>, %223, %cst_100 [1] : vector<2x2x8x6xf32> to vector<2x8x6xf32>
    %225 = vector.shape_cast %224 : vector<2x8x6xf32> to vector<2x1x8x6xf32>
    %226 = vector.broadcast %225 : vector<2x1x8x6xf32> to vector<2x2x8x6xf32>
    %227 = arith.subf %223, %226 : vector<2x2x8x6xf32>
    %228 = math.exp %227 : vector<2x2x8x6xf32>
    %cst_101 = arith.constant dense<0.000000e+00> : vector<2x8x6xf32>
    %229 = vector.multi_reduction <add>, %228, %cst_101 [1] : vector<2x2x8x6xf32> to vector<2x8x6xf32>
    %230 = vector.shape_cast %229 : vector<2x8x6xf32> to vector<2x1x8x6xf32>
    %231 = tpu.reciprocal %230 {approx = true} : vector<2x1x8x6xf32> -> vector<2x1x8x6xf32>
    %232 = vector.broadcast %231 : vector<2x1x8x6xf32> to vector<2x2x8x6xf32>
    %233 = arith.mulf %228, %232 : vector<2x2x8x6xf32>
    %234 = vector.shape_cast %233 : vector<2x2x8x6xf32> to vector<32x6xf32>
    %cst_102 = arith.constant dense<0.000000e+00> : vector<32x24xf32>
    %235 = tpu.matmul %234, %36, %cst_102 {dimension_numbers = #tpu.dot_dimension_numbers<[1], [0], [0], [1], [0, 0, 1, 1], [], []>} : vector<32x6xf32>, vector<6x24xf32>, vector<32x24xf32> -> vector<32x24xf32>
    %236 = vector.shape_cast %235 : vector<32x24xf32> to vector<2x2x8x24xf32>
    %237 = vector.shape_cast %215 : vector<2x8x24xf32> to vector<1x2x8x24xf32>
    %238 = vector.broadcast %237 : vector<1x2x8x24xf32> to vector<2x2x8x24xf32>
    %239 = arith.mulf %236, %238 : vector<2x2x8x24xf32>
    %cst_103 = arith.constant dense<0.000000e+00> : vector<2x8x24xf32>
    %240 = vector.multi_reduction <add>, %239, %cst_103 [1] : vector<2x2x8x24xf32> to vector<2x8x24xf32>
    %241 = vector.shape_cast %240 : vector<2x8x24xf32> to vector<16x24xf32>
    %c1_104 = arith.constant 1 : index
    %c0_105 = arith.constant 0 : index
    %c0_106 = arith.constant 0 : index
    %242 = vector.load %arg9[%c1_104, %c0_105, %c0_106] : memref<4x24x24xf32, #tpu.memory_space<vmem>>, vector<1x24x24xf32>
    %243 = vector.shape_cast %242 : vector<1x24x24xf32> to vector<24x24xf32>
    %cst_107 = arith.constant dense<0.000000e+00> : vector<16x24xf32>
    %244 = tpu.matmul %241, %243, %cst_107 {dimension_numbers = #tpu.dot_dimension_numbers<[1], [0], [0], [1], [0, 0, 1, 1], [], []>} : vector<16x24xf32>, vector<24x24xf32>, vector<16x24xf32> -> vector<16x24xf32>
    %245 = vector.broadcast %197 : vector<1x24xf32> to vector<16x24xf32>
    %246 = arith.addf %244, %245 : vector<16x24xf32>
    %247 = arith.addf %194, %246 : vector<16x24xf32>
    %cst_108 = arith.constant dense<0.000000e+00> : vector<16xf32>
    %248 = vector.multi_reduction <add>, %247, %cst_108 [1] : vector<16x24xf32> to vector<16xf32>
    %249 = vector.shape_cast %248 : vector<16xf32> to vector<16x1xf32>
    %cst_109 = arith.constant 2.400000e+01 : f32
    %250 = vector.broadcast %cst_109 : f32 to vector<16x1xf32>
    %251 = arith.divf %249, %250 : vector<16x1xf32>
    %252 = vector.broadcast %251 : vector<16x1xf32> to vector<16x24xf32>
    %253 = arith.subf %247, %252 : vector<16x24xf32>
    %254 = arith.mulf %253, %253 : vector<16x24xf32>
    %cst_110 = arith.constant dense<0.000000e+00> : vector<16xf32>
    %255 = vector.multi_reduction <add>, %254, %cst_110 [1] : vector<16x24xf32> to vector<16xf32>
    %256 = vector.shape_cast %255 : vector<16xf32> to vector<16x1xf32>
    %cst_111 = arith.constant 2.400000e+01 : f32
    %257 = vector.broadcast %cst_111 : f32 to vector<16x1xf32>
    %258 = arith.divf %256, %257 : vector<16x1xf32>
    %259 = vector.broadcast %251 : vector<16x1xf32> to vector<16x24xf32>
    %260 = arith.subf %247, %259 : vector<16x24xf32>
    %cst_112 = arith.constant 9.99999974E-6 : f32
    %261 = vector.broadcast %cst_112 : f32 to vector<16x1xf32>
    %262 = arith.addf %258, %261 : vector<16x1xf32>
    %263 = math.rsqrt %262 : vector<16x1xf32>
    %264 = vector.broadcast %263 : vector<16x1xf32> to vector<16x24xf32>
    %265 = arith.mulf %260, %264 : vector<16x24xf32>
    %266 = vector.broadcast %198 : vector<1x24xf32> to vector<16x24xf32>
    %267 = arith.mulf %265, %266 : vector<16x24xf32>
    %268 = vector.broadcast %199 : vector<1x24xf32> to vector<16x24xf32>
    %269 = arith.addf %267, %268 : vector<16x24xf32>
    %270 = arith.truncf %269 : vector<16x24xf32> to vector<16x24xbf16>
    %cst_113 = arith.constant 0.000000e+00 : f32
    %271 = vector.broadcast %cst_113 : f32 to vector<16x24xf32>
    %c1_114 = arith.constant 1 : index
    %c0_115 = arith.constant 0 : index
    %c0_116 = arith.constant 0 : index
    %272 = vector.load %arg11[%c1_114, %c0_115, %c0_116] : memref<4x24x2048xbf16, #tpu.memory_space<vmem>>, vector<1x24x512xbf16>
    %273 = vector.shape_cast %272 : vector<1x24x512xbf16> to vector<24x512xbf16>
    %c1_117 = arith.constant 1 : index
    %c0_118 = arith.constant 0 : index
    %c0_119 = arith.constant 0 : index
    %274 = vector.load %arg12[%c1_117, %c0_118, %c0_119] : memref<4x1x2048xf32, #tpu.memory_space<vmem>>, vector<1x1x512xf32>
    %275 = vector.shape_cast %274 : vector<1x1x512xf32> to vector<1x512xf32>
    %cst_120 = arith.constant dense<0.000000e+00> : vector<16x512xf32>
    %276 = tpu.matmul %270, %273, %cst_120 {dimension_numbers = #tpu.dot_dimension_numbers<[1], [0], [0], [1], [0, 0, 1, 1], [], []>} : vector<16x24xbf16>, vector<24x512xbf16>, vector<16x512xf32> -> vector<16x512xf32>
    %277 = vector.broadcast %275 : vector<1x512xf32> to vector<16x512xf32>
    %278 = arith.addf %276, %277 : vector<16x512xf32>
    %cst_121 = arith.constant 0.000000e+00 : f32
    %279 = vector.broadcast %cst_121 : f32 to vector<16x512xf32>
    %280 = arith.maximumf %278, %279 : vector<16x512xf32>
    %281 = arith.truncf %280 : vector<16x512xf32> to vector<16x512xbf16>
    %c1_122 = arith.constant 1 : index
    %c0_123 = arith.constant 0 : index
    %c0_124 = arith.constant 0 : index
    %282 = vector.load %arg13[%c1_122, %c0_123, %c0_124] : memref<4x2048x24xbf16, #tpu.memory_space<vmem>>, vector<1x512x24xbf16>
    %283 = vector.shape_cast %282 : vector<1x512x24xbf16> to vector<512x24xbf16>
    %cst_125 = arith.constant dense<0.000000e+00> : vector<16x24xf32>
    %284 = tpu.matmul %281, %283, %cst_125 {dimension_numbers = #tpu.dot_dimension_numbers<[1], [0], [0], [1], [0, 0, 1, 1], [], []>} : vector<16x512xbf16>, vector<512x24xbf16>, vector<16x24xf32> -> vector<16x24xf32>
    %285 = arith.addf %271, %284 : vector<16x24xf32>
    %c1_126 = arith.constant 1 : index
    %c0_127 = arith.constant 0 : index
    %c512_128 = arith.constant 512 : index
    %286 = vector.load %arg11[%c1_126, %c0_127, %c512_128] : memref<4x24x2048xbf16, #tpu.memory_space<vmem>>, vector<1x24x512xbf16>
    %287 = vector.shape_cast %286 : vector<1x24x512xbf16> to vector<24x512xbf16>
    %c1_129 = arith.constant 1 : index
    %c0_130 = arith.constant 0 : index
    %c512_131 = arith.constant 512 : index
    %288 = vector.load %arg12[%c1_129, %c0_130, %c512_131] : memref<4x1x2048xf32, #tpu.memory_space<vmem>>, vector<1x1x512xf32>
    %289 = vector.shape_cast %288 : vector<1x1x512xf32> to vector<1x512xf32>
    %cst_132 = arith.constant dense<0.000000e+00> : vector<16x512xf32>
    %290 = tpu.matmul %270, %287, %cst_132 {dimension_numbers = #tpu.dot_dimension_numbers<[1], [0], [0], [1], [0, 0, 1, 1], [], []>} : vector<16x24xbf16>, vector<24x512xbf16>, vector<16x512xf32> -> vector<16x512xf32>
    %291 = vector.broadcast %289 : vector<1x512xf32> to vector<16x512xf32>
    %292 = arith.addf %290, %291 : vector<16x512xf32>
    %cst_133 = arith.constant 0.000000e+00 : f32
    %293 = vector.broadcast %cst_133 : f32 to vector<16x512xf32>
    %294 = arith.maximumf %292, %293 : vector<16x512xf32>
    %295 = arith.truncf %294 : vector<16x512xf32> to vector<16x512xbf16>
    %c1_134 = arith.constant 1 : index
    %c512_135 = arith.constant 512 : index
    %c0_136 = arith.constant 0 : index
    %296 = vector.load %arg13[%c1_134, %c512_135, %c0_136] : memref<4x2048x24xbf16, #tpu.memory_space<vmem>>, vector<1x512x24xbf16>
    %297 = vector.shape_cast %296 : vector<1x512x24xbf16> to vector<512x24xbf16>
    %cst_137 = arith.constant dense<0.000000e+00> : vector<16x24xf32>
    %298 = tpu.matmul %295, %297, %cst_137 {dimension_numbers = #tpu.dot_dimension_numbers<[1], [0], [0], [1], [0, 0, 1, 1], [], []>} : vector<16x512xbf16>, vector<512x24xbf16>, vector<16x24xf32> -> vector<16x24xf32>
    %299 = arith.addf %285, %298 : vector<16x24xf32>
    %c1_138 = arith.constant 1 : index
    %c0_139 = arith.constant 0 : index
    %c1024_140 = arith.constant 1024 : index
    %300 = vector.load %arg11[%c1_138, %c0_139, %c1024_140] : memref<4x24x2048xbf16, #tpu.memory_space<vmem>>, vector<1x24x512xbf16>
    %301 = vector.shape_cast %300 : vector<1x24x512xbf16> to vector<24x512xbf16>
    %c1_141 = arith.constant 1 : index
    %c0_142 = arith.constant 0 : index
    %c1024_143 = arith.constant 1024 : index
    %302 = vector.load %arg12[%c1_141, %c0_142, %c1024_143] : memref<4x1x2048xf32, #tpu.memory_space<vmem>>, vector<1x1x512xf32>
    %303 = vector.shape_cast %302 : vector<1x1x512xf32> to vector<1x512xf32>
    %cst_144 = arith.constant dense<0.000000e+00> : vector<16x512xf32>
    %304 = tpu.matmul %270, %301, %cst_144 {dimension_numbers = #tpu.dot_dimension_numbers<[1], [0], [0], [1], [0, 0, 1, 1], [], []>} : vector<16x24xbf16>, vector<24x512xbf16>, vector<16x512xf32> -> vector<16x512xf32>
    %305 = vector.broadcast %303 : vector<1x512xf32> to vector<16x512xf32>
    %306 = arith.addf %304, %305 : vector<16x512xf32>
    %cst_145 = arith.constant 0.000000e+00 : f32
    %307 = vector.broadcast %cst_145 : f32 to vector<16x512xf32>
    %308 = arith.maximumf %306, %307 : vector<16x512xf32>
    %309 = arith.truncf %308 : vector<16x512xf32> to vector<16x512xbf16>
    %c1_146 = arith.constant 1 : index
    %c1024_147 = arith.constant 1024 : index
    %c0_148 = arith.constant 0 : index
    %310 = vector.load %arg13[%c1_146, %c1024_147, %c0_148] : memref<4x2048x24xbf16, #tpu.memory_space<vmem>>, vector<1x512x24xbf16>
    %311 = vector.shape_cast %310 : vector<1x512x24xbf16> to vector<512x24xbf16>
    %cst_149 = arith.constant dense<0.000000e+00> : vector<16x24xf32>
    %312 = tpu.matmul %309, %311, %cst_149 {dimension_numbers = #tpu.dot_dimension_numbers<[1], [0], [0], [1], [0, 0, 1, 1], [], []>} : vector<16x512xbf16>, vector<512x24xbf16>, vector<16x24xf32> -> vector<16x24xf32>
    %313 = arith.addf %299, %312 : vector<16x24xf32>
    %c1_150 = arith.constant 1 : index
    %c0_151 = arith.constant 0 : index
    %c1536_152 = arith.constant 1536 : index
    %314 = vector.load %arg11[%c1_150, %c0_151, %c1536_152] : memref<4x24x2048xbf16, #tpu.memory_space<vmem>>, vector<1x24x512xbf16>
    %315 = vector.shape_cast %314 : vector<1x24x512xbf16> to vector<24x512xbf16>
    %c1_153 = arith.constant 1 : index
    %c0_154 = arith.constant 0 : index
    %c1536_155 = arith.constant 1536 : index
    %316 = vector.load %arg12[%c1_153, %c0_154, %c1536_155] : memref<4x1x2048xf32, #tpu.memory_space<vmem>>, vector<1x1x512xf32>
    %317 = vector.shape_cast %316 : vector<1x1x512xf32> to vector<1x512xf32>
    %cst_156 = arith.constant dense<0.000000e+00> : vector<16x512xf32>
    %318 = tpu.matmul %270, %315, %cst_156 {dimension_numbers = #tpu.dot_dimension_numbers<[1], [0], [0], [1], [0, 0, 1, 1], [], []>} : vector<16x24xbf16>, vector<24x512xbf16>, vector<16x512xf32> -> vector<16x512xf32>
    %319 = vector.broadcast %317 : vector<1x512xf32> to vector<16x512xf32>
    %320 = arith.addf %318, %319 : vector<16x512xf32>
    %cst_157 = arith.constant 0.000000e+00 : f32
    %321 = vector.broadcast %cst_157 : f32 to vector<16x512xf32>
    %322 = arith.maximumf %320, %321 : vector<16x512xf32>
    %323 = arith.truncf %322 : vector<16x512xf32> to vector<16x512xbf16>
    %c1_158 = arith.constant 1 : index
    %c1536_159 = arith.constant 1536 : index
    %c0_160 = arith.constant 0 : index
    %324 = vector.load %arg13[%c1_158, %c1536_159, %c0_160] : memref<4x2048x24xbf16, #tpu.memory_space<vmem>>, vector<1x512x24xbf16>
    %325 = vector.shape_cast %324 : vector<1x512x24xbf16> to vector<512x24xbf16>
    %cst_161 = arith.constant dense<0.000000e+00> : vector<16x24xf32>
    %326 = tpu.matmul %323, %325, %cst_161 {dimension_numbers = #tpu.dot_dimension_numbers<[1], [0], [0], [1], [0, 0, 1, 1], [], []>} : vector<16x512xbf16>, vector<512x24xbf16>, vector<16x24xf32> -> vector<16x24xf32>
    %327 = arith.addf %313, %326 : vector<16x24xf32>
    %328 = vector.broadcast %202 : vector<1x24xf32> to vector<16x24xf32>
    %329 = arith.addf %327, %328 : vector<16x24xf32>
    %330 = arith.addf %269, %329 : vector<16x24xf32>
    %cst_162 = arith.constant dense<0.000000e+00> : vector<16xf32>
    %331 = vector.multi_reduction <add>, %330, %cst_162 [1] : vector<16x24xf32> to vector<16xf32>
    %332 = vector.shape_cast %331 : vector<16xf32> to vector<16x1xf32>
    %cst_163 = arith.constant 2.400000e+01 : f32
    %333 = vector.broadcast %cst_163 : f32 to vector<16x1xf32>
    %334 = arith.divf %332, %333 : vector<16x1xf32>
    %335 = vector.broadcast %334 : vector<16x1xf32> to vector<16x24xf32>
    %336 = arith.subf %330, %335 : vector<16x24xf32>
    %337 = arith.mulf %336, %336 : vector<16x24xf32>
    %cst_164 = arith.constant dense<0.000000e+00> : vector<16xf32>
    %338 = vector.multi_reduction <add>, %337, %cst_164 [1] : vector<16x24xf32> to vector<16xf32>
    %339 = vector.shape_cast %338 : vector<16xf32> to vector<16x1xf32>
    %cst_165 = arith.constant 2.400000e+01 : f32
    %340 = vector.broadcast %cst_165 : f32 to vector<16x1xf32>
    %341 = arith.divf %339, %340 : vector<16x1xf32>
    %342 = vector.broadcast %334 : vector<16x1xf32> to vector<16x24xf32>
    %343 = arith.subf %330, %342 : vector<16x24xf32>
    %cst_166 = arith.constant 9.99999974E-6 : f32
    %344 = vector.broadcast %cst_166 : f32 to vector<16x1xf32>
    %345 = arith.addf %341, %344 : vector<16x1xf32>
    %346 = math.rsqrt %345 : vector<16x1xf32>
    %347 = vector.broadcast %346 : vector<16x1xf32> to vector<16x24xf32>
    %348 = arith.mulf %343, %347 : vector<16x24xf32>
    %349 = vector.broadcast %200 : vector<1x24xf32> to vector<16x24xf32>
    %350 = arith.mulf %348, %349 : vector<16x24xf32>
    %351 = vector.broadcast %201 : vector<1x24xf32> to vector<16x24xf32>
    %352 = arith.addf %350, %351 : vector<16x24xf32>
    %c2 = arith.constant 2 : index
    %c0_167 = arith.constant 0 : index
    %c0_168 = arith.constant 0 : index
    %353 = vector.load %arg10[%c2, %c0_167, %c0_168] : memref<4x8x24xf32, #tpu.memory_space<vmem>>, vector<1x8x24xf32>
    %354 = vector.shape_cast %353 : vector<1x8x24xf32> to vector<8x24xf32>
    %355 = vector.extract_strided_slice %354 {offsets = [0, 0], sizes = [1, 24], strides = [1, 1]} : vector<8x24xf32> to vector<1x24xf32>
    %356 = vector.extract_strided_slice %354 {offsets = [1, 0], sizes = [1, 24], strides = [1, 1]} : vector<8x24xf32> to vector<1x24xf32>
    %357 = vector.extract_strided_slice %354 {offsets = [2, 0], sizes = [1, 24], strides = [1, 1]} : vector<8x24xf32> to vector<1x24xf32>
    %358 = vector.extract_strided_slice %354 {offsets = [3, 0], sizes = [1, 24], strides = [1, 1]} : vector<8x24xf32> to vector<1x24xf32>
    %359 = vector.extract_strided_slice %354 {offsets = [4, 0], sizes = [1, 24], strides = [1, 1]} : vector<8x24xf32> to vector<1x24xf32>
    %360 = vector.extract_strided_slice %354 {offsets = [5, 0], sizes = [1, 24], strides = [1, 1]} : vector<8x24xf32> to vector<1x24xf32>
    %c2_169 = arith.constant 2 : index
    %c0_170 = arith.constant 0 : index
    %c0_171 = arith.constant 0 : index
    %361 = vector.load %arg7[%c2_169, %c0_170, %c0_171] : memref<4x24x384xf32, #tpu.memory_space<vmem>>, vector<1x24x384xf32>
    %362 = vector.shape_cast %361 : vector<1x24x384xf32> to vector<24x384xf32>
    %cst_172 = arith.constant dense<0.000000e+00> : vector<16x384xf32>
    %363 = tpu.matmul %352, %362, %cst_172 {dimension_numbers = #tpu.dot_dimension_numbers<[1], [0], [0], [1], [0, 0, 1, 1], [], []>} : vector<16x24xf32>, vector<24x384xf32>, vector<16x384xf32> -> vector<16x384xf32>
    %c2_173 = arith.constant 2 : index
    %c0_174 = arith.constant 0 : index
    %c0_175 = arith.constant 0 : index
    %364 = vector.load %arg8[%c2_173, %c0_174, %c0_175] : memref<4x1x384xf32, #tpu.memory_space<vmem>>, vector<1x1x384xf32>
    %365 = vector.shape_cast %364 : vector<1x1x384xf32> to vector<1x384xf32>
    %366 = vector.broadcast %365 : vector<1x384xf32> to vector<16x384xf32>
    %367 = arith.addf %363, %366 : vector<16x384xf32>
    %368 = vector.extract_strided_slice %367 {offsets = [0, 0], sizes = [16, 24], strides = [1, 1]} : vector<16x384xf32> to vector<16x24xf32>
    %369 = vector.shape_cast %368 : vector<16x24xf32> to vector<2x8x24xf32>
    %370 = vector.extract_strided_slice %367 {offsets = [0, 128], sizes = [16, 24], strides = [1, 1]} : vector<16x384xf32> to vector<16x24xf32>
    %371 = vector.shape_cast %370 : vector<16x24xf32> to vector<2x8x24xf32>
    %372 = vector.extract_strided_slice %367 {offsets = [0, 256], sizes = [16, 24], strides = [1, 1]} : vector<16x384xf32> to vector<16x24xf32>
    %373 = vector.shape_cast %372 : vector<16x24xf32> to vector<2x8x24xf32>
    %374 = vector.shape_cast %369 : vector<2x8x24xf32> to vector<2x1x8x24xf32>
    %375 = vector.shape_cast %371 : vector<2x8x24xf32> to vector<1x2x8x24xf32>
    %376 = vector.broadcast %374 : vector<2x1x8x24xf32> to vector<2x2x8x24xf32>
    %377 = vector.broadcast %375 : vector<1x2x8x24xf32> to vector<2x2x8x24xf32>
    %378 = arith.mulf %376, %377 : vector<2x2x8x24xf32>
    %379 = vector.shape_cast %378 : vector<2x2x8x24xf32> to vector<32x24xf32>
    %cst_176 = arith.constant dense<0.000000e+00> : vector<32x6xf32>
    %380 = tpu.matmul %379, %35, %cst_176 {dimension_numbers = #tpu.dot_dimension_numbers<[1], [0], [0], [1], [0, 0, 1, 1], [], []>} : vector<32x24xf32>, vector<24x6xf32>, vector<32x6xf32> -> vector<32x6xf32>
    %381 = vector.shape_cast %380 : vector<32x6xf32> to vector<2x2x8x6xf32>
    %cst_177 = arith.constant dense<0xFF800000> : vector<2x8x6xf32>
    %382 = vector.multi_reduction <maximumf>, %381, %cst_177 [1] : vector<2x2x8x6xf32> to vector<2x8x6xf32>
    %383 = vector.shape_cast %382 : vector<2x8x6xf32> to vector<2x1x8x6xf32>
    %384 = vector.broadcast %383 : vector<2x1x8x6xf32> to vector<2x2x8x6xf32>
    %385 = arith.subf %381, %384 : vector<2x2x8x6xf32>
    %386 = math.exp %385 : vector<2x2x8x6xf32>
    %cst_178 = arith.constant dense<0.000000e+00> : vector<2x8x6xf32>
    %387 = vector.multi_reduction <add>, %386, %cst_178 [1] : vector<2x2x8x6xf32> to vector<2x8x6xf32>
    %388 = vector.shape_cast %387 : vector<2x8x6xf32> to vector<2x1x8x6xf32>
    %389 = tpu.reciprocal %388 {approx = true} : vector<2x1x8x6xf32> -> vector<2x1x8x6xf32>
    %390 = vector.broadcast %389 : vector<2x1x8x6xf32> to vector<2x2x8x6xf32>
    %391 = arith.mulf %386, %390 : vector<2x2x8x6xf32>
    %392 = vector.shape_cast %391 : vector<2x2x8x6xf32> to vector<32x6xf32>
    %cst_179 = arith.constant dense<0.000000e+00> : vector<32x24xf32>
    %393 = tpu.matmul %392, %36, %cst_179 {dimension_numbers = #tpu.dot_dimension_numbers<[1], [0], [0], [1], [0, 0, 1, 1], [], []>} : vector<32x6xf32>, vector<6x24xf32>, vector<32x24xf32> -> vector<32x24xf32>
    %394 = vector.shape_cast %393 : vector<32x24xf32> to vector<2x2x8x24xf32>
    %395 = vector.shape_cast %373 : vector<2x8x24xf32> to vector<1x2x8x24xf32>
    %396 = vector.broadcast %395 : vector<1x2x8x24xf32> to vector<2x2x8x24xf32>
    %397 = arith.mulf %394, %396 : vector<2x2x8x24xf32>
    %cst_180 = arith.constant dense<0.000000e+00> : vector<2x8x24xf32>
    %398 = vector.multi_reduction <add>, %397, %cst_180 [1] : vector<2x2x8x24xf32> to vector<2x8x24xf32>
    %399 = vector.shape_cast %398 : vector<2x8x24xf32> to vector<16x24xf32>
    %c2_181 = arith.constant 2 : index
    %c0_182 = arith.constant 0 : index
    %c0_183 = arith.constant 0 : index
    %400 = vector.load %arg9[%c2_181, %c0_182, %c0_183] : memref<4x24x24xf32, #tpu.memory_space<vmem>>, vector<1x24x24xf32>
    %401 = vector.shape_cast %400 : vector<1x24x24xf32> to vector<24x24xf32>
    %cst_184 = arith.constant dense<0.000000e+00> : vector<16x24xf32>
    %402 = tpu.matmul %399, %401, %cst_184 {dimension_numbers = #tpu.dot_dimension_numbers<[1], [0], [0], [1], [0, 0, 1, 1], [], []>} : vector<16x24xf32>, vector<24x24xf32>, vector<16x24xf32> -> vector<16x24xf32>
    %403 = vector.broadcast %355 : vector<1x24xf32> to vector<16x24xf32>
    %404 = arith.addf %402, %403 : vector<16x24xf32>
    %405 = arith.addf %352, %404 : vector<16x24xf32>
    %cst_185 = arith.constant dense<0.000000e+00> : vector<16xf32>
    %406 = vector.multi_reduction <add>, %405, %cst_185 [1] : vector<16x24xf32> to vector<16xf32>
    %407 = vector.shape_cast %406 : vector<16xf32> to vector<16x1xf32>
    %cst_186 = arith.constant 2.400000e+01 : f32
    %408 = vector.broadcast %cst_186 : f32 to vector<16x1xf32>
    %409 = arith.divf %407, %408 : vector<16x1xf32>
    %410 = vector.broadcast %409 : vector<16x1xf32> to vector<16x24xf32>
    %411 = arith.subf %405, %410 : vector<16x24xf32>
    %412 = arith.mulf %411, %411 : vector<16x24xf32>
    %cst_187 = arith.constant dense<0.000000e+00> : vector<16xf32>
    %413 = vector.multi_reduction <add>, %412, %cst_187 [1] : vector<16x24xf32> to vector<16xf32>
    %414 = vector.shape_cast %413 : vector<16xf32> to vector<16x1xf32>
    %cst_188 = arith.constant 2.400000e+01 : f32
    %415 = vector.broadcast %cst_188 : f32 to vector<16x1xf32>
    %416 = arith.divf %414, %415 : vector<16x1xf32>
    %417 = vector.broadcast %409 : vector<16x1xf32> to vector<16x24xf32>
    %418 = arith.subf %405, %417 : vector<16x24xf32>
    %cst_189 = arith.constant 9.99999974E-6 : f32
    %419 = vector.broadcast %cst_189 : f32 to vector<16x1xf32>
    %420 = arith.addf %416, %419 : vector<16x1xf32>
    %421 = math.rsqrt %420 : vector<16x1xf32>
    %422 = vector.broadcast %421 : vector<16x1xf32> to vector<16x24xf32>
    %423 = arith.mulf %418, %422 : vector<16x24xf32>
    %424 = vector.broadcast %356 : vector<1x24xf32> to vector<16x24xf32>
    %425 = arith.mulf %423, %424 : vector<16x24xf32>
    %426 = vector.broadcast %357 : vector<1x24xf32> to vector<16x24xf32>
    %427 = arith.addf %425, %426 : vector<16x24xf32>
    %428 = arith.truncf %427 : vector<16x24xf32> to vector<16x24xbf16>
    %cst_190 = arith.constant 0.000000e+00 : f32
    %429 = vector.broadcast %cst_190 : f32 to vector<16x24xf32>
    %c2_191 = arith.constant 2 : index
    %c0_192 = arith.constant 0 : index
    %c0_193 = arith.constant 0 : index
    %430 = vector.load %arg11[%c2_191, %c0_192, %c0_193] : memref<4x24x2048xbf16, #tpu.memory_space<vmem>>, vector<1x24x512xbf16>
    %431 = vector.shape_cast %430 : vector<1x24x512xbf16> to vector<24x512xbf16>
    %c2_194 = arith.constant 2 : index
    %c0_195 = arith.constant 0 : index
    %c0_196 = arith.constant 0 : index
    %432 = vector.load %arg12[%c2_194, %c0_195, %c0_196] : memref<4x1x2048xf32, #tpu.memory_space<vmem>>, vector<1x1x512xf32>
    %433 = vector.shape_cast %432 : vector<1x1x512xf32> to vector<1x512xf32>
    %cst_197 = arith.constant dense<0.000000e+00> : vector<16x512xf32>
    %434 = tpu.matmul %428, %431, %cst_197 {dimension_numbers = #tpu.dot_dimension_numbers<[1], [0], [0], [1], [0, 0, 1, 1], [], []>} : vector<16x24xbf16>, vector<24x512xbf16>, vector<16x512xf32> -> vector<16x512xf32>
    %435 = vector.broadcast %433 : vector<1x512xf32> to vector<16x512xf32>
    %436 = arith.addf %434, %435 : vector<16x512xf32>
    %cst_198 = arith.constant 0.000000e+00 : f32
    %437 = vector.broadcast %cst_198 : f32 to vector<16x512xf32>
    %438 = arith.maximumf %436, %437 : vector<16x512xf32>
    %439 = arith.truncf %438 : vector<16x512xf32> to vector<16x512xbf16>
    %c2_199 = arith.constant 2 : index
    %c0_200 = arith.constant 0 : index
    %c0_201 = arith.constant 0 : index
    %440 = vector.load %arg13[%c2_199, %c0_200, %c0_201] : memref<4x2048x24xbf16, #tpu.memory_space<vmem>>, vector<1x512x24xbf16>
    %441 = vector.shape_cast %440 : vector<1x512x24xbf16> to vector<512x24xbf16>
    %cst_202 = arith.constant dense<0.000000e+00> : vector<16x24xf32>
    %442 = tpu.matmul %439, %441, %cst_202 {dimension_numbers = #tpu.dot_dimension_numbers<[1], [0], [0], [1], [0, 0, 1, 1], [], []>} : vector<16x512xbf16>, vector<512x24xbf16>, vector<16x24xf32> -> vector<16x24xf32>
    %443 = arith.addf %429, %442 : vector<16x24xf32>
    %c2_203 = arith.constant 2 : index
    %c0_204 = arith.constant 0 : index
    %c512_205 = arith.constant 512 : index
    %444 = vector.load %arg11[%c2_203, %c0_204, %c512_205] : memref<4x24x2048xbf16, #tpu.memory_space<vmem>>, vector<1x24x512xbf16>
    %445 = vector.shape_cast %444 : vector<1x24x512xbf16> to vector<24x512xbf16>
    %c2_206 = arith.constant 2 : index
    %c0_207 = arith.constant 0 : index
    %c512_208 = arith.constant 512 : index
    %446 = vector.load %arg12[%c2_206, %c0_207, %c512_208] : memref<4x1x2048xf32, #tpu.memory_space<vmem>>, vector<1x1x512xf32>
    %447 = vector.shape_cast %446 : vector<1x1x512xf32> to vector<1x512xf32>
    %cst_209 = arith.constant dense<0.000000e+00> : vector<16x512xf32>
    %448 = tpu.matmul %428, %445, %cst_209 {dimension_numbers = #tpu.dot_dimension_numbers<[1], [0], [0], [1], [0, 0, 1, 1], [], []>} : vector<16x24xbf16>, vector<24x512xbf16>, vector<16x512xf32> -> vector<16x512xf32>
    %449 = vector.broadcast %447 : vector<1x512xf32> to vector<16x512xf32>
    %450 = arith.addf %448, %449 : vector<16x512xf32>
    %cst_210 = arith.constant 0.000000e+00 : f32
    %451 = vector.broadcast %cst_210 : f32 to vector<16x512xf32>
    %452 = arith.maximumf %450, %451 : vector<16x512xf32>
    %453 = arith.truncf %452 : vector<16x512xf32> to vector<16x512xbf16>
    %c2_211 = arith.constant 2 : index
    %c512_212 = arith.constant 512 : index
    %c0_213 = arith.constant 0 : index
    %454 = vector.load %arg13[%c2_211, %c512_212, %c0_213] : memref<4x2048x24xbf16, #tpu.memory_space<vmem>>, vector<1x512x24xbf16>
    %455 = vector.shape_cast %454 : vector<1x512x24xbf16> to vector<512x24xbf16>
    %cst_214 = arith.constant dense<0.000000e+00> : vector<16x24xf32>
    %456 = tpu.matmul %453, %455, %cst_214 {dimension_numbers = #tpu.dot_dimension_numbers<[1], [0], [0], [1], [0, 0, 1, 1], [], []>} : vector<16x512xbf16>, vector<512x24xbf16>, vector<16x24xf32> -> vector<16x24xf32>
    %457 = arith.addf %443, %456 : vector<16x24xf32>
    %c2_215 = arith.constant 2 : index
    %c0_216 = arith.constant 0 : index
    %c1024_217 = arith.constant 1024 : index
    %458 = vector.load %arg11[%c2_215, %c0_216, %c1024_217] : memref<4x24x2048xbf16, #tpu.memory_space<vmem>>, vector<1x24x512xbf16>
    %459 = vector.shape_cast %458 : vector<1x24x512xbf16> to vector<24x512xbf16>
    %c2_218 = arith.constant 2 : index
    %c0_219 = arith.constant 0 : index
    %c1024_220 = arith.constant 1024 : index
    %460 = vector.load %arg12[%c2_218, %c0_219, %c1024_220] : memref<4x1x2048xf32, #tpu.memory_space<vmem>>, vector<1x1x512xf32>
    %461 = vector.shape_cast %460 : vector<1x1x512xf32> to vector<1x512xf32>
    %cst_221 = arith.constant dense<0.000000e+00> : vector<16x512xf32>
    %462 = tpu.matmul %428, %459, %cst_221 {dimension_numbers = #tpu.dot_dimension_numbers<[1], [0], [0], [1], [0, 0, 1, 1], [], []>} : vector<16x24xbf16>, vector<24x512xbf16>, vector<16x512xf32> -> vector<16x512xf32>
    %463 = vector.broadcast %461 : vector<1x512xf32> to vector<16x512xf32>
    %464 = arith.addf %462, %463 : vector<16x512xf32>
    %cst_222 = arith.constant 0.000000e+00 : f32
    %465 = vector.broadcast %cst_222 : f32 to vector<16x512xf32>
    %466 = arith.maximumf %464, %465 : vector<16x512xf32>
    %467 = arith.truncf %466 : vector<16x512xf32> to vector<16x512xbf16>
    %c2_223 = arith.constant 2 : index
    %c1024_224 = arith.constant 1024 : index
    %c0_225 = arith.constant 0 : index
    %468 = vector.load %arg13[%c2_223, %c1024_224, %c0_225] : memref<4x2048x24xbf16, #tpu.memory_space<vmem>>, vector<1x512x24xbf16>
    %469 = vector.shape_cast %468 : vector<1x512x24xbf16> to vector<512x24xbf16>
    %cst_226 = arith.constant dense<0.000000e+00> : vector<16x24xf32>
    %470 = tpu.matmul %467, %469, %cst_226 {dimension_numbers = #tpu.dot_dimension_numbers<[1], [0], [0], [1], [0, 0, 1, 1], [], []>} : vector<16x512xbf16>, vector<512x24xbf16>, vector<16x24xf32> -> vector<16x24xf32>
    %471 = arith.addf %457, %470 : vector<16x24xf32>
    %c2_227 = arith.constant 2 : index
    %c0_228 = arith.constant 0 : index
    %c1536_229 = arith.constant 1536 : index
    %472 = vector.load %arg11[%c2_227, %c0_228, %c1536_229] : memref<4x24x2048xbf16, #tpu.memory_space<vmem>>, vector<1x24x512xbf16>
    %473 = vector.shape_cast %472 : vector<1x24x512xbf16> to vector<24x512xbf16>
    %c2_230 = arith.constant 2 : index
    %c0_231 = arith.constant 0 : index
    %c1536_232 = arith.constant 1536 : index
    %474 = vector.load %arg12[%c2_230, %c0_231, %c1536_232] : memref<4x1x2048xf32, #tpu.memory_space<vmem>>, vector<1x1x512xf32>
    %475 = vector.shape_cast %474 : vector<1x1x512xf32> to vector<1x512xf32>
    %cst_233 = arith.constant dense<0.000000e+00> : vector<16x512xf32>
    %476 = tpu.matmul %428, %473, %cst_233 {dimension_numbers = #tpu.dot_dimension_numbers<[1], [0], [0], [1], [0, 0, 1, 1], [], []>} : vector<16x24xbf16>, vector<24x512xbf16>, vector<16x512xf32> -> vector<16x512xf32>
    %477 = vector.broadcast %475 : vector<1x512xf32> to vector<16x512xf32>
    %478 = arith.addf %476, %477 : vector<16x512xf32>
    %cst_234 = arith.constant 0.000000e+00 : f32
    %479 = vector.broadcast %cst_234 : f32 to vector<16x512xf32>
    %480 = arith.maximumf %478, %479 : vector<16x512xf32>
    %481 = arith.truncf %480 : vector<16x512xf32> to vector<16x512xbf16>
    %c2_235 = arith.constant 2 : index
    %c1536_236 = arith.constant 1536 : index
    %c0_237 = arith.constant 0 : index
    %482 = vector.load %arg13[%c2_235, %c1536_236, %c0_237] : memref<4x2048x24xbf16, #tpu.memory_space<vmem>>, vector<1x512x24xbf16>
    %483 = vector.shape_cast %482 : vector<1x512x24xbf16> to vector<512x24xbf16>
    %cst_238 = arith.constant dense<0.000000e+00> : vector<16x24xf32>
    %484 = tpu.matmul %481, %483, %cst_238 {dimension_numbers = #tpu.dot_dimension_numbers<[1], [0], [0], [1], [0, 0, 1, 1], [], []>} : vector<16x512xbf16>, vector<512x24xbf16>, vector<16x24xf32> -> vector<16x24xf32>
    %485 = arith.addf %471, %484 : vector<16x24xf32>
    %486 = vector.broadcast %360 : vector<1x24xf32> to vector<16x24xf32>
    %487 = arith.addf %485, %486 : vector<16x24xf32>
    %488 = arith.addf %427, %487 : vector<16x24xf32>
    %cst_239 = arith.constant dense<0.000000e+00> : vector<16xf32>
    %489 = vector.multi_reduction <add>, %488, %cst_239 [1] : vector<16x24xf32> to vector<16xf32>
    %490 = vector.shape_cast %489 : vector<16xf32> to vector<16x1xf32>
    %cst_240 = arith.constant 2.400000e+01 : f32
    %491 = vector.broadcast %cst_240 : f32 to vector<16x1xf32>
    %492 = arith.divf %490, %491 : vector<16x1xf32>
    %493 = vector.broadcast %492 : vector<16x1xf32> to vector<16x24xf32>
    %494 = arith.subf %488, %493 : vector<16x24xf32>
    %495 = arith.mulf %494, %494 : vector<16x24xf32>
    %cst_241 = arith.constant dense<0.000000e+00> : vector<16xf32>
    %496 = vector.multi_reduction <add>, %495, %cst_241 [1] : vector<16x24xf32> to vector<16xf32>
    %497 = vector.shape_cast %496 : vector<16xf32> to vector<16x1xf32>
    %cst_242 = arith.constant 2.400000e+01 : f32
    %498 = vector.broadcast %cst_242 : f32 to vector<16x1xf32>
    %499 = arith.divf %497, %498 : vector<16x1xf32>
    %500 = vector.broadcast %492 : vector<16x1xf32> to vector<16x24xf32>
    %501 = arith.subf %488, %500 : vector<16x24xf32>
    %cst_243 = arith.constant 9.99999974E-6 : f32
    %502 = vector.broadcast %cst_243 : f32 to vector<16x1xf32>
    %503 = arith.addf %499, %502 : vector<16x1xf32>
    %504 = math.rsqrt %503 : vector<16x1xf32>
    %505 = vector.broadcast %504 : vector<16x1xf32> to vector<16x24xf32>
    %506 = arith.mulf %501, %505 : vector<16x24xf32>
    %507 = vector.broadcast %358 : vector<1x24xf32> to vector<16x24xf32>
    %508 = arith.mulf %506, %507 : vector<16x24xf32>
    %509 = vector.broadcast %359 : vector<1x24xf32> to vector<16x24xf32>
    %510 = arith.addf %508, %509 : vector<16x24xf32>
    %c3 = arith.constant 3 : index
    %c0_244 = arith.constant 0 : index
    %c0_245 = arith.constant 0 : index
    %511 = vector.load %arg10[%c3, %c0_244, %c0_245] : memref<4x8x24xf32, #tpu.memory_space<vmem>>, vector<1x8x24xf32>
    %512 = vector.shape_cast %511 : vector<1x8x24xf32> to vector<8x24xf32>
    %513 = vector.extract_strided_slice %512 {offsets = [0, 0], sizes = [1, 24], strides = [1, 1]} : vector<8x24xf32> to vector<1x24xf32>
    %514 = vector.extract_strided_slice %512 {offsets = [1, 0], sizes = [1, 24], strides = [1, 1]} : vector<8x24xf32> to vector<1x24xf32>
    %515 = vector.extract_strided_slice %512 {offsets = [2, 0], sizes = [1, 24], strides = [1, 1]} : vector<8x24xf32> to vector<1x24xf32>
    %516 = vector.extract_strided_slice %512 {offsets = [3, 0], sizes = [1, 24], strides = [1, 1]} : vector<8x24xf32> to vector<1x24xf32>
    %517 = vector.extract_strided_slice %512 {offsets = [4, 0], sizes = [1, 24], strides = [1, 1]} : vector<8x24xf32> to vector<1x24xf32>
    %518 = vector.extract_strided_slice %512 {offsets = [5, 0], sizes = [1, 24], strides = [1, 1]} : vector<8x24xf32> to vector<1x24xf32>
    %c3_246 = arith.constant 3 : index
    %c0_247 = arith.constant 0 : index
    %c0_248 = arith.constant 0 : index
    %519 = vector.load %arg7[%c3_246, %c0_247, %c0_248] : memref<4x24x384xf32, #tpu.memory_space<vmem>>, vector<1x24x384xf32>
    %520 = vector.shape_cast %519 : vector<1x24x384xf32> to vector<24x384xf32>
    %cst_249 = arith.constant dense<0.000000e+00> : vector<16x384xf32>
    %521 = tpu.matmul %510, %520, %cst_249 {dimension_numbers = #tpu.dot_dimension_numbers<[1], [0], [0], [1], [0, 0, 1, 1], [], []>} : vector<16x24xf32>, vector<24x384xf32>, vector<16x384xf32> -> vector<16x384xf32>
    %c3_250 = arith.constant 3 : index
    %c0_251 = arith.constant 0 : index
    %c0_252 = arith.constant 0 : index
    %522 = vector.load %arg8[%c3_250, %c0_251, %c0_252] : memref<4x1x384xf32, #tpu.memory_space<vmem>>, vector<1x1x384xf32>
    %523 = vector.shape_cast %522 : vector<1x1x384xf32> to vector<1x384xf32>
    %524 = vector.broadcast %523 : vector<1x384xf32> to vector<16x384xf32>
    %525 = arith.addf %521, %524 : vector<16x384xf32>
    %526 = vector.extract_strided_slice %525 {offsets = [0, 0], sizes = [16, 24], strides = [1, 1]} : vector<16x384xf32> to vector<16x24xf32>
    %527 = vector.shape_cast %526 : vector<16x24xf32> to vector<2x8x24xf32>
    %528 = vector.extract_strided_slice %525 {offsets = [0, 128], sizes = [16, 24], strides = [1, 1]} : vector<16x384xf32> to vector<16x24xf32>
    %529 = vector.shape_cast %528 : vector<16x24xf32> to vector<2x8x24xf32>
    %530 = vector.extract_strided_slice %525 {offsets = [0, 256], sizes = [16, 24], strides = [1, 1]} : vector<16x384xf32> to vector<16x24xf32>
    %531 = vector.shape_cast %530 : vector<16x24xf32> to vector<2x8x24xf32>
    %532 = vector.shape_cast %527 : vector<2x8x24xf32> to vector<2x1x8x24xf32>
    %533 = vector.shape_cast %529 : vector<2x8x24xf32> to vector<1x2x8x24xf32>
    %534 = vector.broadcast %532 : vector<2x1x8x24xf32> to vector<2x2x8x24xf32>
    %535 = vector.broadcast %533 : vector<1x2x8x24xf32> to vector<2x2x8x24xf32>
    %536 = arith.mulf %534, %535 : vector<2x2x8x24xf32>
    %537 = vector.shape_cast %536 : vector<2x2x8x24xf32> to vector<32x24xf32>
    %cst_253 = arith.constant dense<0.000000e+00> : vector<32x6xf32>
    %538 = tpu.matmul %537, %35, %cst_253 {dimension_numbers = #tpu.dot_dimension_numbers<[1], [0], [0], [1], [0, 0, 1, 1], [], []>} : vector<32x24xf32>, vector<24x6xf32>, vector<32x6xf32> -> vector<32x6xf32>
    %539 = vector.shape_cast %538 : vector<32x6xf32> to vector<2x2x8x6xf32>
    %cst_254 = arith.constant dense<0xFF800000> : vector<2x8x6xf32>
    %540 = vector.multi_reduction <maximumf>, %539, %cst_254 [1] : vector<2x2x8x6xf32> to vector<2x8x6xf32>
    %541 = vector.shape_cast %540 : vector<2x8x6xf32> to vector<2x1x8x6xf32>
    %542 = vector.broadcast %541 : vector<2x1x8x6xf32> to vector<2x2x8x6xf32>
    %543 = arith.subf %539, %542 : vector<2x2x8x6xf32>
    %544 = math.exp %543 : vector<2x2x8x6xf32>
    %cst_255 = arith.constant dense<0.000000e+00> : vector<2x8x6xf32>
    %545 = vector.multi_reduction <add>, %544, %cst_255 [1] : vector<2x2x8x6xf32> to vector<2x8x6xf32>
    %546 = vector.shape_cast %545 : vector<2x8x6xf32> to vector<2x1x8x6xf32>
    %547 = tpu.reciprocal %546 {approx = true} : vector<2x1x8x6xf32> -> vector<2x1x8x6xf32>
    %548 = vector.broadcast %547 : vector<2x1x8x6xf32> to vector<2x2x8x6xf32>
    %549 = arith.mulf %544, %548 : vector<2x2x8x6xf32>
    %550 = vector.shape_cast %549 : vector<2x2x8x6xf32> to vector<32x6xf32>
    %cst_256 = arith.constant dense<0.000000e+00> : vector<32x24xf32>
    %551 = tpu.matmul %550, %36, %cst_256 {dimension_numbers = #tpu.dot_dimension_numbers<[1], [0], [0], [1], [0, 0, 1, 1], [], []>} : vector<32x6xf32>, vector<6x24xf32>, vector<32x24xf32> -> vector<32x24xf32>
    %552 = vector.shape_cast %551 : vector<32x24xf32> to vector<2x2x8x24xf32>
    %553 = vector.shape_cast %531 : vector<2x8x24xf32> to vector<1x2x8x24xf32>
    %554 = vector.broadcast %553 : vector<1x2x8x24xf32> to vector<2x2x8x24xf32>
    %555 = arith.mulf %552, %554 : vector<2x2x8x24xf32>
    %cst_257 = arith.constant dense<0.000000e+00> : vector<2x8x24xf32>
    %556 = vector.multi_reduction <add>, %555, %cst_257 [1] : vector<2x2x8x24xf32> to vector<2x8x24xf32>
    %557 = vector.shape_cast %556 : vector<2x8x24xf32> to vector<16x24xf32>
    %c3_258 = arith.constant 3 : index
    %c0_259 = arith.constant 0 : index
    %c0_260 = arith.constant 0 : index
    %558 = vector.load %arg9[%c3_258, %c0_259, %c0_260] : memref<4x24x24xf32, #tpu.memory_space<vmem>>, vector<1x24x24xf32>
    %559 = vector.shape_cast %558 : vector<1x24x24xf32> to vector<24x24xf32>
    %cst_261 = arith.constant dense<0.000000e+00> : vector<16x24xf32>
    %560 = tpu.matmul %557, %559, %cst_261 {dimension_numbers = #tpu.dot_dimension_numbers<[1], [0], [0], [1], [0, 0, 1, 1], [], []>} : vector<16x24xf32>, vector<24x24xf32>, vector<16x24xf32> -> vector<16x24xf32>
    %561 = vector.broadcast %513 : vector<1x24xf32> to vector<16x24xf32>
    %562 = arith.addf %560, %561 : vector<16x24xf32>
    %563 = arith.addf %510, %562 : vector<16x24xf32>
    %cst_262 = arith.constant dense<0.000000e+00> : vector<16xf32>
    %564 = vector.multi_reduction <add>, %563, %cst_262 [1] : vector<16x24xf32> to vector<16xf32>
    %565 = vector.shape_cast %564 : vector<16xf32> to vector<16x1xf32>
    %cst_263 = arith.constant 2.400000e+01 : f32
    %566 = vector.broadcast %cst_263 : f32 to vector<16x1xf32>
    %567 = arith.divf %565, %566 : vector<16x1xf32>
    %568 = vector.broadcast %567 : vector<16x1xf32> to vector<16x24xf32>
    %569 = arith.subf %563, %568 : vector<16x24xf32>
    %570 = arith.mulf %569, %569 : vector<16x24xf32>
    %cst_264 = arith.constant dense<0.000000e+00> : vector<16xf32>
    %571 = vector.multi_reduction <add>, %570, %cst_264 [1] : vector<16x24xf32> to vector<16xf32>
    %572 = vector.shape_cast %571 : vector<16xf32> to vector<16x1xf32>
    %cst_265 = arith.constant 2.400000e+01 : f32
    %573 = vector.broadcast %cst_265 : f32 to vector<16x1xf32>
    %574 = arith.divf %572, %573 : vector<16x1xf32>
    %575 = vector.broadcast %567 : vector<16x1xf32> to vector<16x24xf32>
    %576 = arith.subf %563, %575 : vector<16x24xf32>
    %cst_266 = arith.constant 9.99999974E-6 : f32
    %577 = vector.broadcast %cst_266 : f32 to vector<16x1xf32>
    %578 = arith.addf %574, %577 : vector<16x1xf32>
    %579 = math.rsqrt %578 : vector<16x1xf32>
    %580 = vector.broadcast %579 : vector<16x1xf32> to vector<16x24xf32>
    %581 = arith.mulf %576, %580 : vector<16x24xf32>
    %582 = vector.broadcast %514 : vector<1x24xf32> to vector<16x24xf32>
    %583 = arith.mulf %581, %582 : vector<16x24xf32>
    %584 = vector.broadcast %515 : vector<1x24xf32> to vector<16x24xf32>
    %585 = arith.addf %583, %584 : vector<16x24xf32>
    %586 = arith.truncf %585 : vector<16x24xf32> to vector<16x24xbf16>
    %cst_267 = arith.constant 0.000000e+00 : f32
    %587 = vector.broadcast %cst_267 : f32 to vector<16x24xf32>
    %c3_268 = arith.constant 3 : index
    %c0_269 = arith.constant 0 : index
    %c0_270 = arith.constant 0 : index
    %588 = vector.load %arg11[%c3_268, %c0_269, %c0_270] : memref<4x24x2048xbf16, #tpu.memory_space<vmem>>, vector<1x24x512xbf16>
    %589 = vector.shape_cast %588 : vector<1x24x512xbf16> to vector<24x512xbf16>
    %c3_271 = arith.constant 3 : index
    %c0_272 = arith.constant 0 : index
    %c0_273 = arith.constant 0 : index
    %590 = vector.load %arg12[%c3_271, %c0_272, %c0_273] : memref<4x1x2048xf32, #tpu.memory_space<vmem>>, vector<1x1x512xf32>
    %591 = vector.shape_cast %590 : vector<1x1x512xf32> to vector<1x512xf32>
    %cst_274 = arith.constant dense<0.000000e+00> : vector<16x512xf32>
    %592 = tpu.matmul %586, %589, %cst_274 {dimension_numbers = #tpu.dot_dimension_numbers<[1], [0], [0], [1], [0, 0, 1, 1], [], []>} : vector<16x24xbf16>, vector<24x512xbf16>, vector<16x512xf32> -> vector<16x512xf32>
    %593 = vector.broadcast %591 : vector<1x512xf32> to vector<16x512xf32>
    %594 = arith.addf %592, %593 : vector<16x512xf32>
    %cst_275 = arith.constant 0.000000e+00 : f32
    %595 = vector.broadcast %cst_275 : f32 to vector<16x512xf32>
    %596 = arith.maximumf %594, %595 : vector<16x512xf32>
    %597 = arith.truncf %596 : vector<16x512xf32> to vector<16x512xbf16>
    %c3_276 = arith.constant 3 : index
    %c0_277 = arith.constant 0 : index
    %c0_278 = arith.constant 0 : index
    %598 = vector.load %arg13[%c3_276, %c0_277, %c0_278] : memref<4x2048x24xbf16, #tpu.memory_space<vmem>>, vector<1x512x24xbf16>
    %599 = vector.shape_cast %598 : vector<1x512x24xbf16> to vector<512x24xbf16>
    %cst_279 = arith.constant dense<0.000000e+00> : vector<16x24xf32>
    %600 = tpu.matmul %597, %599, %cst_279 {dimension_numbers = #tpu.dot_dimension_numbers<[1], [0], [0], [1], [0, 0, 1, 1], [], []>} : vector<16x512xbf16>, vector<512x24xbf16>, vector<16x24xf32> -> vector<16x24xf32>
    %601 = arith.addf %587, %600 : vector<16x24xf32>
    %c3_280 = arith.constant 3 : index
    %c0_281 = arith.constant 0 : index
    %c512_282 = arith.constant 512 : index
    %602 = vector.load %arg11[%c3_280, %c0_281, %c512_282] : memref<4x24x2048xbf16, #tpu.memory_space<vmem>>, vector<1x24x512xbf16>
    %603 = vector.shape_cast %602 : vector<1x24x512xbf16> to vector<24x512xbf16>
    %c3_283 = arith.constant 3 : index
    %c0_284 = arith.constant 0 : index
    %c512_285 = arith.constant 512 : index
    %604 = vector.load %arg12[%c3_283, %c0_284, %c512_285] : memref<4x1x2048xf32, #tpu.memory_space<vmem>>, vector<1x1x512xf32>
    %605 = vector.shape_cast %604 : vector<1x1x512xf32> to vector<1x512xf32>
    %cst_286 = arith.constant dense<0.000000e+00> : vector<16x512xf32>
    %606 = tpu.matmul %586, %603, %cst_286 {dimension_numbers = #tpu.dot_dimension_numbers<[1], [0], [0], [1], [0, 0, 1, 1], [], []>} : vector<16x24xbf16>, vector<24x512xbf16>, vector<16x512xf32> -> vector<16x512xf32>
    %607 = vector.broadcast %605 : vector<1x512xf32> to vector<16x512xf32>
    %608 = arith.addf %606, %607 : vector<16x512xf32>
    %cst_287 = arith.constant 0.000000e+00 : f32
    %609 = vector.broadcast %cst_287 : f32 to vector<16x512xf32>
    %610 = arith.maximumf %608, %609 : vector<16x512xf32>
    %611 = arith.truncf %610 : vector<16x512xf32> to vector<16x512xbf16>
    %c3_288 = arith.constant 3 : index
    %c512_289 = arith.constant 512 : index
    %c0_290 = arith.constant 0 : index
    %612 = vector.load %arg13[%c3_288, %c512_289, %c0_290] : memref<4x2048x24xbf16, #tpu.memory_space<vmem>>, vector<1x512x24xbf16>
    %613 = vector.shape_cast %612 : vector<1x512x24xbf16> to vector<512x24xbf16>
    %cst_291 = arith.constant dense<0.000000e+00> : vector<16x24xf32>
    %614 = tpu.matmul %611, %613, %cst_291 {dimension_numbers = #tpu.dot_dimension_numbers<[1], [0], [0], [1], [0, 0, 1, 1], [], []>} : vector<16x512xbf16>, vector<512x24xbf16>, vector<16x24xf32> -> vector<16x24xf32>
    %615 = arith.addf %601, %614 : vector<16x24xf32>
    %c3_292 = arith.constant 3 : index
    %c0_293 = arith.constant 0 : index
    %c1024_294 = arith.constant 1024 : index
    %616 = vector.load %arg11[%c3_292, %c0_293, %c1024_294] : memref<4x24x2048xbf16, #tpu.memory_space<vmem>>, vector<1x24x512xbf16>
    %617 = vector.shape_cast %616 : vector<1x24x512xbf16> to vector<24x512xbf16>
    %c3_295 = arith.constant 3 : index
    %c0_296 = arith.constant 0 : index
    %c1024_297 = arith.constant 1024 : index
    %618 = vector.load %arg12[%c3_295, %c0_296, %c1024_297] : memref<4x1x2048xf32, #tpu.memory_space<vmem>>, vector<1x1x512xf32>
    %619 = vector.shape_cast %618 : vector<1x1x512xf32> to vector<1x512xf32>
    %cst_298 = arith.constant dense<0.000000e+00> : vector<16x512xf32>
    %620 = tpu.matmul %586, %617, %cst_298 {dimension_numbers = #tpu.dot_dimension_numbers<[1], [0], [0], [1], [0, 0, 1, 1], [], []>} : vector<16x24xbf16>, vector<24x512xbf16>, vector<16x512xf32> -> vector<16x512xf32>
    %621 = vector.broadcast %619 : vector<1x512xf32> to vector<16x512xf32>
    %622 = arith.addf %620, %621 : vector<16x512xf32>
    %cst_299 = arith.constant 0.000000e+00 : f32
    %623 = vector.broadcast %cst_299 : f32 to vector<16x512xf32>
    %624 = arith.maximumf %622, %623 : vector<16x512xf32>
    %625 = arith.truncf %624 : vector<16x512xf32> to vector<16x512xbf16>
    %c3_300 = arith.constant 3 : index
    %c1024_301 = arith.constant 1024 : index
    %c0_302 = arith.constant 0 : index
    %626 = vector.load %arg13[%c3_300, %c1024_301, %c0_302] : memref<4x2048x24xbf16, #tpu.memory_space<vmem>>, vector<1x512x24xbf16>
    %627 = vector.shape_cast %626 : vector<1x512x24xbf16> to vector<512x24xbf16>
    %cst_303 = arith.constant dense<0.000000e+00> : vector<16x24xf32>
    %628 = tpu.matmul %625, %627, %cst_303 {dimension_numbers = #tpu.dot_dimension_numbers<[1], [0], [0], [1], [0, 0, 1, 1], [], []>} : vector<16x512xbf16>, vector<512x24xbf16>, vector<16x24xf32> -> vector<16x24xf32>
    %629 = arith.addf %615, %628 : vector<16x24xf32>
    %c3_304 = arith.constant 3 : index
    %c0_305 = arith.constant 0 : index
    %c1536_306 = arith.constant 1536 : index
    %630 = vector.load %arg11[%c3_304, %c0_305, %c1536_306] : memref<4x24x2048xbf16, #tpu.memory_space<vmem>>, vector<1x24x512xbf16>
    %631 = vector.shape_cast %630 : vector<1x24x512xbf16> to vector<24x512xbf16>
    %c3_307 = arith.constant 3 : index
    %c0_308 = arith.constant 0 : index
    %c1536_309 = arith.constant 1536 : index
    %632 = vector.load %arg12[%c3_307, %c0_308, %c1536_309] : memref<4x1x2048xf32, #tpu.memory_space<vmem>>, vector<1x1x512xf32>
    %633 = vector.shape_cast %632 : vector<1x1x512xf32> to vector<1x512xf32>
    %cst_310 = arith.constant dense<0.000000e+00> : vector<16x512xf32>
    %634 = tpu.matmul %586, %631, %cst_310 {dimension_numbers = #tpu.dot_dimension_numbers<[1], [0], [0], [1], [0, 0, 1, 1], [], []>} : vector<16x24xbf16>, vector<24x512xbf16>, vector<16x512xf32> -> vector<16x512xf32>
    %635 = vector.broadcast %633 : vector<1x512xf32> to vector<16x512xf32>
    %636 = arith.addf %634, %635 : vector<16x512xf32>
    %cst_311 = arith.constant 0.000000e+00 : f32
    %637 = vector.broadcast %cst_311 : f32 to vector<16x512xf32>
    %638 = arith.maximumf %636, %637 : vector<16x512xf32>
    %639 = arith.truncf %638 : vector<16x512xf32> to vector<16x512xbf16>
    %c3_312 = arith.constant 3 : index
    %c1536_313 = arith.constant 1536 : index
    %c0_314 = arith.constant 0 : index
    %640 = vector.load %arg13[%c3_312, %c1536_313, %c0_314] : memref<4x2048x24xbf16, #tpu.memory_space<vmem>>, vector<1x512x24xbf16>
    %641 = vector.shape_cast %640 : vector<1x512x24xbf16> to vector<512x24xbf16>
    %cst_315 = arith.constant dense<0.000000e+00> : vector<16x24xf32>
    %642 = tpu.matmul %639, %641, %cst_315 {dimension_numbers = #tpu.dot_dimension_numbers<[1], [0], [0], [1], [0, 0, 1, 1], [], []>} : vector<16x512xbf16>, vector<512x24xbf16>, vector<16x24xf32> -> vector<16x24xf32>
    %643 = arith.addf %629, %642 : vector<16x24xf32>
    %644 = vector.broadcast %518 : vector<1x24xf32> to vector<16x24xf32>
    %645 = arith.addf %643, %644 : vector<16x24xf32>
    %646 = arith.addf %585, %645 : vector<16x24xf32>
    %cst_316 = arith.constant dense<0.000000e+00> : vector<16xf32>
    %647 = vector.multi_reduction <add>, %646, %cst_316 [1] : vector<16x24xf32> to vector<16xf32>
    %648 = vector.shape_cast %647 : vector<16xf32> to vector<16x1xf32>
    %cst_317 = arith.constant 2.400000e+01 : f32
    %649 = vector.broadcast %cst_317 : f32 to vector<16x1xf32>
    %650 = arith.divf %648, %649 : vector<16x1xf32>
    %651 = vector.broadcast %650 : vector<16x1xf32> to vector<16x24xf32>
    %652 = arith.subf %646, %651 : vector<16x24xf32>
    %653 = arith.mulf %652, %652 : vector<16x24xf32>
    %cst_318 = arith.constant dense<0.000000e+00> : vector<16xf32>
    %654 = vector.multi_reduction <add>, %653, %cst_318 [1] : vector<16x24xf32> to vector<16xf32>
    %655 = vector.shape_cast %654 : vector<16xf32> to vector<16x1xf32>
    %cst_319 = arith.constant 2.400000e+01 : f32
    %656 = vector.broadcast %cst_319 : f32 to vector<16x1xf32>
    %657 = arith.divf %655, %656 : vector<16x1xf32>
    %658 = vector.broadcast %650 : vector<16x1xf32> to vector<16x24xf32>
    %659 = arith.subf %646, %658 : vector<16x24xf32>
    %cst_320 = arith.constant 9.99999974E-6 : f32
    %660 = vector.broadcast %cst_320 : f32 to vector<16x1xf32>
    %661 = arith.addf %657, %660 : vector<16x1xf32>
    %662 = math.rsqrt %661 : vector<16x1xf32>
    %663 = vector.broadcast %662 : vector<16x1xf32> to vector<16x24xf32>
    %664 = arith.mulf %659, %663 : vector<16x24xf32>
    %665 = vector.broadcast %516 : vector<1x24xf32> to vector<16x24xf32>
    %666 = arith.mulf %664, %665 : vector<16x24xf32>
    %667 = vector.broadcast %517 : vector<1x24xf32> to vector<16x24xf32>
    %668 = arith.addf %666, %667 : vector<16x24xf32>
    %cst_321 = arith.constant dense<0.000000e+00> : vector<16xf32>
    %669 = vector.multi_reduction <add>, %668, %cst_321 [1] : vector<16x24xf32> to vector<16xf32>
    %670 = vector.shape_cast %669 : vector<16xf32> to vector<16x1xf32>
    %cst_322 = arith.constant 2.400000e+01 : f32
    %671 = vector.broadcast %cst_322 : f32 to vector<16x1xf32>
    %672 = arith.divf %670, %671 : vector<16x1xf32>
    %673 = vector.broadcast %672 : vector<16x1xf32> to vector<16x24xf32>
    %674 = arith.subf %668, %673 : vector<16x24xf32>
    %675 = arith.mulf %674, %674 : vector<16x24xf32>
    %cst_323 = arith.constant dense<0.000000e+00> : vector<16xf32>
    %676 = vector.multi_reduction <add>, %675, %cst_323 [1] : vector<16x24xf32> to vector<16xf32>
    %677 = vector.shape_cast %676 : vector<16xf32> to vector<16x1xf32>
    %cst_324 = arith.constant 2.400000e+01 : f32
    %678 = vector.broadcast %cst_324 : f32 to vector<16x1xf32>
    %679 = arith.divf %677, %678 : vector<16x1xf32>
    %680 = vector.broadcast %672 : vector<16x1xf32> to vector<16x24xf32>
    %681 = arith.subf %668, %680 : vector<16x24xf32>
    %cst_325 = arith.constant 9.99999974E-6 : f32
    %682 = vector.broadcast %cst_325 : f32 to vector<16x1xf32>
    %683 = arith.addf %679, %682 : vector<16x1xf32>
    %684 = math.rsqrt %683 : vector<16x1xf32>
    %685 = vector.broadcast %684 : vector<16x1xf32> to vector<16x24xf32>
    %686 = arith.mulf %681, %685 : vector<16x24xf32>
    %687 = vector.broadcast %7 : vector<1x24xf32> to vector<16x24xf32>
    %688 = arith.mulf %686, %687 : vector<16x24xf32>
    %689 = vector.broadcast %8 : vector<1x24xf32> to vector<16x24xf32>
    %690 = arith.addf %688, %689 : vector<16x24xf32>
    %691 = vector.shape_cast %690 : vector<16x24xf32> to vector<2x8x24xf32>
    %cst_326 = arith.constant dense<0.000000e+00> : vector<2x24xf32>
    %692 = vector.multi_reduction <add>, %691, %cst_326 [1] : vector<2x8x24xf32> to vector<2x24xf32>
    %cst_327 = arith.constant 8.000000e+00 : f32
    %693 = vector.broadcast %cst_327 : f32 to vector<2x24xf32>
    %694 = arith.divf %692, %693 : vector<2x24xf32>
    %cst_328 = arith.constant dense<0xFF800000> : vector<2x24xf32>
    %695 = vector.multi_reduction <maximumf>, %691, %cst_328 [1] : vector<2x8x24xf32> to vector<2x24xf32>
    %c24 = arith.constant 24 : index
    %c0_329 = arith.constant 0 : index
    %696 = vector.load %arg5[%c24, %c0_329] : memref<96x24xf32, #tpu.memory_space<vmem>>, vector<24x24xf32>
    %c48 = arith.constant 48 : index
    %c0_330 = arith.constant 0 : index
    %697 = vector.load %arg5[%c48, %c0_330] : memref<96x24xf32, #tpu.memory_space<vmem>>, vector<24x24xf32>
    %cst_331 = arith.constant dense<0.000000e+00> : vector<2x24xf32>
    %698 = tpu.matmul %694, %696, %cst_331 {dimension_numbers = #tpu.dot_dimension_numbers<[1], [0], [0], [1], [0, 0, 1, 1], [], []>} : vector<2x24xf32>, vector<24x24xf32>, vector<2x24xf32> -> vector<2x24xf32>
    %cst_332 = arith.constant dense<0.000000e+00> : vector<2x24xf32>
    %699 = tpu.matmul %695, %697, %cst_332 {dimension_numbers = #tpu.dot_dimension_numbers<[1], [0], [0], [1], [0, 0, 1, 1], [], []>} : vector<2x24xf32>, vector<24x24xf32>, vector<2x24xf32> -> vector<2x24xf32>
    %700 = arith.addf %698, %699 : vector<2x24xf32>
    %701 = vector.broadcast %9 : vector<1x24xf32> to vector<2x24xf32>
    %702 = arith.addf %700, %701 : vector<2x24xf32>
    %cst_333 = arith.constant 0.000000e+00 : f32
    %703 = vector.broadcast %cst_333 : f32 to vector<2x24xf32>
    %704 = arith.maximumf %702, %703 : vector<2x24xf32>
    %c72 = arith.constant 72 : index
    %c0_334 = arith.constant 0 : index
    %705 = vector.load %arg5[%c72, %c0_334] : memref<96x24xf32, #tpu.memory_space<vmem>>, vector<24x2xf32>
    %cst_335 = arith.constant dense<0.000000e+00> : vector<2x2xf32>
    %706 = tpu.matmul %704, %705, %cst_335 {dimension_numbers = #tpu.dot_dimension_numbers<[1], [0], [0], [1], [0, 0, 1, 1], [], []>} : vector<2x24xf32>, vector<24x2xf32>, vector<2x2xf32> -> vector<2x2xf32>
    %707 = vector.broadcast %10 : vector<1x2xf32> to vector<2x2xf32>
    %708 = arith.addf %706, %707 : vector<2x2xf32>
    %cst_336 = arith.constant dense<0xFF800000> : vector<2xf32>
    %709 = vector.multi_reduction <maximumf>, %708, %cst_336 [1] : vector<2x2xf32> to vector<2xf32>
    %710 = vector.shape_cast %709 : vector<2xf32> to vector<2x1xf32>
    %711 = vector.broadcast %710 : vector<2x1xf32> to vector<2x2xf32>
    %712 = arith.subf %708, %711 : vector<2x2xf32>
    %713 = math.exp %712 : vector<2x2xf32>
    %cst_337 = arith.constant dense<0.000000e+00> : vector<2xf32>
    %714 = vector.multi_reduction <add>, %713, %cst_337 [1] : vector<2x2xf32> to vector<2xf32>
    %715 = vector.shape_cast %714 : vector<2xf32> to vector<2x1xf32>
    %716 = vector.broadcast %715 : vector<2x1xf32> to vector<2x2xf32>
    %717 = arith.divf %713, %716 : vector<2x2xf32>
    %c0_338 = arith.constant 0 : index
    %c0_339 = arith.constant 0 : index
    %718 = vector.load %arg14[%c0_338, %c0_339] : memref<2x2xf32, #tpu.memory_space<vmem>>, vector<2x2xf32>
    tpu.vector_store %arg14[%c0_338, %c0_339], %717 {strides = array<i32>} : memref<2x2xf32, #tpu.memory_space<vmem>>, vector<2x2xf32>,
    return
  }
  func.func @transform_0(%arg0: i32) -> (i32, i32) {
    %c0_i32 = arith.constant 0 : i32
    %c0_i32_0 = arith.constant 0 : i32
    %c0_i32_1 = arith.constant 0 : i32
    return %c0_i32, %c0_i32_0 : i32, i32
  }
  func.func @transform_1(%arg0: i32) -> (i32, i32) {
    %c0_i32 = arith.constant 0 : i32
    %c0_i32_0 = arith.constant 0 : i32
    %c0_i32_1 = arith.constant 0 : i32
    return %c0_i32, %c0_i32_0 : i32, i32
  }
  func.func @transform_2(%arg0: i32) -> (i32, i32) {
    %c0_i32 = arith.constant 0 : i32
    %c0_i32_0 = arith.constant 0 : i32
    %c0_i32_1 = arith.constant 0 : i32
    return %c0_i32, %c0_i32_0 : i32, i32
  }
  func.func @transform_3(%arg0: i32) -> (i32, i32) {
    %c0_i32 = arith.constant 0 : i32
    %c0_i32_0 = arith.constant 0 : i32
    %c0_i32_1 = arith.constant 0 : i32
    return %c0_i32, %c0_i32_0 : i32, i32
  }
  func.func @transform_4(%arg0: i32) -> (i32, i32) {
    %c0_i32 = arith.constant 0 : i32
    %c0_i32_0 = arith.constant 0 : i32
    %c0_i32_1 = arith.constant 0 : i32
    return %c0_i32, %c0_i32_0 : i32, i32
  }
  func.func @transform_5(%arg0: i32) -> (i32, i32) {
    %c0_i32 = arith.constant 0 : i32
    %c0_i32_0 = arith.constant 0 : i32
    %c0_i32_1 = arith.constant 0 : i32
    return %c0_i32, %c0_i32_0 : i32, i32
  }
  func.func @transform_6(%arg0: i32) -> (i32, i32, i32) {
    %c0_i32 = arith.constant 0 : i32
    %c0_i32_0 = arith.constant 0 : i32
    %c0_i32_1 = arith.constant 0 : i32
    %c0_i32_2 = arith.constant 0 : i32
    return %c0_i32, %c0_i32_0, %c0_i32_1 : i32, i32, i32
  }
  func.func @transform_7(%arg0: i32) -> (i32, i32, i32) {
    %c0_i32 = arith.constant 0 : i32
    %c0_i32_0 = arith.constant 0 : i32
    %c0_i32_1 = arith.constant 0 : i32
    %c0_i32_2 = arith.constant 0 : i32
    return %c0_i32, %c0_i32_0, %c0_i32_1 : i32, i32, i32
  }
  func.func @transform_8(%arg0: i32) -> (i32, i32, i32) {
    %c0_i32 = arith.constant 0 : i32
    %c0_i32_0 = arith.constant 0 : i32
    %c0_i32_1 = arith.constant 0 : i32
    %c0_i32_2 = arith.constant 0 : i32
    return %c0_i32, %c0_i32_0, %c0_i32_1 : i32, i32, i32
  }
  func.func @transform_9(%arg0: i32) -> (i32, i32, i32) {
    %c0_i32 = arith.constant 0 : i32
    %c0_i32_0 = arith.constant 0 : i32
    %c0_i32_1 = arith.constant 0 : i32
    %c0_i32_2 = arith.constant 0 : i32
    return %c0_i32, %c0_i32_0, %c0_i32_1 : i32, i32, i32
  }
  func.func @transform_10(%arg0: i32) -> (i32, i32, i32) {
    %c0_i32 = arith.constant 0 : i32
    %c0_i32_0 = arith.constant 0 : i32
    %c0_i32_1 = arith.constant 0 : i32
    %c0_i32_2 = arith.constant 0 : i32
    return %c0_i32, %c0_i32_0, %c0_i32_1 : i32, i32, i32
  }
  func.func @transform_11(%arg0: i32) -> (i32, i32, i32) {
    %c0_i32 = arith.constant 0 : i32
    %c0_i32_0 = arith.constant 0 : i32
    %c0_i32_1 = arith.constant 0 : i32
    %c0_i32_2 = arith.constant 0 : i32
    return %c0_i32, %c0_i32_0, %c0_i32_1 : i32, i32, i32
  }
  func.func @transform_12(%arg0: i32) -> (i32, i32, i32) {
    %c0_i32 = arith.constant 0 : i32
    %c0_i32_0 = arith.constant 0 : i32
    %c0_i32_1 = arith.constant 0 : i32
    %c0_i32_2 = arith.constant 0 : i32
    return %c0_i32, %c0_i32_0, %c0_i32_1 : i32, i32, i32
  }
  func.func @transform_13(%arg0: i32) -> (i32, i32) {
    %c0_i32 = arith.constant 0 : i32
    %c0_i32_0 = arith.constant 0 : i32
    %c0_i32_1 = arith.constant 0 : i32
    return %c0_i32, %c0_i32_0 : i32, i32
  }
}

</mosaic_0001>

<llo_original>
// kernel: transformer_forward.1
$region0: #{transformer_forward.1}
  #allocation0 [shape = 'u32[]', space=smem, size = 0x4, offset = 0x4, fixed_abs, tag = 'smem constant byte address 0x4 - core index']
  #allocation1 [shape = 'u32[144,128]{1,0:T(1,128)}', space=vmem, size = 0x12000, scoped, tag = 'internal scratch']
  %s0 = inlined_call_operand.vmem [shape: f32[16,36], index: 0, kind: input, shape index: {}]
  %s1 = inlined_call_operand.vmem [shape: f32[24,6], index: 1, kind: input, shape index: {}]
  %s2 = inlined_call_operand.vmem [shape: f32[6,24], index: 2, kind: input, shape index: {}]
  %s3 = inlined_call_operand.vmem [shape: f32[36,24], index: 3, kind: input, shape index: {}]
  %s4 = inlined_call_operand.vmem [shape: f32[96,24], index: 4, kind: input, shape index: {}]
  %s5 = inlined_call_operand.vmem [shape: f32[16,24], index: 5, kind: input, shape index: {}]
  %s6 = inlined_call_operand.vmem [shape: f32[4,24,384], index: 6, kind: input, shape index: {}]
  %s7 = inlined_call_operand.vmem [shape: f32[4,1,384], index: 7, kind: input, shape index: {}]
  %s8 = inlined_call_operand.vmem [shape: f32[4,24,24], index: 8, kind: input, shape index: {}]
  %s9 = inlined_call_operand.vmem [shape: f32[4,8,24], index: 9, kind: input, shape index: {}]
  %s10 = inlined_call_operand.vmem [shape: bf16[4,24,2048], index: 10, kind: input, shape index: {}]
  %s11 = inlined_call_operand.vmem [shape: f32[4,1,2048], index: 11, kind: input, shape index: {}]
  %s12 = inlined_call_operand.vmem [shape: bf16[4,2048,24], index: 12, kind: input, shape index: {}]
  %s13 = inlined_call_operand.hbm [shape: f32[2,2], index: 13, kind: output, shape index: {}]
  %s14 = sld [smem:[#allocation0]]
  $region62: #{transformer_forward.1} parent=0
    _
  %s16 = ssub.s32 1, %s14
  %s17 = scalar_select 0, %s16, %s14
  $region1: #{transformer_forward.1} parent=0
    #allocation2 [shape = 'u8[1024]{0}', space=vmem, size = 0x400, scoped, tag = 'output window, operand 0, single buffered']
    #allocation3 [shape = 's32[1]{0}', space=sflag, size = 0x4, scoped, tag = 'scoped memory for transformer_forward.1']
    %18 = vsyncpa [#allocation3], 0
    // Predicated region
    $region2: #{transformer_forward.1} parent=1 // pred_check
      _
    $region3: #{transformer_forward.1} parent=1 // pred_check_branch
      %20 = sbr.rel (0) target = $region5
    $region4: #{transformer_forward.1} parent=1 // pred_region
      _
    $region5: #{transformer_forward.1} parent=1 // pred_fallthru
      _
    // Predicated region
    $region6: #{transformer_forward.1} parent=1 // pred_check
      _
    $region7: #{transformer_forward.1} parent=1 // pred_check_branch
      %22 = sbr.rel (0) target = $region9
    $region8: #{transformer_forward.1} parent=1 // pred_region
      _
    $region9: #{transformer_forward.1} parent=1 // pred_fallthru
      _
    // Predicated region
    $region10: #{transformer_forward.1} parent=1 // pred_check
      _
    $region11: #{transformer_forward.1} parent=1 // pred_check_branch
      %24 = sbr.rel (0) target = $region13
    $region12: #{transformer_forward.1} parent=1 // pred_region
      _
    $region13: #{transformer_forward.1} parent=1 // pred_fallthru
      _
    // Predicated region
    $region14: #{transformer_forward.1} parent=1 // pred_check
      _
    $region15: #{transformer_forward.1} parent=1 // pred_check_branch
      %26 = sbr.rel (0) target = $region17
    $region16: #{transformer_forward.1} parent=1 // pred_region
      _
    $region17: #{transformer_forward.1} parent=1 // pred_fallthru
      _
    // Predicated region
    $region18: #{transformer_forward.1} parent=1 // pred_check
      _
    $region19: #{transformer_forward.1} parent=1 // pred_check_branch
      %28 = sbr.rel (0) target = $region21
    $region20: #{transformer_forward.1} parent=1 // pred_region
      _
    $region21: #{transformer_forward.1} parent=1 // pred_fallthru
      _
    // Predicated region
    $region22: #{transformer_forward.1} parent=1 // pred_check
      _
    $region23: #{transformer_forward.1} parent=1 // pred_check_branch
      %30 = sbr.rel (0) target = $region25
    $region24: #{transformer_forward.1} parent=1 // pred_region
      _
    $region25: #{transformer_forward.1} parent=1 // pred_fallthru
      _
    // Predicated region
    $region26: #{transformer_forward.1} parent=1 // pred_check
      _
    $region27: #{transformer_forward.1} parent=1 // pred_check_branch
      %32 = sbr.rel (0) target = $region29
    $region28: #{transformer_forward.1} parent=1 // pred_region
      _
    $region29: #{transformer_forward.1} parent=1 // pred_fallthru
      _
    // Predicated region
    $region30: #{transformer_forward.1} parent=1 // pred_check
      _
    $region31: #{transformer_forward.1} parent=1 // pred_check_branch
      %34 = sbr.rel (0) target = $region33
    $region32: #{transformer_forward.1} parent=1 // pred_region
      _
    $region33: #{transformer_forward.1} parent=1 // pred_fallthru
      _
    // Predicated region
    $region34: #{transformer_forward.1} parent=1 // pred_check
      _
    $region35: #{transformer_forward.1} parent=1 // pred_check_branch
      %36 = sbr.rel (0) target = $region37
    $region36: #{transformer_forward.1} parent=1 // pred_region
      _
    $region37: #{transformer_forward.1} parent=1 // pred_fallthru
      _
    // Predicated region
    $region38: #{transformer_forward.1} parent=1 // pred_check
      _
    $region39: #{transformer_forward.1} parent=1 // pred_check_branch
      %38 = sbr.rel (0) target = $region41
    $region40: #{transformer_forward.1} parent=1 // pred_region
      _
    $region41: #{transformer_forward.1} parent=1 // pred_fallthru
      _
    // Predicated region
    $region42: #{transformer_forward.1} parent=1 // pred_check
      _
    $region43: #{transformer_forward.1} parent=1 // pred_check_branch
      %40 = sbr.rel (0) target = $region45
    $region44: #{transformer_forward.1} parent=1 // pred_region
      _
    $region45: #{transformer_forward.1} parent=1 // pred_fallthru
      _
    // Predicated region
    $region46: #{transformer_forward.1} parent=1 // pred_check
      _
    $region47: #{transformer_forward.1} parent=1 // pred_check_branch
      %42 = sbr.rel (0) target = $region49
    $region48: #{transformer_forward.1} parent=1 // pred_region
      _
    $region49: #{transformer_forward.1} parent=1 // pred_fallthru
      _
    // Predicated region
    $region50: #{transformer_forward.1} parent=1 // pred_check
      _
    $region51: #{transformer_forward.1} parent=1 // pred_check_branch
      %44 = sbr.rel (0) target = $region53
    $region52: #{transformer_forward.1} parent=1 // pred_region
      _
    $region53: #{transformer_forward.1} parent=1 // pred_fallthru
      _
    %v46 = vld [vmem:[%s5] sm:$0xff]
    %v47 = vld [vmem:[%s5 + $0x8] sm:$0xff]
    %v48 = vld [vmem:[%s0] sm:$0xff]
    %v49 = vld [vmem:[%s0 + $0x8] sm:$0xff]
    %v50 = vld [vmem:[%s3] sm:$0xff]
    %v51 = vld [vmem:[%s3 + $0x8] sm:$0xff]
    %v52 = vld [vmem:[%s3 + $0x10] sm:$0xff]
    %v53 = vld [vmem:[%s3 + $0x18] sm:$0xff]
    %v54 = vld [vmem:[%s3 + $0x20] sm:$0xf]
    %v55 = vlaneseq
    %v56 = vshrl.u32 %v55, 7
    %v57 = vsub.s32 0, %v56
    %v58 = vrot.slane %v46, %v57
    %vm59 = vcmask 293888
    %v61 = vsel %vm59, %v48, 0
    %v64 = vsel %vm59, %v49, 0
    %vm66 = vcmask 1043456
    %v68 = vsel %vm66, %v54, 0
    %70 = vmatprep.subr.mxu0 0.0
    %71 = vmatpush1.msra.mxu0 0.0
    %72 = vmatprep.subr.mxu0 0.0
    %73 = vmatpush1.msra.mxu0 0.0
    %74 = vmatprep.subr.mxu0 0.0
    %75 = vmatpush1.msra.mxu0 0.0
    %76 = vmatprep.subr.mxu0 0.0
    %77 = vmatpush1.msra.mxu0 0.0
    %78 = vmatprep.subr.mxu0 0.0
    %79 = vmatpush1.msra.mxu0 0.0
    %80 = vmatprep.subr.mxu0 0.0
    %81 = vmatpush1.msra.mxu0 0.0
    %82 = vmatprep.subr.mxu0 0.0
    %83 = vmatpush1.msra.mxu0 0.0
    %84 = vmatprep.subr.mxu0 0.0
    %85 = vmatpush1.msra.mxu0 0.0
    %86 = vmatprep.subr.mxu0 0.0
    %87 = vmatpush1.msra.mxu0 0.0
    %88 = vmatprep.subr.mxu0 0.0
    %89 = vmatpush1.msra.mxu0 0.0
    %90 = vmatprep.subr.mxu0 0.0
    %91 = vmatpush1.msra.mxu0 0.0
    %92 = vmatprep.subr.mxu0 0.0
    %93 = vmatpush1.msra.mxu0 %v68
    %94 = vmatprep.subr.mxu0 0.0
    %95 = vmatpush1.msra.mxu0 %v53
    %96 = vmatprep.subr.mxu0 0.0
    %97 = vmatpush1.msra.mxu0 %v52
    %98 = vmatprep.subr.mxu0 0.0
    %99 = vmatpush1.msra.mxu0 %v51
    %100 = vmatprep.subr.mxu0 0.0
    %101 = vmatpush1.msra.mxu0 %v50
    %102 = vmatprep.subr.mxu0 0.0
    %103 = vmatpush2.msra.mxu0 0.0
    %104 = vmatprep.subr.mxu0 0.0
    %105 = vmatpush2.msra.mxu0 0.0
    %106 = vmatprep.subr.mxu0 0.0
    %107 = vmatpush2.msra.mxu0 0.0
    %108 = vmatprep.subr.mxu0 0.0
    %109 = vmatpush2.msra.mxu0 0.0
    %110 = vmatprep.subr.mxu0 0.0
    %111 = vmatpush2.msra.mxu0 0.0
    %112 = vmatprep.subr.mxu0 0.0
    %113 = vmatpush2.msra.mxu0 0.0
    %114 = vmatprep.subr.mxu0 0.0
    %115 = vmatpush2.msra.mxu0 0.0
    %116 = vmatprep.subr.mxu0 0.0
    %117 = vmatpush2.msra.mxu0 0.0
    %118 = vmatprep.subr.mxu0 0.0
    %119 = vmatpush2.msra.mxu0 0.0
    %120 = vmatprep.subr.mxu0 0.0
    %121 = vmatpush2.msra.mxu0 0.0
    %122 = vmatprep.subr.mxu0 0.0
    %123 = vmatpush2.msra.mxu0 0.0
    %124 = vmatprep.subr.mxu0 0.0
    %125 = vmatpush2.msra.mxu0 0.0
    %126 = vmatprep.subr.mxu0 0.0
    %127 = vmatpush2.msra.mxu0 0.0
    %128 = vmatprep.subr.mxu0 0.0
    %129 = vmatpush2.msra.mxu0 0.0
    %130 = vmatprep.subr.mxu0 0.0
    %131 = vmatpush2.msra.mxu0 0.0
    %132 = vmatprep.subr.mxu0 0.0
    %133 = vmatpush2.msra.mxu0 0.0
    %134 = vmatprep.mubr.f32.mxu0 0.0
    %135 = vmatmul.mubr.f32.gmra.mxu0 %v61
    %v136 = vpop.f32.mrf.mxu0
    %v137 = vadd.f32 %v58, %v136
    %v138 = vpop.f32.mrf.mxu0
    %139 = vmatprep.mubr.f32.mxu0 0.0
    %140 = vmatmul.mubr.f32.gmra.mxu0 %v64
    %v141 = vpop.f32.mrf.mxu0
    %v142 = vadd.f32 %v58, %v141
    %v143 = vpop.f32.mrf.mxu0
    %144 = vdwg.mxu0
    %v145 = vmax.f32 %v137, 0.0
    %v146 = vmax.f32 %v142, 0.0
    %v147 = vlaneseq
    %v148 = vshrl.u32 %v147, 7
    %v149 = vsub.s32 3, %v148
    %v150 = vrot.slane %v46, %v149
    %v151 = vsub.f32 %v145, %v150
    %v152 = vsub.f32 %v146, %v150
    %v153 = vadd.f32 %v46, 1e-05
    %v154 = vrsqrt.pop %v153
    %v155 = vlaneseq
    %v156 = vshrl.u32 %v155, 7
    %v157 = vsub.s32 4, %v156
    %v158 = vrot.slane %v154, %v157
    %v159 = vmul.f32 %v151, %v158
    %v160 = vmul.f32 %v152, %v158
    %v161 = vlaneseq
    %v162 = vshrl.u32 %v161, 7
    %v163 = vsub.s32 1, %v162
    %v164 = vrot.slane %v46, %v163
    %v165 = vmul.f32 %v159, %v164
    %v166 = vmul.f32 %v160, %v164
    %v167 = vlaneseq
    %v168 = vshrl.u32 %v167, 7
    %v169 = vsub.s32 2, %v168
    %v170 = vrot.slane %v46, %v169
    %v171 = vadd.f32 %v165, %v170
    %v172 = vadd.f32 %v166, %v170
    %v173 = vld [vmem:[%s4] sm:$0xff]
    %v174 = vld [vmem:[%s4 + $0x8] sm:$0xff]
    %v175 = vld [vmem:[%s4 + $0x10] sm:$0xff]
    %v176 = vlaneseq
    %v177 = vshrl.u32 %v176, 7
    %v178 = vsub.s32 5, %v177
    %v179 = vrot.slane %v46, %v178
    %vm180 = vcmask 195584
    %v182 = vsel %vm180, %v171, 0
    %v185 = vsel %vm180, %v172, 0
    %187 = vmatprep.subr.mxu0 0.0
    %188 = vmatpush1.msra.mxu0 0.0
    %189 = vmatprep.subr.mxu0 0.0
    %190 = vmatpush1.msra.mxu0 0.0
    %191 = vmatprep.subr.mxu0 0.0
    %192 = vmatpush1.msra.mxu0 0.0
    %193 = vmatprep.subr.mxu0 0.0
    %194 = vmatpush1.msra.mxu0 0.0
    %195 = vmatprep.subr.mxu0 0.0
    %196 = vmatpush1.msra.mxu0 0.0
    %197 = vmatprep.subr.mxu0 0.0
    %198 = vmatpush1.msra.mxu0 0.0
    %199 = vmatprep.subr.mxu0 0.0
    %200 = vmatpush1.msra.mxu0 0.0
    %201 = vmatprep.subr.mxu0 0.0
    %202 = vmatpush1.msra.mxu0 0.0
    %203 = vmatprep.subr.mxu0 0.0
    %204 = vmatpush1.msra.mxu0 0.0
    %205 = vmatprep.subr.mxu0 0.0
    %206 = vmatpush1.msra.mxu0 0.0
    %207 = vmatprep.subr.mxu0 0.0
    %208 = vmatpush1.msra.mxu0 0.0
    %209 = vmatprep.subr.mxu0 0.0
    %210 = vmatpush1.msra.mxu0 0.0
    %211 = vmatprep.subr.mxu0 0.0
    %212 = vmatpush1.msra.mxu0 0.0
    %213 = vmatprep.subr.mxu0 0.0
    %214 = vmatpush1.msra.mxu0 %v175
    %215 = vmatprep.subr.mxu0 0.0
    %216 = vmatpush1.msra.mxu0 %v174
    %217 = vmatprep.subr.mxu0 0.0
    %218 = vmatpush1.msra.mxu0 %v173
    %219 = vmatprep.subr.mxu0 0.0
    %220 = vmatpush2.msra.mxu0 0.0
    %221 = vmatprep.subr.mxu0 0.0
    %222 = vmatpush2.msra.mxu0 0.0
    %223 = vmatprep.subr.mxu0 0.0
    %224 = vmatpush2.msra.mxu0 0.0
    %225 = vmatprep.subr.mxu0 0.0
    %226 = vmatpush2.msra.mxu0 0.0
    %227 = vmatprep.subr.mxu0 0.0
    %228 = vmatpush2.msra.mxu0 0.0
    %229 = vmatprep.subr.mxu0 0.0
    %230 = vmatpush2.msra.mxu0 0.0
    %231 = vmatprep.subr.mxu0 0.0
    %232 = vmatpush2.msra.mxu0 0.0
    %233 = vmatprep.subr.mxu0 0.0
    %234 = vmatpush2.msra.mxu0 0.0
    %235 = vmatprep.subr.mxu0 0.0
    %236 = vmatpush2.msra.mxu0 0.0
    %237 = vmatprep.subr.mxu0 0.0
    %238 = vmatpush2.msra.mxu0 0.0
    %239 = vmatprep.subr.mxu0 0.0
    %240 = vmatpush2.msra.mxu0 0.0
    %241 = vmatprep.subr.mxu0 0.0
    %242 = vmatpush2.msra.mxu0 0.0
    %243 = vmatprep.subr.mxu0 0.0
    %244 = vmatpush2.msra.mxu0 0.0
    %245 = vmatprep.subr.mxu0 0.0
    %246 = vmatpush2.msra.mxu0 0.0
    %247 = vmatprep.subr.mxu0 0.0
    %248 = vmatpush2.msra.mxu0 0.0
    %249 = vmatprep.subr.mxu0 0.0
    %250 = vmatpush2.msra.mxu0 0.0
    %251 = vmatprep.mubr.f32.mxu0 0.0
    %252 = vmatmul.mubr.f32.gmra.mxu0 %v182
    %v253 = vpop.f32.mrf.mxu0
    %v254 = vadd.f32 %v179, %v253
    %v255 = vpop.f32.mrf.mxu0
    %256 = vmatprep.mubr.f32.mxu0 0.0
    %257 = vmatmul.mubr.f32.gmra.mxu0 %v185
    %v258 = vpop.f32.mrf.mxu0
    %v259 = vadd.f32 %v179, %v258
    %v260 = vpop.f32.mrf.mxu0
    %261 = vdwg.mxu0
    %v262 = vmax.f32 %v254, 0.0
    %v263 = vmax.f32 %v259, 0.0
    %v264 = vld [vmem:[%s1] sm:$0xff]
    %v265 = vld [vmem:[%s1 + $0x8] sm:$0xff]
    %v266 = vld [vmem:[%s1 + $0x10] sm:$0xff]
    %v267 = vld [vmem:[%s2] sm:$0x3f]
    %v268 = vld [vmem:[%s9] sm:$0xff]
    %v269 = vld [vmem:[%s6] sm:$0xff]
    %v270 = vld [vmem:[%s6 + $0x8] sm:$0xff]
    %v271 = vld [vmem:[%s6 + $0x10] sm:$0xff]
    %v272 = vld [vmem:[%s6 + $0x18] sm:$0xff]
    %v273 = vld [vmem:[%s6 + $0x20] sm:$0xff]
    %v274 = vld [vmem:[%s6 + $0x28] sm:$0xff]
    %v275 = vld [vmem:[%s6 + $0x30] sm:$0xff]
    %v276 = vld [vmem:[%s6 + $0x38] sm:$0xff]
    %v277 = vld [vmem:[%s6 + $0x40] sm:$0xff]
    %v278 = vld [vmem:[%s7] sm:$0x7]
    %v280 = vlaneseq
    %v281 = vshrl.u32 %v280, 7
    %v282 = vsub.s32 0, %v281
    %v283 = vrot.slane %v278, %v282
    %v284 = vlaneseq
    %v285 = vshrl.u32 %v284, 7
    %v286 = vsub.s32 1, %v285
    %v287 = vrot.slane %v278, %v286
    %v288 = vlaneseq
    %v289 = vshrl.u32 %v288, 7
    %v290 = vsub.s32 2, %v289
    %v291 = vrot.slane %v278, %v290
    %v296 = vsel %vm180, %v262, 0
    %v299 = vsel %vm180, %v263, 0
    %301 = vmatprep.subr.mxu0 0.0
    %302 = vmatpush1.msra.mxu0 0.0
    %303 = vmatprep.subr.mxu0 0.0
    %304 = vmatpush1.msra.mxu0 0.0
    %305 = vmatprep.subr.mxu0 0.0
    %306 = vmatpush1.msra.mxu0 0.0
    %307 = vmatprep.subr.mxu0 0.0
    %308 = vmatpush1.msra.mxu0 0.0
    %309 = vmatprep.subr.mxu0 0.0
    %310 = vmatpush1.msra.mxu0 0.0
    %311 = vmatprep.subr.mxu0 0.0
    %312 = vmatpush1.msra.mxu0 0.0
    %313 = vmatprep.subr.mxu0 0.0
    %314 = vmatpush1.msra.mxu0 0.0
    %315 = vmatprep.subr.mxu0 0.0
    %316 = vmatpush1.msra.mxu0 0.0
    %317 = vmatprep.subr.mxu0 0.0
    %318 = vmatpush1.msra.mxu0 0.0
    %319 = vmatprep.subr.mxu0 0.0
    %320 = vmatpush1.msra.mxu0 0.0
    %321 = vmatprep.subr.mxu0 0.0
    %322 = vmatpush1.msra.mxu0 0.0
    %323 = vmatprep.subr.mxu0 0.0
    %324 = vmatpush1.msra.mxu0 0.0
    %325 = vmatprep.subr.mxu0 0.0
    %326 = vmatpush1.msra.mxu0 0.0
    %327 = vmatprep.subr.mxu0 %v276
    %328 = vmatpush1.msra.mxu0 %v275
    %329 = vmatprep.subr.mxu0 %v273
    %330 = vmatpush1.msra.mxu0 %v272
    %331 = vmatprep.subr.mxu0 %v270
    %332 = vmatpush1.msra.mxu0 %v269
    %333 = vmatprep.subr.mxu0 0.0
    %334 = vmatpush2.msra.mxu0 0.0
    %335 = vmatprep.subr.mxu0 0.0
    %336 = vmatpush2.msra.mxu0 0.0
    %337 = vmatprep.subr.mxu0 0.0
    %338 = vmatpush2.msra.mxu0 0.0
    %339 = vmatprep.subr.mxu0 0.0
    %340 = vmatpush2.msra.mxu0 0.0
    %341 = vmatprep.subr.mxu0 0.0
    %342 = vmatpush2.msra.mxu0 0.0
    %343 = vmatprep.subr.mxu0 0.0
    %344 = vmatpush2.msra.mxu0 0.0
    %345 = vmatprep.subr.mxu0 0.0
    %346 = vmatpush2.msra.mxu0 0.0
    %347 = vmatprep.subr.mxu0 0.0
    %348 = vmatpush2.msra.mxu0 0.0
    %349 = vmatprep.subr.mxu0 0.0
    %350 = vmatpush2.msra.mxu0 0.0
    %351 = vmatprep.subr.mxu0 0.0
    %352 = vmatpush2.msra.mxu0 0.0
    %353 = vmatprep.subr.mxu0 0.0
    %354 = vmatpush2.msra.mxu0 0.0
    %355 = vmatprep.subr.mxu0 0.0
    %356 = vmatpush2.msra.mxu0 0.0
    %357 = vmatprep.subr.mxu0 0.0
    %358 = vmatpush2.msra.mxu0 0.0
    %359 = vmatprep.subr.mxu0 0.0
    %360 = vmatpush2.msra.mxu0 0.0
    %361 = vmatprep.subr.mxu0 0.0
    %362 = vmatpush2.msra.mxu0 0.0
    %363 = vmatprep.subr.mxu0 0.0
    %364 = vmatpush2.msra.mxu0 0.0
    %365 = vmatprep.mubr.f32.mxu0 0.0
    %366 = vmatmul.mubr.f32.gmra.mxu0 %v296
    %v367 = vpop.f32.mrf.mxu0
    %v368 = vadd.f32 %v283, %v367
    %v369 = vpop.f32.mrf.mxu0
    %v370 = vadd.f32 %v287, %v369
    %371 = vmatprep.mubr.f32.mxu0 0.0
    %372 = vmatmul.mubr.f32.gmra.mxu0 %v299
    %v373 = vpop.f32.mrf.mxu0
    %v374 = vadd.f32 %v283, %v373
    %v375 = vpop.f32.mrf.mxu0
    %v376 = vadd.f32 %v287, %v375
    %377 = vdwg.mxu0
    %378 = vmatprep.subr.mxu0 0.0
    %379 = vmatpush1.msra.mxu0 0.0
    %380 = vmatprep.subr.mxu0 0.0
    %381 = vmatpush1.msra.mxu0 0.0
    %382 = vmatprep.subr.mxu0 0.0
    %383 = vmatpush1.msra.mxu0 0.0
    %384 = vmatprep.subr.mxu0 0.0
    %385 = vmatpush1.msra.mxu0 0.0
    %386 = vmatprep.subr.mxu0 0.0
    %387 = vmatpush1.msra.mxu0 0.0
    %388 = vmatprep.subr.mxu0 0.0
    %389 = vmatpush1.msra.mxu0 0.0
    %390 = vmatprep.subr.mxu0 0.0
    %391 = vmatpush1.msra.mxu0 0.0
    %392 = vmatprep.subr.mxu0 0.0
    %393 = vmatpush1.msra.mxu0 0.0
    %394 = vmatprep.subr.mxu0 0.0
    %395 = vmatpush1.msra.mxu0 0.0
    %396 = vmatprep.subr.mxu0 0.0
    %397 = vmatpush1.msra.mxu0 0.0
    %398 = vmatprep.subr.mxu0 0.0
    %399 = vmatpush1.msra.mxu0 0.0
    %400 = vmatprep.subr.mxu0 0.0
    %401 = vmatpush1.msra.mxu0 0.0
    %402 = vmatprep.subr.mxu0 0.0
    %403 = vmatpush1.msra.mxu0 0.0
    %404 = vmatprep.subr.mxu0 0.0
    %405 = vmatpush1.msra.mxu0 %v277
    %406 = vmatprep.subr.mxu0 0.0
    %407 = vmatpush1.msra.mxu0 %v274
    %408 = vmatprep.subr.mxu0 0.0
    %409 = vmatpush1.msra.mxu0 %v271
    %410 = vmatprep.subr.mxu0 0.0
    %411 = vmatpush2.msra.mxu0 0.0
    %412 = vmatprep.subr.mxu0 0.0
    %413 = vmatpush2.msra.mxu0 0.0
    %414 = vmatprep.subr.mxu0 0.0
    %415 = vmatpush2.msra.mxu0 0.0
    %416 = vmatprep.subr.mxu0 0.0
    %417 = vmatpush2.msra.mxu0 0.0
    %418 = vmatprep.subr.mxu0 0.0
    %419 = vmatpush2.msra.mxu0 0.0
    %420 = vmatprep.subr.mxu0 0.0
    %421 = vmatpush2.msra.mxu0 0.0
    %422 = vmatprep.subr.mxu0 0.0
    %423 = vmatpush2.msra.mxu0 0.0
    %424 = vmatprep.subr.mxu0 0.0
    %425 = vmatpush2.msra.mxu0 0.0
    %426 = vmatprep.subr.mxu0 0.0
    %427 = vmatpush2.msra.mxu0 0.0
    %428 = vmatprep.subr.mxu0 0.0
    %429 = vmatpush2.msra.mxu0 0.0
    %430 = vmatprep.subr.mxu0 0.0
    %431 = vmatpush2.msra.mxu0 0.0
    %432 = vmatprep.subr.mxu0 0.0
    %433 = vmatpush2.msra.mxu0 0.0
    %434 = vmatprep.subr.mxu0 0.0
    %435 = vmatpush2.msra.mxu0 0.0
    %436 = vmatprep.subr.mxu0 0.0
    %437 = vmatpush2.msra.mxu0 0.0
    %438 = vmatprep.subr.mxu0 0.0
    %439 = vmatpush2.msra.mxu0 0.0
    %440 = vmatprep.subr.mxu0 0.0
    %441 = vmatpush2.msra.mxu0 0.0
    %442 = vmatprep.mubr.f32.mxu0 0.0
    %443 = vmatmul.mubr.f32.gmra.mxu0 %v296
    %v444 = vpop.f32.mrf.mxu0
    %v445 = vadd.f32 %v291, %v444
    %v446 = vpop.f32.mrf.mxu0
    %447 = vmatprep.mubr.f32.mxu0 0.0
    %448 = vmatmul.mubr.f32.gmra.mxu0 %v299
    %v449 = vpop.f32.mrf.mxu0
    %v450 = vadd.f32 %v291, %v449
    %v451 = vpop.f32.mrf.mxu0
    %452 = vdwg.mxu0
    %v453 = vmul.f32 %v368, %v370
    %v454 = vmul.f32 %v368, %v376
    %v455 = vmul.f32 %v374, %v370
    %v456 = vmul.f32 %v374, %v376
    %v458 = vsel %vm180, %v453, 0
    %v461 = vsel %vm180, %v454, 0
    %v464 = vsel %vm180, %v455, 0
    %v467 = vsel %vm180, %v456, 0
    %469 = vmatprep.subr.mxu0 0.0
    %470 = vmatpush1.msra.mxu0 0.0
    %471 = vmatprep.subr.mxu0 0.0
    %472 = vmatpush1.msra.mxu0 0.0
    %473 = vmatprep.subr.mxu0 0.0
    %474 = vmatpush1.msra.mxu0 0.0
    %475 = vmatprep.subr.mxu0 0.0
    %476 = vmatpush1.msra.mxu0 0.0
    %477 = vmatprep.subr.mxu0 0.0
    %478 = vmatpush1.msra.mxu0 0.0
    %479 = vmatprep.subr.mxu0 0.0
    %480 = vmatpush1.msra.mxu0 0.0
    %481 = vmatprep.subr.mxu0 0.0
    %482 = vmatpush1.msra.mxu0 0.0
    %483 = vmatprep.subr.mxu0 0.0
    %484 = vmatpush1.msra.mxu0 0.0
    %485 = vmatprep.subr.mxu0 0.0
    %486 = vmatpush1.msra.mxu0 0.0
    %487 = vmatprep.subr.mxu0 0.0
    %488 = vmatpush1.msra.mxu0 0.0
    %489 = vmatprep.subr.mxu0 0.0
    %490 = vmatpush1.msra.mxu0 0.0
    %491 = vmatprep.subr.mxu0 0.0
    %492 = vmatpush1.msra.mxu0 0.0
    %493 = vmatprep.subr.mxu0 0.0
    %494 = vmatpush1.msra.mxu0 0.0
    %495 = vmatprep.subr.mxu0 0.0
    %496 = vmatpush1.msra.mxu0 %v266
    %497 = vmatprep.subr.mxu0 0.0
    %498 = vmatpush1.msra.mxu0 %v265
    %499 = vmatprep.subr.mxu0 0.0
    %500 = vmatpush1.msra.mxu0 %v264
    %501 = vmatprep.subr.mxu0 0.0
    %502 = vmatpush2.msra.mxu0 0.0
    %503 = vmatprep.subr.mxu0 0.0
    %504 = vmatpush2.msra.mxu0 0.0
    %505 = vmatprep.subr.mxu0 0.0
    %506 = vmatpush2.msra.mxu0 0.0
    %507 = vmatprep.subr.mxu0 0.0
    %508 = vmatpush2.msra.mxu0 0.0
    %509 = vmatprep.subr.mxu0 0.0
    %510 = vmatpush2.msra.mxu0 0.0
    %511 = vmatprep.subr.mxu0 0.0
    %512 = vmatpush2.msra.mxu0 0.0
    %513 = vmatprep.subr.mxu0 0.0
    %514 = vmatpush2.msra.mxu0 0.0
    %515 = vmatprep.subr.mxu0 0.0
    %516 = vmatpush2.msra.mxu0 0.0
    %517 = vmatprep.subr.mxu0 0.0
    %518 = vmatpush2.msra.mxu0 0.0
    %519 = vmatprep.subr.mxu0 0.0
    %520 = vmatpush2.msra.mxu0 0.0
    %521 = vmatprep.subr.mxu0 0.0
    %522 = vmatpush2.msra.mxu0 0.0
    %523 = vmatprep.subr.mxu0 0.0
    %524 = vmatpush2.msra.mxu0 0.0
    %525 = vmatprep.subr.mxu0 0.0
    %526 = vmatpush2.msra.mxu0 0.0
    %527 = vmatprep.subr.mxu0 0.0
    %528 = vmatpush2.msra.mxu0 0.0
    %529 = vmatprep.subr.mxu0 0.0
    %530 = vmatpush2.msra.mxu0 0.0
    %531 = vmatprep.subr.mxu0 0.0
    %532 = vmatpush2.msra.mxu0 0.0
    %533 = vmatprep.mubr.f32.mxu0 0.0
    %534 = vmatmul.mubr.f32.gmra.mxu0 %v458
    %v535 = vpop.f32.mrf.mxu0
    %v536 = vadd.f32 0.0, %v535
    %v537 = vpop.f32.mrf.mxu0
    %538 = vmatprep.mubr.f32.mxu0 0.0
    %539 = vmatmul.mubr.f32.gmra.mxu0 %v461
    %v540 = vpop.f32.mrf.mxu0
    %v541 = vadd.f32 0.0, %v540
    %v542 = vpop.f32.mrf.mxu0
    %543 = vmatprep.mubr.f32.mxu0 0.0
    %544 = vmatmul.mubr.f32.gmra.mxu0 %v464
    %v545 = vpop.f32.mrf.mxu0
    %v546 = vadd.f32 0.0, %v545
    %v547 = vpop.f32.mrf.mxu0
    %548 = vmatprep.mubr.f32.mxu0 0.0
    %549 = vmatmul.mubr.f32.gmra.mxu0 %v467
    %v550 = vpop.f32.mrf.mxu0
    %v551 = vadd.f32 0.0, %v550
    %v552 = vpop.f32.mrf.mxu0
    %553 = vdwg.mxu0
    %vm554 = vcmask 48128
    %v555 = vsel %vm554, %v536, -inf
    %v556 = vsel %vm554, %v541, -inf
    %v557 = vmax.f32 %v555, %v556
    %v558 = vsel %vm554, %v546, -inf
    %v559 = vsel %vm554, %v551, -inf
    %v560 = vmax.f32 %v558, %v559
    %v561 = vsub.f32 %v536, %v557
    %v562 = vsub.f32 %v541, %v557
    %v563 = vsub.f32 %v546, %v560
    %v564 = vsub.f32 %v551, %v560
    %v565 = vmul.f32 %v561, 1.442695
    %v566 = vpow.pop %v565
    %v567 = vmul.f32 %v562, 1.442695
    %v568 = vpow.pop %v567
    %v569 = vmul.f32 %v563, 1.442695
    %v570 = vpow.pop %v569
    %v571 = vmul.f32 %v564, 1.442695
    %v572 = vpow.pop %v571
    %v573 = vsel %vm554, %v566, 0.0
    %v574 = vsel %vm554, %v568, 0.0
    %v575 = vadd.f32 %v573, %v574
    %v576 = vsel %vm554, %v570, 0.0
    %v577 = vsel %vm554, %v572, 0.0
    %v578 = vadd.f32 %v576, %v577
    %v579 = vrcp.pop %v575
    %v580 = vrcp.pop %v578
    %v581 = vmul.f32 %v566, %v579
    %v582 = vmul.f32 %v568, %v579
    %v583 = vmul.f32 %v570, %v580
    %v584 = vmul.f32 %v572, %v580
    %v586 = vsel %vm554, %v581, 0
    %v589 = vsel %vm554, %v582, 0
    %v592 = vsel %vm554, %v583, 0
    %v595 = vsel %vm554, %v584, 0
    %vm597 = vcmask 1045504
    %v599 = vsel %vm597, %v267, 0
    %601 = vmatprep.subr.mxu0 0.0
    %602 = vmatpush1.msra.mxu0 0.0
    %603 = vmatprep.subr.mxu0 0.0
    %604 = vmatpush1.msra.mxu0 0.0
    %605 = vmatprep.subr.mxu0 0.0
    %606 = vmatpush1.msra.mxu0 0.0
    %607 = vmatprep.subr.mxu0 0.0
    %608 = vmatpush1.msra.mxu0 0.0
    %609 = vmatprep.subr.mxu0 0.0
    %610 = vmatpush1.msra.mxu0 0.0
    %611 = vmatprep.subr.mxu0 0.0
    %612 = vmatpush1.msra.mxu0 0.0
    %613 = vmatprep.subr.mxu0 0.0
    %614 = vmatpush1.msra.mxu0 0.0
    %615 = vmatprep.subr.mxu0 0.0
    %616 = vmatpush1.msra.mxu0 0.0
    %617 = vmatprep.subr.mxu0 0.0
    %618 = vmatpush1.msra.mxu0 0.0
    %619 = vmatprep.subr.mxu0 0.0
    %620 = vmatpush1.msra.mxu0 0.0
    %621 = vmatprep.subr.mxu0 0.0
    %622 = vmatpush1.msra.mxu0 0.0
    %623 = vmatprep.subr.mxu0 0.0
    %624 = vmatpush1.msra.mxu0 0.0
    %625 = vmatprep.subr.mxu0 0.0
    %626 = vmatpush1.msra.mxu0 0.0
    %627 = vmatprep.subr.mxu0 0.0
    %628 = vmatpush1.msra.mxu0 0.0
    %629 = vmatprep.subr.mxu0 0.0
    %630 = vmatpush1.msra.mxu0 0.0
    %631 = vmatprep.subr.mxu0 0.0
    %632 = vmatpush1.msra.mxu0 %v599
    %633 = vmatprep.subr.mxu0 0.0
    %634 = vmatpush2.msra.mxu0 0.0
    %635 = vmatprep.subr.mxu0 0.0
    %636 = vmatpush2.msra.mxu0 0.0
    %637 = vmatprep.subr.mxu0 0.0
    %638 = vmatpush2.msra.mxu0 0.0
    %639 = vmatprep.subr.mxu0 0.0
    %640 = vmatpush2.msra.mxu0 0.0
    %641 = vmatprep.subr.mxu0 0.0
    %642 = vmatpush2.msra.mxu0 0.0
    %643 = vmatprep.subr.mxu0 0.0
    %644 = vmatpush2.msra.mxu0 0.0
    %645 = vmatprep.subr.mxu0 0.0
    %646 = vmatpush2.msra.mxu0 0.0
    %647 = vmatprep.subr.mxu0 0.0
    %648 = vmatpush2.msra.mxu0 0.0
    %649 = vmatprep.subr.mxu0 0.0
    %650 = vmatpush2.msra.mxu0 0.0
    %651 = vmatprep.subr.mxu0 0.0
    %652 = vmatpush2.msra.mxu0 0.0
    %653 = vmatprep.subr.mxu0 0.0
    %654 = vmatpush2.msra.mxu0 0.0
    %655 = vmatprep.subr.mxu0 0.0
    %656 = vmatpush2.msra.mxu0 0.0
    %657 = vmatprep.subr.mxu0 0.0
    %658 = vmatpush2.msra.mxu0 0.0
    %659 = vmatprep.subr.mxu0 0.0
    %660 = vmatpush2.msra.mxu0 0.0
    %661 = vmatprep.subr.mxu0 0.0
    %662 = vmatpush2.msra.mxu0 0.0
    %663 = vmatprep.subr.mxu0 0.0
    %664 = vmatpush2.msra.mxu0 0.0
    %665 = vmatprep.mubr.f32.mxu0 0.0
    %666 = vmatmul.mubr.f32.gmra.mxu0 %v586
    %v667 = vpop.f32.mrf.mxu0
    %v668 = vadd.f32 0.0, %v667
    %v669 = vpop.f32.mrf.mxu0
    %670 = vmatprep.mubr.f32.mxu0 0.0
    %671 = vmatmul.mubr.f32.gmra.mxu0 %v589
    %v672 = vpop.f32.mrf.mxu0
    %v673 = vadd.f32 0.0, %v672
    %v674 = vpop.f32.mrf.mxu0
    %675 = vmatprep.mubr.f32.mxu0 0.0
    %676 = vmatmul.mubr.f32.gmra.mxu0 %v592
    %v677 = vpop.f32.mrf.mxu0
    %v678 = vadd.f32 0.0, %v677
    %v679 = vpop.f32.mrf.mxu0
    %680 = vmatprep.mubr.f32.mxu0 0.0
    %681 = vmatmul.mubr.f32.gmra.mxu0 %v595
    %v682 = vpop.f32.mrf.mxu0
    %v683 = vadd.f32 0.0, %v682
    %v684 = vpop.f32.mrf.mxu0
    %685 = vdwg.mxu0
    %v686 = vmul.f32 %v668, %v445
    %v687 = vmul.f32 %v673, %v450
    %v688 = vmul.f32 %v678, %v445
    %v689 = vmul.f32 %v683, %v450
    %v690 = vsel %vm180, %v686, 0.0
    %v691 = vsel %vm180, %v687, 0.0
    %v692 = vadd.f32 %v690, %v691
    %v693 = vsel %vm180, %v688, 0.0
    %v694 = vsel %vm180, %v689, 0.0
    %v695 = vadd.f32 %v693, %v694
    %v696 = vld [vmem:[%s8] sm:$0xff]
    %v697 = vld [vmem:[%s8 + $0x8] sm:$0xff]
    %v698 = vld [vmem:[%s8 + $0x10] sm:$0xff]
    %v699 = vlaneseq
    %v700 = vshrl.u32 %v699, 7
    %v701 = vsub.s32 0, %v700
    %v702 = vrot.slane %v268, %v701
    %v704 = vsel %vm180, %v692, 0
    %v707 = vsel %vm180, %v695, 0
    %709 = vmatprep.subr.mxu0 0.0
    %710 = vmatpush1.msra.mxu0 0.0
    %711 = vmatprep.subr.mxu0 0.0
    %712 = vmatpush1.msra.mxu0 0.0
    %713 = vmatprep.subr.mxu0 0.0
    %714 = vmatpush1.msra.mxu0 0.0
    %715 = vmatprep.subr.mxu0 0.0
    %716 = vmatpush1.msra.mxu0 0.0
    %717 = vmatprep.subr.mxu0 0.0
    %718 = vmatpush1.msra.mxu0 0.0
    %719 = vmatprep.subr.mxu0 0.0
    %720 = vmatpush1.msra.mxu0 0.0
    %721 = vmatprep.subr.mxu0 0.0
    %722 = vmatpush1.msra.mxu0 0.0
    %723 = vmatprep.subr.mxu0 0.0
    %724 = vmatpush1.msra.mxu0 0.0
    %725 = vmatprep.subr.mxu0 0.0
    %726 = vmatpush1.msra.mxu0 0.0
    %727 = vmatprep.subr.mxu0 0.0
    %728 = vmatpush1.msra.mxu0 0.0
    %729 = vmatprep.subr.mxu0 0.0
    %730 = vmatpush1.msra.mxu0 0.0
    %731 = vmatprep.subr.mxu0 0.0
    %732 = vmatpush1.msra.mxu0 0.0
    %733 = vmatprep.subr.mxu0 0.0
    %734 = vmatpush1.msra.mxu0 0.0
    %735 = vmatprep.subr.mxu0 0.0
    %736 = vmatpush1.msra.mxu0 %v698
    %737 = vmatprep.subr.mxu0 0.0
    %738 = vmatpush1.msra.mxu0 %v697
    %739 = vmatprep.subr.mxu0 0.0
    %740 = vmatpush1.msra.mxu0 %v696
    %741 = vmatprep.subr.mxu0 0.0
    %742 = vmatpush2.msra.mxu0 0.0
    %743 = vmatprep.subr.mxu0 0.0
    %744 = vmatpush2.msra.mxu0 0.0
    %745 = vmatprep.subr.mxu0 0.0
    %746 = vmatpush2.msra.mxu0 0.0
    %747 = vmatprep.subr.mxu0 0.0
    %748 = vmatpush2.msra.mxu0 0.0
    %749 = vmatprep.subr.mxu0 0.0
    %750 = vmatpush2.msra.mxu0 0.0
    %751 = vmatprep.subr.mxu0 0.0
    %752 = vmatpush2.msra.mxu0 0.0
    %753 = vmatprep.subr.mxu0 0.0
    %754 = vmatpush2.msra.mxu0 0.0
    %755 = vmatprep.subr.mxu0 0.0
    %756 = vmatpush2.msra.mxu0 0.0
    %757 = vmatprep.subr.mxu0 0.0
    %758 = vmatpush2.msra.mxu0 0.0
    %759 = vmatprep.subr.mxu0 0.0
    %760 = vmatpush2.msra.mxu0 0.0
    %761 = vmatprep.subr.mxu0 0.0
    %762 = vmatpush2.msra.mxu0 0.0
    %763 = vmatprep.subr.mxu0 0.0
    %764 = vmatpush2.msra.mxu0 0.0
    %765 = vmatprep.subr.mxu0 0.0
    %766 = vmatpush2.msra.mxu0 0.0
    %767 = vmatprep.subr.mxu0 0.0
    %768 = vmatpush2.msra.mxu0 0.0
    %769 = vmatprep.subr.mxu0 0.0
    %770 = vmatpush2.msra.mxu0 0.0
    %771 = vmatprep.subr.mxu0 0.0
    %772 = vmatpush2.msra.mxu0 0.0
    %773 = vmatprep.mubr.f32.mxu0 0.0
    %774 = vmatmul.mubr.f32.gmra.mxu0 %v704
    %v775 = vpop.f32.mrf.mxu0
    %v776 = vadd.f32 %v702, %v775
    %v777 = vpop.f32.mrf.mxu0
    %778 = vmatprep.mubr.f32.mxu0 0.0
    %779 = vmatmul.mubr.f32.gmra.mxu0 %v707
    %v780 = vpop.f32.mrf.mxu0
    %v781 = vadd.f32 %v702, %v780
    %v782 = vpop.f32.mrf.mxu0
    %783 = vdwg.mxu0
    %v784 = vadd.f32 %v262, %v776
    %v785 = vadd.f32 %v263, %v781
    %v786 = vsel %vm180, %v784, 0.0
    %787 = vadd.xlane.f32.xlu0 %v786
    %v788 = vpop.xlane.xlu0 %787
    %v789 = vsel %vm180, %v785, 0.0
    %790 = vadd.xlane.f32.xlu0 %v789
    %v791 = vpop.xlane.xlu0 %790
    %v792 = vrcp.pop 24.0
    %v793 = vmul.f32 %v788, %v792
    %v794 = vmul.f32 %v791, %v792
    %v795 = vsub.f32 %v784, %v793
    %v796 = vsub.f32 %v785, %v794
    %v797 = vmul.f32 %v795, %v795
    %v798 = vmul.f32 %v796, %v796
    %v799 = vsel %vm180, %v797, 0.0
    %800 = vadd.xlane.f32.xlu0 %v799
    %v801 = vpop.xlane.xlu0 %800
    %v802 = vsel %vm180, %v798, 0.0
    %803 = vadd.xlane.f32.xlu0 %v802
    %v804 = vpop.xlane.xlu0 %803
    %v805 = vmul.f32 %v801, %v792
    %v806 = vmul.f32 %v804, %v792
    %v807 = vadd.f32 %v805, 1e-05
    %v808 = vadd.f32 %v806, 1e-05
    %v809 = vrsqrt.pop %v807
    %v810 = vrsqrt.pop %v808
    %v811 = vmul.f32 %v795, %v809
    %v812 = vmul.f32 %v796, %v810
    %v813 = vlaneseq
    %v814 = vshrl.u32 %v813, 7
    %v815 = vsub.s32 1, %v814
    %v816 = vrot.slane %v268, %v815
    %v817 = vmul.f32 %v811, %v816
    %v818 = vmul.f32 %v812, %v816
    %v819 = vlaneseq
    %v820 = vshrl.u32 %v819, 7
    %v821 = vsub.s32 2, %v820
    %v822 = vrot.slane %v268, %v821
    %v823 = vadd.f32 %v817, %v822
    %v824 = vadd.f32 %v818, %v822
    %v825 = vpack.c.bf16 %v824, %v823
    %v826 = vld [vmem:[%s10] sm:$0xff]
    %v827 = vld [vmem:[%s10 + $0x8] sm:$0xff]
    %v828 = vld [vmem:[%s10 + $0x40] sm:$0xff]
    %v829 = vld [vmem:[%s10 + $0x48] sm:$0xff]
    %v830 = vld [vmem:[%s10 + $0x80] sm:$0xff]
    %v831 = vld [vmem:[%s10 + $0x88] sm:$0xff]
    %v832 = vld [vmem:[%s11] sm:$0xf]
    %v834 = vlaneseq
    %v835 = vshrl.u32 %v834, 7
    %v836 = vsub.s32 0, %v835
    %v837 = vrot.slane %v832, %v836
    %v838 = vlaneseq
    %v839 = vshrl.u32 %v838, 7
    %v840 = vsub.s32 1, %v839
    %v841 = vrot.slane %v832, %v840
    %v842 = vlaneseq
    %v843 = vshrl.u32 %v842, 7
    %v844 = vsub.s32 2, %v843
    %v845 = vrot.slane %v832, %v844
    %v846 = vlaneseq
    %v847 = vshrl.u32 %v846, 7
    %v848 = vsub.s32 3, %v847
    %v849 = vrot.slane %v832, %v848
    %v860 = vunpack.c.l.b16 %v826
    %v861 = vunpack.c.h.b16 %v826
    %v862 = vunpack.c.l.b16 %v827
    %v863 = vunpack.c.h.b16 %v827
    %v864 = vunpack.c.l.b16 %v828
    %v865 = vunpack.c.h.b16 %v828
    %v866 = vunpack.c.l.b16 %v829
    %v867 = vunpack.c.h.b16 %v829
    %v868 = vunpack.c.l.b16 %v830
    %v869 = vunpack.c.h.b16 %v830
    %v870 = vunpack.c.l.b16 %v831
    %v871 = vunpack.c.h.b16 %v831
    %v872 = vpack.c.b16 %v864, %v860
    %v873 = vpack.c.b16 %v865, %v861
    %v874 = vpack.c.b16 %v866, %v862
    %v875 = vpack.c.b16 %v867, %v863
    %v876 = vpack.c.b16 %v868, %v868
    %v877 = vpack.c.b16 %v869, %v869
    %v878 = vpack.c.b16 %v870, %v870
    %v879 = vpack.c.b16 %v871, %v871
    %v885 = vsel %vm180, %v825, 0
    %v888 = vsel %vm66, %v876, 0
    %v891 = vsel %vm66, %v877, 0
    %v894 = vsel %vm66, %v878, 0
    %v897 = vsel %vm66, %v879, 0
    %899 = vmatprep.subr.bf16.mxu0 0
    %900 = vmatpush1.bf16.msra.mxu0 0
    %901 = vmatprep.subr.bf16.mxu0 0
    %902 = vmatpush1.bf16.msra.mxu0 0
    %903 = vmatprep.subr.bf16.mxu0 0
    %904 = vmatpush1.bf16.msra.mxu0 0
    %905 = vmatprep.subr.bf16.mxu0 0
    %906 = vmatpush1.bf16.msra.mxu0 0
    %907 = vmatprep.subr.bf16.mxu0 0
    %908 = vmatpush1.bf16.msra.mxu0 0
    %909 = vmatprep.subr.bf16.mxu0 0
    %910 = vmatpush1.bf16.msra.mxu0 0
    %911 = vmatprep.subr.bf16.mxu0 %v891
    %912 = vmatpush1.bf16.msra.mxu0 %v888
    %913 = vmatprep.subr.bf16.mxu0 %v873
    %914 = vmatpush1.bf16.msra.mxu0 %v872
    %915 = vmatprep.subr.bf16.mxu0 0
    %916 = vmatpush2.bf16.msra.mxu0 0
    %917 = vmatprep.subr.bf16.mxu0 0
    %918 = vmatpush2.bf16.msra.mxu0 0
    %919 = vmatprep.subr.bf16.mxu0 0
    %920 = vmatpush2.bf16.msra.mxu0 0
    %921 = vmatprep.subr.bf16.mxu0 0
    %922 = vmatpush2.bf16.msra.mxu0 0
    %923 = vmatprep.subr.bf16.mxu0 0
    %924 = vmatpush2.bf16.msra.mxu0 0
    %925 = vmatprep.subr.bf16.mxu0 0
    %926 = vmatpush2.bf16.msra.mxu0 0
    %927 = vmatprep.subr.bf16.mxu0 0
    %928 = vmatpush2.bf16.msra.mxu0 0
    %929 = vmatprep.subr.bf16.mxu0 0
    %930 = vmatpush2.bf16.msra.mxu0 0
    %931 = vmatprep.mubr.bf16.mxu0 0
    %932 = vmatmul.mubr.bf16.gmra.mxu0 %v885
    %v933 = vpop.f32.mrf.mxu0
    %v934 = vadd.f32 %v837, %v933
    %v935 = vpop.f32.mrf.mxu0
    %v936 = vadd.f32 %v841, %v935
    %v937 = vpop.f32.mrf.mxu0
    %v938 = vadd.f32 %v837, %v937
    %v939 = vpop.f32.mrf.mxu0
    %v940 = vadd.f32 %v841, %v939
    %941 = vdwg.mxu0
    %942 = vmatprep.subr.bf16.mxu0 0
    %943 = vmatpush1.bf16.msra.mxu0 0
    %944 = vmatprep.subr.bf16.mxu0 0
    %945 = vmatpush1.bf16.msra.mxu0 0
    %946 = vmatprep.subr.bf16.mxu0 0
    %947 = vmatpush1.bf16.msra.mxu0 0
    %948 = vmatprep.subr.bf16.mxu0 0
    %949 = vmatpush1.bf16.msra.mxu0 0
    %950 = vmatprep.subr.bf16.mxu0 0
    %951 = vmatpush1.bf16.msra.mxu0 0
    %952 = vmatprep.subr.bf16.mxu0 0
    %953 = vmatpush1.bf16.msra.mxu0 0
    %954 = vmatprep.subr.bf16.mxu0 %v897
    %955 = vmatpush1.bf16.msra.mxu0 %v894
    %956 = vmatprep.subr.bf16.mxu0 %v875
    %957 = vmatpush1.bf16.msra.mxu0 %v874
    %958 = vmatprep.subr.bf16.mxu0 0
    %959 = vmatpush2.bf16.msra.mxu0 0
    %960 = vmatprep.subr.bf16.mxu0 0
    %961 = vmatpush2.bf16.msra.mxu0 0
    %962 = vmatprep.subr.bf16.mxu0 0
    %963 = vmatpush2.bf16.msra.mxu0 0
    %964 = vmatprep.subr.bf16.mxu0 0
    %965 = vmatpush2.bf16.msra.mxu0 0
    %966 = vmatprep.subr.bf16.mxu0 0
    %967 = vmatpush2.bf16.msra.mxu0 0
    %968 = vmatprep.subr.bf16.mxu0 0
    %969 = vmatpush2.bf16.msra.mxu0 0
    %970 = vmatprep.subr.bf16.mxu0 0
    %971 = vmatpush2.bf16.msra.mxu0 0
    %972 = vmatprep.subr.bf16.mxu0 0
    %973 = vmatpush2.bf16.msra.mxu0 0
    %974 = vmatprep.mubr.bf16.mxu0 0
    %975 = vmatmul.mubr.bf16.gmra.mxu0 %v885
    %v976 = vpop.f32.mrf.mxu0
    %v977 = vadd.f32 %v845, %v976
    %v978 = vpop.f32.mrf.mxu0
    %v979 = vadd.f32 %v849, %v978
    %v980 = vpop.f32.mrf.mxu0
    %v981 = vadd.f32 %v845, %v980
    %v982 = vpop.f32.mrf.mxu0
    %v983 = vadd.f32 %v849, %v982
    %984 = vdwg.mxu0
    %v985 = vmax.f32 %v934, 0.0
    %v986 = vmax.f32 %v936, 0.0
    %v987 = vmax.f32 %v977, 0.0
    %v988 = vmax.f32 %v979, 0.0
    %v989 = vmax.f32 %v938, 0.0
    %v990 = vmax.f32 %v940, 0.0
    %v991 = vmax.f32 %v981, 0.0
    %v992 = vmax.f32 %v983, 0.0
    %v993 = vpack.c.bf16 %v989, %v985
    %v994 = vpack.c.bf16 %v990, %v986
    %v995 = vpack.c.bf16 %v991, %v987
    %v996 = vpack.c.bf16 %v992, %v988
    %v997 = vld [vmem:[%s12] sm:$0xf]
    %v998 = vld [vmem:[%s12 + $0x4] sm:$0xf]
    %v999 = vld [vmem:[%s12 + $0x8] sm:$0xf]
    %v1000 = vld [vmem:[%s12 + $0xc] sm:$0xf]
    %v1001 = vld [vmem:[%s12 + $0x10] sm:$0xf]
    %v1002 = vld [vmem:[%s12 + $0x14] sm:$0xf]
    %v1003 = vld [vmem:[%s12 + $0x18] sm:$0xf]
    %v1004 = vld [vmem:[%s12 + $0x1c] sm:$0xf]
    %v1005 = vld [vmem:[%s12 + $0x20] sm:$0xf]
    %v1006 = vld [vmem:[%s12 + $0x24] sm:$0xf]
    %v1007 = vld [vmem:[%s12 + $0x28] sm:$0xf]
    %v1008 = vld [vmem:[%s12 + $0x2c] sm:$0xf]
    %v1009 = vld [vmem:[%s12 + $0x30] sm:$0xf]
    %v1010 = vld [vmem:[%s12 + $0x34] sm:$0xf]
    %v1011 = vld [vmem:[%s12 + $0x38] sm:$0xf]
    %v1012 = vld [vmem:[%s12 + $0x3c] sm:$0xf]
    %v1013 = vld [vmem:[%s12 + $0x40] sm:$0xf]
    %v1014 = vld [vmem:[%s12 + $0x44] sm:$0xf]
    %v1015 = vld [vmem:[%s12 + $0x48] sm:$0xf]
    %v1016 = vld [vmem:[%s12 + $0x4c] sm:$0xf]
    %v1017 = vld [vmem:[%s12 + $0x50] sm:$0xf]
    %v1018 = vld [vmem:[%s12 + $0x54] sm:$0xf]
    %v1019 = vld [vmem:[%s12 + $0x58] sm:$0xf]
    %v1020 = vld [vmem:[%s12 + $0x5c] sm:$0xf]
    %v1021 = vld [vmem:[%s12 + $0x60] sm:$0xf]
    %v1022 = vld [vmem:[%s12 + $0x64] sm:$0xf]
    %v1023 = vld [vmem:[%s12 + $0x68] sm:$0xf]
    %v1024 = vld [vmem:[%s12 + $0x6c] sm:$0xf]
    %v1025 = vld [vmem:[%s12 + $0x70] sm:$0xf]
    %v1026 = vld [vmem:[%s12 + $0x74] sm:$0xf]
    %v1027 = vld [vmem:[%s12 + $0x78] sm:$0xf]
    %v1028 = vld [vmem:[%s12 + $0x7c] sm:$0xf]
    %v1029 = vld [vmem:[%s12 + $0x80] sm:$0xf]
    %v1030 = vld [vmem:[%s12 + $0x84] sm:$0xf]
    %v1031 = vld [vmem:[%s12 + $0x88] sm:$0xf]
    %v1032 = vld [vmem:[%s12 + $0x8c] sm:$0xf]
    %v1033 = vld [vmem:[%s12 + $0x90] sm:$0xf]
    %v1034 = vld [vmem:[%s12 + $0x94] sm:$0xf]
    %v1035 = vld [vmem:[%s12 + $0x98] sm:$0xf]
    %v1036 = vld [vmem:[%s12 + $0x9c] sm:$0xf]
    %v1037 = vld [vmem:[%s12 + $0xa0] sm:$0xf]
    %v1038 = vld [vmem:[%s12 + $0xa4] sm:$0xf]
    %v1039 = vld [vmem:[%s12 + $0xa8] sm:$0xf]
    %v1040 = vld [vmem:[%s12 + $0xac] sm:$0xf]
    %v1041 = vld [vmem:[%s12 + $0xb0] sm:$0xf]
    %v1042 = vld [vmem:[%s12 + $0xb4] sm:$0xf]
    %v1043 = vld [vmem:[%s12 + $0xb8] sm:$0xf]
    %v1044 = vld [vmem:[%s12 + $0xbc] sm:$0xf]
    %v1045 = vld [vmem:[%s12 + $0xc0] sm:$0xf]
    %v1046 = vld [vmem:[%s12 + $0xc4] sm:$0xf]
    %v1047 = vld [vmem:[%s12 + $0xc8] sm:$0xf]
    %v1048 = vld [vmem:[%s12 + $0xcc] sm:$0xf]
    %v1049 = vld [vmem:[%s12 + $0xd0] sm:$0xf]
    %v1050 = vld [vmem:[%s12 + $0xd4] sm:$0xf]
    %v1051 = vld [vmem:[%s12 + $0xd8] sm:$0xf]
    %v1052 = vld [vmem:[%s12 + $0xdc] sm:$0xf]
    %v1053 = vld [vmem:[%s12 + $0xe0] sm:$0xf]
    %v1054 = vld [vmem:[%s12 + $0xe4] sm:$0xf]
    %v1055 = vld [vmem:[%s12 + $0xe8] sm:$0xf]
    %v1056 = vld [vmem:[%s12 + $0xec] sm:$0xf]
    %v1057 = vld [vmem:[%s12 + $0xf0] sm:$0xf]
    %v1058 = vld [vmem:[%s12 + $0xf4] sm:$0xf]
    %v1059 = vld [vmem:[%s12 + $0xf8] sm:$0xf]
    %v1060 = vld [vmem:[%s12 + $0xfc] sm:$0xf]
    %v1061 = vld [vmem:[%s10 + $0x10] sm:$0xff]
    %v1062 = vld [vmem:[%s10 + $0x18] sm:$0xff]
    %v1063 = vld [vmem:[%s10 + $0x50] sm:$0xff]
    %v1064 = vld [vmem:[%s10 + $0x58] sm:$0xff]
    %v1065 = vld [vmem:[%s10 + $0x90] sm:$0xff]
    %v1066 = vld [vmem:[%s10 + $0x98] sm:$0xff]
    %v1067 = vld [vmem:[%s11 + $0x4] sm:$0xf]
    %v1069 = vlaneseq
    %v1070 = vshrl.u32 %v1069, 7
    %v1071 = vsub.s32 0, %v1070
    %v1072 = vrot.slane %v1067, %v1071
    %v1073 = vlaneseq
    %v1074 = vshrl.u32 %v1073, 7
    %v1075 = vsub.s32 1, %v1074
    %v1076 = vrot.slane %v1067, %v1075
    %v1077 = vlaneseq
    %v1078 = vshrl.u32 %v1077, 7
    %v1079 = vsub.s32 2, %v1078
    %v1080 = vrot.slane %v1067, %v1079
    %v1081 = vlaneseq
    %v1082 = vshrl.u32 %v1081, 7
    %v1083 = vsub.s32 3, %v1082
    %v1084 = vrot.slane %v1067, %v1083
    %v1095 = vunpack.c.l.b16 %v1061
    %v1096 = vunpack.c.h.b16 %v1061
    %v1097 = vunpack.c.l.b16 %v1062
    %v1098 = vunpack.c.h.b16 %v1062
    %v1099 = vunpack.c.l.b16 %v1063
    %v1100 = vunpack.c.h.b16 %v1063
    %v1101 = vunpack.c.l.b16 %v1064
    %v1102 = vunpack.c.h.b16 %v1064
    %v1103 = vunpack.c.l.b16 %v1065
    %v1104 = vunpack.c.h.b16 %v1065
    %v1105 = vunpack.c.l.b16 %v1066
    %v1106 = vunpack.c.h.b16 %v1066
    %v1107 = vpack.c.b16 %v1099, %v1095
    %v1108 = vpack.c.b16 %v1100, %v1096
    %v1109 = vpack.c.b16 %v1101, %v1097
    %v1110 = vpack.c.b16 %v1102, %v1098
    %v1111 = vpack.c.b16 %v1103, %v1103
    %v1112 = vpack.c.b16 %v1104, %v1104
    %v1113 = vpack.c.b16 %v1105, %v1105
    %v1114 = vpack.c.b16 %v1106, %v1106
    %v1120 = vsel %vm66, %v1111, 0
    %v1123 = vsel %vm66, %v1112, 0
    %v1126 = vsel %vm66, %v1113, 0
    %v1129 = vsel %vm66, %v1114, 0
    %1131 = vmatprep.subr.bf16.mxu0 0
    %1132 = vmatpush1.bf16.msra.mxu0 0
    %1133 = vmatprep.subr.bf16.mxu0 0
    %1134 = vmatpush1.bf16.msra.mxu0 0
    %1135 = vmatprep.subr.bf16.mxu0 0
    %1136 = vmatpush1.bf16.msra.mxu0 0
    %1137 = vmatprep.subr.bf16.mxu0 0
    %1138 = vmatpush1.bf16.msra.mxu0 0
    %1139 = vmatprep.subr.bf16.mxu0 0
    %1140 = vmatpush1.bf16.msra.mxu0 0
    %1141 = vmatprep.subr.bf16.mxu0 0
    %1142 = vmatpush1.bf16.msra.mxu0 0
    %1143 = vmatprep.subr.bf16.mxu0 %v1123
    %1144 = vmatpush1.bf16.msra.mxu0 %v1120
    %1145 = vmatprep.subr.bf16.mxu0 %v1108
    %1146 = vmatpush1.bf16.msra.mxu0 %v1107
    %1147 = vmatprep.subr.bf16.mxu0 0
    %1148 = vmatpush2.bf16.msra.mxu0 0
    %1149 = vmatprep.subr.bf16.mxu0 0
    %1150 = vmatpush2.bf16.msra.mxu0 0
    %1151 = vmatprep.subr.bf16.mxu0 0
    %1152 = vmatpush2.bf16.msra.mxu0 0
    %1153 = vmatprep.subr.bf16.mxu0 0
    %1154 = vmatpush2.bf16.msra.mxu0 0
    %1155 = vmatprep.subr.bf16.mxu0 0
    %1156 = vmatpush2.bf16.msra.mxu0 0
    %1157 = vmatprep.subr.bf16.mxu0 0
    %1158 = vmatpush2.bf16.msra.mxu0 0
    %1159 = vmatprep.subr.bf16.mxu0 0
    %1160 = vmatpush2.bf16.msra.mxu0 0
    %1161 = vmatprep.subr.bf16.mxu0 0
    %1162 = vmatpush2.bf16.msra.mxu0 0
    %1163 = vmatprep.mubr.bf16.mxu0 0
    %1164 = vmatmul.mubr.bf16.gmra.mxu0 %v885
    %v1165 = vpop.f32.mrf.mxu0
    %v1166 = vadd.f32 %v1072, %v1165
    %v1167 = vpop.f32.mrf.mxu0
    %v1168 = vadd.f32 %v1076, %v1167
    %v1169 = vpop.f32.mrf.mxu0
    %v1170 = vadd.f32 %v1072, %v1169
    %v1171 = vpop.f32.mrf.mxu0
    %v1172 = vadd.f32 %v1076, %v1171
    %1173 = vdwg.mxu0
    %1174 = vmatprep.subr.bf16.mxu0 0
    %1175 = vmatpush1.bf16.msra.mxu0 0
    %1176 = vmatprep.subr.bf16.mxu0 0
    %1177 = vmatpush1.bf16.msra.mxu0 0
    %1178 = vmatprep.subr.bf16.mxu0 0
    %1179 = vmatpush1.bf16.msra.mxu0 0
    %1180 = vmatprep.subr.bf16.mxu0 0
    %1181 = vmatpush1.bf16.msra.mxu0 0
    %1182 = vmatprep.subr.bf16.mxu0 0
    %1183 = vmatpush1.bf16.msra.mxu0 0
    %1184 = vmatprep.subr.bf16.mxu0 0
    %1185 = vmatpush1.bf16.msra.mxu0 0
    %1186 = vmatprep.subr.bf16.mxu0 %v1129
    %1187 = vmatpush1.bf16.msra.mxu0 %v1126
    %1188 = vmatprep.subr.bf16.mxu0 %v1110
    %1189 = vmatpush1.bf16.msra.mxu0 %v1109
    %1190 = vmatprep.subr.bf16.mxu0 0
    %1191 = vmatpush2.bf16.msra.mxu0 0
    %1192 = vmatprep.subr.bf16.mxu0 0
    %1193 = vmatpush2.bf16.msra.mxu0 0
    %1194 = vmatprep.subr.bf16.mxu0 0
    %1195 = vmatpush2.bf16.msra.mxu0 0
    %1196 = vmatprep.subr.bf16.mxu0 0
    %1197 = vmatpush2.bf16.msra.mxu0 0
    %1198 = vmatprep.subr.bf16.mxu0 0
    %1199 = vmatpush2.bf16.msra.mxu0 0
    %1200 = vmatprep.subr.bf16.mxu0 0
    %1201 = vmatpush2.bf16.msra.mxu0 0
    %1202 = vmatprep.subr.bf16.mxu0 0
    %1203 = vmatpush2.bf16.msra.mxu0 0
    %1204 = vmatprep.subr.bf16.mxu0 0
    %1205 = vmatpush2.bf16.msra.mxu0 0
    %1206 = vmatprep.mubr.bf16.mxu0 0
    %1207 = vmatmul.mubr.bf16.gmra.mxu0 %v885
    %v1208 = vpop.f32.mrf.mxu0
    %v1209 = vadd.f32 %v1080, %v1208
    %v1210 = vpop.f32.mrf.mxu0
    %v1211 = vadd.f32 %v1084, %v1210
    %v1212 = vpop.f32.mrf.mxu0
    %v1213 = vadd.f32 %v1080, %v1212
    %v1214 = vpop.f32.mrf.mxu0
    %v1215 = vadd.f32 %v1084, %v1214
    %1216 = vdwg.mxu0
    %v1217 = vmax.f32 %v1166, 0.0
    %v1218 = vmax.f32 %v1168, 0.0
    %v1219 = vmax.f32 %v1209, 0.0
    %v1220 = vmax.f32 %v1211, 0.0
    %v1221 = vmax.f32 %v1170, 0.0
    %v1222 = vmax.f32 %v1172, 0.0
    %v1223 = vmax.f32 %v1213, 0.0
    %v1224 = vmax.f32 %v1215, 0.0
    %v1225 = vpack.c.bf16 %v1221, %v1217
    %v1226 = vpack.c.bf16 %v1222, %v1218
    %v1227 = vpack.c.bf16 %v1223, %v1219
    %v1228 = vpack.c.bf16 %v1224, %v1220
    %v1229 = vld [vmem:[%s12 + $0x100] sm:$0xf]
    %v1230 = vld [vmem:[%s12 + $0x104] sm:$0xf]
    %v1231 = vld [vmem:[%s12 + $0x108] sm:$0xf]
    %v1232 = vld [vmem:[%s12 + $0x10c] sm:$0xf]
    %v1233 = vld [vmem:[%s12 + $0x110] sm:$0xf]
    %v1234 = vld [vmem:[%s12 + $0x114] sm:$0xf]
    %v1235 = vld [vmem:[%s12 + $0x118] sm:$0xf]
    %v1236 = vld [vmem:[%s12 + $0x11c] sm:$0xf]
    %v1237 = vld [vmem:[%s12 + $0x120] sm:$0xf]
    %v1238 = vld [vmem:[%s12 + $0x124] sm:$0xf]
    %v1239 = vld [vmem:[%s12 + $0x128] sm:$0xf]
    %v1240 = vld [vmem:[%s12 + $0x12c] sm:$0xf]
    %v1241 = vld [vmem:[%s12 + $0x130] sm:$0xf]
    %v1242 = vld [vmem:[%s12 + $0x134] sm:$0xf]
    %v1243 = vld [vmem:[%s12 + $0x138] sm:$0xf]
    %v1244 = vld [vmem:[%s12 + $0x13c] sm:$0xf]
    %v1245 = vld [vmem:[%s12 + $0x140] sm:$0xf]
    %v1246 = vld [vmem:[%s12 + $0x144] sm:$0xf]
    %v1247 = vld [vmem:[%s12 + $0x148] sm:$0xf]
    %v1248 = vld [vmem:[%s12 + $0x14c] sm:$0xf]
    %v1249 = vld [vmem:[%s12 + $0x150] sm:$0xf]
    %v1250 = vld [vmem:[%s12 + $0x154] sm:$0xf]
    %v1251 = vld [vmem:[%s12 + $0x158] sm:$0xf]
    %v1252 = vld [vmem:[%s12 + $0x15c] sm:$0xf]
    %v1253 = vld [vmem:[%s12 + $0x160] sm:$0xf]
    %v1254 = vld [vmem:[%s12 + $0x164] sm:$0xf]
    %v1255 = vld [vmem:[%s12 + $0x168] sm:$0xf]
    %v1256 = vld [vmem:[%s12 + $0x16c] sm:$0xf]
    %v1257 = vld [vmem:[%s12 + $0x170] sm:$0xf]
    %v1258 = vld [vmem:[%s12 + $0x174] sm:$0xf]
    %v1259 = vld [vmem:[%s12 + $0x178] sm:$0xf]
    %v1260 = vld [vmem:[%s12 + $0x17c] sm:$0xf]
    %v1261 = vld [vmem:[%s12 + $0x180] sm:$0xf]
    %v1262 = vld [vmem:[%s12 + $0x184] sm:$0xf]
    %v1263 = vld [vmem:[%s12 + $0x188] sm:$0xf]
    %v1264 = vld [vmem:[%s12 + $0x18c] sm:$0xf]
    %v1265 = vld [vmem:[%s12 + $0x190] sm:$0xf]
    %v1266 = vld [vmem:[%s12 + $0x194] sm:$0xf]
    %v1267 = vld [vmem:[%s12 + $0x198] sm:$0xf]
    %v1268 = vld [vmem:[%s12 + $0x19c] sm:$0xf]
    %v1269 = vld [vmem:[%s12 + $0x1a0] sm:$0xf]
    %v1270 = vld [vmem:[%s12 + $0x1a4] sm:$0xf]
    %v1271 = vld [vmem:[%s12 + $0x1a8] sm:$0xf]
    %v1272 = vld [vmem:[%s12 + $0x1ac] sm:$0xf]
    %v1273 = vld [vmem:[%s12 + $0x1b0] sm:$0xf]
    %v1274 = vld [vmem:[%s12 + $0x1b4] sm:$0xf]
    %v1275 = vld [vmem:[%s12 + $0x1b8] sm:$0xf]
    %v1276 = vld [vmem:[%s12 + $0x1bc] sm:$0xf]
    %v1277 = vld [vmem:[%s12 + $0x1c0] sm:$0xf]
    %v1278 = vld [vmem:[%s12 + $0x1c4] sm:$0xf]
    %v1279 = vld [vmem:[%s12 + $0x1c8] sm:$0xf]
    %v1280 = vld [vmem:[%s12 + $0x1cc] sm:$0xf]
    %v1281 = vld [vmem:[%s12 + $0x1d0] sm:$0xf]
    %v1282 = vld [vmem:[%s12 + $0x1d4] sm:$0xf]
    %v1283 = vld [vmem:[%s12 + $0x1d8] sm:$0xf]
    %v1284 = vld [vmem:[%s12 + $0x1dc] sm:$0xf]
    %v1285 = vld [vmem:[%s12 + $0x1e0] sm:$0xf]
    %v1286 = vld [vmem:[%s12 + $0x1e4] sm:$0xf]
    %v1287 = vld [vmem:[%s12 + $0x1e8] sm:$0xf]
    %v1288 = vld [vmem:[%s12 + $0x1ec] sm:$0xf]
    %v1289 = vld [vmem:[%s12 + $0x1f0] sm:$0xf]
    %v1290 = vld [vmem:[%s12 + $0x1f4] sm:$0xf]
    %v1291 = vld [vmem:[%s12 + $0x1f8] sm:$0xf]
    %v1292 = vld [vmem:[%s12 + $0x1fc] sm:$0xf]
    %v1357 = vunpack.c.l.b16 %v1229
    %v1358 = vunpack.c.l.b16 %v1230
    %v1359 = vunpack.c.l.b16 %v1231
    %v1360 = vunpack.c.l.b16 %v1232
    %v1361 = vunpack.c.l.b16 %v1233
    %v1362 = vunpack.c.l.b16 %v1234
    %v1363 = vunpack.c.l.b16 %v1235
    %v1364 = vunpack.c.l.b16 %v1236
    %v1365 = vunpack.c.l.b16 %v1237
    %v1366 = vunpack.c.l.b16 %v1238
    %v1367 = vunpack.c.l.b16 %v1239
    %v1368 = vunpack.c.l.b16 %v1240
    %v1369 = vunpack.c.l.b16 %v1241
    %v1370 = vunpack.c.l.b16 %v1242
    %v1371 = vunpack.c.l.b16 %v1243
    %v1372 = vunpack.c.l.b16 %v1244
    %v1373 = vunpack.c.l.b16 %v1245
    %v1374 = vunpack.c.l.b16 %v1246
    %v1375 = vunpack.c.l.b16 %v1247
    %v1376 = vunpack.c.l.b16 %v1248
    %v1377 = vunpack.c.l.b16 %v1249
    %v1378 = vunpack.c.l.b16 %v1250
    %v1379 = vunpack.c.l.b16 %v1251
    %v1380 = vunpack.c.l.b16 %v1252
    %v1381 = vunpack.c.l.b16 %v1253
    %v1382 = vunpack.c.l.b16 %v1254
    %v1383 = vunpack.c.l.b16 %v1255
    %v1384 = vunpack.c.l.b16 %v1256
    %v1385 = vunpack.c.l.b16 %v1257
    %v1386 = vunpack.c.l.b16 %v1258
    %v1387 = vunpack.c.l.b16 %v1259
    %v1388 = vunpack.c.l.b16 %v1260
    %v1389 = vunpack.c.l.b16 %v1261
    %v1390 = vunpack.c.l.b16 %v1262
    %v1391 = vunpack.c.l.b16 %v1263
    %v1392 = vunpack.c.l.b16 %v1264
    %v1393 = vunpack.c.l.b16 %v1265
    %v1394 = vunpack.c.l.b16 %v1266
    %v1395 = vunpack.c.l.b16 %v1267
    %v1396 = vunpack.c.l.b16 %v1268
    %v1397 = vunpack.c.l.b16 %v1269
    %v1398 = vunpack.c.l.b16 %v1270
    %v1399 = vunpack.c.l.b16 %v1271
    %v1400 = vunpack.c.l.b16 %v1272
    %v1401 = vunpack.c.l.b16 %v1273
    %v1402 = vunpack.c.l.b16 %v1274
    %v1403 = vunpack.c.l.b16 %v1275
    %v1404 = vunpack.c.l.b16 %v1276
    %v1405 = vunpack.c.l.b16 %v1277
    %v1406 = vunpack.c.l.b16 %v1278
    %v1407 = vunpack.c.l.b16 %v1279
    %v1408 = vunpack.c.l.b16 %v1280
    %v1409 = vunpack.c.l.b16 %v1281
    %v1410 = vunpack.c.l.b16 %v1282
    %v1411 = vunpack.c.l.b16 %v1283
    %v1412 = vunpack.c.l.b16 %v1284
    %v1413 = vunpack.c.l.b16 %v1285
    %v1414 = vunpack.c.l.b16 %v1286
    %v1415 = vunpack.c.l.b16 %v1287
    %v1416 = vunpack.c.l.b16 %v1288
    %v1417 = vunpack.c.l.b16 %v1289
    %v1418 = vunpack.c.l.b16 %v1290
    %v1419 = vunpack.c.l.b16 %v1291
    %v1420 = vunpack.c.l.b16 %v1292
    %v1421 = vpack.c.b16 %v1358, %v1357
    %v1422 = vpack.c.b16 %v1360, %v1359
    %v1423 = vpack.c.b16 %v1362, %v1361
    %v1424 = vpack.c.b16 %v1364, %v1363
    %v1425 = vpack.c.b16 %v1366, %v1365
    %v1426 = vpack.c.b16 %v1368, %v1367
    %v1427 = vpack.c.b16 %v1370, %v1369
    %v1428 = vpack.c.b16 %v1372, %v1371
    %v1429 = vpack.c.b16 %v1374, %v1373
    %v1430 = vpack.c.b16 %v1376, %v1375
    %v1431 = vpack.c.b16 %v1378, %v1377
    %v1432 = vpack.c.b16 %v1380, %v1379
    %v1433 = vpack.c.b16 %v1382, %v1381
    %v1434 = vpack.c.b16 %v1384, %v1383
    %v1435 = vpack.c.b16 %v1386, %v1385
    %v1436 = vpack.c.b16 %v1388, %v1387
    %v1437 = vpack.c.b16 %v1390, %v1389
    %v1438 = vpack.c.b16 %v1392, %v1391
    %v1439 = vpack.c.b16 %v1394, %v1393
    %v1440 = vpack.c.b16 %v1396, %v1395
    %v1441 = vpack.c.b16 %v1398, %v1397
    %v1442 = vpack.c.b16 %v1400, %v1399
    %v1443 = vpack.c.b16 %v1402, %v1401
    %v1444 = vpack.c.b16 %v1404, %v1403
    %v1445 = vpack.c.b16 %v1406, %v1405
    %v1446 = vpack.c.b16 %v1408, %v1407
    %v1447 = vpack.c.b16 %v1410, %v1409
    %v1448 = vpack.c.b16 %v1412, %v1411
    %v1449 = vpack.c.b16 %v1414, %v1413
    %v1450 = vpack.c.b16 %v1416, %v1415
    %v1451 = vpack.c.b16 %v1418, %v1417
    %v1452 = vpack.c.b16 %v1420, %v1419
    %1485 = vmatprep.subr.bf16.mxu0 0
    %1486 = vmatpush1.bf16.msra.mxu0 %v1428
    %1487 = vmatprep.subr.bf16.mxu0 0
    %1488 = vmatpush1.bf16.msra.mxu0 %v1427
    %1489 = vmatprep.subr.bf16.mxu0 0
    %1490 = vmatpush1.bf16.msra.mxu0 %v1426
    %1491 = vmatprep.subr.bf16.mxu0 0
    %1492 = vmatpush1.bf16.msra.mxu0 %v1425
    %1493 = vmatprep.subr.bf16.mxu0 0
    %1494 = vmatpush1.bf16.msra.mxu0 %v1424
    %1495 = vmatprep.subr.bf16.mxu0 0
    %1496 = vmatpush1.bf16.msra.mxu0 %v1423
    %1497 = vmatprep.subr.bf16.mxu0 0
    %1498 = vmatpush1.bf16.msra.mxu0 %v1422
    %1499 = vmatprep.subr.bf16.mxu0 0
    %1500 = vmatpush1.bf16.msra.mxu0 %v1421
    %1501 = vmatprep.subr.bf16.mxu0 0
    %1502 = vmatpush2.bf16.msra.mxu0 %v1436
    %1503 = vmatprep.subr.bf16.mxu0 0
    %1504 = vmatpush2.bf16.msra.mxu0 %v1435
    %1505 = vmatprep.subr.bf16.mxu0 0
    %1506 = vmatpush2.bf16.msra.mxu0 %v1434
    %1507 = vmatprep.subr.bf16.mxu0 0
    %1508 = vmatpush2.bf16.msra.mxu0 %v1433
    %1509 = vmatprep.subr.bf16.mxu0 0
    %1510 = vmatpush2.bf16.msra.mxu0 %v1432
    %1511 = vmatprep.subr.bf16.mxu0 0
    %1512 = vmatpush2.bf16.msra.mxu0 %v1431
    %1513 = vmatprep.subr.bf16.mxu0 0
    %1514 = vmatpush2.bf16.msra.mxu0 %v1430
    %1515 = vmatprep.subr.bf16.mxu0 0
    %1516 = vmatpush2.bf16.msra.mxu0 %v1429
    %1517 = vmatprep.mubr.bf16.mxu0 %v1226
    %1518 = vmatmul.mubr.bf16.gmra.mxu0 %v1225
    %v1519 = vpop.f32.mrf.mxu0
    %v1520 = vadd.f32 0.0, %v1519
    %v1521 = vpop.f32.mrf.mxu0
    %v1522 = vpop.f32.mrf.mxu0
    %v1523 = vadd.f32 0.0, %v1522
    %v1524 = vpop.f32.mrf.mxu0
    %1525 = vdwg.mxu0
    %1526 = vmatprep.subr.bf16.mxu0 0
    %1527 = vmatpush1.bf16.msra.mxu0 %v1444
    %1528 = vmatprep.subr.bf16.mxu0 0
    %1529 = vmatpush1.bf16.msra.mxu0 %v1443
    %1530 = vmatprep.subr.bf16.mxu0 0
    %1531 = vmatpush1.bf16.msra.mxu0 %v1442
    %1532 = vmatprep.subr.bf16.mxu0 0
    %1533 = vmatpush1.bf16.msra.mxu0 %v1441
    %1534 = vmatprep.subr.bf16.mxu0 0
    %1535 = vmatpush1.bf16.msra.mxu0 %v1440
    %1536 = vmatprep.subr.bf16.mxu0 0
    %1537 = vmatpush1.bf16.msra.mxu0 %v1439
    %1538 = vmatprep.subr.bf16.mxu0 0
    %1539 = vmatpush1.bf16.msra.mxu0 %v1438
    %1540 = vmatprep.subr.bf16.mxu0 0
    %1541 = vmatpush1.bf16.msra.mxu0 %v1437
    %1542 = vmatprep.subr.bf16.mxu0 0
    %1543 = vmatpush2.bf16.msra.mxu0 %v1452
    %1544 = vmatprep.subr.bf16.mxu0 0
    %1545 = vmatpush2.bf16.msra.mxu0 %v1451
    %1546 = vmatprep.subr.bf16.mxu0 0
    %1547 = vmatpush2.bf16.msra.mxu0 %v1450
    %1548 = vmatprep.subr.bf16.mxu0 0
    %1549 = vmatpush2.bf16.msra.mxu0 %v1449
    %1550 = vmatprep.subr.bf16.mxu0 0
    %1551 = vmatpush2.bf16.msra.mxu0 %v1448
    %1552 = vmatprep.subr.bf16.mxu0 0
    %1553 = vmatpush2.bf16.msra.mxu0 %v1447
    %1554 = vmatprep.subr.bf16.mxu0 0
    %1555 = vmatpush2.bf16.msra.mxu0 %v1446
    %1556 = vmatprep.subr.bf16.mxu0 0
    %1557 = vmatpush2.bf16.msra.mxu0 %v1445
    %1558 = vmatprep.mubr.bf16.mxu0 %v1228
    %1559 = vmatmul.mubr.bf16.gmra.mxu0 %v1227
    %v1560 = vpop.f32.mrf.mxu0
    %v1561 = vadd.f32 %v1520, %v1560
    %v1562 = vpop.f32.mrf.mxu0
    %v1563 = vpop.f32.mrf.mxu0
    %v1564 = vadd.f32 %v1523, %v1563
    %v1565 = vpop.f32.mrf.mxu0
    %1566 = vdwg.mxu0
    %v1631 = vunpack.c.l.b16 %v997
    %v1632 = vunpack.c.l.b16 %v998
    %v1633 = vunpack.c.l.b16 %v999
    %v1634 = vunpack.c.l.b16 %v1000
    %v1635 = vunpack.c.l.b16 %v1001
    %v1636 = vunpack.c.l.b16 %v1002
    %v1637 = vunpack.c.l.b16 %v1003
    %v1638 = vunpack.c.l.b16 %v1004
    %v1639 = vunpack.c.l.b16 %v1005
    %v1640 = vunpack.c.l.b16 %v1006
    %v1641 = vunpack.c.l.b16 %v1007
    %v1642 = vunpack.c.l.b16 %v1008
    %v1643 = vunpack.c.l.b16 %v1009
    %v1644 = vunpack.c.l.b16 %v1010
    %v1645 = vunpack.c.l.b16 %v1011
    %v1646 = vunpack.c.l.b16 %v1012
    %v1647 = vunpack.c.l.b16 %v1013
    %v1648 = vunpack.c.l.b16 %v1014
    %v1649 = vunpack.c.l.b16 %v1015
    %v1650 = vunpack.c.l.b16 %v1016
    %v1651 = vunpack.c.l.b16 %v1017
    %v1652 = vunpack.c.l.b16 %v1018
    %v1653 = vunpack.c.l.b16 %v1019
    %v1654 = vunpack.c.l.b16 %v1020
    %v1655 = vunpack.c.l.b16 %v1021
    %v1656 = vunpack.c.l.b16 %v1022
    %v1657 = vunpack.c.l.b16 %v1023
    %v1658 = vunpack.c.l.b16 %v1024
    %v1659 = vunpack.c.l.b16 %v1025
    %v1660 = vunpack.c.l.b16 %v1026
    %v1661 = vunpack.c.l.b16 %v1027
    %v1662 = vunpack.c.l.b16 %v1028
    %v1663 = vunpack.c.l.b16 %v1029
    %v1664 = vunpack.c.l.b16 %v1030
    %v1665 = vunpack.c.l.b16 %v1031
    %v1666 = vunpack.c.l.b16 %v1032
    %v1667 = vunpack.c.l.b16 %v1033
    %v1668 = vunpack.c.l.b16 %v1034
    %v1669 = vunpack.c.l.b16 %v1035
    %v1670 = vunpack.c.l.b16 %v1036
    %v1671 = vunpack.c.l.b16 %v1037
    %v1672 = vunpack.c.l.b16 %v1038
    %v1673 = vunpack.c.l.b16 %v1039
    %v1674 = vunpack.c.l.b16 %v1040
    %v1675 = vunpack.c.l.b16 %v1041
    %v1676 = vunpack.c.l.b16 %v1042
    %v1677 = vunpack.c.l.b16 %v1043
    %v1678 = vunpack.c.l.b16 %v1044
    %v1679 = vunpack.c.l.b16 %v1045
    %v1680 = vunpack.c.l.b16 %v1046
    %v1681 = vunpack.c.l.b16 %v1047
    %v1682 = vunpack.c.l.b16 %v1048
    %v1683 = vunpack.c.l.b16 %v1049
    %v1684 = vunpack.c.l.b16 %v1050
    %v1685 = vunpack.c.l.b16 %v1051
    %v1686 = vunpack.c.l.b16 %v1052
    %v1687 = vunpack.c.l.b16 %v1053
    %v1688 = vunpack.c.l.b16 %v1054
    %v1689 = vunpack.c.l.b16 %v1055
    %v1690 = vunpack.c.l.b16 %v1056
    %v1691 = vunpack.c.l.b16 %v1057
    %v1692 = vunpack.c.l.b16 %v1058
    %v1693 = vunpack.c.l.b16 %v1059
    %v1694 = vunpack.c.l.b16 %v1060
    %v1695 = vpack.c.b16 %v1632, %v1631
    %v1696 = vpack.c.b16 %v1634, %v1633
    %v1697 = vpack.c.b16 %v1636, %v1635
    %v1698 = vpack.c.b16 %v1638, %v1637
    %v1699 = vpack.c.b16 %v1640, %v1639
    %v1700 = vpack.c.b16 %v1642, %v1641
    %v1701 = vpack.c.b16 %v1644, %v1643
    %v1702 = vpack.c.b16 %v1646, %v1645
    %v1703 = vpack.c.b16 %v1648, %v1647
    %v1704 = vpack.c.b16 %v1650, %v1649
    %v1705 = vpack.c.b16 %v1652, %v1651
    %v1706 = vpack.c.b16 %v1654, %v1653
    %v1707 = vpack.c.b16 %v1656, %v1655
    %v1708 = vpack.c.b16 %v1658, %v1657
    %v1709 = vpack.c.b16 %v1660, %v1659
    %v1710 = vpack.c.b16 %v1662, %v1661
    %v1711 = vpack.c.b16 %v1664, %v1663
    %v1712 = vpack.c.b16 %v1666, %v1665
    %v1713 = vpack.c.b16 %v1668, %v1667
    %v1714 = vpack.c.b16 %v1670, %v1669
    %v1715 = vpack.c.b16 %v1672, %v1671
    %v1716 = vpack.c.b16 %v1674, %v1673
    %v1717 = vpack.c.b16 %v1676, %v1675
    %v1718 = vpack.c.b16 %v1678, %v1677
    %v1719 = vpack.c.b16 %v1680, %v1679
    %v1720 = vpack.c.b16 %v1682, %v1681
    %v1721 = vpack.c.b16 %v1684, %v1683
    %v1722 = vpack.c.b16 %v1686, %v1685
    %v1723 = vpack.c.b16 %v1688, %v1687
    %v1724 = vpack.c.b16 %v1690, %v1689
    %v1725 = vpack.c.b16 %v1692, %v1691
    %v1726 = vpack.c.b16 %v1694, %v1693
    %1759 = vmatprep.subr.bf16.mxu0 0
    %1760 = vmatpush1.bf16.msra.mxu0 %v1702
    %1761 = vmatprep.subr.bf16.mxu0 0
    %1762 = vmatpush1.bf16.msra.mxu0 %v1701
    %1763 = vmatprep.subr.bf16.mxu0 0
    %1764 = vmatpush1.bf16.msra.mxu0 %v1700
    %1765 = vmatprep.subr.bf16.mxu0 0
    %1766 = vmatpush1.bf16.msra.mxu0 %v1699
    %1767 = vmatprep.subr.bf16.mxu0 0
    %1768 = vmatpush1.bf16.msra.mxu0 %v1698
    %1769 = vmatprep.subr.bf16.mxu0 0
    %1770 = vmatpush1.bf16.msra.mxu0 %v1697
    %1771 = vmatprep.subr.bf16.mxu0 0
    %1772 = vmatpush1.bf16.msra.mxu0 %v1696
    %1773 = vmatprep.subr.bf16.mxu0 0
    %1774 = vmatpush1.bf16.msra.mxu0 %v1695
    %1775 = vmatprep.subr.bf16.mxu0 0
    %1776 = vmatpush2.bf16.msra.mxu0 %v1710
    %1777 = vmatprep.subr.bf16.mxu0 0
    %1778 = vmatpush2.bf16.msra.mxu0 %v1709
    %1779 = vmatprep.subr.bf16.mxu0 0
    %1780 = vmatpush2.bf16.msra.mxu0 %v1708
    %1781 = vmatprep.subr.bf16.mxu0 0
    %1782 = vmatpush2.bf16.msra.mxu0 %v1707
    %1783 = vmatprep.subr.bf16.mxu0 0
    %1784 = vmatpush2.bf16.msra.mxu0 %v1706
    %1785 = vmatprep.subr.bf16.mxu0 0
    %1786 = vmatpush2.bf16.msra.mxu0 %v1705
    %1787 = vmatprep.subr.bf16.mxu0 0
    %1788 = vmatpush2.bf16.msra.mxu0 %v1704
    %1789 = vmatprep.subr.bf16.mxu0 0
    %1790 = vmatpush2.bf16.msra.mxu0 %v1703
    %1791 = vmatprep.mubr.bf16.mxu0 %v994
    %1792 = vmatmul.mubr.bf16.gmra.mxu0 %v993
    %v1793 = vpop.f32.mrf.mxu0
    %v1794 = vadd.f32 %v1561, %v1793
    %v1795 = vpop.f32.mrf.mxu0
    %v1796 = vpop.f32.mrf.mxu0
    %v1797 = vadd.f32 %v1564, %v1796
    %v1798 = vpop.f32.mrf.mxu0
    %1799 = vdwg.mxu0
    %1800 = vmatprep.subr.bf16.mxu0 0
    %1801 = vmatpush1.bf16.msra.mxu0 %v1718
    %1802 = vmatprep.subr.bf16.mxu0 0
    %1803 = vmatpush1.bf16.msra.mxu0 %v1717
    %1804 = vmatprep.subr.bf16.mxu0 0
    %1805 = vmatpush1.bf16.msra.mxu0 %v1716
    %1806 = vmatprep.subr.bf16.mxu0 0
    %1807 = vmatpush1.bf16.msra.mxu0 %v1715
    %1808 = vmatprep.subr.bf16.mxu0 0
    %1809 = vmatpush1.bf16.msra.mxu0 %v1714
    %1810 = vmatprep.subr.bf16.mxu0 0
    %1811 = vmatpush1.bf16.msra.mxu0 %v1713
    %1812 = vmatprep.subr.bf16.mxu0 0
    %1813 = vmatpush1.bf16.msra.mxu0 %v1712
    %1814 = vmatprep.subr.bf16.mxu0 0
    %1815 = vmatpush1.bf16.msra.mxu0 %v1711
    %1816 = vmatprep.subr.bf16.mxu0 0
    %1817 = vmatpush2.bf16.msra.mxu0 %v1726
    %1818 = vmatprep.subr.bf16.mxu0 0
    %1819 = vmatpush2.bf16.msra.mxu0 %v1725
    %1820 = vmatprep.subr.bf16.mxu0 0
    %1821 = vmatpush2.bf16.msra.mxu0 %v1724
    %1822 = vmatprep.subr.bf16.mxu0 0
    %1823 = vmatpush2.bf16.msra.mxu0 %v1723
    %1824 = vmatprep.subr.bf16.mxu0 0
    %1825 = vmatpush2.bf16.msra.mxu0 %v1722
    %1826 = vmatprep.subr.bf16.mxu0 0
    %1827 = vmatpush2.bf16.msra.mxu0 %v1721
    %1828 = vmatprep.subr.bf16.mxu0 0
    %1829 = vmatpush2.bf16.msra.mxu0 %v1720
    %1830 = vmatprep.subr.bf16.mxu0 0
    %1831 = vmatpush2.bf16.msra.mxu0 %v1719
    %1832 = vmatprep.mubr.bf16.mxu0 %v996
    %1833 = vmatmul.mubr.bf16.gmra.mxu0 %v995
    %v1834 = vpop.f32.mrf.mxu0
    %v1835 = vadd.f32 %v1794, %v1834
    %v1836 = vpop.f32.mrf.mxu0
    %v1837 = vpop.f32.mrf.mxu0
    %v1838 = vadd.f32 %v1797, %v1837
    %v1839 = vpop.f32.mrf.mxu0
    %1840 = vdwg.mxu0
    %v1841 = vld [vmem:[%s10 + $0x20] sm:$0xff]
    %v1842 = vld [vmem:[%s10 + $0x28] sm:$0xff]
    %v1843 = vld [vmem:[%s10 + $0x60] sm:$0xff]
    %v1844 = vld [vmem:[%s10 + $0x68] sm:$0xff]
    %v1845 = vld [vmem:[%s10 + $0xa0] sm:$0xff]
    %v1846 = vld [vmem:[%s10 + $0xa8] sm:$0xff]
    %v1847 = vld [vmem:[%s11 + $0x8] sm:$0xf]
    %v1849 = vlaneseq
    %v1850 = vshrl.u32 %v1849, 7
    %v1851 = vsub.s32 0, %v1850
    %v1852 = vrot.slane %v1847, %v1851
    %v1853 = vlaneseq
    %v1854 = vshrl.u32 %v1853, 7
    %v1855 = vsub.s32 1, %v1854
    %v1856 = vrot.slane %v1847, %v1855
    %v1857 = vlaneseq
    %v1858 = vshrl.u32 %v1857, 7
    %v1859 = vsub.s32 2, %v1858
    %v1860 = vrot.slane %v1847, %v1859
    %v1861 = vlaneseq
    %v1862 = vshrl.u32 %v1861, 7
    %v1863 = vsub.s32 3, %v1862
    %v1864 = vrot.slane %v1847, %v1863
    %v1875 = vunpack.c.l.b16 %v1841
    %v1876 = vunpack.c.h.b16 %v1841
    %v1877 = vunpack.c.l.b16 %v1842
    %v1878 = vunpack.c.h.b16 %v1842
    %v1879 = vunpack.c.l.b16 %v1843
    %v1880 = vunpack.c.h.b16 %v1843
    %v1881 = vunpack.c.l.b16 %v1844
    %v1882 = vunpack.c.h.b16 %v1844
    %v1883 = vunpack.c.l.b16 %v1845
    %v1884 = vunpack.c.h.b16 %v1845
    %v1885 = vunpack.c.l.b16 %v1846
    %v1886 = vunpack.c.h.b16 %v1846
    %v1887 = vpack.c.b16 %v1879, %v1875
    %v1888 = vpack.c.b16 %v1880, %v1876
    %v1889 = vpack.c.b16 %v1881, %v1877
    %v1890 = vpack.c.b16 %v1882, %v1878
    %v1891 = vpack.c.b16 %v1883, %v1883
    %v1892 = vpack.c.b16 %v1884, %v1884
    %v1893 = vpack.c.b16 %v1885, %v1885
    %v1894 = vpack.c.b16 %v1886, %v1886
    %v1900 = vsel %vm66, %v1891, 0
    %v1903 = vsel %vm66, %v1892, 0
    %v1906 = vsel %vm66, %v1893, 0
    %v1909 = vsel %vm66, %v1894, 0
    %1911 = vmatprep.subr.bf16.mxu0 0
    %1912 = vmatpush1.bf16.msra.mxu0 0
    %1913 = vmatprep.subr.bf16.mxu0 0
    %1914 = vmatpush1.bf16.msra.mxu0 0
    %1915 = vmatprep.subr.bf16.mxu0 0
    %1916 = vmatpush1.bf16.msra.mxu0 0
    %1917 = vmatprep.subr.bf16.mxu0 0
    %1918 = vmatpush1.bf16.msra.mxu0 0
    %1919 = vmatprep.subr.bf16.mxu0 0
    %1920 = vmatpush1.bf16.msra.mxu0 0
    %1921 = vmatprep.subr.bf16.mxu0 0
    %1922 = vmatpush1.bf16.msra.mxu0 0
    %1923 = vmatprep.subr.bf16.mxu0 %v1903
    %1924 = vmatpush1.bf16.msra.mxu0 %v1900
    %1925 = vmatprep.subr.bf16.mxu0 %v1888
    %1926 = vmatpush1.bf16.msra.mxu0 %v1887
    %1927 = vmatprep.subr.bf16.mxu0 0
    %1928 = vmatpush2.bf16.msra.mxu0 0
    %1929 = vmatprep.subr.bf16.mxu0 0
    %1930 = vmatpush2.bf16.msra.mxu0 0
    %1931 = vmatprep.subr.bf16.mxu0 0
    %1932 = vmatpush2.bf16.msra.mxu0 0
    %1933 = vmatprep.subr.bf16.mxu0 0
    %1934 = vmatpush2.bf16.msra.mxu0 0
    %1935 = vmatprep.subr.bf16.mxu0 0
    %1936 = vmatpush2.bf16.msra.mxu0 0
    %1937 = vmatprep.subr.bf16.mxu0 0
    %1938 = vmatpush2.bf16.msra.mxu0 0
    %1939 = vmatprep.subr.bf16.mxu0 0
    %1940 = vmatpush2.bf16.msra.mxu0 0
    %1941 = vmatprep.subr.bf16.mxu0 0
    %1942 = vmatpush2.bf16.msra.mxu0 0
    %1943 = vmatprep.mubr.bf16.mxu0 0
    %1944 = vmatmul.mubr.bf16.gmra.mxu0 %v885
    %v1945 = vpop.f32.mrf.mxu0
    %v1946 = vadd.f32 %v1852, %v1945
    %v1947 = vpop.f32.mrf.mxu0
    %v1948 = vadd.f32 %v1856, %v1947
    %v1949 = vpop.f32.mrf.mxu0
    %v1950 = vadd.f32 %v1852, %v1949
    %v1951 = vpop.f32.mrf.mxu0
    %v1952 = vadd.f32 %v1856, %v1951
    %1953 = vdwg.mxu0
    %1954 = vmatprep.subr.bf16.mxu0 0
    %1955 = vmatpush1.bf16.msra.mxu0 0
    %1956 = vmatprep.subr.bf16.mxu0 0
    %1957 = vmatpush1.bf16.msra.mxu0 0
    %1958 = vmatprep.subr.bf16.mxu0 0
    %1959 = vmatpush1.bf16.msra.mxu0 0
    %1960 = vmatprep.subr.bf16.mxu0 0
    %1961 = vmatpush1.bf16.msra.mxu0 0
    %1962 = vmatprep.subr.bf16.mxu0 0
    %1963 = vmatpush1.bf16.msra.mxu0 0
    %1964 = vmatprep.subr.bf16.mxu0 0
    %1965 = vmatpush1.bf16.msra.mxu0 0
    %1966 = vmatprep.subr.bf16.mxu0 %v1909
    %1967 = vmatpush1.bf16.msra.mxu0 %v1906
    %1968 = vmatprep.subr.bf16.mxu0 %v1890
    %1969 = vmatpush1.bf16.msra.mxu0 %v1889
    %1970 = vmatprep.subr.bf16.mxu0 0
    %1971 = vmatpush2.bf16.msra.mxu0 0
    %1972 = vmatprep.subr.bf16.mxu0 0
    %1973 = vmatpush2.bf16.msra.mxu0 0
    %1974 = vmatprep.subr.bf16.mxu0 0
    %1975 = vmatpush2.bf16.msra.mxu0 0
    %1976 = vmatprep.subr.bf16.mxu0 0
    %1977 = vmatpush2.bf16.msra.mxu0 0
    %1978 = vmatprep.subr.bf16.mxu0 0
    %1979 = vmatpush2.bf16.msra.mxu0 0
    %1980 = vmatprep.subr.bf16.mxu0 0
    %1981 = vmatpush2.bf16.msra.mxu0 0
    %1982 = vmatprep.subr.bf16.mxu0 0
    %1983 = vmatpush2.bf16.msra.mxu0 0
    %1984 = vmatprep.subr.bf16.mxu0 0
    %1985 = vmatpush2.bf16.msra.mxu0 0
    %1986 = vmatprep.mubr.bf16.mxu0 0
    %1987 = vmatmul.mubr.bf16.gmra.mxu0 %v885
    %v1988 = vpop.f32.mrf.mxu0
    %v1989 = vadd.f32 %v1860, %v1988
    %v1990 = vpop.f32.mrf.mxu0
    %v1991 = vadd.f32 %v1864, %v1990
    %v1992 = vpop.f32.mrf.mxu0
    %v1993 = vadd.f32 %v1860, %v1992
    %v1994 = vpop.f32.mrf.mxu0
    %v1995 = vadd.f32 %v1864, %v1994
    %1996 = vdwg.mxu0
    %v1997 = vmax.f32 %v1946, 0.0
    %v1998 = vmax.f32 %v1948, 0.0
    %v1999 = vmax.f32 %v1989, 0.0
    %v2000 = vmax.f32 %v1991, 0.0
    %v2001 = vmax.f32 %v1950, 0.0
    %v2002 = vmax.f32 %v1952, 0.0
    %v2003 = vmax.f32 %v1993, 0.0
    %v2004 = vmax.f32 %v1995, 0.0
    %v2005 = vpack.c.bf16 %v2001, %v1997
    %v2006 = vpack.c.bf16 %v2002, %v1998
    %v2007 = vpack.c.bf16 %v2003, %v1999
    %v2008 = vpack.c.bf16 %v2004, %v2000
    %v2009 = vld [vmem:[%s12 + $0x200] sm:$0xf]
    %v2010 = vld [vmem:[%s12 + $0x204] sm:$0xf]
    %v2011 = vld [vmem:[%s12 + $0x208] sm:$0xf]
    %v2012 = vld [vmem:[%s12 + $0x20c] sm:$0xf]
    %v2013 = vld [vmem:[%s12 + $0x210] sm:$0xf]
    %v2014 = vld [vmem:[%s12 + $0x214] sm:$0xf]
    %v2015 = vld [vmem:[%s12 + $0x218] sm:$0xf]
    %v2016 = vld [vmem:[%s12 + $0x21c] sm:$0xf]
    %v2017 = vld [vmem:[%s12 + $0x220] sm:$0xf]
    %v2018 = vld [vmem:[%s12 + $0x224] sm:$0xf]
    %v2019 = vld [vmem:[%s12 + $0x228] sm:$0xf]
    %v2020 = vld [vmem:[%s12 + $0x22c] sm:$0xf]
    %v2021 = vld [vmem:[%s12 + $0x230] sm:$0xf]
    %v2022 = vld [vmem:[%s12 + $0x234] sm:$0xf]
    %v2023 = vld [vmem:[%s12 + $0x238] sm:$0xf]
    %v2024 = vld [vmem:[%s12 + $0x23c] sm:$0xf]
    %v2025 = vld [vmem:[%s12 + $0x240] sm:$0xf]
    %v2026 = vld [vmem:[%s12 + $0x244] sm:$0xf]
    %v2027 = vld [vmem:[%s12 + $0x248] sm:$0xf]
    %v2028 = vld [vmem:[%s12 + $0x24c] sm:$0xf]
    %v2029 = vld [vmem:[%s12 + $0x250] sm:$0xf]
    %v2030 = vld [vmem:[%s12 + $0x254] sm:$0xf]
    %v2031 = vld [vmem:[%s12 + $0x258] sm:$0xf]
    %v2032 = vld [vmem:[%s12 + $0x25c] sm:$0xf]
    %v2033 = vld [vmem:[%s12 + $0x260] sm:$0xf]
    %v2034 = vld [vmem:[%s12 + $0x264] sm:$0xf]
    %v2035 = vld [vmem:[%s12 + $0x268] sm:$0xf]
    %v2036 = vld [vmem:[%s12 + $0x26c] sm:$0xf]
    %v2037 = vld [vmem:[%s12 + $0x270] sm:$0xf]
    %v2038 = vld [vmem:[%s12 + $0x274] sm:$0xf]
    %v2039 = vld [vmem:[%s12 + $0x278] sm:$0xf]
    %v2040 = vld [vmem:[%s12 + $0x27c] sm:$0xf]
    %v2041 = vld [vmem:[%s12 + $0x280] sm:$0xf]
    %v2042 = vld [vmem:[%s12 + $0x284] sm:$0xf]
    %v2043 = vld [vmem:[%s12 + $0x288] sm:$0xf]
    %v2044 = vld [vmem:[%s12 + $0x28c] sm:$0xf]
    %v2045 = vld [vmem:[%s12 + $0x290] sm:$0xf]
    %v2046 = vld [vmem:[%s12 + $0x294] sm:$0xf]
    %v2047 = vld [vmem:[%s12 + $0x298] sm:$0xf]
    %v2048 = vld [vmem:[%s12 + $0x29c] sm:$0xf]
    %v2049 = vld [vmem:[%s12 + $0x2a0] sm:$0xf]
    %v2050 = vld [vmem:[%s12 + $0x2a4] sm:$0xf]
    %v2051 = vld [vmem:[%s12 + $0x2a8] sm:$0xf]
    %v2052 = vld [vmem:[%s12 + $0x2ac] sm:$0xf]
    %v2053 = vld [vmem:[%s12 + $0x2b0] sm:$0xf]
    %v2054 = vld [vmem:[%s12 + $0x2b4] sm:$0xf]
    %v2055 = vld [vmem:[%s12 + $0x2b8] sm:$0xf]
    %v2056 = vld [vmem:[%s12 + $0x2bc] sm:$0xf]
    %v2057 = vld [vmem:[%s12 + $0x2c0] sm:$0xf]
    %v2058 = vld [vmem:[%s12 + $0x2c4] sm:$0xf]
    %v2059 = vld [vmem:[%s12 + $0x2c8] sm:$0xf]
    %v2060 = vld [vmem:[%s12 + $0x2cc] sm:$0xf]
    %v2061 = vld [vmem:[%s12 + $0x2d0] sm:$0xf]
    %v2062 = vld [vmem:[%s12 + $0x2d4] sm:$0xf]
    %v2063 = vld [vmem:[%s12 + $0x2d8] sm:$0xf]
    %v2064 = vld [vmem:[%s12 + $0x2dc] sm:$0xf]
    %v2065 = vld [vmem:[%s12 + $0x2e0] sm:$0xf]
    %v2066 = vld [vmem:[%s12 + $0x2e4] sm:$0xf]
    %v2067 = vld [vmem:[%s12 + $0x2e8] sm:$0xf]
    %v2068 = vld [vmem:[%s12 + $0x2ec] sm:$0xf]
    %v2069 = vld [vmem:[%s12 + $0x2f0] sm:$0xf]
    %v2070 = vld [vmem:[%s12 + $0x2f4] sm:$0xf]
    %v2071 = vld [vmem:[%s12 + $0x2f8] sm:$0xf]
    %v2072 = vld [vmem:[%s12 + $0x2fc] sm:$0xf]
    %v2137 = vunpack.c.l.b16 %v2009
    %v2138 = vunpack.c.l.b16 %v2010
    %v2139 = vunpack.c.l.b16 %v2011
    %v2140 = vunpack.c.l.b16 %v2012
    %v2141 = vunpack.c.l.b16 %v2013
    %v2142 = vunpack.c.l.b16 %v2014
    %v2143 = vunpack.c.l.b16 %v2015
    %v2144 = vunpack.c.l.b16 %v2016
    %v2145 = vunpack.c.l.b16 %v2017
    %v2146 = vunpack.c.l.b16 %v2018
    %v2147 = vunpack.c.l.b16 %v2019
    %v2148 = vunpack.c.l.b16 %v2020
    %v2149 = vunpack.c.l.b16 %v2021
    %v2150 = vunpack.c.l.b16 %v2022
    %v2151 = vunpack.c.l.b16 %v2023
    %v2152 = vunpack.c.l.b16 %v2024
    %v2153 = vunpack.c.l.b16 %v2025
    %v2154 = vunpack.c.l.b16 %v2026
    %v2155 = vunpack.c.l.b16 %v2027
    %v2156 = vunpack.c.l.b16 %v2028
    %v2157 = vunpack.c.l.b16 %v2029
    %v2158 = vunpack.c.l.b16 %v2030
    %v2159 = vunpack.c.l.b16 %v2031
    %v2160 = vunpack.c.l.b16 %v2032
    %v2161 = vunpack.c.l.b16 %v2033
    %v2162 = vunpack.c.l.b16 %v2034
    %v2163 = vunpack.c.l.b16 %v2035
    %v2164 = vunpack.c.l.b16 %v2036
    %v2165 = vunpack.c.l.b16 %v2037
    %v2166 = vunpack.c.l.b16 %v2038
    %v2167 = vunpack.c.l.b16 %v2039
    %v2168 = vunpack.c.l.b16 %v2040
    %v2169 = vunpack.c.l.b16 %v2041
    %v2170 = vunpack.c.l.b16 %v2042
    %v2171 = vunpack.c.l.b16 %v2043
    %v2172 = vunpack.c.l.b16 %v2044
    %v2173 = vunpack.c.l.b16 %v2045
    %v2174 = vunpack.c.l.b16 %v2046
    %v2175 = vunpack.c.l.b16 %v2047
    %v2176 = vunpack.c.l.b16 %v2048
    %v2177 = vunpack.c.l.b16 %v2049
    %v2178 = vunpack.c.l.b16 %v2050
    %v2179 = vunpack.c.l.b16 %v2051
    %v2180 = vunpack.c.l.b16 %v2052
    %v2181 = vunpack.c.l.b16 %v2053
    %v2182 = vunpack.c.l.b16 %v2054
    %v2183 = vunpack.c.l.b16 %v2055
    %v2184 = vunpack.c.l.b16 %v2056
    %v2185 = vunpack.c.l.b16 %v2057
    %v2186 = vunpack.c.l.b16 %v2058
    %v2187 = vunpack.c.l.b16 %v2059
    %v2188 = vunpack.c.l.b16 %v2060
    %v2189 = vunpack.c.l.b16 %v2061
    %v2190 = vunpack.c.l.b16 %v2062
    %v2191 = vunpack.c.l.b16 %v2063
    %v2192 = vunpack.c.l.b16 %v2064
    %v2193 = vunpack.c.l.b16 %v2065
    %v2194 = vunpack.c.l.b16 %v2066
    %v2195 = vunpack.c.l.b16 %v2067
    %v2196 = vunpack.c.l.b16 %v2068
    %v2197 = vunpack.c.l.b16 %v2069
    %v2198 = vunpack.c.l.b16 %v2070
    %v2199 = vunpack.c.l.b16 %v2071
    %v2200 = vunpack.c.l.b16 %v2072
    %v2201 = vpack.c.b16 %v2138, %v2137
    %v2202 = vpack.c.b16 %v2140, %v2139
    %v2203 = vpack.c.b16 %v2142, %v2141
    %v2204 = vpack.c.b16 %v2144, %v2143
    %v2205 = vpack.c.b16 %v2146, %v2145
    %v2206 = vpack.c.b16 %v2148, %v2147
    %v2207 = vpack.c.b16 %v2150, %v2149
    %v2208 = vpack.c.b16 %v2152, %v2151
    %v2209 = vpack.c.b16 %v2154, %v2153
    %v2210 = vpack.c.b16 %v2156, %v2155
    %v2211 = vpack.c.b16 %v2158, %v2157
    %v2212 = vpack.c.b16 %v2160, %v2159
    %v2213 = vpack.c.b16 %v2162, %v2161
    %v2214 = vpack.c.b16 %v2164, %v2163
    %v2215 = vpack.c.b16 %v2166, %v2165
    %v2216 = vpack.c.b16 %v2168, %v2167
    %v2217 = vpack.c.b16 %v2170, %v2169
    %v2218 = vpack.c.b16 %v2172, %v2171
    %v2219 = vpack.c.b16 %v2174, %v2173
    %v2220 = vpack.c.b16 %v2176, %v2175
    %v2221 = vpack.c.b16 %v2178, %v2177
    %v2222 = vpack.c.b16 %v2180, %v2179
    %v2223 = vpack.c.b16 %v2182, %v2181
    %v2224 = vpack.c.b16 %v2184, %v2183
    %v2225 = vpack.c.b16 %v2186, %v2185
    %v2226 = vpack.c.b16 %v2188, %v2187
    %v2227 = vpack.c.b16 %v2190, %v2189
    %v2228 = vpack.c.b16 %v2192, %v2191
    %v2229 = vpack.c.b16 %v2194, %v2193
    %v2230 = vpack.c.b16 %v2196, %v2195
    %v2231 = vpack.c.b16 %v2198, %v2197
    %v2232 = vpack.c.b16 %v2200, %v2199
    %2265 = vmatprep.subr.bf16.mxu0 0
    %2266 = vmatpush1.bf16.msra.mxu0 %v2208
    %2267 = vmatprep.subr.bf16.mxu0 0
    %2268 = vmatpush1.bf16.msra.mxu0 %v2207
    %2269 = vmatprep.subr.bf16.mxu0 0
    %2270 = vmatpush1.bf16.msra.mxu0 %v2206
    %2271 = vmatprep.subr.bf16.mxu0 0
    %2272 = vmatpush1.bf16.msra.mxu0 %v2205
    %2273 = vmatprep.subr.bf16.mxu0 0
    %2274 = vmatpush1.bf16.msra.mxu0 %v2204
    %2275 = vmatprep.subr.bf16.mxu0 0
    %2276 = vmatpush1.bf16.msra.mxu0 %v2203
    %2277 = vmatprep.subr.bf16.mxu0 0
    %2278 = vmatpush1.bf16.msra.mxu0 %v2202
    %2279 = vmatprep.subr.bf16.mxu0 0
    %2280 = vmatpush1.bf16.msra.mxu0 %v2201
    %2281 = vmatprep.subr.bf16.mxu0 0
    %2282 = vmatpush2.bf16.msra.mxu0 %v2216
    %2283 = vmatprep.subr.bf16.mxu0 0
    %2284 = vmatpush2.bf16.msra.mxu0 %v2215
    %2285 = vmatprep.subr.bf16.mxu0 0
    %2286 = vmatpush2.bf16.msra.mxu0 %v2214
    %2287 = vmatprep.subr.bf16.mxu0 0
    %2288 = vmatpush2.bf16.msra.mxu0 %v2213
    %2289 = vmatprep.subr.bf16.mxu0 0
    %2290 = vmatpush2.bf16.msra.mxu0 %v2212
    %2291 = vmatprep.subr.bf16.mxu0 0
    %2292 = vmatpush2.bf16.msra.mxu0 %v2211
    %2293 = vmatprep.subr.bf16.mxu0 0
    %2294 = vmatpush2.bf16.msra.mxu0 %v2210
    %2295 = vmatprep.subr.bf16.mxu0 0
    %2296 = vmatpush2.bf16.msra.mxu0 %v2209
    %2297 = vmatprep.mubr.bf16.mxu0 %v2006
    %2298 = vmatmul.mubr.bf16.gmra.mxu0 %v2005
    %v2299 = vpop.f32.mrf.mxu0
    %v2300 = vadd.f32 0.0, %v2299
    %v2301 = vpop.f32.mrf.mxu0
    %v2302 = vpop.f32.mrf.mxu0
    %v2303 = vadd.f32 0.0, %v2302
    %v2304 = vpop.f32.mrf.mxu0
    %2305 = vdwg.mxu0
    %2306 = vmatprep.subr.bf16.mxu0 0
    %2307 = vmatpush1.bf16.msra.mxu0 %v2224
    %2308 = vmatprep.subr.bf16.mxu0 0
    %2309 = vmatpush1.bf16.msra.mxu0 %v2223
    %2310 = vmatprep.subr.bf16.mxu0 0
    %2311 = vmatpush1.bf16.msra.mxu0 %v2222
    %2312 = vmatprep.subr.bf16.mxu0 0
    %2313 = vmatpush1.bf16.msra.mxu0 %v2221
    %2314 = vmatprep.subr.bf16.mxu0 0
    %2315 = vmatpush1.bf16.msra.mxu0 %v2220
    %2316 = vmatprep.subr.bf16.mxu0 0
    %2317 = vmatpush1.bf16.msra.mxu0 %v2219
    %2318 = vmatprep.subr.bf16.mxu0 0
    %2319 = vmatpush1.bf16.msra.mxu0 %v2218
    %2320 = vmatprep.subr.bf16.mxu0 0
    %2321 = vmatpush1.bf16.msra.mxu0 %v2217
    %2322 = vmatprep.subr.bf16.mxu0 0
    %2323 = vmatpush2.bf16.msra.mxu0 %v2232
    %2324 = vmatprep.subr.bf16.mxu0 0
    %2325 = vmatpush2.bf16.msra.mxu0 %v2231
    %2326 = vmatprep.subr.bf16.mxu0 0
    %2327 = vmatpush2.bf16.msra.mxu0 %v2230
    %2328 = vmatprep.subr.bf16.mxu0 0
    %2329 = vmatpush2.bf16.msra.mxu0 %v2229
    %2330 = vmatprep.subr.bf16.mxu0 0
    %2331 = vmatpush2.bf16.msra.mxu0 %v2228
    %2332 = vmatprep.subr.bf16.mxu0 0
    %2333 = vmatpush2.bf16.msra.mxu0 %v2227
    %2334 = vmatprep.subr.bf16.mxu0 0
    %2335 = vmatpush2.bf16.msra.mxu0 %v2226
    %2336 = vmatprep.subr.bf16.mxu0 0
    %2337 = vmatpush2.bf16.msra.mxu0 %v2225
    %2338 = vmatprep.mubr.bf16.mxu0 %v2008
    %2339 = vmatmul.mubr.bf16.gmra.mxu0 %v2007
    %v2340 = vpop.f32.mrf.mxu0
    %v2341 = vadd.f32 %v2300, %v2340
    %v2342 = vpop.f32.mrf.mxu0
    %v2343 = vpop.f32.mrf.mxu0
    %v2344 = vadd.f32 %v2303, %v2343
    %v2345 = vpop.f32.mrf.mxu0
    %2346 = vdwg.mxu0
    %v2347 = vadd.f32 %v1835, %v2341
    %v2348 = vadd.f32 %v1838, %v2344
    %v2349 = vld [vmem:[%s10 + $0x30] sm:$0xff]
    %v2350 = vld [vmem:[%s10 + $0x38] sm:$0xff]
    %v2351 = vld [vmem:[%s10 + $0x70] sm:$0xff]
    %v2352 = vld [vmem:[%s10 + $0x78] sm:$0xff]
    %v2353 = vld [vmem:[%s10 + $0xb0] sm:$0xff]
    %v2354 = vld [vmem:[%s10 + $0xb8] sm:$0xff]
    %v2355 = vld [vmem:[%s11 + $0xc] sm:$0xf]
    %v2357 = vlaneseq
    %v2358 = vshrl.u32 %v2357, 7
    %v2359 = vsub.s32 0, %v2358
    %v2360 = vrot.slane %v2355, %v2359
    %v2361 = vlaneseq
    %v2362 = vshrl.u32 %v2361, 7
    %v2363 = vsub.s32 1, %v2362
    %v2364 = vrot.slane %v2355, %v2363
    %v2365 = vlaneseq
    %v2366 = vshrl.u32 %v2365, 7
    %v2367 = vsub.s32 2, %v2366
    %v2368 = vrot.slane %v2355, %v2367
    %v2369 = vlaneseq
    %v2370 = vshrl.u32 %v2369, 7
    %v2371 = vsub.s32 3, %v2370
    %v2372 = vrot.slane %v2355, %v2371
    %v2383 = vunpack.c.l.b16 %v2349
    %v2384 = vunpack.c.h.b16 %v2349
    %v2385 = vunpack.c.l.b16 %v2350
    %v2386 = vunpack.c.h.b16 %v2350
    %v2387 = vunpack.c.l.b16 %v2351
    %v2388 = vunpack.c.h.b16 %v2351
    %v2389 = vunpack.c.l.b16 %v2352
    %v2390 = vunpack.c.h.b16 %v2352
    %v2391 = vunpack.c.l.b16 %v2353
    %v2392 = vunpack.c.h.b16 %v2353
    %v2393 = vunpack.c.l.b16 %v2354
    %v2394 = vunpack.c.h.b16 %v2354
    %v2395 = vpack.c.b16 %v2387, %v2383
    %v2396 = vpack.c.b16 %v2388, %v2384
    %v2397 = vpack.c.b16 %v2389, %v2385
    %v2398 = vpack.c.b16 %v2390, %v2386
    %v2399 = vpack.c.b16 %v2391, %v2391
    %v2400 = vpack.c.b16 %v2392, %v2392
    %v2401 = vpack.c.b16 %v2393, %v2393
    %v2402 = vpack.c.b16 %v2394, %v2394
    %v2408 = vsel %vm66, %v2399, 0
    %v2411 = vsel %vm66, %v2400, 0
    %v2414 = vsel %vm66, %v2401, 0
    %v2417 = vsel %vm66, %v2402, 0
    %2419 = vmatprep.subr.bf16.mxu0 0
    %2420 = vmatpush1.bf16.msra.mxu0 0
    %2421 = vmatprep.subr.bf16.mxu0 0
    %2422 = vmatpush1.bf16.msra.mxu0 0
    %2423 = vmatprep.subr.bf16.mxu0 0
    %2424 = vmatpush1.bf16.msra.mxu0 0
    %2425 = vmatprep.subr.bf16.mxu0 0
    %2426 = vmatpush1.bf16.msra.mxu0 0
    %2427 = vmatprep.subr.bf16.mxu0 0
    %2428 = vmatpush1.bf16.msra.mxu0 0
    %2429 = vmatprep.subr.bf16.mxu0 0
    %2430 = vmatpush1.bf16.msra.mxu0 0
    %2431 = vmatprep.subr.bf16.mxu0 %v2411
    %2432 = vmatpush1.bf16.msra.mxu0 %v2408
    %2433 = vmatprep.subr.bf16.mxu0 %v2396
    %2434 = vmatpush1.bf16.msra.mxu0 %v2395
    %2435 = vmatprep.subr.bf16.mxu0 0
    %2436 = vmatpush2.bf16.msra.mxu0 0
    %2437 = vmatprep.subr.bf16.mxu0 0
    %2438 = vmatpush2.bf16.msra.mxu0 0
    %2439 = vmatprep.subr.bf16.mxu0 0
    %2440 = vmatpush2.bf16.msra.mxu0 0
    %2441 = vmatprep.subr.bf16.mxu0 0
    %2442 = vmatpush2.bf16.msra.mxu0 0
    %2443 = vmatprep.subr.bf16.mxu0 0
    %2444 = vmatpush2.bf16.msra.mxu0 0
    %2445 = vmatprep.subr.bf16.mxu0 0
    %2446 = vmatpush2.bf16.msra.mxu0 0
    %2447 = vmatprep.subr.bf16.mxu0 0
    %2448 = vmatpush2.bf16.msra.mxu0 0
    %2449 = vmatprep.subr.bf16.mxu0 0
    %2450 = vmatpush2.bf16.msra.mxu0 0
    %2451 = vmatprep.mubr.bf16.mxu0 0
    %2452 = vmatmul.mubr.bf16.gmra.mxu0 %v885
    %v2453 = vpop.f32.mrf.mxu0
    %v2454 = vadd.f32 %v2360, %v2453
    %v2455 = vpop.f32.mrf.mxu0
    %v2456 = vadd.f32 %v2364, %v2455
    %v2457 = vpop.f32.mrf.mxu0
    %v2458 = vadd.f32 %v2360, %v2457
    %v2459 = vpop.f32.mrf.mxu0
    %v2460 = vadd.f32 %v2364, %v2459
    %2461 = vdwg.mxu0
    %2462 = vmatprep.subr.bf16.mxu0 0
    %2463 = vmatpush1.bf16.msra.mxu0 0
    %2464 = vmatprep.subr.bf16.mxu0 0
    %2465 = vmatpush1.bf16.msra.mxu0 0
    %2466 = vmatprep.subr.bf16.mxu0 0
    %2467 = vmatpush1.bf16.msra.mxu0 0
    %2468 = vmatprep.subr.bf16.mxu0 0
    %2469 = vmatpush1.bf16.msra.mxu0 0
    %2470 = vmatprep.subr.bf16.mxu0 0
    %2471 = vmatpush1.bf16.msra.mxu0 0
    %2472 = vmatprep.subr.bf16.mxu0 0
    %2473 = vmatpush1.bf16.msra.mxu0 0
    %2474 = vmatprep.subr.bf16.mxu0 %v2417
    %2475 = vmatpush1.bf16.msra.mxu0 %v2414
    %2476 = vmatprep.subr.bf16.mxu0 %v2398
    %2477 = vmatpush1.bf16.msra.mxu0 %v2397
    %2478 = vmatprep.subr.bf16.mxu0 0
    %2479 = vmatpush2.bf16.msra.mxu0 0
    %2480 = vmatprep.subr.bf16.mxu0 0
    %2481 = vmatpush2.bf16.msra.mxu0 0
    %2482 = vmatprep.subr.bf16.mxu0 0
    %2483 = vmatpush2.bf16.msra.mxu0 0
    %2484 = vmatprep.subr.bf16.mxu0 0
    %2485 = vmatpush2.bf16.msra.mxu0 0
    %2486 = vmatprep.subr.bf16.mxu0 0
    %2487 = vmatpush2.bf16.msra.mxu0 0
    %2488 = vmatprep.subr.bf16.mxu0 0
    %2489 = vmatpush2.bf16.msra.mxu0 0
    %2490 = vmatprep.subr.bf16.mxu0 0
    %2491 = vmatpush2.bf16.msra.mxu0 0
    %2492 = vmatprep.subr.bf16.mxu0 0
    %2493 = vmatpush2.bf16.msra.mxu0 0
    %2494 = vmatprep.mubr.bf16.mxu0 0
    %2495 = vmatmul.mubr.bf16.gmra.mxu0 %v885
    %v2496 = vpop.f32.mrf.mxu0
    %v2497 = vadd.f32 %v2368, %v2496
    %v2498 = vpop.f32.mrf.mxu0
    %v2499 = vadd.f32 %v2372, %v2498
    %v2500 = vpop.f32.mrf.mxu0
    %v2501 = vadd.f32 %v2368, %v2500
    %v2502 = vpop.f32.mrf.mxu0
    %v2503 = vadd.f32 %v2372, %v2502
    %2504 = vdwg.mxu0
    %v2505 = vmax.f32 %v2454, 0.0
    %v2506 = vmax.f32 %v2456, 0.0
    %v2507 = vmax.f32 %v2497, 0.0
    %v2508 = vmax.f32 %v2499, 0.0
    %v2509 = vmax.f32 %v2458, 0.0
    %v2510 = vmax.f32 %v2460, 0.0
    %v2511 = vmax.f32 %v2501, 0.0
    %v2512 = vmax.f32 %v2503, 0.0
    %v2513 = vpack.c.bf16 %v2509, %v2505
    %v2514 = vpack.c.bf16 %v2510, %v2506
    %v2515 = vpack.c.bf16 %v2511, %v2507
    %v2516 = vpack.c.bf16 %v2512, %v2508
    %v2517 = vld [vmem:[%s12 + $0x300] sm:$0xf]
    %v2518 = vld [vmem:[%s12 + $0x304] sm:$0xf]
    %v2519 = vld [vmem:[%s12 + $0x308] sm:$0xf]
    %v2520 = vld [vmem:[%s12 + $0x30c] sm:$0xf]
    %v2521 = vld [vmem:[%s12 + $0x310] sm:$0xf]
    %v2522 = vld [vmem:[%s12 + $0x314] sm:$0xf]
    %v2523 = vld [vmem:[%s12 + $0x318] sm:$0xf]
    %v2524 = vld [vmem:[%s12 + $0x31c] sm:$0xf]
    %v2525 = vld [vmem:[%s12 + $0x320] sm:$0xf]
    %v2526 = vld [vmem:[%s12 + $0x324] sm:$0xf]
    %v2527 = vld [vmem:[%s12 + $0x328] sm:$0xf]
    %v2528 = vld [vmem:[%s12 + $0x32c] sm:$0xf]
    %v2529 = vld [vmem:[%s12 + $0x330] sm:$0xf]
    %v2530 = vld [vmem:[%s12 + $0x334] sm:$0xf]
    %v2531 = vld [vmem:[%s12 + $0x338] sm:$0xf]
    %v2532 = vld [vmem:[%s12 + $0x33c] sm:$0xf]
    %v2533 = vld [vmem:[%s12 + $0x340] sm:$0xf]
    %v2534 = vld [vmem:[%s12 + $0x344] sm:$0xf]
    %v2535 = vld [vmem:[%s12 + $0x348] sm:$0xf]
    %v2536 = vld [vmem:[%s12 + $0x34c] sm:$0xf]
    %v2537 = vld [vmem:[%s12 + $0x350] sm:$0xf]
    %v2538 = vld [vmem:[%s12 + $0x354] sm:$0xf]
    %v2539 = vld [vmem:[%s12 + $0x358] sm:$0xf]
    %v2540 = vld [vmem:[%s12 + $0x35c] sm:$0xf]
    %v2541 = vld [vmem:[%s12 + $0x360] sm:$0xf]
    %v2542 = vld [vmem:[%s12 + $0x364] sm:$0xf]
    %v2543 = vld [vmem:[%s12 + $0x368] sm:$0xf]
    %v2544 = vld [vmem:[%s12 + $0x36c] sm:$0xf]
    %v2545 = vld [vmem:[%s12 + $0x370] sm:$0xf]
    %v2546 = vld [vmem:[%s12 + $0x374] sm:$0xf]
    %v2547 = vld [vmem:[%s12 + $0x378] sm:$0xf]
    %v2548 = vld [vmem:[%s12 + $0x37c] sm:$0xf]
    %v2549 = vld [vmem:[%s12 + $0x380] sm:$0xf]
    %v2550 = vld [vmem:[%s12 + $0x384] sm:$0xf]
    %v2551 = vld [vmem:[%s12 + $0x388] sm:$0xf]
    %v2552 = vld [vmem:[%s12 + $0x38c] sm:$0xf]
    %v2553 = vld [vmem:[%s12 + $0x390] sm:$0xf]
    %v2554 = vld [vmem:[%s12 + $0x394] sm:$0xf]
    %v2555 = vld [vmem:[%s12 + $0x398] sm:$0xf]
    %v2556 = vld [vmem:[%s12 + $0x39c] sm:$0xf]
    %v2557 = vld [vmem:[%s12 + $0x3a0] sm:$0xf]
    %v2558 = vld [vmem:[%s12 + $0x3a4] sm:$0xf]
    %v2559 = vld [vmem:[%s12 + $0x3a8] sm:$0xf]
    %v2560 = vld [vmem:[%s12 + $0x3ac] sm:$0xf]
    %v2561 = vld [vmem:[%s12 + $0x3b0] sm:$0xf]
    %v2562 = vld [vmem:[%s12 + $0x3b4] sm:$0xf]
    %v2563 = vld [vmem:[%s12 + $0x3b8] sm:$0xf]
    %v2564 = vld [vmem:[%s12 + $0x3bc] sm:$0xf]
    %v2565 = vld [vmem:[%s12 + $0x3c0] sm:$0xf]
    %v2566 = vld [vmem:[%s12 + $0x3c4] sm:$0xf]
    %v2567 = vld [vmem:[%s12 + $0x3c8] sm:$0xf]
    %v2568 = vld [vmem:[%s12 + $0x3cc] sm:$0xf]
    %v2569 = vld [vmem:[%s12 + $0x3d0] sm:$0xf]
    %v2570 = vld [vmem:[%s12 + $0x3d4] sm:$0xf]
    %v2571 = vld [vmem:[%s12 + $0x3d8] sm:$0xf]
    %v2572 = vld [vmem:[%s12 + $0x3dc] sm:$0xf]
    %v2573 = vld [vmem:[%s12 + $0x3e0] sm:$0xf]
    %v2574 = vld [vmem:[%s12 + $0x3e4] sm:$0xf]
    %v2575 = vld [vmem:[%s12 + $0x3e8] sm:$0xf]
    %v2576 = vld [vmem:[%s12 + $0x3ec] sm:$0xf]
    %v2577 = vld [vmem:[%s12 + $0x3f0] sm:$0xf]
    %v2578 = vld [vmem:[%s12 + $0x3f4] sm:$0xf]
    %v2579 = vld [vmem:[%s12 + $0x3f8] sm:$0xf]
    %v2580 = vld [vmem:[%s12 + $0x3fc] sm:$0xf]
    %v2645 = vunpack.c.l.b16 %v2517
    %v2646 = vunpack.c.l.b16 %v2518
    %v2647 = vunpack.c.l.b16 %v2519
    %v2648 = vunpack.c.l.b16 %v2520
    %v2649 = vunpack.c.l.b16 %v2521
    %v2650 = vunpack.c.l.b16 %v2522
    %v2651 = vunpack.c.l.b16 %v2523
    %v2652 = vunpack.c.l.b16 %v2524
    %v2653 = vunpack.c.l.b16 %v2525
    %v2654 = vunpack.c.l.b16 %v2526
    %v2655 = vunpack.c.l.b16 %v2527
    %v2656 = vunpack.c.l.b16 %v2528
    %v2657 = vunpack.c.l.b16 %v2529
    %v2658 = vunpack.c.l.b16 %v2530
    %v2659 = vunpack.c.l.b16 %v2531
    %v2660 = vunpack.c.l.b16 %v2532
    %v2661 = vunpack.c.l.b16 %v2533
    %v2662 = vunpack.c.l.b16 %v2534
    %v2663 = vunpack.c.l.b16 %v2535
    %v2664 = vunpack.c.l.b16 %v2536
    %v2665 = vunpack.c.l.b16 %v2537
    %v2666 = vunpack.c.l.b16 %v2538
    %v2667 = vunpack.c.l.b16 %v2539
    %v2668 = vunpack.c.l.b16 %v2540
    %v2669 = vunpack.c.l.b16 %v2541
    %v2670 = vunpack.c.l.b16 %v2542
    %v2671 = vunpack.c.l.b16 %v2543
    %v2672 = vunpack.c.l.b16 %v2544
    %v2673 = vunpack.c.l.b16 %v2545
    %v2674 = vunpack.c.l.b16 %v2546
    %v2675 = vunpack.c.l.b16 %v2547
    %v2676 = vunpack.c.l.b16 %v2548
    %v2677 = vunpack.c.l.b16 %v2549
    %v2678 = vunpack.c.l.b16 %v2550
    %v2679 = vunpack.c.l.b16 %v2551
    %v2680 = vunpack.c.l.b16 %v2552
    %v2681 = vunpack.c.l.b16 %v2553
    %v2682 = vunpack.c.l.b16 %v2554
    %v2683 = vunpack.c.l.b16 %v2555
    %v2684 = vunpack.c.l.b16 %v2556
    %v2685 = vunpack.c.l.b16 %v2557
    %v2686 = vunpack.c.l.b16 %v2558
    %v2687 = vunpack.c.l.b16 %v2559
    %v2688 = vunpack.c.l.b16 %v2560
    %v2689 = vunpack.c.l.b16 %v2561
    %v2690 = vunpack.c.l.b16 %v2562
    %v2691 = vunpack.c.l.b16 %v2563
    %v2692 = vunpack.c.l.b16 %v2564
    %v2693 = vunpack.c.l.b16 %v2565
    %v2694 = vunpack.c.l.b16 %v2566
    %v2695 = vunpack.c.l.b16 %v2567
    %v2696 = vunpack.c.l.b16 %v2568
    %v2697 = vunpack.c.l.b16 %v2569
    %v2698 = vunpack.c.l.b16 %v2570
    %v2699 = vunpack.c.l.b16 %v2571
    %v2700 = vunpack.c.l.b16 %v2572
    %v2701 = vunpack.c.l.b16 %v2573
    %v2702 = vunpack.c.l.b16 %v2574
    %v2703 = vunpack.c.l.b16 %v2575
    %v2704 = vunpack.c.l.b16 %v2576
    %v2705 = vunpack.c.l.b16 %v2577
    %v2706 = vunpack.c.l.b16 %v2578
    %v2707 = vunpack.c.l.b16 %v2579
    %v2708 = vunpack.c.l.b16 %v2580
    %v2709 = vpack.c.b16 %v2646, %v2645
    %v2710 = vpack.c.b16 %v2648, %v2647
    %v2711 = vpack.c.b16 %v2650, %v2649
    %v2712 = vpack.c.b16 %v2652, %v2651
    %v2713 = vpack.c.b16 %v2654, %v2653
    %v2714 = vpack.c.b16 %v2656, %v2655
    %v2715 = vpack.c.b16 %v2658, %v2657
    %v2716 = vpack.c.b16 %v2660, %v2659
    %v2717 = vpack.c.b16 %v2662, %v2661
    %v2718 = vpack.c.b16 %v2664, %v2663
    %v2719 = vpack.c.b16 %v2666, %v2665
    %v2720 = vpack.c.b16 %v2668, %v2667
    %v2721 = vpack.c.b16 %v2670, %v2669
    %v2722 = vpack.c.b16 %v2672, %v2671
    %v2723 = vpack.c.b16 %v2674, %v2673
    %v2724 = vpack.c.b16 %v2676, %v2675
    %v2725 = vpack.c.b16 %v2678, %v2677
    %v2726 = vpack.c.b16 %v2680, %v2679
    %v2727 = vpack.c.b16 %v2682, %v2681
    %v2728 = vpack.c.b16 %v2684, %v2683
    %v2729 = vpack.c.b16 %v2686, %v2685
    %v2730 = vpack.c.b16 %v2688, %v2687
    %v2731 = vpack.c.b16 %v2690, %v2689
    %v2732 = vpack.c.b16 %v2692, %v2691
    %v2733 = vpack.c.b16 %v2694, %v2693
    %v2734 = vpack.c.b16 %v2696, %v2695
    %v2735 = vpack.c.b16 %v2698, %v2697
    %v2736 = vpack.c.b16 %v2700, %v2699
    %v2737 = vpack.c.b16 %v2702, %v2701
    %v2738 = vpack.c.b16 %v2704, %v2703
    %v2739 = vpack.c.b16 %v2706, %v2705
    %v2740 = vpack.c.b16 %v2708, %v2707
    %2773 = vmatprep.subr.bf16.mxu0 0
    %2774 = vmatpush1.bf16.msra.mxu0 %v2716
    %2775 = vmatprep.subr.bf16.mxu0 0
    %2776 = vmatpush1.bf16.msra.mxu0 %v2715
    %2777 = vmatprep.subr.bf16.mxu0 0
    %2778 = vmatpush1.bf16.msra.mxu0 %v2714
    %2779 = vmatprep.subr.bf16.mxu0 0
    %2780 = vmatpush1.bf16.msra.mxu0 %v2713
    %2781 = vmatprep.subr.bf16.mxu0 0
    %2782 = vmatpush1.bf16.msra.mxu0 %v2712
    %2783 = vmatprep.subr.bf16.mxu0 0
    %2784 = vmatpush1.bf16.msra.mxu0 %v2711
    %2785 = vmatprep.subr.bf16.mxu0 0
    %2786 = vmatpush1.bf16.msra.mxu0 %v2710
    %2787 = vmatprep.subr.bf16.mxu0 0
    %2788 = vmatpush1.bf16.msra.mxu0 %v2709
    %2789 = vmatprep.subr.bf16.mxu0 0
    %2790 = vmatpush2.bf16.msra.mxu0 %v2724
    %2791 = vmatprep.subr.bf16.mxu0 0
    %2792 = vmatpush2.bf16.msra.mxu0 %v2723
    %2793 = vmatprep.subr.bf16.mxu0 0
    %2794 = vmatpush2.bf16.msra.mxu0 %v2722
    %2795 = vmatprep.subr.bf16.mxu0 0
    %2796 = vmatpush2.bf16.msra.mxu0 %v2721
    %2797 = vmatprep.subr.bf16.mxu0 0
    %2798 = vmatpush2.bf16.msra.mxu0 %v2720
    %2799 = vmatprep.subr.bf16.mxu0 0
    %2800 = vmatpush2.bf16.msra.mxu0 %v2719
    %2801 = vmatprep.subr.bf16.mxu0 0
    %2802 = vmatpush2.bf16.msra.mxu0 %v2718
    %2803 = vmatprep.subr.bf16.mxu0 0
    %2804 = vmatpush2.bf16.msra.mxu0 %v2717
    %2805 = vmatprep.mubr.bf16.mxu0 %v2514
    %2806 = vmatmul.mubr.bf16.gmra.mxu0 %v2513
    %v2807 = vpop.f32.mrf.mxu0
    %v2808 = vadd.f32 0.0, %v2807
    %v2809 = vpop.f32.mrf.mxu0
    %v2810 = vpop.f32.mrf.mxu0
    %v2811 = vadd.f32 0.0, %v2810
    %v2812 = vpop.f32.mrf.mxu0
    %2813 = vdwg.mxu0
    %2814 = vmatprep.subr.bf16.mxu0 0
    %2815 = vmatpush1.bf16.msra.mxu0 %v2732
    %2816 = vmatprep.subr.bf16.mxu0 0
    %2817 = vmatpush1.bf16.msra.mxu0 %v2731
    %2818 = vmatprep.subr.bf16.mxu0 0
    %2819 = vmatpush1.bf16.msra.mxu0 %v2730
    %2820 = vmatprep.subr.bf16.mxu0 0
    %2821 = vmatpush1.bf16.msra.mxu0 %v2729
    %2822 = vmatprep.subr.bf16.mxu0 0
    %2823 = vmatpush1.bf16.msra.mxu0 %v2728
    %2824 = vmatprep.subr.bf16.mxu0 0
    %2825 = vmatpush1.bf16.msra.mxu0 %v2727
    %2826 = vmatprep.subr.bf16.mxu0 0
    %2827 = vmatpush1.bf16.msra.mxu0 %v2726
    %2828 = vmatprep.subr.bf16.mxu0 0
    %2829 = vmatpush1.bf16.msra.mxu0 %v2725
    %2830 = vmatprep.subr.bf16.mxu0 0
    %2831 = vmatpush2.bf16.msra.mxu0 %v2740
    %2832 = vmatprep.subr.bf16.mxu0 0
    %2833 = vmatpush2.bf16.msra.mxu0 %v2739
    %2834 = vmatprep.subr.bf16.mxu0 0
    %2835 = vmatpush2.bf16.msra.mxu0 %v2738
    %2836 = vmatprep.subr.bf16.mxu0 0
    %2837 = vmatpush2.bf16.msra.mxu0 %v2737
    %2838 = vmatprep.subr.bf16.mxu0 0
    %2839 = vmatpush2.bf16.msra.mxu0 %v2736
    %2840 = vmatprep.subr.bf16.mxu0 0
    %2841 = vmatpush2.bf16.msra.mxu0 %v2735
    %2842 = vmatprep.subr.bf16.mxu0 0
    %2843 = vmatpush2.bf16.msra.mxu0 %v2734
    %2844 = vmatprep.subr.bf16.mxu0 0
    %2845 = vmatpush2.bf16.msra.mxu0 %v2733
    %2846 = vmatprep.mubr.bf16.mxu0 %v2516
    %2847 = vmatmul.mubr.bf16.gmra.mxu0 %v2515
    %v2848 = vpop.f32.mrf.mxu0
    %v2849 = vadd.f32 %v2808, %v2848
    %v2850 = vpop.f32.mrf.mxu0
    %v2851 = vpop.f32.mrf.mxu0
    %v2852 = vadd.f32 %v2811, %v2851
    %v2853 = vpop.f32.mrf.mxu0
    %2854 = vdwg.mxu0
    %v2855 = vadd.f32 %v2347, %v2849
    %v2856 = vadd.f32 %v2348, %v2852
    %v2857 = vlaneseq
    %v2858 = vshrl.u32 %v2857, 7
    %v2859 = vsub.s32 5, %v2858
    %v2860 = vrot.slane %v268, %v2859
    %v2861 = vadd.f32 %v2855, %v2860
    %v2862 = vadd.f32 %v2856, %v2860
    %v2863 = vadd.f32 %v823, %v2861
    %v2864 = vadd.f32 %v824, %v2862
    %v2865 = vsel %vm180, %v2863, 0.0
    %2866 = vadd.xlane.f32.xlu0 %v2865
    %v2867 = vpop.xlane.xlu0 %2866
    %v2868 = vsel %vm180, %v2864, 0.0
    %2869 = vadd.xlane.f32.xlu0 %v2868
    %v2870 = vpop.xlane.xlu0 %2869
    %v2871 = vmul.f32 %v2867, %v792
    %v2872 = vmul.f32 %v2870, %v792
    %v2873 = vsub.f32 %v2863, %v2871
    %v2874 = vsub.f32 %v2864, %v2872
    %v2875 = vmul.f32 %v2873, %v2873
    %v2876 = vmul.f32 %v2874, %v2874
    %v2877 = vsel %vm180, %v2875, 0.0
    %2878 = vadd.xlane.f32.xlu0 %v2877
    %v2879 = vpop.xlane.xlu0 %2878
    %v2880 = vsel %vm180, %v2876, 0.0
    %2881 = vadd.xlane.f32.xlu0 %v2880
    %v2882 = vpop.xlane.xlu0 %2881
    %v2883 = vmul.f32 %v2879, %v792
    %v2884 = vmul.f32 %v2882, %v792
    %v2885 = vadd.f32 %v2883, 1e-05
    %v2886 = vadd.f32 %v2884, 1e-05
    %v2887 = vrsqrt.pop %v2885
    %v2888 = vrsqrt.pop %v2886
    %v2889 = vmul.f32 %v2873, %v2887
    %v2890 = vmul.f32 %v2874, %v2888
    %v2891 = vlaneseq
    %v2892 = vshrl.u32 %v2891, 7
    %v2893 = vsub.s32 3, %v2892
    %v2894 = vrot.slane %v268, %v2893
    %v2895 = vmul.f32 %v2889, %v2894
    %v2896 = vmul.f32 %v2890, %v2894
    %v2897 = vlaneseq
    %v2898 = vshrl.u32 %v2897, 7
    %v2899 = vsub.s32 4, %v2898
    %v2900 = vrot.slane %v268, %v2899
    %v2901 = vadd.f32 %v2895, %v2900
    %v2902 = vadd.f32 %v2896, %v2900
    %s2903 = scalar_lea.vmem %s9, 8
    %v2904 = vld [vmem:[%s2903] sm:$0xff]
    %s2905 = scalar_lea.vmem %s6, 72
    %v2906 = vld [vmem:[%s2905] sm:$0xff]
    %v2907 = vld [vmem:[%s2905 + $0x8] sm:$0xff]
    %v2908 = vld [vmem:[%s2905 + $0x10] sm:$0xff]
    %v2909 = vld [vmem:[%s2905 + $0x18] sm:$0xff]
    %v2910 = vld [vmem:[%s2905 + $0x20] sm:$0xff]
    %v2911 = vld [vmem:[%s2905 + $0x28] sm:$0xff]
    %v2912 = vld [vmem:[%s2905 + $0x30] sm:$0xff]
    %v2913 = vld [vmem:[%s2905 + $0x38] sm:$0xff]
    %v2914 = vld [vmem:[%s2905 + $0x40] sm:$0xff]
    %s2915 = scalar_lea.vmem %s7, 3
    %v2916 = vld [vmem:[%s2915] sm:$0x7]
    %v2918 = vlaneseq
    %v2919 = vshrl.u32 %v2918, 7
    %v2920 = vsub.s32 0, %v2919
    %v2921 = vrot.slane %v2916, %v2920
    %v2922 = vlaneseq
    %v2923 = vshrl.u32 %v2922, 7
    %v2924 = vsub.s32 1, %v2923
    %v2925 = vrot.slane %v2916, %v2924
    %v2926 = vlaneseq
    %v2927 = vshrl.u32 %v2926, 7
    %v2928 = vsub.s32 2, %v2927
    %v2929 = vrot.slane %v2916, %v2928
    %v2934 = vsel %vm180, %v2901, 0
    %v2937 = vsel %vm180, %v2902, 0
    %2939 = vmatprep.subr.mxu0 0.0
    %2940 = vmatpush1.msra.mxu0 0.0
    %2941 = vmatprep.subr.mxu0 0.0
    %2942 = vmatpush1.msra.mxu0 0.0
    %2943 = vmatprep.subr.mxu0 0.0
    %2944 = vmatpush1.msra.mxu0 0.0
    %2945 = vmatprep.subr.mxu0 0.0
    %2946 = vmatpush1.msra.mxu0 0.0
    %2947 = vmatprep.subr.mxu0 0.0
    %2948 = vmatpush1.msra.mxu0 0.0
    %2949 = vmatprep.subr.mxu0 0.0
    %2950 = vmatpush1.msra.mxu0 0.0
    %2951 = vmatprep.subr.mxu0 0.0
    %2952 = vmatpush1.msra.mxu0 0.0
    %2953 = vmatprep.subr.mxu0 0.0
    %2954 = vmatpush1.msra.mxu0 0.0
    %2955 = vmatprep.subr.mxu0 0.0
    %2956 = vmatpush1.msra.mxu0 0.0
    %2957 = vmatprep.subr.mxu0 0.0
    %2958 = vmatpush1.msra.mxu0 0.0
    %2959 = vmatprep.subr.mxu0 0.0
    %2960 = vmatpush1.msra.mxu0 0.0
    %2961 = vmatprep.subr.mxu0 0.0
    %2962 = vmatpush1.msra.mxu0 0.0
    %2963 = vmatprep.subr.mxu0 0.0
    %2964 = vmatpush1.msra.mxu0 0.0
    %2965 = vmatprep.subr.mxu0 %v2913
    %2966 = vmatpush1.msra.mxu0 %v2912
    %2967 = vmatprep.subr.mxu0 %v2910
    %2968 = vmatpush1.msra.mxu0 %v2909
    %2969 = vmatprep.subr.mxu0 %v2907
    %2970 = vmatpush1.msra.mxu0 %v2906
    %2971 = vmatprep.subr.mxu0 0.0
    %2972 = vmatpush2.msra.mxu0 0.0
    %2973 = vmatprep.subr.mxu0 0.0
    %2974 = vmatpush2.msra.mxu0 0.0
    %2975 = vmatprep.subr.mxu0 0.0
    %2976 = vmatpush2.msra.mxu0 0.0
    %2977 = vmatprep.subr.mxu0 0.0
    %2978 = vmatpush2.msra.mxu0 0.0
    %2979 = vmatprep.subr.mxu0 0.0
    %2980 = vmatpush2.msra.mxu0 0.0
    %2981 = vmatprep.subr.mxu0 0.0
    %2982 = vmatpush2.msra.mxu0 0.0
    %2983 = vmatprep.subr.mxu0 0.0
    %2984 = vmatpush2.msra.mxu0 0.0
    %2985 = vmatprep.subr.mxu0 0.0
    %2986 = vmatpush2.msra.mxu0 0.0
    %2987 = vmatprep.subr.mxu0 0.0
    %2988 = vmatpush2.msra.mxu0 0.0
    %2989 = vmatprep.subr.mxu0 0.0
    %2990 = vmatpush2.msra.mxu0 0.0
    %2991 = vmatprep.subr.mxu0 0.0
    %2992 = vmatpush2.msra.mxu0 0.0
    %2993 = vmatprep.subr.mxu0 0.0
    %2994 = vmatpush2.msra.mxu0 0.0
    %2995 = vmatprep.subr.mxu0 0.0
    %2996 = vmatpush2.msra.mxu0 0.0
    %2997 = vmatprep.subr.mxu0 0.0
    %2998 = vmatpush2.msra.mxu0 0.0
    %2999 = vmatprep.subr.mxu0 0.0
    %3000 = vmatpush2.msra.mxu0 0.0
    %3001 = vmatprep.subr.mxu0 0.0
    %3002 = vmatpush2.msra.mxu0 0.0
    %3003 = vmatprep.mubr.f32.mxu0 0.0
    %3004 = vmatmul.mubr.f32.gmra.mxu0 %v2934
    %v3005 = vpop.f32.mrf.mxu0
    %v3006 = vadd.f32 %v2921, %v3005
    %v3007 = vpop.f32.mrf.mxu0
    %v3008 = vadd.f32 %v2925, %v3007
    %3009 = vmatprep.mubr.f32.mxu0 0.0
    %3010 = vmatmul.mubr.f32.gmra.mxu0 %v2937
    %v3011 = vpop.f32.mrf.mxu0
    %v3012 = vadd.f32 %v2921, %v3011
    %v3013 = vpop.f32.mrf.mxu0
    %v3014 = vadd.f32 %v2925, %v3013
    %3015 = vdwg.mxu0
    %3016 = vmatprep.subr.mxu0 0.0
    %3017 = vmatpush1.msra.mxu0 0.0
    %3018 = vmatprep.subr.mxu0 0.0
    %3019 = vmatpush1.msra.mxu0 0.0
    %3020 = vmatprep.subr.mxu0 0.0
    %3021 = vmatpush1.msra.mxu0 0.0
    %3022 = vmatprep.subr.mxu0 0.0
    %3023 = vmatpush1.msra.mxu0 0.0
    %3024 = vmatprep.subr.mxu0 0.0
    %3025 = vmatpush1.msra.mxu0 0.0
    %3026 = vmatprep.subr.mxu0 0.0
    %3027 = vmatpush1.msra.mxu0 0.0
    %3028 = vmatprep.subr.mxu0 0.0
    %3029 = vmatpush1.msra.mxu0 0.0
    %3030 = vmatprep.subr.mxu0 0.0
    %3031 = vmatpush1.msra.mxu0 0.0
    %3032 = vmatprep.subr.mxu0 0.0
    %3033 = vmatpush1.msra.mxu0 0.0
    %3034 = vmatprep.subr.mxu0 0.0
    %3035 = vmatpush1.msra.mxu0 0.0
    %3036 = vmatprep.subr.mxu0 0.0
    %3037 = vmatpush1.msra.mxu0 0.0
    %3038 = vmatprep.subr.mxu0 0.0
    %3039 = vmatpush1.msra.mxu0 0.0
    %3040 = vmatprep.subr.mxu0 0.0
    %3041 = vmatpush1.msra.mxu0 0.0
    %3042 = vmatprep.subr.mxu0 0.0
    %3043 = vmatpush1.msra.mxu0 %v2914
    %3044 = vmatprep.subr.mxu0 0.0
    %3045 = vmatpush1.msra.mxu0 %v2911
    %3046 = vmatprep.subr.mxu0 0.0
    %3047 = vmatpush1.msra.mxu0 %v2908
    %3048 = vmatprep.subr.mxu0 0.0
    %3049 = vmatpush2.msra.mxu0 0.0
    %3050 = vmatprep.subr.mxu0 0.0
    %3051 = vmatpush2.msra.mxu0 0.0
    %3052 = vmatprep.subr.mxu0 0.0
    %3053 = vmatpush2.msra.mxu0 0.0
    %3054 = vmatprep.subr.mxu0 0.0
    %3055 = vmatpush2.msra.mxu0 0.0
    %3056 = vmatprep.subr.mxu0 0.0
    %3057 = vmatpush2.msra.mxu0 0.0
    %3058 = vmatprep.subr.mxu0 0.0
    %3059 = vmatpush2.msra.mxu0 0.0
    %3060 = vmatprep.subr.mxu0 0.0
    %3061 = vmatpush2.msra.mxu0 0.0
    %3062 = vmatprep.subr.mxu0 0.0
    %3063 = vmatpush2.msra.mxu0 0.0
    %3064 = vmatprep.subr.mxu0 0.0
    %3065 = vmatpush2.msra.mxu0 0.0
    %3066 = vmatprep.subr.mxu0 0.0
    %3067 = vmatpush2.msra.mxu0 0.0
    %3068 = vmatprep.subr.mxu0 0.0
    %3069 = vmatpush2.msra.mxu0 0.0
    %3070 = vmatprep.subr.mxu0 0.0
    %3071 = vmatpush2.msra.mxu0 0.0
    %3072 = vmatprep.subr.mxu0 0.0
    %3073 = vmatpush2.msra.mxu0 0.0
    %3074 = vmatprep.subr.mxu0 0.0
    %3075 = vmatpush2.msra.mxu0 0.0
    %3076 = vmatprep.subr.mxu0 0.0
    %3077 = vmatpush2.msra.mxu0 0.0
    %3078 = vmatprep.subr.mxu0 0.0
    %3079 = vmatpush2.msra.mxu0 0.0
    %3080 = vmatprep.mubr.f32.mxu0 0.0
    %3081 = vmatmul.mubr.f32.gmra.mxu0 %v2934
    %v3082 = vpop.f32.mrf.mxu0
    %v3083 = vadd.f32 %v2929, %v3082
    %v3084 = vpop.f32.mrf.mxu0
    %3085 = vmatprep.mubr.f32.mxu0 0.0
    %3086 = vmatmul.mubr.f32.gmra.mxu0 %v2937
    %v3087 = vpop.f32.mrf.mxu0
    %v3088 = vadd.f32 %v2929, %v3087
    %v3089 = vpop.f32.mrf.mxu0
    %3090 = vdwg.mxu0
    %v3091 = vmul.f32 %v3006, %v3008
    %v3092 = vmul.f32 %v3006, %v3014
    %v3093 = vmul.f32 %v3012, %v3008
    %v3094 = vmul.f32 %v3012, %v3014
    %v3096 = vsel %vm180, %v3091, 0
    %v3099 = vsel %vm180, %v3092, 0
    %v3102 = vsel %vm180, %v3093, 0
    %v3105 = vsel %vm180, %v3094, 0
    %3107 = vmatprep.subr.mxu0 0.0
    %3108 = vmatpush1.msra.mxu0 0.0
    %3109 = vmatprep.subr.mxu0 0.0
    %3110 = vmatpush1.msra.mxu0 0.0
    %3111 = vmatprep.subr.mxu0 0.0
    %3112 = vmatpush1.msra.mxu0 0.0
    %3113 = vmatprep.subr.mxu0 0.0
    %3114 = vmatpush1.msra.mxu0 0.0
    %3115 = vmatprep.subr.mxu0 0.0
    %3116 = vmatpush1.msra.mxu0 0.0
    %3117 = vmatprep.subr.mxu0 0.0
    %3118 = vmatpush1.msra.mxu0 0.0
    %3119 = vmatprep.subr.mxu0 0.0
    %3120 = vmatpush1.msra.mxu0 0.0
    %3121 = vmatprep.subr.mxu0 0.0
    %3122 = vmatpush1.msra.mxu0 0.0
    %3123 = vmatprep.subr.mxu0 0.0
    %3124 = vmatpush1.msra.mxu0 0.0
    %3125 = vmatprep.subr.mxu0 0.0
    %3126 = vmatpush1.msra.mxu0 0.0
    %3127 = vmatprep.subr.mxu0 0.0
    %3128 = vmatpush1.msra.mxu0 0.0
    %3129 = vmatprep.subr.mxu0 0.0
    %3130 = vmatpush1.msra.mxu0 0.0
    %3131 = vmatprep.subr.mxu0 0.0
    %3132 = vmatpush1.msra.mxu0 0.0
    %3133 = vmatprep.subr.mxu0 0.0
    %3134 = vmatpush1.msra.mxu0 %v266
    %3135 = vmatprep.subr.mxu0 0.0
    %3136 = vmatpush1.msra.mxu0 %v265
    %3137 = vmatprep.subr.mxu0 0.0
    %3138 = vmatpush1.msra.mxu0 %v264
    %3139 = vmatprep.subr.mxu0 0.0
    %3140 = vmatpush2.msra.mxu0 0.0
    %3141 = vmatprep.subr.mxu0 0.0
    %3142 = vmatpush2.msra.mxu0 0.0
    %3143 = vmatprep.subr.mxu0 0.0
    %3144 = vmatpush2.msra.mxu0 0.0
    %3145 = vmatprep.subr.mxu0 0.0
    %3146 = vmatpush2.msra.mxu0 0.0
    %3147 = vmatprep.subr.mxu0 0.0
    %3148 = vmatpush2.msra.mxu0 0.0
    %3149 = vmatprep.subr.mxu0 0.0
    %3150 = vmatpush2.msra.mxu0 0.0
    %3151 = vmatprep.subr.mxu0 0.0
    %3152 = vmatpush2.msra.mxu0 0.0
    %3153 = vmatprep.subr.mxu0 0.0
    %3154 = vmatpush2.msra.mxu0 0.0
    %3155 = vmatprep.subr.mxu0 0.0
    %3156 = vmatpush2.msra.mxu0 0.0
    %3157 = vmatprep.subr.mxu0 0.0
    %3158 = vmatpush2.msra.mxu0 0.0
    %3159 = vmatprep.subr.mxu0 0.0
    %3160 = vmatpush2.msra.mxu0 0.0
    %3161 = vmatprep.subr.mxu0 0.0
    %3162 = vmatpush2.msra.mxu0 0.0
    %3163 = vmatprep.subr.mxu0 0.0
    %3164 = vmatpush2.msra.mxu0 0.0
    %3165 = vmatprep.subr.mxu0 0.0
    %3166 = vmatpush2.msra.mxu0 0.0
    %3167 = vmatprep.subr.mxu0 0.0
    %3168 = vmatpush2.msra.mxu0 0.0
    %3169 = vmatprep.subr.mxu0 0.0
    %3170 = vmatpush2.msra.mxu0 0.0
    %3171 = vmatprep.mubr.f32.mxu0 0.0
    %3172 = vmatmul.mubr.f32.gmra.mxu0 %v3096
    %v3173 = vpop.f32.mrf.mxu0
    %v3174 = vadd.f32 0.0, %v3173
    %v3175 = vpop.f32.mrf.mxu0
    %3176 = vmatprep.mubr.f32.mxu0 0.0
    %3177 = vmatmul.mubr.f32.gmra.mxu0 %v3099
    %v3178 = vpop.f32.mrf.mxu0
    %v3179 = vadd.f32 0.0, %v3178
    %v3180 = vpop.f32.mrf.mxu0
    %3181 = vmatprep.mubr.f32.mxu0 0.0
    %3182 = vmatmul.mubr.f32.gmra.mxu0 %v3102
    %v3183 = vpop.f32.mrf.mxu0
    %v3184 = vadd.f32 0.0, %v3183
    %v3185 = vpop.f32.mrf.mxu0
    %3186 = vmatprep.mubr.f32.mxu0 0.0
    %3187 = vmatmul.mubr.f32.gmra.mxu0 %v3105
    %v3188 = vpop.f32.mrf.mxu0
    %v3189 = vadd.f32 0.0, %v3188
    %v3190 = vpop.f32.mrf.mxu0
    %3191 = vdwg.mxu0
    %v3192 = vsel %vm554, %v3174, -inf
    %v3193 = vsel %vm554, %v3179, -inf
    %v3194 = vmax.f32 %v3192, %v3193
    %v3195 = vsel %vm554, %v3184, -inf
    %v3196 = vsel %vm554, %v3189, -inf
    %v3197 = vmax.f32 %v3195, %v3196
    %v3198 = vsub.f32 %v3174, %v3194
    %v3199 = vsub.f32 %v3179, %v3194
    %v3200 = vsub.f32 %v3184, %v3197
    %v3201 = vsub.f32 %v3189, %v3197
    %v3202 = vmul.f32 %v3198, 1.442695
    %v3203 = vpow.pop %v3202
    %v3204 = vmul.f32 %v3199, 1.442695
    %v3205 = vpow.pop %v3204
    %v3206 = vmul.f32 %v3200, 1.442695
    %v3207 = vpow.pop %v3206
    %v3208 = vmul.f32 %v3201, 1.442695
    %v3209 = vpow.pop %v3208
    %v3210 = vsel %vm554, %v3203, 0.0
    %v3211 = vsel %vm554, %v3205, 0.0
    %v3212 = vadd.f32 %v3210, %v3211
    %v3213 = vsel %vm554, %v3207, 0.0
    %v3214 = vsel %vm554, %v3209, 0.0
    %v3215 = vadd.f32 %v3213, %v3214
    %v3216 = vrcp.pop %v3212
    %v3217 = vrcp.pop %v3215
    %v3218 = vmul.f32 %v3203, %v3216
    %v3219 = vmul.f32 %v3205, %v3216
    %v3220 = vmul.f32 %v3207, %v3217
    %v3221 = vmul.f32 %v3209, %v3217
    %v3223 = vsel %vm554, %v3218, 0
    %v3226 = vsel %vm554, %v3219, 0
    %v3229 = vsel %vm554, %v3220, 0
    %v3232 = vsel %vm554, %v3221, 0
    %3234 = vmatprep.subr.mxu0 0.0
    %3235 = vmatpush1.msra.mxu0 0.0
    %3236 = vmatprep.subr.mxu0 0.0
    %3237 = vmatpush1.msra.mxu0 0.0
    %3238 = vmatprep.subr.mxu0 0.0
    %3239 = vmatpush1.msra.mxu0 0.0
    %3240 = vmatprep.subr.mxu0 0.0
    %3241 = vmatpush1.msra.mxu0 0.0
    %3242 = vmatprep.subr.mxu0 0.0
    %3243 = vmatpush1.msra.mxu0 0.0
    %3244 = vmatprep.subr.mxu0 0.0
    %3245 = vmatpush1.msra.mxu0 0.0
    %3246 = vmatprep.subr.mxu0 0.0
    %3247 = vmatpush1.msra.mxu0 0.0
    %3248 = vmatprep.subr.mxu0 0.0
    %3249 = vmatpush1.msra.mxu0 0.0
    %3250 = vmatprep.subr.mxu0 0.0
    %3251 = vmatpush1.msra.mxu0 0.0
    %3252 = vmatprep.subr.mxu0 0.0
    %3253 = vmatpush1.msra.mxu0 0.0
    %3254 = vmatprep.subr.mxu0 0.0
    %3255 = vmatpush1.msra.mxu0 0.0
    %3256 = vmatprep.subr.mxu0 0.0
    %3257 = vmatpush1.msra.mxu0 0.0
    %3258 = vmatprep.subr.mxu0 0.0
    %3259 = vmatpush1.msra.mxu0 0.0
    %3260 = vmatprep.subr.mxu0 0.0
    %3261 = vmatpush1.msra.mxu0 0.0
    %3262 = vmatprep.subr.mxu0 0.0
    %3263 = vmatpush1.msra.mxu0 0.0
    %3264 = vmatprep.subr.mxu0 0.0
    %3265 = vmatpush1.msra.mxu0 %v599
    %3266 = vmatprep.subr.mxu0 0.0
    %3267 = vmatpush2.msra.mxu0 0.0
    %3268 = vmatprep.subr.mxu0 0.0
    %3269 = vmatpush2.msra.mxu0 0.0
    %3270 = vmatprep.subr.mxu0 0.0
    %3271 = vmatpush2.msra.mxu0 0.0
    %3272 = vmatprep.subr.mxu0 0.0
    %3273 = vmatpush2.msra.mxu0 0.0
    %3274 = vmatprep.subr.mxu0 0.0
    %3275 = vmatpush2.msra.mxu0 0.0
    %3276 = vmatprep.subr.mxu0 0.0
    %3277 = vmatpush2.msra.mxu0 0.0
    %3278 = vmatprep.subr.mxu0 0.0
    %3279 = vmatpush2.msra.mxu0 0.0
    %3280 = vmatprep.subr.mxu0 0.0
    %3281 = vmatpush2.msra.mxu0 0.0
    %3282 = vmatprep.subr.mxu0 0.0
    %3283 = vmatpush2.msra.mxu0 0.0
    %3284 = vmatprep.subr.mxu0 0.0
    %3285 = vmatpush2.msra.mxu0 0.0
    %3286 = vmatprep.subr.mxu0 0.0
    %3287 = vmatpush2.msra.mxu0 0.0
    %3288 = vmatprep.subr.mxu0 0.0
    %3289 = vmatpush2.msra.mxu0 0.0
    %3290 = vmatprep.subr.mxu0 0.0
    %3291 = vmatpush2.msra.mxu0 0.0
    %3292 = vmatprep.subr.mxu0 0.0
    %3293 = vmatpush2.msra.mxu0 0.0
    %3294 = vmatprep.subr.mxu0 0.0
    %3295 = vmatpush2.msra.mxu0 0.0
    %3296 = vmatprep.subr.mxu0 0.0
    %3297 = vmatpush2.msra.mxu0 0.0
    %3298 = vmatprep.mubr.f32.mxu0 0.0
    %3299 = vmatmul.mubr.f32.gmra.mxu0 %v3223
    %v3300 = vpop.f32.mrf.mxu0
    %v3301 = vadd.f32 0.0, %v3300
    %v3302 = vpop.f32.mrf.mxu0
    %3303 = vmatprep.mubr.f32.mxu0 0.0
    %3304 = vmatmul.mubr.f32.gmra.mxu0 %v3226
    %v3305 = vpop.f32.mrf.mxu0
    %v3306 = vadd.f32 0.0, %v3305
    %v3307 = vpop.f32.mrf.mxu0
    %3308 = vmatprep.mubr.f32.mxu0 0.0
    %3309 = vmatmul.mubr.f32.gmra.mxu0 %v3229
    %v3310 = vpop.f32.mrf.mxu0
    %v3311 = vadd.f32 0.0, %v3310
    %v3312 = vpop.f32.mrf.mxu0
    %3313 = vmatprep.mubr.f32.mxu0 0.0
    %3314 = vmatmul.mubr.f32.gmra.mxu0 %v3232
    %v3315 = vpop.f32.mrf.mxu0
    %v3316 = vadd.f32 0.0, %v3315
    %v3317 = vpop.f32.mrf.mxu0
    %3318 = vdwg.mxu0
    %v3319 = vmul.f32 %v3301, %v3083
    %v3320 = vmul.f32 %v3306, %v3088
    %v3321 = vmul.f32 %v3311, %v3083
    %v3322 = vmul.f32 %v3316, %v3088
    %v3323 = vsel %vm180, %v3319, 0.0
    %v3324 = vsel %vm180, %v3320, 0.0
    %v3325 = vadd.f32 %v3323, %v3324
    %v3326 = vsel %vm180, %v3321, 0.0
    %v3327 = vsel %vm180, %v3322, 0.0
    %v3328 = vadd.f32 %v3326, %v3327
    %s3329 = scalar_lea.vmem %s8, 24
    %v3330 = vld [vmem:[%s3329] sm:$0xff]
    %v3331 = vld [vmem:[%s3329 + $0x8] sm:$0xff]
    %v3332 = vld [vmem:[%s3329 + $0x10] sm:$0xff]
    %v3333 = vlaneseq
    %v3334 = vshrl.u32 %v3333, 7
    %v3335 = vsub.s32 0, %v3334
    %v3336 = vrot.slane %v2904, %v3335
    %v3338 = vsel %vm180, %v3325, 0
    %v3341 = vsel %vm180, %v3328, 0
    %3343 = vmatprep.subr.mxu0 0.0
    %3344 = vmatpush1.msra.mxu0 0.0
    %3345 = vmatprep.subr.mxu0 0.0
    %3346 = vmatpush1.msra.mxu0 0.0
    %3347 = vmatprep.subr.mxu0 0.0
    %3348 = vmatpush1.msra.mxu0 0.0
    %3349 = vmatprep.subr.mxu0 0.0
    %3350 = vmatpush1.msra.mxu0 0.0
    %3351 = vmatprep.subr.mxu0 0.0
    %3352 = vmatpush1.msra.mxu0 0.0
    %3353 = vmatprep.subr.mxu0 0.0
    %3354 = vmatpush1.msra.mxu0 0.0
    %3355 = vmatprep.subr.mxu0 0.0
    %3356 = vmatpush1.msra.mxu0 0.0
    %3357 = vmatprep.subr.mxu0 0.0
    %3358 = vmatpush1.msra.mxu0 0.0
    %3359 = vmatprep.subr.mxu0 0.0
    %3360 = vmatpush1.msra.mxu0 0.0
    %3361 = vmatprep.subr.mxu0 0.0
    %3362 = vmatpush1.msra.mxu0 0.0
    %3363 = vmatprep.subr.mxu0 0.0
    %3364 = vmatpush1.msra.mxu0 0.0
    %3365 = vmatprep.subr.mxu0 0.0
    %3366 = vmatpush1.msra.mxu0 0.0
    %3367 = vmatprep.subr.mxu0 0.0
    %3368 = vmatpush1.msra.mxu0 0.0
    %3369 = vmatprep.subr.mxu0 0.0
    %3370 = vmatpush1.msra.mxu0 %v3332
    %3371 = vmatprep.subr.mxu0 0.0
    %3372 = vmatpush1.msra.mxu0 %v3331
    %3373 = vmatprep.subr.mxu0 0.0
    %3374 = vmatpush1.msra.mxu0 %v3330
    %3375 = vmatprep.subr.mxu0 0.0
    %3376 = vmatpush2.msra.mxu0 0.0
    %3377 = vmatprep.subr.mxu0 0.0
    %3378 = vmatpush2.msra.mxu0 0.0
    %3379 = vmatprep.subr.mxu0 0.0
    %3380 = vmatpush2.msra.mxu0 0.0
    %3381 = vmatprep.subr.mxu0 0.0
    %3382 = vmatpush2.msra.mxu0 0.0
    %3383 = vmatprep.subr.mxu0 0.0
    %3384 = vmatpush2.msra.mxu0 0.0
    %3385 = vmatprep.subr.mxu0 0.0
    %3386 = vmatpush2.msra.mxu0 0.0
    %3387 = vmatprep.subr.mxu0 0.0
    %3388 = vmatpush2.msra.mxu0 0.0
    %3389 = vmatprep.subr.mxu0 0.0
    %3390 = vmatpush2.msra.mxu0 0.0
    %3391 = vmatprep.subr.mxu0 0.0
    %3392 = vmatpush2.msra.mxu0 0.0
    %3393 = vmatprep.subr.mxu0 0.0
    %3394 = vmatpush2.msra.mxu0 0.0
    %3395 = vmatprep.subr.mxu0 0.0
    %3396 = vmatpush2.msra.mxu0 0.0
    %3397 = vmatprep.subr.mxu0 0.0
    %3398 = vmatpush2.msra.mxu0 0.0
    %3399 = vmatprep.subr.mxu0 0.0
    %3400 = vmatpush2.msra.mxu0 0.0
    %3401 = vmatprep.subr.mxu0 0.0
    %3402 = vmatpush2.msra.mxu0 0.0
    %3403 = vmatprep.subr.mxu0 0.0
    %3404 = vmatpush2.msra.mxu0 0.0
    %3405 = vmatprep.subr.mxu0 0.0
    %3406 = vmatpush2.msra.mxu0 0.0
    %3407 = vmatprep.mubr.f32.mxu0 0.0
    %3408 = vmatmul.mubr.f32.gmra.mxu0 %v3338
    %v3409 = vpop.f32.mrf.mxu0
    %v3410 = vadd.f32 %v3336, %v3409
    %v3411 = vpop.f32.mrf.mxu0
    %3412 = vmatprep.mubr.f32.mxu0 0.0
    %3413 = vmatmul.mubr.f32.gmra.mxu0 %v3341
    %v3414 = vpop.f32.mrf.mxu0
    %v3415 = vadd.f32 %v3336, %v3414
    %v3416 = vpop.f32.mrf.mxu0
    %3417 = vdwg.mxu0
    %v3418 = vadd.f32 %v2901, %v3410
    %v3419 = vadd.f32 %v2902, %v3415
    %v3420 = vsel %vm180, %v3418, 0.0
    %3421 = vadd.xlane.f32.xlu0 %v3420
    %v3422 = vpop.xlane.xlu0 %3421
    %v3423 = vsel %vm180, %v3419, 0.0
    %3424 = vadd.xlane.f32.xlu0 %v3423
    %v3425 = vpop.xlane.xlu0 %3424
    %v3426 = vmul.f32 %v3422, %v792
    %v3427 = vmul.f32 %v3425, %v792
    %v3428 = vsub.f32 %v3418, %v3426
    %v3429 = vsub.f32 %v3419, %v3427
    %v3430 = vmul.f32 %v3428, %v3428
    %v3431 = vmul.f32 %v3429, %v3429
    %v3432 = vsel %vm180, %v3430, 0.0
    %3433 = vadd.xlane.f32.xlu0 %v3432
    %v3434 = vpop.xlane.xlu0 %3433
    %v3435 = vsel %vm180, %v3431, 0.0
    %3436 = vadd.xlane.f32.xlu0 %v3435
    %v3437 = vpop.xlane.xlu0 %3436
    %v3438 = vmul.f32 %v3434, %v792
    %v3439 = vmul.f32 %v3437, %v792
    %v3440 = vadd.f32 %v3438, 1e-05
    %v3441 = vadd.f32 %v3439, 1e-05
    %v3442 = vrsqrt.pop %v3440
    %v3443 = vrsqrt.pop %v3441
    %v3444 = vmul.f32 %v3428, %v3442
    %v3445 = vmul.f32 %v3429, %v3443
    %v3446 = vlaneseq
    %v3447 = vshrl.u32 %v3446, 7
    %v3448 = vsub.s32 1, %v3447
    %v3449 = vrot.slane %v2904, %v3448
    %v3450 = vmul.f32 %v3444, %v3449
    %v3451 = vmul.f32 %v3445, %v3449
    %v3452 = vlaneseq
    %v3453 = vshrl.u32 %v3452, 7
    %v3454 = vsub.s32 2, %v3453
    %v3455 = vrot.slane %v2904, %v3454
    %v3456 = vadd.f32 %v3450, %v3455
    %v3457 = vadd.f32 %v3451, %v3455
    %v3458 = vpack.c.bf16 %v3457, %v3456
    %s3459 = scalar_lea.vmem %s10, 192
    %v3460 = vld [vmem:[%s3459] sm:$0xff]
    %v3461 = vld [vmem:[%s3459 + $0x8] sm:$0xff]
    %v3462 = vld [vmem:[%s3459 + $0x40] sm:$0xff]
    %v3463 = vld [vmem:[%s3459 + $0x48] sm:$0xff]
    %v3464 = vld [vmem:[%s3459 + $0x80] sm:$0xff]
    %v3465 = vld [vmem:[%s3459 + $0x88] sm:$0xff]
    %s3466 = scalar_lea.vmem %s11, 16
    %v3467 = vld [vmem:[%s3466] sm:$0xf]
    %v3469 = vlaneseq
    %v3470 = vshrl.u32 %v3469, 7
    %v3471 = vsub.s32 0, %v3470
    %v3472 = vrot.slane %v3467, %v3471
    %v3473 = vlaneseq
    %v3474 = vshrl.u32 %v3473, 7
    %v3475 = vsub.s32 1, %v3474
    %v3476 = vrot.slane %v3467, %v3475
    %v3477 = vlaneseq
    %v3478 = vshrl.u32 %v3477, 7
    %v3479 = vsub.s32 2, %v3478
    %v3480 = vrot.slane %v3467, %v3479
    %v3481 = vlaneseq
    %v3482 = vshrl.u32 %v3481, 7
    %v3483 = vsub.s32 3, %v3482
    %v3484 = vrot.slane %v3467, %v3483
    %v3495 = vunpack.c.l.b16 %v3460
    %v3496 = vunpack.c.h.b16 %v3460
    %v3497 = vunpack.c.l.b16 %v3461
    %v3498 = vunpack.c.h.b16 %v3461
    %v3499 = vunpack.c.l.b16 %v3462
    %v3500 = vunpack.c.h.b16 %v3462
    %v3501 = vunpack.c.l.b16 %v3463
    %v3502 = vunpack.c.h.b16 %v3463
    %v3503 = vunpack.c.l.b16 %v3464
    %v3504 = vunpack.c.h.b16 %v3464
    %v3505 = vunpack.c.l.b16 %v3465
    %v3506 = vunpack.c.h.b16 %v3465
    %v3507 = vpack.c.b16 %v3499, %v3495
    %v3508 = vpack.c.b16 %v3500, %v3496
    %v3509 = vpack.c.b16 %v3501, %v3497
    %v3510 = vpack.c.b16 %v3502, %v3498
    %v3511 = vpack.c.b16 %v3503, %v3503
    %v3512 = vpack.c.b16 %v3504, %v3504
    %v3513 = vpack.c.b16 %v3505, %v3505
    %v3514 = vpack.c.b16 %v3506, %v3506
    %v3520 = vsel %vm180, %v3458, 0
    %v3523 = vsel %vm66, %v3511, 0
    %v3526 = vsel %vm66, %v3512, 0
    %v3529 = vsel %vm66, %v3513, 0
    %v3532 = vsel %vm66, %v3514, 0
    %3534 = vmatprep.subr.bf16.mxu0 0
    %3535 = vmatpush1.bf16.msra.mxu0 0
    %3536 = vmatprep.subr.bf16.mxu0 0
    %3537 = vmatpush1.bf16.msra.mxu0 0
    %3538 = vmatprep.subr.bf16.mxu0 0
    %3539 = vmatpush1.bf16.msra.mxu0 0
    %3540 = vmatprep.subr.bf16.mxu0 0
    %3541 = vmatpush1.bf16.msra.mxu0 0
    %3542 = vmatprep.subr.bf16.mxu0 0
    %3543 = vmatpush1.bf16.msra.mxu0 0
    %3544 = vmatprep.subr.bf16.mxu0 0
    %3545 = vmatpush1.bf16.msra.mxu0 0
    %3546 = vmatprep.subr.bf16.mxu0 %v3526
    %3547 = vmatpush1.bf16.msra.mxu0 %v3523
    %3548 = vmatprep.subr.bf16.mxu0 %v3508
    %3549 = vmatpush1.bf16.msra.mxu0 %v3507
    %3550 = vmatprep.subr.bf16.mxu0 0
    %3551 = vmatpush2.bf16.msra.mxu0 0
    %3552 = vmatprep.subr.bf16.mxu0 0
    %3553 = vmatpush2.bf16.msra.mxu0 0
    %3554 = vmatprep.subr.bf16.mxu0 0
    %3555 = vmatpush2.bf16.msra.mxu0 0
    %3556 = vmatprep.subr.bf16.mxu0 0
    %3557 = vmatpush2.bf16.msra.mxu0 0
    %3558 = vmatprep.subr.bf16.mxu0 0
    %3559 = vmatpush2.bf16.msra.mxu0 0
    %3560 = vmatprep.subr.bf16.mxu0 0
    %3561 = vmatpush2.bf16.msra.mxu0 0
    %3562 = vmatprep.subr.bf16.mxu0 0
    %3563 = vmatpush2.bf16.msra.mxu0 0
    %3564 = vmatprep.subr.bf16.mxu0 0
    %3565 = vmatpush2.bf16.msra.mxu0 0
    %3566 = vmatprep.mubr.bf16.mxu0 0
    %3567 = vmatmul.mubr.bf16.gmra.mxu0 %v3520
    %v3568 = vpop.f32.mrf.mxu0
    %v3569 = vadd.f32 %v3472, %v3568
    %v3570 = vpop.f32.mrf.mxu0
    %v3571 = vadd.f32 %v3476, %v3570
    %v3572 = vpop.f32.mrf.mxu0
    %v3573 = vadd.f32 %v3472, %v3572
    %v3574 = vpop.f32.mrf.mxu0
    %v3575 = vadd.f32 %v3476, %v3574
    %3576 = vdwg.mxu0
    %3577 = vmatprep.subr.bf16.mxu0 0
    %3578 = vmatpush1.bf16.msra.mxu0 0
    %3579 = vmatprep.subr.bf16.mxu0 0
    %3580 = vmatpush1.bf16.msra.mxu0 0
    %3581 = vmatprep.subr.bf16.mxu0 0
    %3582 = vmatpush1.bf16.msra.mxu0 0
    %3583 = vmatprep.subr.bf16.mxu0 0
    %3584 = vmatpush1.bf16.msra.mxu0 0
    %3585 = vmatprep.subr.bf16.mxu0 0
    %3586 = vmatpush1.bf16.msra.mxu0 0
    %3587 = vmatprep.subr.bf16.mxu0 0
    %3588 = vmatpush1.bf16.msra.mxu0 0
    %3589 = vmatprep.subr.bf16.mxu0 %v3532
    %3590 = vmatpush1.bf16.msra.mxu0 %v3529
    %3591 = vmatprep.subr.bf16.mxu0 %v3510
    %3592 = vmatpush1.bf16.msra.mxu0 %v3509
    %3593 = vmatprep.subr.bf16.mxu0 0
    %3594 = vmatpush2.bf16.msra.mxu0 0
    %3595 = vmatprep.subr.bf16.mxu0 0
    %3596 = vmatpush2.bf16.msra.mxu0 0
    %3597 = vmatprep.subr.bf16.mxu0 0
    %3598 = vmatpush2.bf16.msra.mxu0 0
    %3599 = vmatprep.subr.bf16.mxu0 0
    %3600 = vmatpush2.bf16.msra.mxu0 0
    %3601 = vmatprep.subr.bf16.mxu0 0
    %3602 = vmatpush2.bf16.msra.mxu0 0
    %3603 = vmatprep.subr.bf16.mxu0 0
    %3604 = vmatpush2.bf16.msra.mxu0 0
    %3605 = vmatprep.subr.bf16.mxu0 0
    %3606 = vmatpush2.bf16.msra.mxu0 0
    %3607 = vmatprep.subr.bf16.mxu0 0
    %3608 = vmatpush2.bf16.msra.mxu0 0
    %3609 = vmatprep.mubr.bf16.mxu0 0
    %3610 = vmatmul.mubr.bf16.gmra.mxu0 %v3520
    %v3611 = vpop.f32.mrf.mxu0
    %v3612 = vadd.f32 %v3480, %v3611
    %v3613 = vpop.f32.mrf.mxu0
    %v3614 = vadd.f32 %v3484, %v3613
    %v3615 = vpop.f32.mrf.mxu0
    %v3616 = vadd.f32 %v3480, %v3615
    %v3617 = vpop.f32.mrf.mxu0
    %v3618 = vadd.f32 %v3484, %v3617
    %3619 = vdwg.mxu0
    %v3620 = vmax.f32 %v3569, 0.0
    %v3621 = vmax.f32 %v3571, 0.0
    %v3622 = vmax.f32 %v3612, 0.0
    %v3623 = vmax.f32 %v3614, 0.0
    %v3624 = vmax.f32 %v3573, 0.0
    %v3625 = vmax.f32 %v3575, 0.0
    %v3626 = vmax.f32 %v3616, 0.0
    %v3627 = vmax.f32 %v3618, 0.0
    %v3628 = vpack.c.bf16 %v3624, %v3620
    %v3629 = vpack.c.bf16 %v3625, %v3621
    %v3630 = vpack.c.bf16 %v3626, %v3622
    %v3631 = vpack.c.bf16 %v3627, %v3623
    %s3632 = scalar_lea.vmem %s12, 1024
    %v3633 = vld [vmem:[%s3632] sm:$0xf]
    %v3634 = vld [vmem:[%s3632 + $0x4] sm:$0xf]
    %v3635 = vld [vmem:[%s3632 + $0x8] sm:$0xf]
    %v3636 = vld [vmem:[%s3632 + $0xc] sm:$0xf]
    %v3637 = vld [vmem:[%s3632 + $0x10] sm:$0xf]
    %v3638 = vld [vmem:[%s3632 + $0x14] sm:$0xf]
    %v3639 = vld [vmem:[%s3632 + $0x18] sm:$0xf]
    %v3640 = vld [vmem:[%s3632 + $0x1c] sm:$0xf]
    %v3641 = vld [vmem:[%s3632 + $0x20] sm:$0xf]
    %v3642 = vld [vmem:[%s3632 + $0x24] sm:$0xf]
    %v3643 = vld [vmem:[%s3632 + $0x28] sm:$0xf]
    %v3644 = vld [vmem:[%s3632 + $0x2c] sm:$0xf]
    %v3645 = vld [vmem:[%s3632 + $0x30] sm:$0xf]
    %v3646 = vld [vmem:[%s3632 + $0x34] sm:$0xf]
    %v3647 = vld [vmem:[%s3632 + $0x38] sm:$0xf]
    %v3648 = vld [vmem:[%s3632 + $0x3c] sm:$0xf]
    %v3649 = vld [vmem:[%s3632 + $0x40] sm:$0xf]
    %v3650 = vld [vmem:[%s3632 + $0x44] sm:$0xf]
    %v3651 = vld [vmem:[%s3632 + $0x48] sm:$0xf]
    %v3652 = vld [vmem:[%s3632 + $0x4c] sm:$0xf]
    %v3653 = vld [vmem:[%s3632 + $0x50] sm:$0xf]
    %v3654 = vld [vmem:[%s3632 + $0x54] sm:$0xf]
    %v3655 = vld [vmem:[%s3632 + $0x58] sm:$0xf]
    %v3656 = vld [vmem:[%s3632 + $0x5c] sm:$0xf]
    %v3657 = vld [vmem:[%s3632 + $0x60] sm:$0xf]
    %v3658 = vld [vmem:[%s3632 + $0x64] sm:$0xf]
    %v3659 = vld [vmem:[%s3632 + $0x68] sm:$0xf]
    %v3660 = vld [vmem:[%s3632 + $0x6c] sm:$0xf]
    %v3661 = vld [vmem:[%s3632 + $0x70] sm:$0xf]
    %v3662 = vld [vmem:[%s3632 + $0x74] sm:$0xf]
    %v3663 = vld [vmem:[%s3632 + $0x78] sm:$0xf]
    %v3664 = vld [vmem:[%s3632 + $0x7c] sm:$0xf]
    %v3665 = vld [vmem:[%s3632 + $0x80] sm:$0xf]
    %v3666 = vld [vmem:[%s3632 + $0x84] sm:$0xf]
    %v3667 = vld [vmem:[%s3632 + $0x88] sm:$0xf]
    %v3668 = vld [vmem:[%s3632 + $0x8c] sm:$0xf]
    %v3669 = vld [vmem:[%s3632 + $0x90] sm:$0xf]
    %v3670 = vld [vmem:[%s3632 + $0x94] sm:$0xf]
    %v3671 = vld [vmem:[%s3632 + $0x98] sm:$0xf]
    %v3672 = vld [vmem:[%s3632 + $0x9c] sm:$0xf]
    %v3673 = vld [vmem:[%s3632 + $0xa0] sm:$0xf]
    %v3674 = vld [vmem:[%s3632 + $0xa4] sm:$0xf]
    %v3675 = vld [vmem:[%s3632 + $0xa8] sm:$0xf]
    %v3676 = vld [vmem:[%s3632 + $0xac] sm:$0xf]
    %v3677 = vld [vmem:[%s3632 + $0xb0] sm:$0xf]
    %v3678 = vld [vmem:[%s3632 + $0xb4] sm:$0xf]
    %v3679 = vld [vmem:[%s3632 + $0xb8] sm:$0xf]
    %v3680 = vld [vmem:[%s3632 + $0xbc] sm:$0xf]
    %v3681 = vld [vmem:[%s3632 + $0xc0] sm:$0xf]
    %v3682 = vld [vmem:[%s3632 + $0xc4] sm:$0xf]
    %v3683 = vld [vmem:[%s3632 + $0xc8] sm:$0xf]
    %v3684 = vld [vmem:[%s3632 + $0xcc] sm:$0xf]
    %v3685 = vld [vmem:[%s3632 + $0xd0] sm:$0xf]
    %v3686 = vld [vmem:[%s3632 + $0xd4] sm:$0xf]
    %v3687 = vld [vmem:[%s3632 + $0xd8] sm:$0xf]
    %v3688 = vld [vmem:[%s3632 + $0xdc] sm:$0xf]
    %v3689 = vld [vmem:[%s3632 + $0xe0] sm:$0xf]
    %v3690 = vld [vmem:[%s3632 + $0xe4] sm:$0xf]
    %v3691 = vld [vmem:[%s3632 + $0xe8] sm:$0xf]
    %v3692 = vld [vmem:[%s3632 + $0xec] sm:$0xf]
    %v3693 = vld [vmem:[%s3632 + $0xf0] sm:$0xf]
    %v3694 = vld [vmem:[%s3632 + $0xf4] sm:$0xf]
    %v3695 = vld [vmem:[%s3632 + $0xf8] sm:$0xf]
    %v3696 = vld [vmem:[%s3632 + $0xfc] sm:$0xf]
    %v3697 = vld [vmem:[%s3459 + $0x10] sm:$0xff]
    %v3698 = vld [vmem:[%s3459 + $0x18] sm:$0xff]
    %v3699 = vld [vmem:[%s3459 + $0x50] sm:$0xff]
    %v3700 = vld [vmem:[%s3459 + $0x58] sm:$0xff]
    %v3701 = vld [vmem:[%s3459 + $0x90] sm:$0xff]
    %v3702 = vld [vmem:[%s3459 + $0x98] sm:$0xff]
    %v3703 = vld [vmem:[%s3466 + $0x4] sm:$0xf]
    %v3705 = vlaneseq
    %v3706 = vshrl.u32 %v3705, 7
    %v3707 = vsub.s32 0, %v3706
    %v3708 = vrot.slane %v3703, %v3707
    %v3709 = vlaneseq
    %v3710 = vshrl.u32 %v3709, 7
    %v3711 = vsub.s32 1, %v3710
    %v3712 = vrot.slane %v3703, %v3711
    %v3713 = vlaneseq
    %v3714 = vshrl.u32 %v3713, 7
    %v3715 = vsub.s32 2, %v3714
    %v3716 = vrot.slane %v3703, %v3715
    %v3717 = vlaneseq
    %v3718 = vshrl.u32 %v3717, 7
    %v3719 = vsub.s32 3, %v3718
    %v3720 = vrot.slane %v3703, %v3719
    %v3731 = vunpack.c.l.b16 %v3697
    %v3732 = vunpack.c.h.b16 %v3697
    %v3733 = vunpack.c.l.b16 %v3698
    %v3734 = vunpack.c.h.b16 %v3698
    %v3735 = vunpack.c.l.b16 %v3699
    %v3736 = vunpack.c.h.b16 %v3699
    %v3737 = vunpack.c.l.b16 %v3700
    %v3738 = vunpack.c.h.b16 %v3700
    %v3739 = vunpack.c.l.b16 %v3701
    %v3740 = vunpack.c.h.b16 %v3701
    %v3741 = vunpack.c.l.b16 %v3702
    %v3742 = vunpack.c.h.b16 %v3702
    %v3743 = vpack.c.b16 %v3735, %v3731
    %v3744 = vpack.c.b16 %v3736, %v3732
    %v3745 = vpack.c.b16 %v3737, %v3733
    %v3746 = vpack.c.b16 %v3738, %v3734
    %v3747 = vpack.c.b16 %v3739, %v3739
    %v3748 = vpack.c.b16 %v3740, %v3740
    %v3749 = vpack.c.b16 %v3741, %v3741
    %v3750 = vpack.c.b16 %v3742, %v3742
    %v3756 = vsel %vm66, %v3747, 0
    %v3759 = vsel %vm66, %v3748, 0
    %v3762 = vsel %vm66, %v3749, 0
    %v3765 = vsel %vm66, %v3750, 0
    %3767 = vmatprep.subr.bf16.mxu0 0
    %3768 = vmatpush1.bf16.msra.mxu0 0
    %3769 = vmatprep.subr.bf16.mxu0 0
    %3770 = vmatpush1.bf16.msra.mxu0 0
    %3771 = vmatprep.subr.bf16.mxu0 0
    %3772 = vmatpush1.bf16.msra.mxu0 0
    %3773 = vmatprep.subr.bf16.mxu0 0
    %3774 = vmatpush1.bf16.msra.mxu0 0
    %3775 = vmatprep.subr.bf16.mxu0 0
    %3776 = vmatpush1.bf16.msra.mxu0 0
    %3777 = vmatprep.subr.bf16.mxu0 0
    %3778 = vmatpush1.bf16.msra.mxu0 0
    %3779 = vmatprep.subr.bf16.mxu0 %v3759
    %3780 = vmatpush1.bf16.msra.mxu0 %v3756
    %3781 = vmatprep.subr.bf16.mxu0 %v3744
    %3782 = vmatpush1.bf16.msra.mxu0 %v3743
    %3783 = vmatprep.subr.bf16.mxu0 0
    %3784 = vmatpush2.bf16.msra.mxu0 0
    %3785 = vmatprep.subr.bf16.mxu0 0
    %3786 = vmatpush2.bf16.msra.mxu0 0
    %3787 = vmatprep.subr.bf16.mxu0 0
    %3788 = vmatpush2.bf16.msra.mxu0 0
    %3789 = vmatprep.subr.bf16.mxu0 0
    %3790 = vmatpush2.bf16.msra.mxu0 0
    %3791 = vmatprep.subr.bf16.mxu0 0
    %3792 = vmatpush2.bf16.msra.mxu0 0
    %3793 = vmatprep.subr.bf16.mxu0 0
    %3794 = vmatpush2.bf16.msra.mxu0 0
    %3795 = vmatprep.subr.bf16.mxu0 0
    %3796 = vmatpush2.bf16.msra.mxu0 0
    %3797 = vmatprep.subr.bf16.mxu0 0
    %3798 = vmatpush2.bf16.msra.mxu0 0
    %3799 = vmatprep.mubr.bf16.mxu0 0
    %3800 = vmatmul.mubr.bf16.gmra.mxu0 %v3520
    %v3801 = vpop.f32.mrf.mxu0
    %v3802 = vadd.f32 %v3708, %v3801
    %v3803 = vpop.f32.mrf.mxu0
    %v3804 = vadd.f32 %v3712, %v3803
    %v3805 = vpop.f32.mrf.mxu0
    %v3806 = vadd.f32 %v3708, %v3805
    %v3807 = vpop.f32.mrf.mxu0
    %v3808 = vadd.f32 %v3712, %v3807
    %3809 = vdwg.mxu0
    %3810 = vmatprep.subr.bf16.mxu0 0
    %3811 = vmatpush1.bf16.msra.mxu0 0
    %3812 = vmatprep.subr.bf16.mxu0 0
    %3813 = vmatpush1.bf16.msra.mxu0 0
    %3814 = vmatprep.subr.bf16.mxu0 0
    %3815 = vmatpush1.bf16.msra.mxu0 0
    %3816 = vmatprep.subr.bf16.mxu0 0
    %3817 = vmatpush1.bf16.msra.mxu0 0
    %3818 = vmatprep.subr.bf16.mxu0 0
    %3819 = vmatpush1.bf16.msra.mxu0 0
    %3820 = vmatprep.subr.bf16.mxu0 0
    %3821 = vmatpush1.bf16.msra.mxu0 0
    %3822 = vmatprep.subr.bf16.mxu0 %v3765
    %3823 = vmatpush1.bf16.msra.mxu0 %v3762
    %3824 = vmatprep.subr.bf16.mxu0 %v3746
    %3825 = vmatpush1.bf16.msra.mxu0 %v3745
    %3826 = vmatprep.subr.bf16.mxu0 0
    %3827 = vmatpush2.bf16.msra.mxu0 0
    %3828 = vmatprep.subr.bf16.mxu0 0
    %3829 = vmatpush2.bf16.msra.mxu0 0
    %3830 = vmatprep.subr.bf16.mxu0 0
    %3831 = vmatpush2.bf16.msra.mxu0 0
    %3832 = vmatprep.subr.bf16.mxu0 0
    %3833 = vmatpush2.bf16.msra.mxu0 0
    %3834 = vmatprep.subr.bf16.mxu0 0
    %3835 = vmatpush2.bf16.msra.mxu0 0
    %3836 = vmatprep.subr.bf16.mxu0 0
    %3837 = vmatpush2.bf16.msra.mxu0 0
    %3838 = vmatprep.subr.bf16.mxu0 0
    %3839 = vmatpush2.bf16.msra.mxu0 0
    %3840 = vmatprep.subr.bf16.mxu0 0
    %3841 = vmatpush2.bf16.msra.mxu0 0
    %3842 = vmatprep.mubr.bf16.mxu0 0
    %3843 = vmatmul.mubr.bf16.gmra.mxu0 %v3520
    %v3844 = vpop.f32.mrf.mxu0
    %v3845 = vadd.f32 %v3716, %v3844
    %v3846 = vpop.f32.mrf.mxu0
    %v3847 = vadd.f32 %v3720, %v3846
    %v3848 = vpop.f32.mrf.mxu0
    %v3849 = vadd.f32 %v3716, %v3848
    %v3850 = vpop.f32.mrf.mxu0
    %v3851 = vadd.f32 %v3720, %v3850
    %3852 = vdwg.mxu0
    %v3853 = vmax.f32 %v3802, 0.0
    %v3854 = vmax.f32 %v3804, 0.0
    %v3855 = vmax.f32 %v3845, 0.0
    %v3856 = vmax.f32 %v3847, 0.0
    %v3857 = vmax.f32 %v3806, 0.0
    %v3858 = vmax.f32 %v3808, 0.0
    %v3859 = vmax.f32 %v3849, 0.0
    %v3860 = vmax.f32 %v3851, 0.0
    %v3861 = vpack.c.bf16 %v3857, %v3853
    %v3862 = vpack.c.bf16 %v3858, %v3854
    %v3863 = vpack.c.bf16 %v3859, %v3855
    %v3864 = vpack.c.bf16 %v3860, %v3856
    %v3865 = vld [vmem:[%s3632 + $0x100] sm:$0xf]
    %v3866 = vld [vmem:[%s3632 + $0x104] sm:$0xf]
    %v3867 = vld [vmem:[%s3632 + $0x108] sm:$0xf]
    %v3868 = vld [vmem:[%s3632 + $0x10c] sm:$0xf]
    %v3869 = vld [vmem:[%s3632 + $0x110] sm:$0xf]
    %v3870 = vld [vmem:[%s3632 + $0x114] sm:$0xf]
    %v3871 = vld [vmem:[%s3632 + $0x118] sm:$0xf]
    %v3872 = vld [vmem:[%s3632 + $0x11c] sm:$0xf]
    %v3873 = vld [vmem:[%s3632 + $0x120] sm:$0xf]
    %v3874 = vld [vmem:[%s3632 + $0x124] sm:$0xf]
    %v3875 = vld [vmem:[%s3632 + $0x128] sm:$0xf]
    %v3876 = vld [vmem:[%s3632 + $0x12c] sm:$0xf]
    %v3877 = vld [vmem:[%s3632 + $0x130] sm:$0xf]
    %v3878 = vld [vmem:[%s3632 + $0x134] sm:$0xf]
    %v3879 = vld [vmem:[%s3632 + $0x138] sm:$0xf]
    %v3880 = vld [vmem:[%s3632 + $0x13c] sm:$0xf]
    %v3881 = vld [vmem:[%s3632 + $0x140] sm:$0xf]
    %v3882 = vld [vmem:[%s3632 + $0x144] sm:$0xf]
    %v3883 = vld [vmem:[%s3632 + $0x148] sm:$0xf]
    %v3884 = vld [vmem:[%s3632 + $0x14c] sm:$0xf]
    %v3885 = vld [vmem:[%s3632 + $0x150] sm:$0xf]
    %v3886 = vld [vmem:[%s3632 + $0x154] sm:$0xf]
    %v3887 = vld [vmem:[%s3632 + $0x158] sm:$0xf]
    %v3888 = vld [vmem:[%s3632 + $0x15c] sm:$0xf]
    %v3889 = vld [vmem:[%s3632 + $0x160] sm:$0xf]
    %v3890 = vld [vmem:[%s3632 + $0x164] sm:$0xf]
    %v3891 = vld [vmem:[%s3632 + $0x168] sm:$0xf]
    %v3892 = vld [vmem:[%s3632 + $0x16c] sm:$0xf]
    %v3893 = vld [vmem:[%s3632 + $0x170] sm:$0xf]
    %v3894 = vld [vmem:[%s3632 + $0x174] sm:$0xf]
    %v3895 = vld [vmem:[%s3632 + $0x178] sm:$0xf]
    %v3896 = vld [vmem:[%s3632 + $0x17c] sm:$0xf]
    %v3897 = vld [vmem:[%s3632 + $0x180] sm:$0xf]
    %v3898 = vld [vmem:[%s3632 + $0x184] sm:$0xf]
    %v3899 = vld [vmem:[%s3632 + $0x188] sm:$0xf]
    %v3900 = vld [vmem:[%s3632 + $0x18c] sm:$0xf]
    %v3901 = vld [vmem:[%s3632 + $0x190] sm:$0xf]
    %v3902 = vld [vmem:[%s3632 + $0x194] sm:$0xf]
    %v3903 = vld [vmem:[%s3632 + $0x198] sm:$0xf]
    %v3904 = vld [vmem:[%s3632 + $0x19c] sm:$0xf]
    %v3905 = vld [vmem:[%s3632 + $0x1a0] sm:$0xf]
    %v3906 = vld [vmem:[%s3632 + $0x1a4] sm:$0xf]
    %v3907 = vld [vmem:[%s3632 + $0x1a8] sm:$0xf]
    %v3908 = vld [vmem:[%s3632 + $0x1ac] sm:$0xf]
    %v3909 = vld [vmem:[%s3632 + $0x1b0] sm:$0xf]
    %v3910 = vld [vmem:[%s3632 + $0x1b4] sm:$0xf]
    %v3911 = vld [vmem:[%s3632 + $0x1b8] sm:$0xf]
    %v3912 = vld [vmem:[%s3632 + $0x1bc] sm:$0xf]
    %v3913 = vld [vmem:[%s3632 + $0x1c0] sm:$0xf]
    %v3914 = vld [vmem:[%s3632 + $0x1c4] sm:$0xf]
    %v3915 = vld [vmem:[%s3632 + $0x1c8] sm:$0xf]
    %v3916 = vld [vmem:[%s3632 + $0x1cc] sm:$0xf]
    %v3917 = vld [vmem:[%s3632 + $0x1d0] sm:$0xf]
    %v3918 = vld [vmem:[%s3632 + $0x1d4] sm:$0xf]
    %v3919 = vld [vmem:[%s3632 + $0x1d8] sm:$0xf]
    %v3920 = vld [vmem:[%s3632 + $0x1dc] sm:$0xf]
    %v3921 = vld [vmem:[%s3632 + $0x1e0] sm:$0xf]
    %v3922 = vld [vmem:[%s3632 + $0x1e4] sm:$0xf]
    %v3923 = vld [vmem:[%s3632 + $0x1e8] sm:$0xf]
    %v3924 = vld [vmem:[%s3632 + $0x1ec] sm:$0xf]
    %v3925 = vld [vmem:[%s3632 + $0x1f0] sm:$0xf]
    %v3926 = vld [vmem:[%s3632 + $0x1f4] sm:$0xf]
    %v3927 = vld [vmem:[%s3632 + $0x1f8] sm:$0xf]
    %v3928 = vld [vmem:[%s3632 + $0x1fc] sm:$0xf]
    %v3993 = vunpack.c.l.b16 %v3865
    %v3994 = vunpack.c.l.b16 %v3866
    %v3995 = vunpack.c.l.b16 %v3867
    %v3996 = vunpack.c.l.b16 %v3868
    %v3997 = vunpack.c.l.b16 %v3869
    %v3998 = vunpack.c.l.b16 %v3870
    %v3999 = vunpack.c.l.b16 %v3871
    %v4000 = vunpack.c.l.b16 %v3872
    %v4001 = vunpack.c.l.b16 %v3873
    %v4002 = vunpack.c.l.b16 %v3874
    %v4003 = vunpack.c.l.b16 %v3875
    %v4004 = vunpack.c.l.b16 %v3876
    %v4005 = vunpack.c.l.b16 %v3877
    %v4006 = vunpack.c.l.b16 %v3878
    %v4007 = vunpack.c.l.b16 %v3879
    %v4008 = vunpack.c.l.b16 %v3880
    %v4009 = vunpack.c.l.b16 %v3881
    %v4010 = vunpack.c.l.b16 %v3882
    %v4011 = vunpack.c.l.b16 %v3883
    %v4012 = vunpack.c.l.b16 %v3884
    %v4013 = vunpack.c.l.b16 %v3885
    %v4014 = vunpack.c.l.b16 %v3886
    %v4015 = vunpack.c.l.b16 %v3887
    %v4016 = vunpack.c.l.b16 %v3888
    %v4017 = vunpack.c.l.b16 %v3889
    %v4018 = vunpack.c.l.b16 %v3890
    %v4019 = vunpack.c.l.b16 %v3891
    %v4020 = vunpack.c.l.b16 %v3892
    %v4021 = vunpack.c.l.b16 %v3893
    %v4022 = vunpack.c.l.b16 %v3894
    %v4023 = vunpack.c.l.b16 %v3895
    %v4024 = vunpack.c.l.b16 %v3896
    %v4025 = vunpack.c.l.b16 %v3897
    %v4026 = vunpack.c.l.b16 %v3898
    %v4027 = vunpack.c.l.b16 %v3899
    %v4028 = vunpack.c.l.b16 %v3900
    %v4029 = vunpack.c.l.b16 %v3901
    %v4030 = vunpack.c.l.b16 %v3902
    %v4031 = vunpack.c.l.b16 %v3903
    %v4032 = vunpack.c.l.b16 %v3904
    %v4033 = vunpack.c.l.b16 %v3905
    %v4034 = vunpack.c.l.b16 %v3906
    %v4035 = vunpack.c.l.b16 %v3907
    %v4036 = vunpack.c.l.b16 %v3908
    %v4037 = vunpack.c.l.b16 %v3909
    %v4038 = vunpack.c.l.b16 %v3910
    %v4039 = vunpack.c.l.b16 %v3911
    %v4040 = vunpack.c.l.b16 %v3912
    %v4041 = vunpack.c.l.b16 %v3913
    %v4042 = vunpack.c.l.b16 %v3914
    %v4043 = vunpack.c.l.b16 %v3915
    %v4044 = vunpack.c.l.b16 %v3916
    %v4045 = vunpack.c.l.b16 %v3917
    %v4046 = vunpack.c.l.b16 %v3918
    %v4047 = vunpack.c.l.b16 %v3919
    %v4048 = vunpack.c.l.b16 %v3920
    %v4049 = vunpack.c.l.b16 %v3921
    %v4050 = vunpack.c.l.b16 %v3922
    %v4051 = vunpack.c.l.b16 %v3923
    %v4052 = vunpack.c.l.b16 %v3924
    %v4053 = vunpack.c.l.b16 %v3925
    %v4054 = vunpack.c.l.b16 %v3926
    %v4055 = vunpack.c.l.b16 %v3927
    %v4056 = vunpack.c.l.b16 %v3928
    %v4057 = vpack.c.b16 %v3994, %v3993
    %v4058 = vpack.c.b16 %v3996, %v3995
    %v4059 = vpack.c.b16 %v3998, %v3997
    %v4060 = vpack.c.b16 %v4000, %v3999
    %v4061 = vpack.c.b16 %v4002, %v4001
    %v4062 = vpack.c.b16 %v4004, %v4003
    %v4063 = vpack.c.b16 %v4006, %v4005
    %v4064 = vpack.c.b16 %v4008, %v4007
    %v4065 = vpack.c.b16 %v4010, %v4009
    %v4066 = vpack.c.b16 %v4012, %v4011
    %v4067 = vpack.c.b16 %v4014, %v4013
    %v4068 = vpack.c.b16 %v4016, %v4015
    %v4069 = vpack.c.b16 %v4018, %v4017
    %v4070 = vpack.c.b16 %v4020, %v4019
    %v4071 = vpack.c.b16 %v4022, %v4021
    %v4072 = vpack.c.b16 %v4024, %v4023
    %v4073 = vpack.c.b16 %v4026, %v4025
    %v4074 = vpack.c.b16 %v4028, %v4027
    %v4075 = vpack.c.b16 %v4030, %v4029
    %v4076 = vpack.c.b16 %v4032, %v4031
    %v4077 = vpack.c.b16 %v4034, %v4033
    %v4078 = vpack.c.b16 %v4036, %v4035
    %v4079 = vpack.c.b16 %v4038, %v4037
    %v4080 = vpack.c.b16 %v4040, %v4039
    %v4081 = vpack.c.b16 %v4042, %v4041
    %v4082 = vpack.c.b16 %v4044, %v4043
    %v4083 = vpack.c.b16 %v4046, %v4045
    %v4084 = vpack.c.b16 %v4048, %v4047
    %v4085 = vpack.c.b16 %v4050, %v4049
    %v4086 = vpack.c.b16 %v4052, %v4051
    %v4087 = vpack.c.b16 %v4054, %v4053
    %v4088 = vpack.c.b16 %v4056, %v4055
    %4121 = vmatprep.subr.bf16.mxu0 0
    %4122 = vmatpush1.bf16.msra.mxu0 %v4064
    %4123 = vmatprep.subr.bf16.mxu0 0
    %4124 = vmatpush1.bf16.msra.mxu0 %v4063
    %4125 = vmatprep.subr.bf16.mxu0 0
    %4126 = vmatpush1.bf16.msra.mxu0 %v4062
    %4127 = vmatprep.subr.bf16.mxu0 0
    %4128 = vmatpush1.bf16.msra.mxu0 %v4061
    %4129 = vmatprep.subr.bf16.mxu0 0
    %4130 = vmatpush1.bf16.msra.mxu0 %v4060
    %4131 = vmatprep.subr.bf16.mxu0 0
    %4132 = vmatpush1.bf16.msra.mxu0 %v4059
    %4133 = vmatprep.subr.bf16.mxu0 0
    %4134 = vmatpush1.bf16.msra.mxu0 %v4058
    %4135 = vmatprep.subr.bf16.mxu0 0
    %4136 = vmatpush1.bf16.msra.mxu0 %v4057
    %4137 = vmatprep.subr.bf16.mxu0 0
    %4138 = vmatpush2.bf16.msra.mxu0 %v4072
    %4139 = vmatprep.subr.bf16.mxu0 0
    %4140 = vmatpush2.bf16.msra.mxu0 %v4071
    %4141 = vmatprep.subr.bf16.mxu0 0
    %4142 = vmatpush2.bf16.msra.mxu0 %v4070
    %4143 = vmatprep.subr.bf16.mxu0 0
    %4144 = vmatpush2.bf16.msra.mxu0 %v4069
    %4145 = vmatprep.subr.bf16.mxu0 0
    %4146 = vmatpush2.bf16.msra.mxu0 %v4068
    %4147 = vmatprep.subr.bf16.mxu0 0
    %4148 = vmatpush2.bf16.msra.mxu0 %v4067
    %4149 = vmatprep.subr.bf16.mxu0 0
    %4150 = vmatpush2.bf16.msra.mxu0 %v4066
    %4151 = vmatprep.subr.bf16.mxu0 0
    %4152 = vmatpush2.bf16.msra.mxu0 %v4065
    %4153 = vmatprep.mubr.bf16.mxu0 %v3862
    %4154 = vmatmul.mubr.bf16.gmra.mxu0 %v3861
    %v4155 = vpop.f32.mrf.mxu0
    %v4156 = vadd.f32 0.0, %v4155
    %v4157 = vpop.f32.mrf.mxu0
    %v4158 = vpop.f32.mrf.mxu0
    %v4159 = vadd.f32 0.0, %v4158
    %v4160 = vpop.f32.mrf.mxu0
    %4161 = vdwg.mxu0
    %4162 = vmatprep.subr.bf16.mxu0 0
    %4163 = vmatpush1.bf16.msra.mxu0 %v4080
    %4164 = vmatprep.subr.bf16.mxu0 0
    %4165 = vmatpush1.bf16.msra.mxu0 %v4079
    %4166 = vmatprep.subr.bf16.mxu0 0
    %4167 = vmatpush1.bf16.msra.mxu0 %v4078
    %4168 = vmatprep.subr.bf16.mxu0 0
    %4169 = vmatpush1.bf16.msra.mxu0 %v4077
    %4170 = vmatprep.subr.bf16.mxu0 0
    %4171 = vmatpush1.bf16.msra.mxu0 %v4076
    %4172 = vmatprep.subr.bf16.mxu0 0
    %4173 = vmatpush1.bf16.msra.mxu0 %v4075
    %4174 = vmatprep.subr.bf16.mxu0 0
    %4175 = vmatpush1.bf16.msra.mxu0 %v4074
    %4176 = vmatprep.subr.bf16.mxu0 0
    %4177 = vmatpush1.bf16.msra.mxu0 %v4073
    %4178 = vmatprep.subr.bf16.mxu0 0
    %4179 = vmatpush2.bf16.msra.mxu0 %v4088
    %4180 = vmatprep.subr.bf16.mxu0 0
    %4181 = vmatpush2.bf16.msra.mxu0 %v4087
    %4182 = vmatprep.subr.bf16.mxu0 0
    %4183 = vmatpush2.bf16.msra.mxu0 %v4086
    %4184 = vmatprep.subr.bf16.mxu0 0
    %4185 = vmatpush2.bf16.msra.mxu0 %v4085
    %4186 = vmatprep.subr.bf16.mxu0 0
    %4187 = vmatpush2.bf16.msra.mxu0 %v4084
    %4188 = vmatprep.subr.bf16.mxu0 0
    %4189 = vmatpush2.bf16.msra.mxu0 %v4083
    %4190 = vmatprep.subr.bf16.mxu0 0
    %4191 = vmatpush2.bf16.msra.mxu0 %v4082
    %4192 = vmatprep.subr.bf16.mxu0 0
    %4193 = vmatpush2.bf16.msra.mxu0 %v4081
    %4194 = vmatprep.mubr.bf16.mxu0 %v3864
    %4195 = vmatmul.mubr.bf16.gmra.mxu0 %v3863
    %v4196 = vpop.f32.mrf.mxu0
    %v4197 = vadd.f32 %v4156, %v4196
    %v4198 = vpop.f32.mrf.mxu0
    %v4199 = vpop.f32.mrf.mxu0
    %v4200 = vadd.f32 %v4159, %v4199
    %v4201 = vpop.f32.mrf.mxu0
    %4202 = vdwg.mxu0
    %v4267 = vunpack.c.l.b16 %v3633
    %v4268 = vunpack.c.l.b16 %v3634
    %v4269 = vunpack.c.l.b16 %v3635
    %v4270 = vunpack.c.l.b16 %v3636
    %v4271 = vunpack.c.l.b16 %v3637
    %v4272 = vunpack.c.l.b16 %v3638
    %v4273 = vunpack.c.l.b16 %v3639
    %v4274 = vunpack.c.l.b16 %v3640
    %v4275 = vunpack.c.l.b16 %v3641
    %v4276 = vunpack.c.l.b16 %v3642
    %v4277 = vunpack.c.l.b16 %v3643
    %v4278 = vunpack.c.l.b16 %v3644
    %v4279 = vunpack.c.l.b16 %v3645
    %v4280 = vunpack.c.l.b16 %v3646
    %v4281 = vunpack.c.l.b16 %v3647
    %v4282 = vunpack.c.l.b16 %v3648
    %v4283 = vunpack.c.l.b16 %v3649
    %v4284 = vunpack.c.l.b16 %v3650
    %v4285 = vunpack.c.l.b16 %v3651
    %v4286 = vunpack.c.l.b16 %v3652
    %v4287 = vunpack.c.l.b16 %v3653
    %v4288 = vunpack.c.l.b16 %v3654
    %v4289 = vunpack.c.l.b16 %v3655
    %v4290 = vunpack.c.l.b16 %v3656
    %v4291 = vunpack.c.l.b16 %v3657
    %v4292 = vunpack.c.l.b16 %v3658
    %v4293 = vunpack.c.l.b16 %v3659
    %v4294 = vunpack.c.l.b16 %v3660
    %v4295 = vunpack.c.l.b16 %v3661
    %v4296 = vunpack.c.l.b16 %v3662
    %v4297 = vunpack.c.l.b16 %v3663
    %v4298 = vunpack.c.l.b16 %v3664
    %v4299 = vunpack.c.l.b16 %v3665
    %v4300 = vunpack.c.l.b16 %v3666
    %v4301 = vunpack.c.l.b16 %v3667
    %v4302 = vunpack.c.l.b16 %v3668
    %v4303 = vunpack.c.l.b16 %v3669
    %v4304 = vunpack.c.l.b16 %v3670
    %v4305 = vunpack.c.l.b16 %v3671
    %v4306 = vunpack.c.l.b16 %v3672
    %v4307 = vunpack.c.l.b16 %v3673
    %v4308 = vunpack.c.l.b16 %v3674
    %v4309 = vunpack.c.l.b16 %v3675
    %v4310 = vunpack.c.l.b16 %v3676
    %v4311 = vunpack.c.l.b16 %v3677
    %v4312 = vunpack.c.l.b16 %v3678
    %v4313 = vunpack.c.l.b16 %v3679
    %v4314 = vunpack.c.l.b16 %v3680
    %v4315 = vunpack.c.l.b16 %v3681
    %v4316 = vunpack.c.l.b16 %v3682
    %v4317 = vunpack.c.l.b16 %v3683
    %v4318 = vunpack.c.l.b16 %v3684
    %v4319 = vunpack.c.l.b16 %v3685
    %v4320 = vunpack.c.l.b16 %v3686
    %v4321 = vunpack.c.l.b16 %v3687
    %v4322 = vunpack.c.l.b16 %v3688
    %v4323 = vunpack.c.l.b16 %v3689
    %v4324 = vunpack.c.l.b16 %v3690
    %v4325 = vunpack.c.l.b16 %v3691
    %v4326 = vunpack.c.l.b16 %v3692
    %v4327 = vunpack.c.l.b16 %v3693
    %v4328 = vunpack.c.l.b16 %v3694
    %v4329 = vunpack.c.l.b16 %v3695
    %v4330 = vunpack.c.l.b16 %v3696
    %v4331 = vpack.c.b16 %v4268, %v4267
    %v4332 = vpack.c.b16 %v4270, %v4269
    %v4333 = vpack.c.b16 %v4272, %v4271
    %v4334 = vpack.c.b16 %v4274, %v4273
    %v4335 = vpack.c.b16 %v4276, %v4275
    %v4336 = vpack.c.b16 %v4278, %v4277
    %v4337 = vpack.c.b16 %v4280, %v4279
    %v4338 = vpack.c.b16 %v4282, %v4281
    %v4339 = vpack.c.b16 %v4284, %v4283
    %v4340 = vpack.c.b16 %v4286, %v4285
    %v4341 = vpack.c.b16 %v4288, %v4287
    %v4342 = vpack.c.b16 %v4290, %v4289
    %v4343 = vpack.c.b16 %v4292, %v4291
    %v4344 = vpack.c.b16 %v4294, %v4293
    %v4345 = vpack.c.b16 %v4296, %v4295
    %v4346 = vpack.c.b16 %v4298, %v4297
    %v4347 = vpack.c.b16 %v4300, %v4299
    %v4348 = vpack.c.b16 %v4302, %v4301
    %v4349 = vpack.c.b16 %v4304, %v4303
    %v4350 = vpack.c.b16 %v4306, %v4305
    %v4351 = vpack.c.b16 %v4308, %v4307
    %v4352 = vpack.c.b16 %v4310, %v4309
    %v4353 = vpack.c.b16 %v4312, %v4311
    %v4354 = vpack.c.b16 %v4314, %v4313
    %v4355 = vpack.c.b16 %v4316, %v4315
    %v4356 = vpack.c.b16 %v4318, %v4317
    %v4357 = vpack.c.b16 %v4320, %v4319
    %v4358 = vpack.c.b16 %v4322, %v4321
    %v4359 = vpack.c.b16 %v4324, %v4323
    %v4360 = vpack.c.b16 %v4326, %v4325
    %v4361 = vpack.c.b16 %v4328, %v4327
    %v4362 = vpack.c.b16 %v4330, %v4329
    %4395 = vmatprep.subr.bf16.mxu0 0
    %4396 = vmatpush1.bf16.msra.mxu0 %v4338
    %4397 = vmatprep.subr.bf16.mxu0 0
    %4398 = vmatpush1.bf16.msra.mxu0 %v4337
    %4399 = vmatprep.subr.bf16.mxu0 0
    %4400 = vmatpush1.bf16.msra.mxu0 %v4336
    %4401 = vmatprep.subr.bf16.mxu0 0
    %4402 = vmatpush1.bf16.msra.mxu0 %v4335
    %4403 = vmatprep.subr.bf16.mxu0 0
    %4404 = vmatpush1.bf16.msra.mxu0 %v4334
    %4405 = vmatprep.subr.bf16.mxu0 0
    %4406 = vmatpush1.bf16.msra.mxu0 %v4333
    %4407 = vmatprep.subr.bf16.mxu0 0
    %4408 = vmatpush1.bf16.msra.mxu0 %v4332
    %4409 = vmatprep.subr.bf16.mxu0 0
    %4410 = vmatpush1.bf16.msra.mxu0 %v4331
    %4411 = vmatprep.subr.bf16.mxu0 0
    %4412 = vmatpush2.bf16.msra.mxu0 %v4346
    %4413 = vmatprep.subr.bf16.mxu0 0
    %4414 = vmatpush2.bf16.msra.mxu0 %v4345
    %4415 = vmatprep.subr.bf16.mxu0 0
    %4416 = vmatpush2.bf16.msra.mxu0 %v4344
    %4417 = vmatprep.subr.bf16.mxu0 0
    %4418 = vmatpush2.bf16.msra.mxu0 %v4343
    %4419 = vmatprep.subr.bf16.mxu0 0
    %4420 = vmatpush2.bf16.msra.mxu0 %v4342
    %4421 = vmatprep.subr.bf16.mxu0 0
    %4422 = vmatpush2.bf16.msra.mxu0 %v4341
    %4423 = vmatprep.subr.bf16.mxu0 0
    %4424 = vmatpush2.bf16.msra.mxu0 %v4340
    %4425 = vmatprep.subr.bf16.mxu0 0
    %4426 = vmatpush2.bf16.msra.mxu0 %v4339
    %4427 = vmatprep.mubr.bf16.mxu0 %v3629
    %4428 = vmatmul.mubr.bf16.gmra.mxu0 %v3628
    %v4429 = vpop.f32.mrf.mxu0
    %v4430 = vadd.f32 %v4197, %v4429
    %v4431 = vpop.f32.mrf.mxu0
    %v4432 = vpop.f32.mrf.mxu0
    %v4433 = vadd.f32 %v4200, %v4432
    %v4434 = vpop.f32.mrf.mxu0
    %4435 = vdwg.mxu0
    %4436 = vmatprep.subr.bf16.mxu0 0
    %4437 = vmatpush1.bf16.msra.mxu0 %v4354
    %4438 = vmatprep.subr.bf16.mxu0 0
    %4439 = vmatpush1.bf16.msra.mxu0 %v4353
    %4440 = vmatprep.subr.bf16.mxu0 0
    %4441 = vmatpush1.bf16.msra.mxu0 %v4352
    %4442 = vmatprep.subr.bf16.mxu0 0
    %4443 = vmatpush1.bf16.msra.mxu0 %v4351
    %4444 = vmatprep.subr.bf16.mxu0 0
    %4445 = vmatpush1.bf16.msra.mxu0 %v4350
    %4446 = vmatprep.subr.bf16.mxu0 0
    %4447 = vmatpush1.bf16.msra.mxu0 %v4349
    %4448 = vmatprep.subr.bf16.mxu0 0
    %4449 = vmatpush1.bf16.msra.mxu0 %v4348
    %4450 = vmatprep.subr.bf16.mxu0 0
    %4451 = vmatpush1.bf16.msra.mxu0 %v4347
    %4452 = vmatprep.subr.bf16.mxu0 0
    %4453 = vmatpush2.bf16.msra.mxu0 %v4362
    %4454 = vmatprep.subr.bf16.mxu0 0
    %4455 = vmatpush2.bf16.msra.mxu0 %v4361
    %4456 = vmatprep.subr.bf16.mxu0 0
    %4457 = vmatpush2.bf16.msra.mxu0 %v4360
    %4458 = vmatprep.subr.bf16.mxu0 0
    %4459 = vmatpush2.bf16.msra.mxu0 %v4359
    %4460 = vmatprep.subr.bf16.mxu0 0
    %4461 = vmatpush2.bf16.msra.mxu0 %v4358
    %4462 = vmatprep.subr.bf16.mxu0 0
    %4463 = vmatpush2.bf16.msra.mxu0 %v4357
    %4464 = vmatprep.subr.bf16.mxu0 0
    %4465 = vmatpush2.bf16.msra.mxu0 %v4356
    %4466 = vmatprep.subr.bf16.mxu0 0
    %4467 = vmatpush2.bf16.msra.mxu0 %v4355
    %4468 = vmatprep.mubr.bf16.mxu0 %v3631
    %4469 = vmatmul.mubr.bf16.gmra.mxu0 %v3630
    %v4470 = vpop.f32.mrf.mxu0
    %v4471 = vadd.f32 %v4430, %v4470
    %v4472 = vpop.f32.mrf.mxu0
    %v4473 = vpop.f32.mrf.mxu0
    %v4474 = vadd.f32 %v4433, %v4473
    %v4475 = vpop.f32.mrf.mxu0
    %4476 = vdwg.mxu0
    %v4477 = vld [vmem:[%s3459 + $0x20] sm:$0xff]
    %v4478 = vld [vmem:[%s3459 + $0x28] sm:$0xff]
    %v4479 = vld [vmem:[%s3459 + $0x60] sm:$0xff]
    %v4480 = vld [vmem:[%s3459 + $0x68] sm:$0xff]
    %v4481 = vld [vmem:[%s3459 + $0xa0] sm:$0xff]
    %v4482 = vld [vmem:[%s3459 + $0xa8] sm:$0xff]
    %v4483 = vld [vmem:[%s3466 + $0x8] sm:$0xf]
    %v4485 = vlaneseq
    %v4486 = vshrl.u32 %v4485, 7
    %v4487 = vsub.s32 0, %v4486
    %v4488 = vrot.slane %v4483, %v4487
    %v4489 = vlaneseq
    %v4490 = vshrl.u32 %v4489, 7
    %v4491 = vsub.s32 1, %v4490
    %v4492 = vrot.slane %v4483, %v4491
    %v4493 = vlaneseq
    %v4494 = vshrl.u32 %v4493, 7
    %v4495 = vsub.s32 2, %v4494
    %v4496 = vrot.slane %v4483, %v4495
    %v4497 = vlaneseq
    %v4498 = vshrl.u32 %v4497, 7
    %v4499 = vsub.s32 3, %v4498
    %v4500 = vrot.slane %v4483, %v4499
    %v4511 = vunpack.c.l.b16 %v4477
    %v4512 = vunpack.c.h.b16 %v4477
    %v4513 = vunpack.c.l.b16 %v4478
    %v4514 = vunpack.c.h.b16 %v4478
    %v4515 = vunpack.c.l.b16 %v4479
    %v4516 = vunpack.c.h.b16 %v4479
    %v4517 = vunpack.c.l.b16 %v4480
    %v4518 = vunpack.c.h.b16 %v4480
    %v4519 = vunpack.c.l.b16 %v4481
    %v4520 = vunpack.c.h.b16 %v4481
    %v4521 = vunpack.c.l.b16 %v4482
    %v4522 = vunpack.c.h.b16 %v4482
    %v4523 = vpack.c.b16 %v4515, %v4511
    %v4524 = vpack.c.b16 %v4516, %v4512
    %v4525 = vpack.c.b16 %v4517, %v4513
    %v4526 = vpack.c.b16 %v4518, %v4514
    %v4527 = vpack.c.b16 %v4519, %v4519
    %v4528 = vpack.c.b16 %v4520, %v4520
    %v4529 = vpack.c.b16 %v4521, %v4521
    %v4530 = vpack.c.b16 %v4522, %v4522
    %v4536 = vsel %vm66, %v4527, 0
    %v4539 = vsel %vm66, %v4528, 0
    %v4542 = vsel %vm66, %v4529, 0
    %v4545 = vsel %vm66, %v4530, 0
    %4547 = vmatprep.subr.bf16.mxu0 0
    %4548 = vmatpush1.bf16.msra.mxu0 0
    %4549 = vmatprep.subr.bf16.mxu0 0
    %4550 = vmatpush1.bf16.msra.mxu0 0
    %4551 = vmatprep.subr.bf16.mxu0 0
    %4552 = vmatpush1.bf16.msra.mxu0 0
    %4553 = vmatprep.subr.bf16.mxu0 0
    %4554 = vmatpush1.bf16.msra.mxu0 0
    %4555 = vmatprep.subr.bf16.mxu0 0
    %4556 = vmatpush1.bf16.msra.mxu0 0
    %4557 = vmatprep.subr.bf16.mxu0 0
    %4558 = vmatpush1.bf16.msra.mxu0 0
    %4559 = vmatprep.subr.bf16.mxu0 %v4539
    %4560 = vmatpush1.bf16.msra.mxu0 %v4536
    %4561 = vmatprep.subr.bf16.mxu0 %v4524
    %4562 = vmatpush1.bf16.msra.mxu0 %v4523
    %4563 = vmatprep.subr.bf16.mxu0 0
    %4564 = vmatpush2.bf16.msra.mxu0 0
    %4565 = vmatprep.subr.bf16.mxu0 0
    %4566 = vmatpush2.bf16.msra.mxu0 0
    %4567 = vmatprep.subr.bf16.mxu0 0
    %4568 = vmatpush2.bf16.msra.mxu0 0
    %4569 = vmatprep.subr.bf16.mxu0 0
    %4570 = vmatpush2.bf16.msra.mxu0 0
    %4571 = vmatprep.subr.bf16.mxu0 0
    %4572 = vmatpush2.bf16.msra.mxu0 0
    %4573 = vmatprep.subr.bf16.mxu0 0
    %4574 = vmatpush2.bf16.msra.mxu0 0
    %4575 = vmatprep.subr.bf16.mxu0 0
    %4576 = vmatpush2.bf16.msra.mxu0 0
    %4577 = vmatprep.subr.bf16.mxu0 0
    %4578 = vmatpush2.bf16.msra.mxu0 0
    %4579 = vmatprep.mubr.bf16.mxu0 0
    %4580 = vmatmul.mubr.bf16.gmra.mxu0 %v3520
    %v4581 = vpop.f32.mrf.mxu0
    %v4582 = vadd.f32 %v4488, %v4581
    %v4583 = vpop.f32.mrf.mxu0
    %v4584 = vadd.f32 %v4492, %v4583
    %v4585 = vpop.f32.mrf.mxu0
    %v4586 = vadd.f32 %v4488, %v4585
    %v4587 = vpop.f32.mrf.mxu0
    %v4588 = vadd.f32 %v4492, %v4587
    %4589 = vdwg.mxu0
    %4590 = vmatprep.subr.bf16.mxu0 0
    %4591 = vmatpush1.bf16.msra.mxu0 0
    %4592 = vmatprep.subr.bf16.mxu0 0
    %4593 = vmatpush1.bf16.msra.mxu0 0
    %4594 = vmatprep.subr.bf16.mxu0 0
    %4595 = vmatpush1.bf16.msra.mxu0 0
    %4596 = vmatprep.subr.bf16.mxu0 0
    %4597 = vmatpush1.bf16.msra.mxu0 0
    %4598 = vmatprep.subr.bf16.mxu0 0
    %4599 = vmatpush1.bf16.msra.mxu0 0
    %4600 = vmatprep.subr.bf16.mxu0 0
    %4601 = vmatpush1.bf16.msra.mxu0 0
    %4602 = vmatprep.subr.bf16.mxu0 %v4545
    %4603 = vmatpush1.bf16.msra.mxu0 %v4542
    %4604 = vmatprep.subr.bf16.mxu0 %v4526
    %4605 = vmatpush1.bf16.msra.mxu0 %v4525
    %4606 = vmatprep.subr.bf16.mxu0 0
    %4607 = vmatpush2.bf16.msra.mxu0 0
    %4608 = vmatprep.subr.bf16.mxu0 0
    %4609 = vmatpush2.bf16.msra.mxu0 0
    %4610 = vmatprep.subr.bf16.mxu0 0
    %4611 = vmatpush2.bf16.msra.mxu0 0
    %4612 = vmatprep.subr.bf16.mxu0 0
    %4613 = vmatpush2.bf16.msra.mxu0 0
    %4614 = vmatprep.subr.bf16.mxu0 0
    %4615 = vmatpush2.bf16.msra.mxu0 0
    %4616 = vmatprep.subr.bf16.mxu0 0
    %4617 = vmatpush2.bf16.msra.mxu0 0
    %4618 = vmatprep.subr.bf16.mxu0 0
    %4619 = vmatpush2.bf16.msra.mxu0 0
    %4620 = vmatprep.subr.bf16.mxu0 0
    %4621 = vmatpush2.bf16.msra.mxu0 0
    %4622 = vmatprep.mubr.bf16.mxu0 0
    %4623 = vmatmul.mubr.bf16.gmra.mxu0 %v3520
    %v4624 = vpop.f32.mrf.mxu0
    %v4625 = vadd.f32 %v4496, %v4624
    %v4626 = vpop.f32.mrf.mxu0
    %v4627 = vadd.f32 %v4500, %v4626
    %v4628 = vpop.f32.mrf.mxu0
    %v4629 = vadd.f32 %v4496, %v4628
    %v4630 = vpop.f32.mrf.mxu0
    %v4631 = vadd.f32 %v4500, %v4630
    %4632 = vdwg.mxu0
    %v4633 = vmax.f32 %v4582, 0.0
    %v4634 = vmax.f32 %v4584, 0.0
    %v4635 = vmax.f32 %v4625, 0.0
    %v4636 = vmax.f32 %v4627, 0.0
    %v4637 = vmax.f32 %v4586, 0.0
    %v4638 = vmax.f32 %v4588, 0.0
    %v4639 = vmax.f32 %v4629, 0.0
    %v4640 = vmax.f32 %v4631, 0.0
    %v4641 = vpack.c.bf16 %v4637, %v4633
    %v4642 = vpack.c.bf16 %v4638, %v4634
    %v4643 = vpack.c.bf16 %v4639, %v4635
    %v4644 = vpack.c.bf16 %v4640, %v4636
    %v4645 = vld [vmem:[%s3632 + $0x200] sm:$0xf]
    %v4646 = vld [vmem:[%s3632 + $0x204] sm:$0xf]
    %v4647 = vld [vmem:[%s3632 + $0x208] sm:$0xf]
    %v4648 = vld [vmem:[%s3632 + $0x20c] sm:$0xf]
    %v4649 = vld [vmem:[%s3632 + $0x210] sm:$0xf]
    %v4650 = vld [vmem:[%s3632 + $0x214] sm:$0xf]
    %v4651 = vld [vmem:[%s3632 + $0x218] sm:$0xf]
    %v4652 = vld [vmem:[%s3632 + $0x21c] sm:$0xf]
    %v4653 = vld [vmem:[%s3632 + $0x220] sm:$0xf]
    %v4654 = vld [vmem:[%s3632 + $0x224] sm:$0xf]
    %v4655 = vld [vmem:[%s3632 + $0x228] sm:$0xf]
    %v4656 = vld [vmem:[%s3632 + $0x22c] sm:$0xf]
    %v4657 = vld [vmem:[%s3632 + $0x230] sm:$0xf]
    %v4658 = vld [vmem:[%s3632 + $0x234] sm:$0xf]
    %v4659 = vld [vmem:[%s3632 + $0x238] sm:$0xf]
    %v4660 = vld [vmem:[%s3632 + $0x23c] sm:$0xf]
    %v4661 = vld [vmem:[%s3632 + $0x240] sm:$0xf]
    %v4662 = vld [vmem:[%s3632 + $0x244] sm:$0xf]
    %v4663 = vld [vmem:[%s3632 + $0x248] sm:$0xf]
    %v4664 = vld [vmem:[%s3632 + $0x24c] sm:$0xf]
    %v4665 = vld [vmem:[%s3632 + $0x250] sm:$0xf]
    %v4666 = vld [vmem:[%s3632 + $0x254] sm:$0xf]
    %v4667 = vld [vmem:[%s3632 + $0x258] sm:$0xf]
    %v4668 = vld [vmem:[%s3632 + $0x25c] sm:$0xf]
    %v4669 = vld [vmem:[%s3632 + $0x260] sm:$0xf]
    %v4670 = vld [vmem:[%s3632 + $0x264] sm:$0xf]
    %v4671 = vld [vmem:[%s3632 + $0x268] sm:$0xf]
    %v4672 = vld [vmem:[%s3632 + $0x26c] sm:$0xf]
    %v4673 = vld [vmem:[%s3632 + $0x270] sm:$0xf]
    %v4674 = vld [vmem:[%s3632 + $0x274] sm:$0xf]
    %v4675 = vld [vmem:[%s3632 + $0x278] sm:$0xf]
    %v4676 = vld [vmem:[%s3632 + $0x27c] sm:$0xf]
    %v4677 = vld [vmem:[%s3632 + $0x280] sm:$0xf]
    %v4678 = vld [vmem:[%s3632 + $0x284] sm:$0xf]
    %v4679 = vld [vmem:[%s3632 + $0x288] sm:$0xf]
    %v4680 = vld [vmem:[%s3632 + $0x28c] sm:$0xf]
    %v4681 = vld [vmem:[%s3632 + $0x290] sm:$0xf]
    %v4682 = vld [vmem:[%s3632 + $0x294] sm:$0xf]
    %v4683 = vld [vmem:[%s3632 + $0x298] sm:$0xf]
    %v4684 = vld [vmem:[%s3632 + $0x29c] sm:$0xf]
    %v4685 = vld [vmem:[%s3632 + $0x2a0] sm:$0xf]
    %v4686 = vld [vmem:[%s3632 + $0x2a4] sm:$0xf]
    %v4687 = vld [vmem:[%s3632 + $0x2a8] sm:$0xf]
    %v4688 = vld [vmem:[%s3632 + $0x2ac] sm:$0xf]
    %v4689 = vld [vmem:[%s3632 + $0x2b0] sm:$0xf]
    %v4690 = vld [vmem:[%s3632 + $0x2b4] sm:$0xf]
    %v4691 = vld [vmem:[%s3632 + $0x2b8] sm:$0xf]
    %v4692 = vld [vmem:[%s3632 + $0x2bc] sm:$0xf]
    %v4693 = vld [vmem:[%s3632 + $0x2c0] sm:$0xf]
    %v4694 = vld [vmem:[%s3632 + $0x2c4] sm:$0xf]
    %v4695 = vld [vmem:[%s3632 + $0x2c8] sm:$0xf]
    %v4696 = vld [vmem:[%s3632 + $0x2cc] sm:$0xf]
    %v4697 = vld [vmem:[%s3632 + $0x2d0] sm:$0xf]
    %v4698 = vld [vmem:[%s3632 + $0x2d4] sm:$0xf]
    %v4699 = vld [vmem:[%s3632 + $0x2d8] sm:$0xf]
    %v4700 = vld [vmem:[%s3632 + $0x2dc] sm:$0xf]
    %v4701 = vld [vmem:[%s3632 + $0x2e0] sm:$0xf]
    %v4702 = vld [vmem:[%s3632 + $0x2e4] sm:$0xf]
    %v4703 = vld [vmem:[%s3632 + $0x2e8] sm:$0xf]
    %v4704 = vld [vmem:[%s3632 + $0x2ec] sm:$0xf]
    %v4705 = vld [vmem:[%s3632 + $0x2f0] sm:$0xf]
    %v4706 = vld [vmem:[%s3632 + $0x2f4] sm:$0xf]
    %v4707 = vld [vmem:[%s3632 + $0x2f8] sm:$0xf]
    %v4708 = vld [vmem:[%s3632 + $0x2fc] sm:$0xf]
    %v4773 = vunpack.c.l.b16 %v4645
    %v4774 = vunpack.c.l.b16 %v4646
    %v4775 = vunpack.c.l.b16 %v4647
    %v4776 = vunpack.c.l.b16 %v4648
    %v4777 = vunpack.c.l.b16 %v4649
    %v4778 = vunpack.c.l.b16 %v4650
    %v4779 = vunpack.c.l.b16 %v4651
    %v4780 = vunpack.c.l.b16 %v4652
    %v4781 = vunpack.c.l.b16 %v4653
    %v4782 = vunpack.c.l.b16 %v4654
    %v4783 = vunpack.c.l.b16 %v4655
    %v4784 = vunpack.c.l.b16 %v4656
    %v4785 = vunpack.c.l.b16 %v4657
    %v4786 = vunpack.c.l.b16 %v4658
    %v4787 = vunpack.c.l.b16 %v4659
    %v4788 = vunpack.c.l.b16 %v4660
    %v4789 = vunpack.c.l.b16 %v4661
    %v4790 = vunpack.c.l.b16 %v4662
    %v4791 = vunpack.c.l.b16 %v4663
    %v4792 = vunpack.c.l.b16 %v4664
    %v4793 = vunpack.c.l.b16 %v4665
    %v4794 = vunpack.c.l.b16 %v4666
    %v4795 = vunpack.c.l.b16 %v4667
    %v4796 = vunpack.c.l.b16 %v4668
    %v4797 = vunpack.c.l.b16 %v4669
    %v4798 = vunpack.c.l.b16 %v4670
    %v4799 = vunpack.c.l.b16 %v4671
    %v4800 = vunpack.c.l.b16 %v4672
    %v4801 = vunpack.c.l.b16 %v4673
    %v4802 = vunpack.c.l.b16 %v4674
    %v4803 = vunpack.c.l.b16 %v4675
    %v4804 = vunpack.c.l.b16 %v4676
    %v4805 = vunpack.c.l.b16 %v4677
    %v4806 = vunpack.c.l.b16 %v4678
    %v4807 = vunpack.c.l.b16 %v4679
    %v4808 = vunpack.c.l.b16 %v4680
    %v4809 = vunpack.c.l.b16 %v4681
    %v4810 = vunpack.c.l.b16 %v4682
    %v4811 = vunpack.c.l.b16 %v4683
    %v4812 = vunpack.c.l.b16 %v4684
    %v4813 = vunpack.c.l.b16 %v4685
    %v4814 = vunpack.c.l.b16 %v4686
    %v4815 = vunpack.c.l.b16 %v4687
    %v4816 = vunpack.c.l.b16 %v4688
    %v4817 = vunpack.c.l.b16 %v4689
    %v4818 = vunpack.c.l.b16 %v4690
    %v4819 = vunpack.c.l.b16 %v4691
    %v4820 = vunpack.c.l.b16 %v4692
    %v4821 = vunpack.c.l.b16 %v4693
    %v4822 = vunpack.c.l.b16 %v4694
    %v4823 = vunpack.c.l.b16 %v4695
    %v4824 = vunpack.c.l.b16 %v4696
    %v4825 = vunpack.c.l.b16 %v4697
    %v4826 = vunpack.c.l.b16 %v4698
    %v4827 = vunpack.c.l.b16 %v4699
    %v4828 = vunpack.c.l.b16 %v4700
    %v4829 = vunpack.c.l.b16 %v4701
    %v4830 = vunpack.c.l.b16 %v4702
    %v4831 = vunpack.c.l.b16 %v4703
    %v4832 = vunpack.c.l.b16 %v4704
    %v4833 = vunpack.c.l.b16 %v4705
    %v4834 = vunpack.c.l.b16 %v4706
    %v4835 = vunpack.c.l.b16 %v4707
    %v4836 = vunpack.c.l.b16 %v4708
    %v4837 = vpack.c.b16 %v4774, %v4773
    %v4838 = vpack.c.b16 %v4776, %v4775
    %v4839 = vpack.c.b16 %v4778, %v4777
    %v4840 = vpack.c.b16 %v4780, %v4779
    %v4841 = vpack.c.b16 %v4782, %v4781
    %v4842 = vpack.c.b16 %v4784, %v4783
    %v4843 = vpack.c.b16 %v4786, %v4785
    %v4844 = vpack.c.b16 %v4788, %v4787
    %v4845 = vpack.c.b16 %v4790, %v4789
    %v4846 = vpack.c.b16 %v4792, %v4791
    %v4847 = vpack.c.b16 %v4794, %v4793
    %v4848 = vpack.c.b16 %v4796, %v4795
    %v4849 = vpack.c.b16 %v4798, %v4797
    %v4850 = vpack.c.b16 %v4800, %v4799
    %v4851 = vpack.c.b16 %v4802, %v4801
    %v4852 = vpack.c.b16 %v4804, %v4803
    %v4853 = vpack.c.b16 %v4806, %v4805
    %v4854 = vpack.c.b16 %v4808, %v4807
    %v4855 = vpack.c.b16 %v4810, %v4809
    %v4856 = vpack.c.b16 %v4812, %v4811
    %v4857 = vpack.c.b16 %v4814, %v4813
    %v4858 = vpack.c.b16 %v4816, %v4815
    %v4859 = vpack.c.b16 %v4818, %v4817
    %v4860 = vpack.c.b16 %v4820, %v4819
    %v4861 = vpack.c.b16 %v4822, %v4821
    %v4862 = vpack.c.b16 %v4824, %v4823
    %v4863 = vpack.c.b16 %v4826, %v4825
    %v4864 = vpack.c.b16 %v4828, %v4827
    %v4865 = vpack.c.b16 %v4830, %v4829
    %v4866 = vpack.c.b16 %v4832, %v4831
    %v4867 = vpack.c.b16 %v4834, %v4833
    %v4868 = vpack.c.b16 %v4836, %v4835
    %4901 = vmatprep.subr.bf16.mxu0 0
    %4902 = vmatpush1.bf16.msra.mxu0 %v4844
    %4903 = vmatprep.subr.bf16.mxu0 0
    %4904 = vmatpush1.bf16.msra.mxu0 %v4843
    %4905 = vmatprep.subr.bf16.mxu0 0
    %4906 = vmatpush1.bf16.msra.mxu0 %v4842
    %4907 = vmatprep.subr.bf16.mxu0 0
    %4908 = vmatpush1.bf16.msra.mxu0 %v4841
    %4909 = vmatprep.subr.bf16.mxu0 0
    %4910 = vmatpush1.bf16.msra.mxu0 %v4840
    %4911 = vmatprep.subr.bf16.mxu0 0
    %4912 = vmatpush1.bf16.msra.mxu0 %v4839
    %4913 = vmatprep.subr.bf16.mxu0 0
    %4914 = vmatpush1.bf16.msra.mxu0 %v4838
    %4915 = vmatprep.subr.bf16.mxu0 0
    %4916 = vmatpush1.bf16.msra.mxu0 %v4837
    %4917 = vmatprep.subr.bf16.mxu0 0
    %4918 = vmatpush2.bf16.msra.mxu0 %v4852
    %4919 = vmatprep.subr.bf16.mxu0 0
    %4920 = vmatpush2.bf16.msra.mxu0 %v4851
    %4921 = vmatprep.subr.bf16.mxu0 0
    %4922 = vmatpush2.bf16.msra.mxu0 %v4850
    %4923 = vmatprep.subr.bf16.mxu0 0
    %4924 = vmatpush2.bf16.msra.mxu0 %v4849
    %4925 = vmatprep.subr.bf16.mxu0 0
    %4926 = vmatpush2.bf16.msra.mxu0 %v4848
    %4927 = vmatprep.subr.bf16.mxu0 0
    %4928 = vmatpush2.bf16.msra.mxu0 %v4847
    %4929 = vmatprep.subr.bf16.mxu0 0
    %4930 = vmatpush2.bf16.msra.mxu0 %v4846
    %4931 = vmatprep.subr.bf16.mxu0 0
    %4932 = vmatpush2.bf16.msra.mxu0 %v4845
    %4933 = vmatprep.mubr.bf16.mxu0 %v4642
    %4934 = vmatmul.mubr.bf16.gmra.mxu0 %v4641
    %v4935 = vpop.f32.mrf.mxu0
    %v4936 = vadd.f32 0.0, %v4935
    %v4937 = vpop.f32.mrf.mxu0
    %v4938 = vpop.f32.mrf.mxu0
    %v4939 = vadd.f32 0.0, %v4938
    %v4940 = vpop.f32.mrf.mxu0
    %4941 = vdwg.mxu0
    %4942 = vmatprep.subr.bf16.mxu0 0
    %4943 = vmatpush1.bf16.msra.mxu0 %v4860
    %4944 = vmatprep.subr.bf16.mxu0 0
    %4945 = vmatpush1.bf16.msra.mxu0 %v4859
    %4946 = vmatprep.subr.bf16.mxu0 0
    %4947 = vmatpush1.bf16.msra.mxu0 %v4858
    %4948 = vmatprep.subr.bf16.mxu0 0
    %4949 = vmatpush1.bf16.msra.mxu0 %v4857
    %4950 = vmatprep.subr.bf16.mxu0 0
    %4951 = vmatpush1.bf16.msra.mxu0 %v4856
    %4952 = vmatprep.subr.bf16.mxu0 0
    %4953 = vmatpush1.bf16.msra.mxu0 %v4855
    %4954 = vmatprep.subr.bf16.mxu0 0
    %4955 = vmatpush1.bf16.msra.mxu0 %v4854
    %4956 = vmatprep.subr.bf16.mxu0 0
    %4957 = vmatpush1.bf16.msra.mxu0 %v4853
    %4958 = vmatprep.subr.bf16.mxu0 0
    %4959 = vmatpush2.bf16.msra.mxu0 %v4868
    %4960 = vmatprep.subr.bf16.mxu0 0
    %4961 = vmatpush2.bf16.msra.mxu0 %v4867
    %4962 = vmatprep.subr.bf16.mxu0 0
    %4963 = vmatpush2.bf16.msra.mxu0 %v4866
    %4964 = vmatprep.subr.bf16.mxu0 0
    %4965 = vmatpush2.bf16.msra.mxu0 %v4865
    %4966 = vmatprep.subr.bf16.mxu0 0
    %4967 = vmatpush2.bf16.msra.mxu0 %v4864
    %4968 = vmatprep.subr.bf16.mxu0 0
    %4969 = vmatpush2.bf16.msra.mxu0 %v4863
    %4970 = vmatprep.subr.bf16.mxu0 0
    %4971 = vmatpush2.bf16.msra.mxu0 %v4862
    %4972 = vmatprep.subr.bf16.mxu0 0
    %4973 = vmatpush2.bf16.msra.mxu0 %v4861
    %4974 = vmatprep.mubr.bf16.mxu0 %v4644
    %4975 = vmatmul.mubr.bf16.gmra.mxu0 %v4643
    %v4976 = vpop.f32.mrf.mxu0
    %v4977 = vadd.f32 %v4936, %v4976
    %v4978 = vpop.f32.mrf.mxu0
    %v4979 = vpop.f32.mrf.mxu0
    %v4980 = vadd.f32 %v4939, %v4979
    %v4981 = vpop.f32.mrf.mxu0
    %4982 = vdwg.mxu0
    %v4983 = vadd.f32 %v4471, %v4977
    %v4984 = vadd.f32 %v4474, %v4980
    %v4985 = vld [vmem:[%s3459 + $0x30] sm:$0xff]
    %v4986 = vld [vmem:[%s3459 + $0x38] sm:$0xff]
    %v4987 = vld [vmem:[%s3459 + $0x70] sm:$0xff]
    %v4988 = vld [vmem:[%s3459 + $0x78] sm:$0xff]
    %v4989 = vld [vmem:[%s3459 + $0xb0] sm:$0xff]
    %v4990 = vld [vmem:[%s3459 + $0xb8] sm:$0xff]
    %v4991 = vld [vmem:[%s3466 + $0xc] sm:$0xf]
    %v4993 = vlaneseq
    %v4994 = vshrl.u32 %v4993, 7
    %v4995 = vsub.s32 0, %v4994
    %v4996 = vrot.slane %v4991, %v4995
    %v4997 = vlaneseq
    %v4998 = vshrl.u32 %v4997, 7
    %v4999 = vsub.s32 1, %v4998
    %v5000 = vrot.slane %v4991, %v4999
    %v5001 = vlaneseq
    %v5002 = vshrl.u32 %v5001, 7
    %v5003 = vsub.s32 2, %v5002
    %v5004 = vrot.slane %v4991, %v5003
    %v5005 = vlaneseq
    %v5006 = vshrl.u32 %v5005, 7
    %v5007 = vsub.s32 3, %v5006
    %v5008 = vrot.slane %v4991, %v5007
    %v5019 = vunpack.c.l.b16 %v4985
    %v5020 = vunpack.c.h.b16 %v4985
    %v5021 = vunpack.c.l.b16 %v4986
    %v5022 = vunpack.c.h.b16 %v4986
    %v5023 = vunpack.c.l.b16 %v4987
    %v5024 = vunpack.c.h.b16 %v4987
    %v5025 = vunpack.c.l.b16 %v4988
    %v5026 = vunpack.c.h.b16 %v4988
    %v5027 = vunpack.c.l.b16 %v4989
    %v5028 = vunpack.c.h.b16 %v4989
    %v5029 = vunpack.c.l.b16 %v4990
    %v5030 = vunpack.c.h.b16 %v4990
    %v5031 = vpack.c.b16 %v5023, %v5019
    %v5032 = vpack.c.b16 %v5024, %v5020
    %v5033 = vpack.c.b16 %v5025, %v5021
    %v5034 = vpack.c.b16 %v5026, %v5022
    %v5035 = vpack.c.b16 %v5027, %v5027
    %v5036 = vpack.c.b16 %v5028, %v5028
    %v5037 = vpack.c.b16 %v5029, %v5029
    %v5038 = vpack.c.b16 %v5030, %v5030
    %v5044 = vsel %vm66, %v5035, 0
    %v5047 = vsel %vm66, %v5036, 0
    %v5050 = vsel %vm66, %v5037, 0
    %v5053 = vsel %vm66, %v5038, 0
    %5055 = vmatprep.subr.bf16.mxu0 0
    %5056 = vmatpush1.bf16.msra.mxu0 0
    %5057 = vmatprep.subr.bf16.mxu0 0
    %5058 = vmatpush1.bf16.msra.mxu0 0
    %5059 = vmatprep.subr.bf16.mxu0 0
    %5060 = vmatpush1.bf16.msra.mxu0 0
    %5061 = vmatprep.subr.bf16.mxu0 0
    %5062 = vmatpush1.bf16.msra.mxu0 0
    %5063 = vmatprep.subr.bf16.mxu0 0
    %5064 = vmatpush1.bf16.msra.mxu0 0
    %5065 = vmatprep.subr.bf16.mxu0 0
    %5066 = vmatpush1.bf16.msra.mxu0 0
    %5067 = vmatprep.subr.bf16.mxu0 %v5047
    %5068 = vmatpush1.bf16.msra.mxu0 %v5044
    %5069 = vmatprep.subr.bf16.mxu0 %v5032
    %5070 = vmatpush1.bf16.msra.mxu0 %v5031
    %5071 = vmatprep.subr.bf16.mxu0 0
    %5072 = vmatpush2.bf16.msra.mxu0 0
    %5073 = vmatprep.subr.bf16.mxu0 0
    %5074 = vmatpush2.bf16.msra.mxu0 0
    %5075 = vmatprep.subr.bf16.mxu0 0
    %5076 = vmatpush2.bf16.msra.mxu0 0
    %5077 = vmatprep.subr.bf16.mxu0 0
    %5078 = vmatpush2.bf16.msra.mxu0 0
    %5079 = vmatprep.subr.bf16.mxu0 0
    %5080 = vmatpush2.bf16.msra.mxu0 0
    %5081 = vmatprep.subr.bf16.mxu0 0
    %5082 = vmatpush2.bf16.msra.mxu0 0
    %5083 = vmatprep.subr.bf16.mxu0 0
    %5084 = vmatpush2.bf16.msra.mxu0 0
    %5085 = vmatprep.subr.bf16.mxu0 0
    %5086 = vmatpush2.bf16.msra.mxu0 0
    %5087 = vmatprep.mubr.bf16.mxu0 0
    %5088 = vmatmul.mubr.bf16.gmra.mxu0 %v3520
    %v5089 = vpop.f32.mrf.mxu0
    %v5090 = vadd.f32 %v4996, %v5089
    %v5091 = vpop.f32.mrf.mxu0
    %v5092 = vadd.f32 %v5000, %v5091
    %v5093 = vpop.f32.mrf.mxu0
    %v5094 = vadd.f32 %v4996, %v5093
    %v5095 = vpop.f32.mrf.mxu0
    %v5096 = vadd.f32 %v5000, %v5095
    %5097 = vdwg.mxu0
    %5098 = vmatprep.subr.bf16.mxu0 0
    %5099 = vmatpush1.bf16.msra.mxu0 0
    %5100 = vmatprep.subr.bf16.mxu0 0
    %5101 = vmatpush1.bf16.msra.mxu0 0
    %5102 = vmatprep.subr.bf16.mxu0 0
    %5103 = vmatpush1.bf16.msra.mxu0 0
    %5104 = vmatprep.subr.bf16.mxu0 0
    %5105 = vmatpush1.bf16.msra.mxu0 0
    %5106 = vmatprep.subr.bf16.mxu0 0
    %5107 = vmatpush1.bf16.msra.mxu0 0
    %5108 = vmatprep.subr.bf16.mxu0 0
    %5109 = vmatpush1.bf16.msra.mxu0 0
    %5110 = vmatprep.subr.bf16.mxu0 %v5053
    %5111 = vmatpush1.bf16.msra.mxu0 %v5050
    %5112 = vmatprep.subr.bf16.mxu0 %v5034
    %5113 = vmatpush1.bf16.msra.mxu0 %v5033
    %5114 = vmatprep.subr.bf16.mxu0 0
    %5115 = vmatpush2.bf16.msra.mxu0 0
    %5116 = vmatprep.subr.bf16.mxu0 0
    %5117 = vmatpush2.bf16.msra.mxu0 0
    %5118 = vmatprep.subr.bf16.mxu0 0
    %5119 = vmatpush2.bf16.msra.mxu0 0
    %5120 = vmatprep.subr.bf16.mxu0 0
    %5121 = vmatpush2.bf16.msra.mxu0 0
    %5122 = vmatprep.subr.bf16.mxu0 0
    %5123 = vmatpush2.bf16.msra.mxu0 0
    %5124 = vmatprep.subr.bf16.mxu0 0
    %5125 = vmatpush2.bf16.msra.mxu0 0
    %5126 = vmatprep.subr.bf16.mxu0 0
    %5127 = vmatpush2.bf16.msra.mxu0 0
    %5128 = vmatprep.subr.bf16.mxu0 0
    %5129 = vmatpush2.bf16.msra.mxu0 0
    %5130 = vmatprep.mubr.bf16.mxu0 0
    %5131 = vmatmul.mubr.bf16.gmra.mxu0 %v3520
    %v5132 = vpop.f32.mrf.mxu0
    %v5133 = vadd.f32 %v5004, %v5132
    %v5134 = vpop.f32.mrf.mxu0
    %v5135 = vadd.f32 %v5008, %v5134
    %v5136 = vpop.f32.mrf.mxu0
    %v5137 = vadd.f32 %v5004, %v5136
    %v5138 = vpop.f32.mrf.mxu0
    %v5139 = vadd.f32 %v5008, %v5138
    %5140 = vdwg.mxu0
    %v5141 = vmax.f32 %v5090, 0.0
    %v5142 = vmax.f32 %v5092, 0.0
    %v5143 = vmax.f32 %v5133, 0.0
    %v5144 = vmax.f32 %v5135, 0.0
    %v5145 = vmax.f32 %v5094, 0.0
    %v5146 = vmax.f32 %v5096, 0.0
    %v5147 = vmax.f32 %v5137, 0.0
    %v5148 = vmax.f32 %v5139, 0.0
    %v5149 = vpack.c.bf16 %v5145, %v5141
    %v5150 = vpack.c.bf16 %v5146, %v5142
    %v5151 = vpack.c.bf16 %v5147, %v5143
    %v5152 = vpack.c.bf16 %v5148, %v5144
    %v5153 = vld [vmem:[%s3632 + $0x300] sm:$0xf]
    %v5154 = vld [vmem:[%s3632 + $0x304] sm:$0xf]
    %v5155 = vld [vmem:[%s3632 + $0x308] sm:$0xf]
    %v5156 = vld [vmem:[%s3632 + $0x30c] sm:$0xf]
    %v5157 = vld [vmem:[%s3632 + $0x310] sm:$0xf]
    %v5158 = vld [vmem:[%s3632 + $0x314] sm:$0xf]
    %v5159 = vld [vmem:[%s3632 + $0x318] sm:$0xf]
    %v5160 = vld [vmem:[%s3632 + $0x31c] sm:$0xf]
    %v5161 = vld [vmem:[%s3632 + $0x320] sm:$0xf]
    %v5162 = vld [vmem:[%s3632 + $0x324] sm:$0xf]
    %v5163 = vld [vmem:[%s3632 + $0x328] sm:$0xf]
    %v5164 = vld [vmem:[%s3632 + $0x32c] sm:$0xf]
    %v5165 = vld [vmem:[%s3632 + $0x330] sm:$0xf]
    %v5166 = vld [vmem:[%s3632 + $0x334] sm:$0xf]
    %v5167 = vld [vmem:[%s3632 + $0x338] sm:$0xf]
    %v5168 = vld [vmem:[%s3632 + $0x33c] sm:$0xf]
    %v5169 = vld [vmem:[%s3632 + $0x340] sm:$0xf]
    %v5170 = vld [vmem:[%s3632 + $0x344] sm:$0xf]
    %v5171 = vld [vmem:[%s3632 + $0x348] sm:$0xf]
    %v5172 = vld [vmem:[%s3632 + $0x34c] sm:$0xf]
    %v5173 = vld [vmem:[%s3632 + $0x350] sm:$0xf]
    %v5174 = vld [vmem:[%s3632 + $0x354] sm:$0xf]
    %v5175 = vld [vmem:[%s3632 + $0x358] sm:$0xf]
    %v5176 = vld [vmem:[%s3632 + $0x35c] sm:$0xf]
    %v5177 = vld [vmem:[%s3632 + $0x360] sm:$0xf]
    %v5178 = vld [vmem:[%s3632 + $0x364] sm:$0xf]
    %v5179 = vld [vmem:[%s3632 + $0x368] sm:$0xf]
    %v5180 = vld [vmem:[%s3632 + $0x36c] sm:$0xf]
    %v5181 = vld [vmem:[%s3632 + $0x370] sm:$0xf]
    %v5182 = vld [vmem:[%s3632 + $0x374] sm:$0xf]
    %v5183 = vld [vmem:[%s3632 + $0x378] sm:$0xf]
    %v5184 = vld [vmem:[%s3632 + $0x37c] sm:$0xf]
    %v5185 = vld [vmem:[%s3632 + $0x380] sm:$0xf]
    %v5186 = vld [vmem:[%s3632 + $0x384] sm:$0xf]
    %v5187 = vld [vmem:[%s3632 + $0x388] sm:$0xf]
    %v5188 = vld [vmem:[%s3632 + $0x38c] sm:$0xf]
    %v5189 = vld [vmem:[%s3632 + $0x390] sm:$0xf]
    %v5190 = vld [vmem:[%s3632 + $0x394] sm:$0xf]
    %v5191 = vld [vmem:[%s3632 + $0x398] sm:$0xf]
    %v5192 = vld [vmem:[%s3632 + $0x39c] sm:$0xf]
    %v5193 = vld [vmem:[%s3632 + $0x3a0] sm:$0xf]
    %v5194 = vld [vmem:[%s3632 + $0x3a4] sm:$0xf]
    %v5195 = vld [vmem:[%s3632 + $0x3a8] sm:$0xf]
    %v5196 = vld [vmem:[%s3632 + $0x3ac] sm:$0xf]
    %v5197 = vld [vmem:[%s3632 + $0x3b0] sm:$0xf]
    %v5198 = vld [vmem:[%s3632 + $0x3b4] sm:$0xf]
    %v5199 = vld [vmem:[%s3632 + $0x3b8] sm:$0xf]
    %v5200 = vld [vmem:[%s3632 + $0x3bc] sm:$0xf]
    %v5201 = vld [vmem:[%s3632 + $0x3c0] sm:$0xf]
    %v5202 = vld [vmem:[%s3632 + $0x3c4] sm:$0xf]
    %v5203 = vld [vmem:[%s3632 + $0x3c8] sm:$0xf]
    %v5204 = vld [vmem:[%s3632 + $0x3cc] sm:$0xf]
    %v5205 = vld [vmem:[%s3632 + $0x3d0] sm:$0xf]
    %v5206 = vld [vmem:[%s3632 + $0x3d4] sm:$0xf]
    %v5207 = vld [vmem:[%s3632 + $0x3d8] sm:$0xf]
    %v5208 = vld [vmem:[%s3632 + $0x3dc] sm:$0xf]
    %v5209 = vld [vmem:[%s3632 + $0x3e0] sm:$0xf]
    %v5210 = vld [vmem:[%s3632 + $0x3e4] sm:$0xf]
    %v5211 = vld [vmem:[%s3632 + $0x3e8] sm:$0xf]
    %v5212 = vld [vmem:[%s3632 + $0x3ec] sm:$0xf]
    %v5213 = vld [vmem:[%s3632 + $0x3f0] sm:$0xf]
    %v5214 = vld [vmem:[%s3632 + $0x3f4] sm:$0xf]
    %v5215 = vld [vmem:[%s3632 + $0x3f8] sm:$0xf]
    %v5216 = vld [vmem:[%s3632 + $0x3fc] sm:$0xf]
    %v5281 = vunpack.c.l.b16 %v5153
    %v5282 = vunpack.c.l.b16 %v5154
    %v5283 = vunpack.c.l.b16 %v5155
    %v5284 = vunpack.c.l.b16 %v5156
    %v5285 = vunpack.c.l.b16 %v5157
    %v5286 = vunpack.c.l.b16 %v5158
    %v5287 = vunpack.c.l.b16 %v5159
    %v5288 = vunpack.c.l.b16 %v5160
    %v5289 = vunpack.c.l.b16 %v5161
    %v5290 = vunpack.c.l.b16 %v5162
    %v5291 = vunpack.c.l.b16 %v5163
    %v5292 = vunpack.c.l.b16 %v5164
    %v5293 = vunpack.c.l.b16 %v5165
    %v5294 = vunpack.c.l.b16 %v5166
    %v5295 = vunpack.c.l.b16 %v5167
    %v5296 = vunpack.c.l.b16 %v5168
    %v5297 = vunpack.c.l.b16 %v5169
    %v5298 = vunpack.c.l.b16 %v5170
    %v5299 = vunpack.c.l.b16 %v5171
    %v5300 = vunpack.c.l.b16 %v5172
    %v5301 = vunpack.c.l.b16 %v5173
    %v5302 = vunpack.c.l.b16 %v5174
    %v5303 = vunpack.c.l.b16 %v5175
    %v5304 = vunpack.c.l.b16 %v5176
    %v5305 = vunpack.c.l.b16 %v5177
    %v5306 = vunpack.c.l.b16 %v5178
    %v5307 = vunpack.c.l.b16 %v5179
    %v5308 = vunpack.c.l.b16 %v5180
    %v5309 = vunpack.c.l.b16 %v5181
    %v5310 = vunpack.c.l.b16 %v5182
    %v5311 = vunpack.c.l.b16 %v5183
    %v5312 = vunpack.c.l.b16 %v5184
    %v5313 = vunpack.c.l.b16 %v5185
    %v5314 = vunpack.c.l.b16 %v5186
    %v5315 = vunpack.c.l.b16 %v5187
    %v5316 = vunpack.c.l.b16 %v5188
    %v5317 = vunpack.c.l.b16 %v5189
    %v5318 = vunpack.c.l.b16 %v5190
    %v5319 = vunpack.c.l.b16 %v5191
    %v5320 = vunpack.c.l.b16 %v5192
    %v5321 = vunpack.c.l.b16 %v5193
    %v5322 = vunpack.c.l.b16 %v5194
    %v5323 = vunpack.c.l.b16 %v5195
    %v5324 = vunpack.c.l.b16 %v5196
    %v5325 = vunpack.c.l.b16 %v5197
    %v5326 = vunpack.c.l.b16 %v5198
    %v5327 = vunpack.c.l.b16 %v5199
    %v5328 = vunpack.c.l.b16 %v5200
    %v5329 = vunpack.c.l.b16 %v5201
    %v5330 = vunpack.c.l.b16 %v5202
    %v5331 = vunpack.c.l.b16 %v5203
    %v5332 = vunpack.c.l.b16 %v5204
    %v5333 = vunpack.c.l.b16 %v5205
    %v5334 = vunpack.c.l.b16 %v5206
    %v5335 = vunpack.c.l.b16 %v5207
    %v5336 = vunpack.c.l.b16 %v5208
    %v5337 = vunpack.c.l.b16 %v5209
    %v5338 = vunpack.c.l.b16 %v5210
    %v5339 = vunpack.c.l.b16 %v5211
    %v5340 = vunpack.c.l.b16 %v5212
    %v5341 = vunpack.c.l.b16 %v5213
    %v5342 = vunpack.c.l.b16 %v5214
    %v5343 = vunpack.c.l.b16 %v5215
    %v5344 = vunpack.c.l.b16 %v5216
    %v5345 = vpack.c.b16 %v5282, %v5281
    %v5346 = vpack.c.b16 %v5284, %v5283
    %v5347 = vpack.c.b16 %v5286, %v5285
    %v5348 = vpack.c.b16 %v5288, %v5287
    %v5349 = vpack.c.b16 %v5290, %v5289
    %v5350 = vpack.c.b16 %v5292, %v5291
    %v5351 = vpack.c.b16 %v5294, %v5293
    %v5352 = vpack.c.b16 %v5296, %v5295
    %v5353 = vpack.c.b16 %v5298, %v5297
    %v5354 = vpack.c.b16 %v5300, %v5299
    %v5355 = vpack.c.b16 %v5302, %v5301
    %v5356 = vpack.c.b16 %v5304, %v5303
    %v5357 = vpack.c.b16 %v5306, %v5305
    %v5358 = vpack.c.b16 %v5308, %v5307
    %v5359 = vpack.c.b16 %v5310, %v5309
    %v5360 = vpack.c.b16 %v5312, %v5311
    %v5361 = vpack.c.b16 %v5314, %v5313
    %v5362 = vpack.c.b16 %v5316, %v5315
    %v5363 = vpack.c.b16 %v5318, %v5317
    %v5364 = vpack.c.b16 %v5320, %v5319
    %v5365 = vpack.c.b16 %v5322, %v5321
    %v5366 = vpack.c.b16 %v5324, %v5323
    %v5367 = vpack.c.b16 %v5326, %v5325
    %v5368 = vpack.c.b16 %v5328, %v5327
    %v5369 = vpack.c.b16 %v5330, %v5329
    %v5370 = vpack.c.b16 %v5332, %v5331
    %v5371 = vpack.c.b16 %v5334, %v5333
    %v5372 = vpack.c.b16 %v5336, %v5335
    %v5373 = vpack.c.b16 %v5338, %v5337
    %v5374 = vpack.c.b16 %v5340, %v5339
    %v5375 = vpack.c.b16 %v5342, %v5341
    %v5376 = vpack.c.b16 %v5344, %v5343
    %5409 = vmatprep.subr.bf16.mxu0 0
    %5410 = vmatpush1.bf16.msra.mxu0 %v5352
    %5411 = vmatprep.subr.bf16.mxu0 0
    %5412 = vmatpush1.bf16.msra.mxu0 %v5351
    %5413 = vmatprep.subr.bf16.mxu0 0
    %5414 = vmatpush1.bf16.msra.mxu0 %v5350
    %5415 = vmatprep.subr.bf16.mxu0 0
    %5416 = vmatpush1.bf16.msra.mxu0 %v5349
    %5417 = vmatprep.subr.bf16.mxu0 0
    %5418 = vmatpush1.bf16.msra.mxu0 %v5348
    %5419 = vmatprep.subr.bf16.mxu0 0
    %5420 = vmatpush1.bf16.msra.mxu0 %v5347
    %5421 = vmatprep.subr.bf16.mxu0 0
    %5422 = vmatpush1.bf16.msra.mxu0 %v5346
    %5423 = vmatprep.subr.bf16.mxu0 0
    %5424 = vmatpush1.bf16.msra.mxu0 %v5345
    %5425 = vmatprep.subr.bf16.mxu0 0
    %5426 = vmatpush2.bf16.msra.mxu0 %v5360
    %5427 = vmatprep.subr.bf16.mxu0 0
    %5428 = vmatpush2.bf16.msra.mxu0 %v5359
    %5429 = vmatprep.subr.bf16.mxu0 0
    %5430 = vmatpush2.bf16.msra.mxu0 %v5358
    %5431 = vmatprep.subr.bf16.mxu0 0
    %5432 = vmatpush2.bf16.msra.mxu0 %v5357
    %5433 = vmatprep.subr.bf16.mxu0 0
    %5434 = vmatpush2.bf16.msra.mxu0 %v5356
    %5435 = vmatprep.subr.bf16.mxu0 0
    %5436 = vmatpush2.bf16.msra.mxu0 %v5355
    %5437 = vmatprep.subr.bf16.mxu0 0
    %5438 = vmatpush2.bf16.msra.mxu0 %v5354
    %5439 = vmatprep.subr.bf16.mxu0 0
    %5440 = vmatpush2.bf16.msra.mxu0 %v5353
    %5441 = vmatprep.mubr.bf16.mxu0 %v5150
    %5442 = vmatmul.mubr.bf16.gmra.mxu0 %v5149
    %v5443 = vpop.f32.mrf.mxu0
    %v5444 = vadd.f32 0.0, %v5443
    %v5445 = vpop.f32.mrf.mxu0
    %v5446 = vpop.f32.mrf.mxu0
    %v5447 = vadd.f32 0.0, %v5446
    %v5448 = vpop.f32.mrf.mxu0
    %5449 = vdwg.mxu0
    %5450 = vmatprep.subr.bf16.mxu0 0
    %5451 = vmatpush1.bf16.msra.mxu0 %v5368
    %5452 = vmatprep.subr.bf16.mxu0 0
    %5453 = vmatpush1.bf16.msra.mxu0 %v5367
    %5454 = vmatprep.subr.bf16.mxu0 0
    %5455 = vmatpush1.bf16.msra.mxu0 %v5366
    %5456 = vmatprep.subr.bf16.mxu0 0
    %5457 = vmatpush1.bf16.msra.mxu0 %v5365
    %5458 = vmatprep.subr.bf16.mxu0 0
    %5459 = vmatpush1.bf16.msra.mxu0 %v5364
    %5460 = vmatprep.subr.bf16.mxu0 0
    %5461 = vmatpush1.bf16.msra.mxu0 %v5363
    %5462 = vmatprep.subr.bf16.mxu0 0
    %5463 = vmatpush1.bf16.msra.mxu0 %v5362
    %5464 = vmatprep.subr.bf16.mxu0 0
    %5465 = vmatpush1.bf16.msra.mxu0 %v5361
    %5466 = vmatprep.subr.bf16.mxu0 0
    %5467 = vmatpush2.bf16.msra.mxu0 %v5376
    %5468 = vmatprep.subr.bf16.mxu0 0
    %5469 = vmatpush2.bf16.msra.mxu0 %v5375
    %5470 = vmatprep.subr.bf16.mxu0 0
    %5471 = vmatpush2.bf16.msra.mxu0 %v5374
    %5472 = vmatprep.subr.bf16.mxu0 0
    %5473 = vmatpush2.bf16.msra.mxu0 %v5373
    %5474 = vmatprep.subr.bf16.mxu0 0
    %5475 = vmatpush2.bf16.msra.mxu0 %v5372
    %5476 = vmatprep.subr.bf16.mxu0 0
    %5477 = vmatpush2.bf16.msra.mxu0 %v5371
    %5478 = vmatprep.subr.bf16.mxu0 0
    %5479 = vmatpush2.bf16.msra.mxu0 %v5370
    %5480 = vmatprep.subr.bf16.mxu0 0
    %5481 = vmatpush2.bf16.msra.mxu0 %v5369
    %5482 = vmatprep.mubr.bf16.mxu0 %v5152
    %5483 = vmatmul.mubr.bf16.gmra.mxu0 %v5151
    %v5484 = vpop.f32.mrf.mxu0
    %v5485 = vadd.f32 %v5444, %v5484
    %v5486 = vpop.f32.mrf.mxu0
    %v5487 = vpop.f32.mrf.mxu0
    %v5488 = vadd.f32 %v5447, %v5487
    %v5489 = vpop.f32.mrf.mxu0
    %5490 = vdwg.mxu0
    %v5491 = vadd.f32 %v4983, %v5485
    %v5492 = vadd.f32 %v4984, %v5488
    %v5493 = vlaneseq
    %v5494 = vshrl.u32 %v5493, 7
    %v5495 = vsub.s32 5, %v5494
    %v5496 = vrot.slane %v2904, %v5495
    %v5497 = vadd.f32 %v5491, %v5496
    %v5498 = vadd.f32 %v5492, %v5496
    %v5499 = vadd.f32 %v3456, %v5497
    %v5500 = vadd.f32 %v3457, %v5498
    %v5501 = vsel %vm180, %v5499, 0.0
    %5502 = vadd.xlane.f32.xlu0 %v5501
    %v5503 = vpop.xlane.xlu0 %5502
    %v5504 = vsel %vm180, %v5500, 0.0
    %5505 = vadd.xlane.f32.xlu0 %v5504
    %v5506 = vpop.xlane.xlu0 %5505
    %v5507 = vmul.f32 %v5503, %v792
    %v5508 = vmul.f32 %v5506, %v792
    %v5509 = vsub.f32 %v5499, %v5507
    %v5510 = vsub.f32 %v5500, %v5508
    %v5511 = vmul.f32 %v5509, %v5509
    %v5512 = vmul.f32 %v5510, %v5510
    %v5513 = vsel %vm180, %v5511, 0.0
    %5514 = vadd.xlane.f32.xlu0 %v5513
    %v5515 = vpop.xlane.xlu0 %5514
    %v5516 = vsel %vm180, %v5512, 0.0
    %5517 = vadd.xlane.f32.xlu0 %v5516
    %v5518 = vpop.xlane.xlu0 %5517
    %v5519 = vmul.f32 %v5515, %v792
    %v5520 = vmul.f32 %v5518, %v792
    %v5521 = vadd.f32 %v5519, 1e-05
    %v5522 = vadd.f32 %v5520, 1e-05
    %v5523 = vrsqrt.pop %v5521
    %v5524 = vrsqrt.pop %v5522
    %v5525 = vmul.f32 %v5509, %v5523
    %v5526 = vmul.f32 %v5510, %v5524
    %v5527 = vlaneseq
    %v5528 = vshrl.u32 %v5527, 7
    %v5529 = vsub.s32 3, %v5528
    %v5530 = vrot.slane %v2904, %v5529
    %v5531 = vmul.f32 %v5525, %v5530
    %v5532 = vmul.f32 %v5526, %v5530
    %v5533 = vlaneseq
    %v5534 = vshrl.u32 %v5533, 7
    %v5535 = vsub.s32 4, %v5534
    %v5536 = vrot.slane %v2904, %v5535
    %v5537 = vadd.f32 %v5531, %v5536
    %v5538 = vadd.f32 %v5532, %v5536
    %s5539 = scalar_lea.vmem %s9, 16
    %v5540 = vld [vmem:[%s5539] sm:$0xff]
    %s5541 = scalar_lea.vmem %s6, 144
    %v5542 = vld [vmem:[%s5541] sm:$0xff]
    %v5543 = vld [vmem:[%s5541 + $0x8] sm:$0xff]
    %v5544 = vld [vmem:[%s5541 + $0x10] sm:$0xff]
    %v5545 = vld [vmem:[%s5541 + $0x18] sm:$0xff]
    %v5546 = vld [vmem:[%s5541 + $0x20] sm:$0xff]
    %v5547 = vld [vmem:[%s5541 + $0x28] sm:$0xff]
    %v5548 = vld [vmem:[%s5541 + $0x30] sm:$0xff]
    %v5549 = vld [vmem:[%s5541 + $0x38] sm:$0xff]
    %v5550 = vld [vmem:[%s5541 + $0x40] sm:$0xff]
    %s5551 = scalar_lea.vmem %s7, 6
    %v5552 = vld [vmem:[%s5551] sm:$0x7]
    %v5554 = vlaneseq
    %v5555 = vshrl.u32 %v5554, 7
    %v5556 = vsub.s32 0, %v5555
    %v5557 = vrot.slane %v5552, %v5556
    %v5558 = vlaneseq
    %v5559 = vshrl.u32 %v5558, 7
    %v5560 = vsub.s32 1, %v5559
    %v5561 = vrot.slane %v5552, %v5560
    %v5562 = vlaneseq
    %v5563 = vshrl.u32 %v5562, 7
    %v5564 = vsub.s32 2, %v5563
    %v5565 = vrot.slane %v5552, %v5564
    %v5570 = vsel %vm180, %v5537, 0
    %v5573 = vsel %vm180, %v5538, 0
    %5575 = vmatprep.subr.mxu0 0.0
    %5576 = vmatpush1.msra.mxu0 0.0
    %5577 = vmatprep.subr.mxu0 0.0
    %5578 = vmatpush1.msra.mxu0 0.0
    %5579 = vmatprep.subr.mxu0 0.0
    %5580 = vmatpush1.msra.mxu0 0.0
    %5581 = vmatprep.subr.mxu0 0.0
    %5582 = vmatpush1.msra.mxu0 0.0
    %5583 = vmatprep.subr.mxu0 0.0
    %5584 = vmatpush1.msra.mxu0 0.0
    %5585 = vmatprep.subr.mxu0 0.0
    %5586 = vmatpush1.msra.mxu0 0.0
    %5587 = vmatprep.subr.mxu0 0.0
    %5588 = vmatpush1.msra.mxu0 0.0
    %5589 = vmatprep.subr.mxu0 0.0
    %5590 = vmatpush1.msra.mxu0 0.0
    %5591 = vmatprep.subr.mxu0 0.0
    %5592 = vmatpush1.msra.mxu0 0.0
    %5593 = vmatprep.subr.mxu0 0.0
    %5594 = vmatpush1.msra.mxu0 0.0
    %5595 = vmatprep.subr.mxu0 0.0
    %5596 = vmatpush1.msra.mxu0 0.0
    %5597 = vmatprep.subr.mxu0 0.0
    %5598 = vmatpush1.msra.mxu0 0.0
    %5599 = vmatprep.subr.mxu0 0.0
    %5600 = vmatpush1.msra.mxu0 0.0
    %5601 = vmatprep.subr.mxu0 %v5549
    %5602 = vmatpush1.msra.mxu0 %v5548
    %5603 = vmatprep.subr.mxu0 %v5546
    %5604 = vmatpush1.msra.mxu0 %v5545
    %5605 = vmatprep.subr.mxu0 %v5543
    %5606 = vmatpush1.msra.mxu0 %v5542
    %5607 = vmatprep.subr.mxu0 0.0
    %5608 = vmatpush2.msra.mxu0 0.0
    %5609 = vmatprep.subr.mxu0 0.0
    %5610 = vmatpush2.msra.mxu0 0.0
    %5611 = vmatprep.subr.mxu0 0.0
    %5612 = vmatpush2.msra.mxu0 0.0
    %5613 = vmatprep.subr.mxu0 0.0
    %5614 = vmatpush2.msra.mxu0 0.0
    %5615 = vmatprep.subr.mxu0 0.0
    %5616 = vmatpush2.msra.mxu0 0.0
    %5617 = vmatprep.subr.mxu0 0.0
    %5618 = vmatpush2.msra.mxu0 0.0
    %5619 = vmatprep.subr.mxu0 0.0
    %5620 = vmatpush2.msra.mxu0 0.0
    %5621 = vmatprep.subr.mxu0 0.0
    %5622 = vmatpush2.msra.mxu0 0.0
    %5623 = vmatprep.subr.mxu0 0.0
    %5624 = vmatpush2.msra.mxu0 0.0
    %5625 = vmatprep.subr.mxu0 0.0
    %5626 = vmatpush2.msra.mxu0 0.0
    %5627 = vmatprep.subr.mxu0 0.0
    %5628 = vmatpush2.msra.mxu0 0.0
    %5629 = vmatprep.subr.mxu0 0.0
    %5630 = vmatpush2.msra.mxu0 0.0
    %5631 = vmatprep.subr.mxu0 0.0
    %5632 = vmatpush2.msra.mxu0 0.0
    %5633 = vmatprep.subr.mxu0 0.0
    %5634 = vmatpush2.msra.mxu0 0.0
    %5635 = vmatprep.subr.mxu0 0.0
    %5636 = vmatpush2.msra.mxu0 0.0
    %5637 = vmatprep.subr.mxu0 0.0
    %5638 = vmatpush2.msra.mxu0 0.0
    %5639 = vmatprep.mubr.f32.mxu0 0.0
    %5640 = vmatmul.mubr.f32.gmra.mxu0 %v5570
    %v5641 = vpop.f32.mrf.mxu0
    %v5642 = vadd.f32 %v5557, %v5641
    %v5643 = vpop.f32.mrf.mxu0
    %v5644 = vadd.f32 %v5561, %v5643
    %5645 = vmatprep.mubr.f32.mxu0 0.0
    %5646 = vmatmul.mubr.f32.gmra.mxu0 %v5573
    %v5647 = vpop.f32.mrf.mxu0
    %v5648 = vadd.f32 %v5557, %v5647
    %v5649 = vpop.f32.mrf.mxu0
    %v5650 = vadd.f32 %v5561, %v5649
    %5651 = vdwg.mxu0
    %5652 = vmatprep.subr.mxu0 0.0
    %5653 = vmatpush1.msra.mxu0 0.0
    %5654 = vmatprep.subr.mxu0 0.0
    %5655 = vmatpush1.msra.mxu0 0.0
    %5656 = vmatprep.subr.mxu0 0.0
    %5657 = vmatpush1.msra.mxu0 0.0
    %5658 = vmatprep.subr.mxu0 0.0
    %5659 = vmatpush1.msra.mxu0 0.0
    %5660 = vmatprep.subr.mxu0 0.0
    %5661 = vmatpush1.msra.mxu0 0.0
    %5662 = vmatprep.subr.mxu0 0.0
    %5663 = vmatpush1.msra.mxu0 0.0
    %5664 = vmatprep.subr.mxu0 0.0
    %5665 = vmatpush1.msra.mxu0 0.0
    %5666 = vmatprep.subr.mxu0 0.0
    %5667 = vmatpush1.msra.mxu0 0.0
    %5668 = vmatprep.subr.mxu0 0.0
    %5669 = vmatpush1.msra.mxu0 0.0
    %5670 = vmatprep.subr.mxu0 0.0
    %5671 = vmatpush1.msra.mxu0 0.0
    %5672 = vmatprep.subr.mxu0 0.0
    %5673 = vmatpush1.msra.mxu0 0.0
    %5674 = vmatprep.subr.mxu0 0.0
    %5675 = vmatpush1.msra.mxu0 0.0
    %5676 = vmatprep.subr.mxu0 0.0
    %5677 = vmatpush1.msra.mxu0 0.0
    %5678 = vmatprep.subr.mxu0 0.0
    %5679 = vmatpush1.msra.mxu0 %v5550
    %5680 = vmatprep.subr.mxu0 0.0
    %5681 = vmatpush1.msra.mxu0 %v5547
    %5682 = vmatprep.subr.mxu0 0.0
    %5683 = vmatpush1.msra.mxu0 %v5544
    %5684 = vmatprep.subr.mxu0 0.0
    %5685 = vmatpush2.msra.mxu0 0.0
    %5686 = vmatprep.subr.mxu0 0.0
    %5687 = vmatpush2.msra.mxu0 0.0
    %5688 = vmatprep.subr.mxu0 0.0
    %5689 = vmatpush2.msra.mxu0 0.0
    %5690 = vmatprep.subr.mxu0 0.0
    %5691 = vmatpush2.msra.mxu0 0.0
    %5692 = vmatprep.subr.mxu0 0.0
    %5693 = vmatpush2.msra.mxu0 0.0
    %5694 = vmatprep.subr.mxu0 0.0
    %5695 = vmatpush2.msra.mxu0 0.0
    %5696 = vmatprep.subr.mxu0 0.0
    %5697 = vmatpush2.msra.mxu0 0.0
    %5698 = vmatprep.subr.mxu0 0.0
    %5699 = vmatpush2.msra.mxu0 0.0
    %5700 = vmatprep.subr.mxu0 0.0
    %5701 = vmatpush2.msra.mxu0 0.0
    %5702 = vmatprep.subr.mxu0 0.0
    %5703 = vmatpush2.msra.mxu0 0.0
    %5704 = vmatprep.subr.mxu0 0.0
    %5705 = vmatpush2.msra.mxu0 0.0
    %5706 = vmatprep.subr.mxu0 0.0
    %5707 = vmatpush2.msra.mxu0 0.0
    %5708 = vmatprep.subr.mxu0 0.0
    %5709 = vmatpush2.msra.mxu0 0.0
    %5710 = vmatprep.subr.mxu0 0.0
    %5711 = vmatpush2.msra.mxu0 0.0
    %5712 = vmatprep.subr.mxu0 0.0
    %5713 = vmatpush2.msra.mxu0 0.0
    %5714 = vmatprep.subr.mxu0 0.0
    %5715 = vmatpush2.msra.mxu0 0.0
    %5716 = vmatprep.mubr.f32.mxu0 0.0
    %5717 = vmatmul.mubr.f32.gmra.mxu0 %v5570
    %v5718 = vpop.f32.mrf.mxu0
    %v5719 = vadd.f32 %v5565, %v5718
    %v5720 = vpop.f32.mrf.mxu0
    %5721 = vmatprep.mubr.f32.mxu0 0.0
    %5722 = vmatmul.mubr.f32.gmra.mxu0 %v5573
    %v5723 = vpop.f32.mrf.mxu0
    %v5724 = vadd.f32 %v5565, %v5723
    %v5725 = vpop.f32.mrf.mxu0
    %5726 = vdwg.mxu0
    %v5727 = vmul.f32 %v5642, %v5644
    %v5728 = vmul.f32 %v5642, %v5650
    %v5729 = vmul.f32 %v5648, %v5644
    %v5730 = vmul.f32 %v5648, %v5650
    %v5732 = vsel %vm180, %v5727, 0
    %v5735 = vsel %vm180, %v5728, 0
    %v5738 = vsel %vm180, %v5729, 0
    %v5741 = vsel %vm180, %v5730, 0
    %5743 = vmatprep.subr.mxu0 0.0
    %5744 = vmatpush1.msra.mxu0 0.0
    %5745 = vmatprep.subr.mxu0 0.0
    %5746 = vmatpush1.msra.mxu0 0.0
    %5747 = vmatprep.subr.mxu0 0.0
    %5748 = vmatpush1.msra.mxu0 0.0
    %5749 = vmatprep.subr.mxu0 0.0
    %5750 = vmatpush1.msra.mxu0 0.0
    %5751 = vmatprep.subr.mxu0 0.0
    %5752 = vmatpush1.msra.mxu0 0.0
    %5753 = vmatprep.subr.mxu0 0.0
    %5754 = vmatpush1.msra.mxu0 0.0
    %5755 = vmatprep.subr.mxu0 0.0
    %5756 = vmatpush1.msra.mxu0 0.0
    %5757 = vmatprep.subr.mxu0 0.0
    %5758 = vmatpush1.msra.mxu0 0.0
    %5759 = vmatprep.subr.mxu0 0.0
    %5760 = vmatpush1.msra.mxu0 0.0
    %5761 = vmatprep.subr.mxu0 0.0
    %5762 = vmatpush1.msra.mxu0 0.0
    %5763 = vmatprep.subr.mxu0 0.0
    %5764 = vmatpush1.msra.mxu0 0.0
    %5765 = vmatprep.subr.mxu0 0.0
    %5766 = vmatpush1.msra.mxu0 0.0
    %5767 = vmatprep.subr.mxu0 0.0
    %5768 = vmatpush1.msra.mxu0 0.0
    %5769 = vmatprep.subr.mxu0 0.0
    %5770 = vmatpush1.msra.mxu0 %v266
    %5771 = vmatprep.subr.mxu0 0.0
    %5772 = vmatpush1.msra.mxu0 %v265
    %5773 = vmatprep.subr.mxu0 0.0
    %5774 = vmatpush1.msra.mxu0 %v264
    %5775 = vmatprep.subr.mxu0 0.0
    %5776 = vmatpush2.msra.mxu0 0.0
    %5777 = vmatprep.subr.mxu0 0.0
    %5778 = vmatpush2.msra.mxu0 0.0
    %5779 = vmatprep.subr.mxu0 0.0
    %5780 = vmatpush2.msra.mxu0 0.0
    %5781 = vmatprep.subr.mxu0 0.0
    %5782 = vmatpush2.msra.mxu0 0.0
    %5783 = vmatprep.subr.mxu0 0.0
    %5784 = vmatpush2.msra.mxu0 0.0
    %5785 = vmatprep.subr.mxu0 0.0
    %5786 = vmatpush2.msra.mxu0 0.0
    %5787 = vmatprep.subr.mxu0 0.0
    %5788 = vmatpush2.msra.mxu0 0.0
    %5789 = vmatprep.subr.mxu0 0.0
    %5790 = vmatpush2.msra.mxu0 0.0
    %5791 = vmatprep.subr.mxu0 0.0
    %5792 = vmatpush2.msra.mxu0 0.0
    %5793 = vmatprep.subr.mxu0 0.0
    %5794 = vmatpush2.msra.mxu0 0.0
    %5795 = vmatprep.subr.mxu0 0.0
    %5796 = vmatpush2.msra.mxu0 0.0
    %5797 = vmatprep.subr.mxu0 0.0
    %5798 = vmatpush2.msra.mxu0 0.0
    %5799 = vmatprep.subr.mxu0 0.0
    %5800 = vmatpush2.msra.mxu0 0.0
    %5801 = vmatprep.subr.mxu0 0.0
    %5802 = vmatpush2.msra.mxu0 0.0
    %5803 = vmatprep.subr.mxu0 0.0
    %5804 = vmatpush2.msra.mxu0 0.0
    %5805 = vmatprep.subr.mxu0 0.0
    %5806 = vmatpush2.msra.mxu0 0.0
    %5807 = vmatprep.mubr.f32.mxu0 0.0
    %5808 = vmatmul.mubr.f32.gmra.mxu0 %v5732
    %v5809 = vpop.f32.mrf.mxu0
    %v5810 = vadd.f32 0.0, %v5809
    %v5811 = vpop.f32.mrf.mxu0
    %5812 = vmatprep.mubr.f32.mxu0 0.0
    %5813 = vmatmul.mubr.f32.gmra.mxu0 %v5735
    %v5814 = vpop.f32.mrf.mxu0
    %v5815 = vadd.f32 0.0, %v5814
    %v5816 = vpop.f32.mrf.mxu0
    %5817 = vmatprep.mubr.f32.mxu0 0.0
    %5818 = vmatmul.mubr.f32.gmra.mxu0 %v5738
    %v5819 = vpop.f32.mrf.mxu0
    %v5820 = vadd.f32 0.0, %v5819
    %v5821 = vpop.f32.mrf.mxu0
    %5822 = vmatprep.mubr.f32.mxu0 0.0
    %5823 = vmatmul.mubr.f32.gmra.mxu0 %v5741
    %v5824 = vpop.f32.mrf.mxu0
    %v5825 = vadd.f32 0.0, %v5824
    %v5826 = vpop.f32.mrf.mxu0
    %5827 = vdwg.mxu0
    %v5828 = vsel %vm554, %v5810, -inf
    %v5829 = vsel %vm554, %v5815, -inf
    %v5830 = vmax.f32 %v5828, %v5829
    %v5831 = vsel %vm554, %v5820, -inf
    %v5832 = vsel %vm554, %v5825, -inf
    %v5833 = vmax.f32 %v5831, %v5832
    %v5834 = vsub.f32 %v5810, %v5830
    %v5835 = vsub.f32 %v5815, %v5830
    %v5836 = vsub.f32 %v5820, %v5833
    %v5837 = vsub.f32 %v5825, %v5833
    %v5838 = vmul.f32 %v5834, 1.442695
    %v5839 = vpow.pop %v5838
    %v5840 = vmul.f32 %v5835, 1.442695
    %v5841 = vpow.pop %v5840
    %v5842 = vmul.f32 %v5836, 1.442695
    %v5843 = vpow.pop %v5842
    %v5844 = vmul.f32 %v5837, 1.442695
    %v5845 = vpow.pop %v5844
    %v5846 = vsel %vm554, %v5839, 0.0
    %v5847 = vsel %vm554, %v5841, 0.0
    %v5848 = vadd.f32 %v5846, %v5847
    %v5849 = vsel %vm554, %v5843, 0.0
    %v5850 = vsel %vm554, %v5845, 0.0
    %v5851 = vadd.f32 %v5849, %v5850
    %v5852 = vrcp.pop %v5848
    %v5853 = vrcp.pop %v5851
    %v5854 = vmul.f32 %v5839, %v5852
    %v5855 = vmul.f32 %v5841, %v5852
    %v5856 = vmul.f32 %v5843, %v5853
    %v5857 = vmul.f32 %v5845, %v5853
    %v5859 = vsel %vm554, %v5854, 0
    %v5862 = vsel %vm554, %v5855, 0
    %v5865 = vsel %vm554, %v5856, 0
    %v5868 = vsel %vm554, %v5857, 0
    %5870 = vmatprep.subr.mxu0 0.0
    %5871 = vmatpush1.msra.mxu0 0.0
    %5872 = vmatprep.subr.mxu0 0.0
    %5873 = vmatpush1.msra.mxu0 0.0
    %5874 = vmatprep.subr.mxu0 0.0
    %5875 = vmatpush1.msra.mxu0 0.0
    %5876 = vmatprep.subr.mxu0 0.0
    %5877 = vmatpush1.msra.mxu0 0.0
    %5878 = vmatprep.subr.mxu0 0.0
    %5879 = vmatpush1.msra.mxu0 0.0
    %5880 = vmatprep.subr.mxu0 0.0
    %5881 = vmatpush1.msra.mxu0 0.0
    %5882 = vmatprep.subr.mxu0 0.0
    %5883 = vmatpush1.msra.mxu0 0.0
    %5884 = vmatprep.subr.mxu0 0.0
    %5885 = vmatpush1.msra.mxu0 0.0
    %5886 = vmatprep.subr.mxu0 0.0
    %5887 = vmatpush1.msra.mxu0 0.0
    %5888 = vmatprep.subr.mxu0 0.0
    %5889 = vmatpush1.msra.mxu0 0.0
    %5890 = vmatprep.subr.mxu0 0.0
    %5891 = vmatpush1.msra.mxu0 0.0
    %5892 = vmatprep.subr.mxu0 0.0
    %5893 = vmatpush1.msra.mxu0 0.0
    %5894 = vmatprep.subr.mxu0 0.0
    %5895 = vmatpush1.msra.mxu0 0.0
    %5896 = vmatprep.subr.mxu0 0.0
    %5897 = vmatpush1.msra.mxu0 0.0
    %5898 = vmatprep.subr.mxu0 0.0
    %5899 = vmatpush1.msra.mxu0 0.0
    %5900 = vmatprep.subr.mxu0 0.0
    %5901 = vmatpush1.msra.mxu0 %v599
    %5902 = vmatprep.subr.mxu0 0.0
    %5903 = vmatpush2.msra.mxu0 0.0
    %5904 = vmatprep.subr.mxu0 0.0
    %5905 = vmatpush2.msra.mxu0 0.0
    %5906 = vmatprep.subr.mxu0 0.0
    %5907 = vmatpush2.msra.mxu0 0.0
    %5908 = vmatprep.subr.mxu0 0.0
    %5909 = vmatpush2.msra.mxu0 0.0
    %5910 = vmatprep.subr.mxu0 0.0
    %5911 = vmatpush2.msra.mxu0 0.0
    %5912 = vmatprep.subr.mxu0 0.0
    %5913 = vmatpush2.msra.mxu0 0.0
    %5914 = vmatprep.subr.mxu0 0.0
    %5915 = vmatpush2.msra.mxu0 0.0
    %5916 = vmatprep.subr.mxu0 0.0
    %5917 = vmatpush2.msra.mxu0 0.0
    %5918 = vmatprep.subr.mxu0 0.0
    %5919 = vmatpush2.msra.mxu0 0.0
    %5920 = vmatprep.subr.mxu0 0.0
    %5921 = vmatpush2.msra.mxu0 0.0
    %5922 = vmatprep.subr.mxu0 0.0
    %5923 = vmatpush2.msra.mxu0 0.0
    %5924 = vmatprep.subr.mxu0 0.0
    %5925 = vmatpush2.msra.mxu0 0.0
    %5926 = vmatprep.subr.mxu0 0.0
    %5927 = vmatpush2.msra.mxu0 0.0
    %5928 = vmatprep.subr.mxu0 0.0
    %5929 = vmatpush2.msra.mxu0 0.0
    %5930 = vmatprep.subr.mxu0 0.0
    %5931 = vmatpush2.msra.mxu0 0.0
    %5932 = vmatprep.subr.mxu0 0.0
    %5933 = vmatpush2.msra.mxu0 0.0
    %5934 = vmatprep.mubr.f32.mxu0 0.0
    %5935 = vmatmul.mubr.f32.gmra.mxu0 %v5859
    %v5936 = vpop.f32.mrf.mxu0
    %v5937 = vadd.f32 0.0, %v5936
    %v5938 = vpop.f32.mrf.mxu0
    %5939 = vmatprep.mubr.f32.mxu0 0.0
    %5940 = vmatmul.mubr.f32.gmra.mxu0 %v5862
    %v5941 = vpop.f32.mrf.mxu0
    %v5942 = vadd.f32 0.0, %v5941
    %v5943 = vpop.f32.mrf.mxu0
    %5944 = vmatprep.mubr.f32.mxu0 0.0
    %5945 = vmatmul.mubr.f32.gmra.mxu0 %v5865
    %v5946 = vpop.f32.mrf.mxu0
    %v5947 = vadd.f32 0.0, %v5946
    %v5948 = vpop.f32.mrf.mxu0
    %5949 = vmatprep.mubr.f32.mxu0 0.0
    %5950 = vmatmul.mubr.f32.gmra.mxu0 %v5868
    %v5951 = vpop.f32.mrf.mxu0
    %v5952 = vadd.f32 0.0, %v5951
    %v5953 = vpop.f32.mrf.mxu0
    %5954 = vdwg.mxu0
    %v5955 = vmul.f32 %v5937, %v5719
    %v5956 = vmul.f32 %v5942, %v5724
    %v5957 = vmul.f32 %v5947, %v5719
    %v5958 = vmul.f32 %v5952, %v5724
    %v5959 = vsel %vm180, %v5955, 0.0
    %v5960 = vsel %vm180, %v5956, 0.0
    %v5961 = vadd.f32 %v5959, %v5960
    %v5962 = vsel %vm180, %v5957, 0.0
    %v5963 = vsel %vm180, %v5958, 0.0
    %v5964 = vadd.f32 %v5962, %v5963
    %s5965 = scalar_lea.vmem %s8, 48
    %v5966 = vld [vmem:[%s5965] sm:$0xff]
    %v5967 = vld [vmem:[%s5965 + $0x8] sm:$0xff]
    %v5968 = vld [vmem:[%s5965 + $0x10] sm:$0xff]
    %v5969 = vlaneseq
    %v5970 = vshrl.u32 %v5969, 7
    %v5971 = vsub.s32 0, %v5970
    %v5972 = vrot.slane %v5540, %v5971
    %v5974 = vsel %vm180, %v5961, 0
    %v5977 = vsel %vm180, %v5964, 0
    %5979 = vmatprep.subr.mxu0 0.0
    %5980 = vmatpush1.msra.mxu0 0.0
    %5981 = vmatprep.subr.mxu0 0.0
    %5982 = vmatpush1.msra.mxu0 0.0
    %5983 = vmatprep.subr.mxu0 0.0
    %5984 = vmatpush1.msra.mxu0 0.0
    %5985 = vmatprep.subr.mxu0 0.0
    %5986 = vmatpush1.msra.mxu0 0.0
    %5987 = vmatprep.subr.mxu0 0.0
    %5988 = vmatpush1.msra.mxu0 0.0
    %5989 = vmatprep.subr.mxu0 0.0
    %5990 = vmatpush1.msra.mxu0 0.0
    %5991 = vmatprep.subr.mxu0 0.0
    %5992 = vmatpush1.msra.mxu0 0.0
    %5993 = vmatprep.subr.mxu0 0.0
    %5994 = vmatpush1.msra.mxu0 0.0
    %5995 = vmatprep.subr.mxu0 0.0
    %5996 = vmatpush1.msra.mxu0 0.0
    %5997 = vmatprep.subr.mxu0 0.0
    %5998 = vmatpush1.msra.mxu0 0.0
    %5999 = vmatprep.subr.mxu0 0.0
    %6000 = vmatpush1.msra.mxu0 0.0
    %6001 = vmatprep.subr.mxu0 0.0
    %6002 = vmatpush1.msra.mxu0 0.0
    %6003 = vmatprep.subr.mxu0 0.0
    %6004 = vmatpush1.msra.mxu0 0.0
    %6005 = vmatprep.subr.mxu0 0.0
    %6006 = vmatpush1.msra.mxu0 %v5968
    %6007 = vmatprep.subr.mxu0 0.0
    %6008 = vmatpush1.msra.mxu0 %v5967
    %6009 = vmatprep.subr.mxu0 0.0
    %6010 = vmatpush1.msra.mxu0 %v5966
    %6011 = vmatprep.subr.mxu0 0.0
    %6012 = vmatpush2.msra.mxu0 0.0
    %6013 = vmatprep.subr.mxu0 0.0
    %6014 = vmatpush2.msra.mxu0 0.0
    %6015 = vmatprep.subr.mxu0 0.0
    %6016 = vmatpush2.msra.mxu0 0.0
    %6017 = vmatprep.subr.mxu0 0.0
    %6018 = vmatpush2.msra.mxu0 0.0
    %6019 = vmatprep.subr.mxu0 0.0
    %6020 = vmatpush2.msra.mxu0 0.0
    %6021 = vmatprep.subr.mxu0 0.0
    %6022 = vmatpush2.msra.mxu0 0.0
    %6023 = vmatprep.subr.mxu0 0.0
    %6024 = vmatpush2.msra.mxu0 0.0
    %6025 = vmatprep.subr.mxu0 0.0
    %6026 = vmatpush2.msra.mxu0 0.0
    %6027 = vmatprep.subr.mxu0 0.0
    %6028 = vmatpush2.msra.mxu0 0.0
    %6029 = vmatprep.subr.mxu0 0.0
    %6030 = vmatpush2.msra.mxu0 0.0
    %6031 = vmatprep.subr.mxu0 0.0
    %6032 = vmatpush2.msra.mxu0 0.0
    %6033 = vmatprep.subr.mxu0 0.0
    %6034 = vmatpush2.msra.mxu0 0.0
    %6035 = vmatprep.subr.mxu0 0.0
    %6036 = vmatpush2.msra.mxu0 0.0
    %6037 = vmatprep.subr.mxu0 0.0
    %6038 = vmatpush2.msra.mxu0 0.0
    %6039 = vmatprep.subr.mxu0 0.0
    %6040 = vmatpush2.msra.mxu0 0.0
    %6041 = vmatprep.subr.mxu0 0.0
    %6042 = vmatpush2.msra.mxu0 0.0
    %6043 = vmatprep.mubr.f32.mxu0 0.0
    %6044 = vmatmul.mubr.f32.gmra.mxu0 %v5974
    %v6045 = vpop.f32.mrf.mxu0
    %v6046 = vadd.f32 %v5972, %v6045
    %v6047 = vpop.f32.mrf.mxu0
    %6048 = vmatprep.mubr.f32.mxu0 0.0
    %6049 = vmatmul.mubr.f32.gmra.mxu0 %v5977
    %v6050 = vpop.f32.mrf.mxu0
    %v6051 = vadd.f32 %v5972, %v6050
    %v6052 = vpop.f32.mrf.mxu0
    %6053 = vdwg.mxu0
    %v6054 = vadd.f32 %v5537, %v6046
    %v6055 = vadd.f32 %v5538, %v6051
    %v6056 = vsel %vm180, %v6054, 0.0
    %6057 = vadd.xlane.f32.xlu0 %v6056
    %v6058 = vpop.xlane.xlu0 %6057
    %v6059 = vsel %vm180, %v6055, 0.0
    %6060 = vadd.xlane.f32.xlu0 %v6059
    %v6061 = vpop.xlane.xlu0 %6060
    %v6062 = vmul.f32 %v6058, %v792
    %v6063 = vmul.f32 %v6061, %v792
    %v6064 = vsub.f32 %v6054, %v6062
    %v6065 = vsub.f32 %v6055, %v6063
    %v6066 = vmul.f32 %v6064, %v6064
    %v6067 = vmul.f32 %v6065, %v6065
    %v6068 = vsel %vm180, %v6066, 0.0
    %6069 = vadd.xlane.f32.xlu0 %v6068
    %v6070 = vpop.xlane.xlu0 %6069
    %v6071 = vsel %vm180, %v6067, 0.0
    %6072 = vadd.xlane.f32.xlu0 %v6071
    %v6073 = vpop.xlane.xlu0 %6072
    %v6074 = vmul.f32 %v6070, %v792
    %v6075 = vmul.f32 %v6073, %v792
    %v6076 = vadd.f32 %v6074, 1e-05
    %v6077 = vadd.f32 %v6075, 1e-05
    %v6078 = vrsqrt.pop %v6076
    %v6079 = vrsqrt.pop %v6077
    %v6080 = vmul.f32 %v6064, %v6078
    %v6081 = vmul.f32 %v6065, %v6079
    %v6082 = vlaneseq
    %v6083 = vshrl.u32 %v6082, 7
    %v6084 = vsub.s32 1, %v6083
    %v6085 = vrot.slane %v5540, %v6084
    %v6086 = vmul.f32 %v6080, %v6085
    %v6087 = vmul.f32 %v6081, %v6085
    %v6088 = vlaneseq
    %v6089 = vshrl.u32 %v6088, 7
    %v6090 = vsub.s32 2, %v6089
    %v6091 = vrot.slane %v5540, %v6090
    %v6092 = vadd.f32 %v6086, %v6091
    %v6093 = vadd.f32 %v6087, %v6091
    %v6094 = vpack.c.bf16 %v6093, %v6092
    %s6095 = scalar_lea.vmem %s10, 384
    %v6096 = vld [vmem:[%s6095] sm:$0xff]
    %v6097 = vld [vmem:[%s6095 + $0x8] sm:$0xff]
    %v6098 = vld [vmem:[%s6095 + $0x40] sm:$0xff]
    %v6099 = vld [vmem:[%s6095 + $0x48] sm:$0xff]
    %v6100 = vld [vmem:[%s6095 + $0x80] sm:$0xff]
    %v6101 = vld [vmem:[%s6095 + $0x88] sm:$0xff]
    %s6102 = scalar_lea.vmem %s11, 32
    %v6103 = vld [vmem:[%s6102] sm:$0xf]
    %v6105 = vlaneseq
    %v6106 = vshrl.u32 %v6105, 7
    %v6107 = vsub.s32 0, %v6106
    %v6108 = vrot.slane %v6103, %v6107
    %v6109 = vlaneseq
    %v6110 = vshrl.u32 %v6109, 7
    %v6111 = vsub.s32 1, %v6110
    %v6112 = vrot.slane %v6103, %v6111
    %v6113 = vlaneseq
    %v6114 = vshrl.u32 %v6113, 7
    %v6115 = vsub.s32 2, %v6114
    %v6116 = vrot.slane %v6103, %v6115
    %v6117 = vlaneseq
    %v6118 = vshrl.u32 %v6117, 7
    %v6119 = vsub.s32 3, %v6118
    %v6120 = vrot.slane %v6103, %v6119
    %v6131 = vunpack.c.l.b16 %v6096
    %v6132 = vunpack.c.h.b16 %v6096
    %v6133 = vunpack.c.l.b16 %v6097
    %v6134 = vunpack.c.h.b16 %v6097
    %v6135 = vunpack.c.l.b16 %v6098
    %v6136 = vunpack.c.h.b16 %v6098
    %v6137 = vunpack.c.l.b16 %v6099
    %v6138 = vunpack.c.h.b16 %v6099
    %v6139 = vunpack.c.l.b16 %v6100
    %v6140 = vunpack.c.h.b16 %v6100
    %v6141 = vunpack.c.l.b16 %v6101
    %v6142 = vunpack.c.h.b16 %v6101
    %v6143 = vpack.c.b16 %v6135, %v6131
    %v6144 = vpack.c.b16 %v6136, %v6132
    %v6145 = vpack.c.b16 %v6137, %v6133
    %v6146 = vpack.c.b16 %v6138, %v6134
    %v6147 = vpack.c.b16 %v6139, %v6139
    %v6148 = vpack.c.b16 %v6140, %v6140
    %v6149 = vpack.c.b16 %v6141, %v6141
    %v6150 = vpack.c.b16 %v6142, %v6142
    %v6156 = vsel %vm180, %v6094, 0
    %v6159 = vsel %vm66, %v6147, 0
    %v6162 = vsel %vm66, %v6148, 0
    %v6165 = vsel %vm66, %v6149, 0
    %v6168 = vsel %vm66, %v6150, 0
    %6170 = vmatprep.subr.bf16.mxu0 0
    %6171 = vmatpush1.bf16.msra.mxu0 0
    %6172 = vmatprep.subr.bf16.mxu0 0
    %6173 = vmatpush1.bf16.msra.mxu0 0
    %6174 = vmatprep.subr.bf16.mxu0 0
    %6175 = vmatpush1.bf16.msra.mxu0 0
    %6176 = vmatprep.subr.bf16.mxu0 0
    %6177 = vmatpush1.bf16.msra.mxu0 0
    %6178 = vmatprep.subr.bf16.mxu0 0
    %6179 = vmatpush1.bf16.msra.mxu0 0
    %6180 = vmatprep.subr.bf16.mxu0 0
    %6181 = vmatpush1.bf16.msra.mxu0 0
    %6182 = vmatprep.subr.bf16.mxu0 %v6162
    %6183 = vmatpush1.bf16.msra.mxu0 %v6159
    %6184 = vmatprep.subr.bf16.mxu0 %v6144
    %6185 = vmatpush1.bf16.msra.mxu0 %v6143
    %6186 = vmatprep.subr.bf16.mxu0 0
    %6187 = vmatpush2.bf16.msra.mxu0 0
    %6188 = vmatprep.subr.bf16.mxu0 0
    %6189 = vmatpush2.bf16.msra.mxu0 0
    %6190 = vmatprep.subr.bf16.mxu0 0
    %6191 = vmatpush2.bf16.msra.mxu0 0
    %6192 = vmatprep.subr.bf16.mxu0 0
    %6193 = vmatpush2.bf16.msra.mxu0 0
    %6194 = vmatprep.subr.bf16.mxu0 0
    %6195 = vmatpush2.bf16.msra.mxu0 0
    %6196 = vmatprep.subr.bf16.mxu0 0
    %6197 = vmatpush2.bf16.msra.mxu0 0
    %6198 = vmatprep.subr.bf16.mxu0 0
    %6199 = vmatpush2.bf16.msra.mxu0 0
    %6200 = vmatprep.subr.bf16.mxu0 0
    %6201 = vmatpush2.bf16.msra.mxu0 0
    %6202 = vmatprep.mubr.bf16.mxu0 0
    %6203 = vmatmul.mubr.bf16.gmra.mxu0 %v6156
    %v6204 = vpop.f32.mrf.mxu0
    %v6205 = vadd.f32 %v6108, %v6204
    %v6206 = vpop.f32.mrf.mxu0
    %v6207 = vadd.f32 %v6112, %v6206
    %v6208 = vpop.f32.mrf.mxu0
    %v6209 = vadd.f32 %v6108, %v6208
    %v6210 = vpop.f32.mrf.mxu0
    %v6211 = vadd.f32 %v6112, %v6210
    %6212 = vdwg.mxu0
    %6213 = vmatprep.subr.bf16.mxu0 0
    %6214 = vmatpush1.bf16.msra.mxu0 0
    %6215 = vmatprep.subr.bf16.mxu0 0
    %6216 = vmatpush1.bf16.msra.mxu0 0
    %6217 = vmatprep.subr.bf16.mxu0 0
    %6218 = vmatpush1.bf16.msra.mxu0 0
    %6219 = vmatprep.subr.bf16.mxu0 0
    %6220 = vmatpush1.bf16.msra.mxu0 0
    %6221 = vmatprep.subr.bf16.mxu0 0
    %6222 = vmatpush1.bf16.msra.mxu0 0
    %6223 = vmatprep.subr.bf16.mxu0 0
    %6224 = vmatpush1.bf16.msra.mxu0 0
    %6225 = vmatprep.subr.bf16.mxu0 %v6168
    %6226 = vmatpush1.bf16.msra.mxu0 %v6165
    %6227 = vmatprep.subr.bf16.mxu0 %v6146
    %6228 = vmatpush1.bf16.msra.mxu0 %v6145
    %6229 = vmatprep.subr.bf16.mxu0 0
    %6230 = vmatpush2.bf16.msra.mxu0 0
    %6231 = vmatprep.subr.bf16.mxu0 0
    %6232 = vmatpush2.bf16.msra.mxu0 0
    %6233 = vmatprep.subr.bf16.mxu0 0
    %6234 = vmatpush2.bf16.msra.mxu0 0
    %6235 = vmatprep.subr.bf16.mxu0 0
    %6236 = vmatpush2.bf16.msra.mxu0 0
    %6237 = vmatprep.subr.bf16.mxu0 0
    %6238 = vmatpush2.bf16.msra.mxu0 0
    %6239 = vmatprep.subr.bf16.mxu0 0
    %6240 = vmatpush2.bf16.msra.mxu0 0
    %6241 = vmatprep.subr.bf16.mxu0 0
    %6242 = vmatpush2.bf16.msra.mxu0 0
    %6243 = vmatprep.subr.bf16.mxu0 0
    %6244 = vmatpush2.bf16.msra.mxu0 0
    %6245 = vmatprep.mubr.bf16.mxu0 0
    %6246 = vmatmul.mubr.bf16.gmra.mxu0 %v6156
    %v6247 = vpop.f32.mrf.mxu0
    %v6248 = vadd.f32 %v6116, %v6247
    %v6249 = vpop.f32.mrf.mxu0
    %v6250 = vadd.f32 %v6120, %v6249
    %v6251 = vpop.f32.mrf.mxu0
    %v6252 = vadd.f32 %v6116, %v6251
    %v6253 = vpop.f32.mrf.mxu0
    %v6254 = vadd.f32 %v6120, %v6253
    %6255 = vdwg.mxu0
    %v6256 = vmax.f32 %v6205, 0.0
    %v6257 = vmax.f32 %v6207, 0.0
    %v6258 = vmax.f32 %v6248, 0.0
    %v6259 = vmax.f32 %v6250, 0.0
    %v6260 = vmax.f32 %v6209, 0.0
    %v6261 = vmax.f32 %v6211, 0.0
    %v6262 = vmax.f32 %v6252, 0.0
    %v6263 = vmax.f32 %v6254, 0.0
    %v6264 = vpack.c.bf16 %v6260, %v6256
    %v6265 = vpack.c.bf16 %v6261, %v6257
    %v6266 = vpack.c.bf16 %v6262, %v6258
    %v6267 = vpack.c.bf16 %v6263, %v6259
    %s6268 = scalar_lea.vmem %s12, 2048
    %v6269 = vld [vmem:[%s6268] sm:$0xf]
    %v6270 = vld [vmem:[%s6268 + $0x4] sm:$0xf]
    %v6271 = vld [vmem:[%s6268 + $0x8] sm:$0xf]
    %v6272 = vld [vmem:[%s6268 + $0xc] sm:$0xf]
    %v6273 = vld [vmem:[%s6268 + $0x10] sm:$0xf]
    %v6274 = vld [vmem:[%s6268 + $0x14] sm:$0xf]
    %v6275 = vld [vmem:[%s6268 + $0x18] sm:$0xf]
    %v6276 = vld [vmem:[%s6268 + $0x1c] sm:$0xf]
    %v6277 = vld [vmem:[%s6268 + $0x20] sm:$0xf]
    %v6278 = vld [vmem:[%s6268 + $0x24] sm:$0xf]
    %v6279 = vld [vmem:[%s6268 + $0x28] sm:$0xf]
    %v6280 = vld [vmem:[%s6268 + $0x2c] sm:$0xf]
    %v6281 = vld [vmem:[%s6268 + $0x30] sm:$0xf]
    %v6282 = vld [vmem:[%s6268 + $0x34] sm:$0xf]
    %v6283 = vld [vmem:[%s6268 + $0x38] sm:$0xf]
    %v6284 = vld [vmem:[%s6268 + $0x3c] sm:$0xf]
    %v6285 = vld [vmem:[%s6268 + $0x40] sm:$0xf]
    %v6286 = vld [vmem:[%s6268 + $0x44] sm:$0xf]
    %v6287 = vld [vmem:[%s6268 + $0x48] sm:$0xf]
    %v6288 = vld [vmem:[%s6268 + $0x4c] sm:$0xf]
    %v6289 = vld [vmem:[%s6268 + $0x50] sm:$0xf]
    %v6290 = vld [vmem:[%s6268 + $0x54] sm:$0xf]
    %v6291 = vld [vmem:[%s6268 + $0x58] sm:$0xf]
    %v6292 = vld [vmem:[%s6268 + $0x5c] sm:$0xf]
    %v6293 = vld [vmem:[%s6268 + $0x60] sm:$0xf]
    %v6294 = vld [vmem:[%s6268 + $0x64] sm:$0xf]
    %v6295 = vld [vmem:[%s6268 + $0x68] sm:$0xf]
    %v6296 = vld [vmem:[%s6268 + $0x6c] sm:$0xf]
    %v6297 = vld [vmem:[%s6268 + $0x70] sm:$0xf]
    %v6298 = vld [vmem:[%s6268 + $0x74] sm:$0xf]
    %v6299 = vld [vmem:[%s6268 + $0x78] sm:$0xf]
    %v6300 = vld [vmem:[%s6268 + $0x7c] sm:$0xf]
    %v6301 = vld [vmem:[%s6268 + $0x80] sm:$0xf]
    %v6302 = vld [vmem:[%s6268 + $0x84] sm:$0xf]
    %v6303 = vld [vmem:[%s6268 + $0x88] sm:$0xf]
    %v6304 = vld [vmem:[%s6268 + $0x8c] sm:$0xf]
    %v6305 = vld [vmem:[%s6268 + $0x90] sm:$0xf]
    %v6306 = vld [vmem:[%s6268 + $0x94] sm:$0xf]
    %v6307 = vld [vmem:[%s6268 + $0x98] sm:$0xf]
    %v6308 = vld [vmem:[%s6268 + $0x9c] sm:$0xf]
    %v6309 = vld [vmem:[%s6268 + $0xa0] sm:$0xf]
    %v6310 = vld [vmem:[%s6268 + $0xa4] sm:$0xf]
    %v6311 = vld [vmem:[%s6268 + $0xa8] sm:$0xf]
    %v6312 = vld [vmem:[%s6268 + $0xac] sm:$0xf]
    %v6313 = vld [vmem:[%s6268 + $0xb0] sm:$0xf]
    %v6314 = vld [vmem:[%s6268 + $0xb4] sm:$0xf]
    %v6315 = vld [vmem:[%s6268 + $0xb8] sm:$0xf]
    %v6316 = vld [vmem:[%s6268 + $0xbc] sm:$0xf]
    %v6317 = vld [vmem:[%s6268 + $0xc0] sm:$0xf]
    %v6318 = vld [vmem:[%s6268 + $0xc4] sm:$0xf]
    %v6319 = vld [vmem:[%s6268 + $0xc8] sm:$0xf]
    %v6320 = vld [vmem:[%s6268 + $0xcc] sm:$0xf]
    %v6321 = vld [vmem:[%s6268 + $0xd0] sm:$0xf]
    %v6322 = vld [vmem:[%s6268 + $0xd4] sm:$0xf]
    %v6323 = vld [vmem:[%s6268 + $0xd8] sm:$0xf]
    %v6324 = vld [vmem:[%s6268 + $0xdc] sm:$0xf]
    %v6325 = vld [vmem:[%s6268 + $0xe0] sm:$0xf]
    %v6326 = vld [vmem:[%s6268 + $0xe4] sm:$0xf]
    %v6327 = vld [vmem:[%s6268 + $0xe8] sm:$0xf]
    %v6328 = vld [vmem:[%s6268 + $0xec] sm:$0xf]
    %v6329 = vld [vmem:[%s6268 + $0xf0] sm:$0xf]
    %v6330 = vld [vmem:[%s6268 + $0xf4] sm:$0xf]
    %v6331 = vld [vmem:[%s6268 + $0xf8] sm:$0xf]
    %v6332 = vld [vmem:[%s6268 + $0xfc] sm:$0xf]
    %v6333 = vld [vmem:[%s6095 + $0x10] sm:$0xff]
    %v6334 = vld [vmem:[%s6095 + $0x18] sm:$0xff]
    %v6335 = vld [vmem:[%s6095 + $0x50] sm:$0xff]
    %v6336 = vld [vmem:[%s6095 + $0x58] sm:$0xff]
    %v6337 = vld [vmem:[%s6095 + $0x90] sm:$0xff]
    %v6338 = vld [vmem:[%s6095 + $0x98] sm:$0xff]
    %v6339 = vld [vmem:[%s6102 + $0x4] sm:$0xf]
    %v6341 = vlaneseq
    %v6342 = vshrl.u32 %v6341, 7
    %v6343 = vsub.s32 0, %v6342
    %v6344 = vrot.slane %v6339, %v6343
    %v6345 = vlaneseq
    %v6346 = vshrl.u32 %v6345, 7
    %v6347 = vsub.s32 1, %v6346
    %v6348 = vrot.slane %v6339, %v6347
    %v6349 = vlaneseq
    %v6350 = vshrl.u32 %v6349, 7
    %v6351 = vsub.s32 2, %v6350
    %v6352 = vrot.slane %v6339, %v6351
    %v6353 = vlaneseq
    %v6354 = vshrl.u32 %v6353, 7
    %v6355 = vsub.s32 3, %v6354
    %v6356 = vrot.slane %v6339, %v6355
    %v6367 = vunpack.c.l.b16 %v6333
    %v6368 = vunpack.c.h.b16 %v6333
    %v6369 = vunpack.c.l.b16 %v6334
    %v6370 = vunpack.c.h.b16 %v6334
    %v6371 = vunpack.c.l.b16 %v6335
    %v6372 = vunpack.c.h.b16 %v6335
    %v6373 = vunpack.c.l.b16 %v6336
    %v6374 = vunpack.c.h.b16 %v6336
    %v6375 = vunpack.c.l.b16 %v6337
    %v6376 = vunpack.c.h.b16 %v6337
    %v6377 = vunpack.c.l.b16 %v6338
    %v6378 = vunpack.c.h.b16 %v6338
    %v6379 = vpack.c.b16 %v6371, %v6367
    %v6380 = vpack.c.b16 %v6372, %v6368
    %v6381 = vpack.c.b16 %v6373, %v6369
    %v6382 = vpack.c.b16 %v6374, %v6370
    %v6383 = vpack.c.b16 %v6375, %v6375
    %v6384 = vpack.c.b16 %v6376, %v6376
    %v6385 = vpack.c.b16 %v6377, %v6377
    %v6386 = vpack.c.b16 %v6378, %v6378
    %v6392 = vsel %vm66, %v6383, 0
    %v6395 = vsel %vm66, %v6384, 0
    %v6398 = vsel %vm66, %v6385, 0
    %v6401 = vsel %vm66, %v6386, 0
    %6403 = vmatprep.subr.bf16.mxu0 0
    %6404 = vmatpush1.bf16.msra.mxu0 0
    %6405 = vmatprep.subr.bf16.mxu0 0
    %6406 = vmatpush1.bf16.msra.mxu0 0
    %6407 = vmatprep.subr.bf16.mxu0 0
    %6408 = vmatpush1.bf16.msra.mxu0 0
    %6409 = vmatprep.subr.bf16.mxu0 0
    %6410 = vmatpush1.bf16.msra.mxu0 0
    %6411 = vmatprep.subr.bf16.mxu0 0
    %6412 = vmatpush1.bf16.msra.mxu0 0
    %6413 = vmatprep.subr.bf16.mxu0 0
    %6414 = vmatpush1.bf16.msra.mxu0 0
    %6415 = vmatprep.subr.bf16.mxu0 %v6395
    %6416 = vmatpush1.bf16.msra.mxu0 %v6392
    %6417 = vmatprep.subr.bf16.mxu0 %v6380
    %6418 = vmatpush1.bf16.msra.mxu0 %v6379
    %6419 = vmatprep.subr.bf16.mxu0 0
    %6420 = vmatpush2.bf16.msra.mxu0 0
    %6421 = vmatprep.subr.bf16.mxu0 0
    %6422 = vmatpush2.bf16.msra.mxu0 0
    %6423 = vmatprep.subr.bf16.mxu0 0
    %6424 = vmatpush2.bf16.msra.mxu0 0
    %6425 = vmatprep.subr.bf16.mxu0 0
    %6426 = vmatpush2.bf16.msra.mxu0 0
    %6427 = vmatprep.subr.bf16.mxu0 0
    %6428 = vmatpush2.bf16.msra.mxu0 0
    %6429 = vmatprep.subr.bf16.mxu0 0
    %6430 = vmatpush2.bf16.msra.mxu0 0
    %6431 = vmatprep.subr.bf16.mxu0 0
    %6432 = vmatpush2.bf16.msra.mxu0 0
    %6433 = vmatprep.subr.bf16.mxu0 0
    %6434 = vmatpush2.bf16.msra.mxu0 0
    %6435 = vmatprep.mubr.bf16.mxu0 0
    %6436 = vmatmul.mubr.bf16.gmra.mxu0 %v6156
    %v6437 = vpop.f32.mrf.mxu0
    %v6438 = vadd.f32 %v6344, %v6437
    %v6439 = vpop.f32.mrf.mxu0
    %v6440 = vadd.f32 %v6348, %v6439
    %v6441 = vpop.f32.mrf.mxu0
    %v6442 = vadd.f32 %v6344, %v6441
    %v6443 = vpop.f32.mrf.mxu0
    %v6444 = vadd.f32 %v6348, %v6443
    %6445 = vdwg.mxu0
    %6446 = vmatprep.subr.bf16.mxu0 0
    %6447 = vmatpush1.bf16.msra.mxu0 0
    %6448 = vmatprep.subr.bf16.mxu0 0
    %6449 = vmatpush1.bf16.msra.mxu0 0
    %6450 = vmatprep.subr.bf16.mxu0 0
    %6451 = vmatpush1.bf16.msra.mxu0 0
    %6452 = vmatprep.subr.bf16.mxu0 0
    %6453 = vmatpush1.bf16.msra.mxu0 0
    %6454 = vmatprep.subr.bf16.mxu0 0
    %6455 = vmatpush1.bf16.msra.mxu0 0
    %6456 = vmatprep.subr.bf16.mxu0 0
    %6457 = vmatpush1.bf16.msra.mxu0 0
    %6458 = vmatprep.subr.bf16.mxu0 %v6401
    %6459 = vmatpush1.bf16.msra.mxu0 %v6398
    %6460 = vmatprep.subr.bf16.mxu0 %v6382
    %6461 = vmatpush1.bf16.msra.mxu0 %v6381
    %6462 = vmatprep.subr.bf16.mxu0 0
    %6463 = vmatpush2.bf16.msra.mxu0 0
    %6464 = vmatprep.subr.bf16.mxu0 0
    %6465 = vmatpush2.bf16.msra.mxu0 0
    %6466 = vmatprep.subr.bf16.mxu0 0
    %6467 = vmatpush2.bf16.msra.mxu0 0
    %6468 = vmatprep.subr.bf16.mxu0 0
    %6469 = vmatpush2.bf16.msra.mxu0 0
    %6470 = vmatprep.subr.bf16.mxu0 0
    %6471 = vmatpush2.bf16.msra.mxu0 0
    %6472 = vmatprep.subr.bf16.mxu0 0
    %6473 = vmatpush2.bf16.msra.mxu0 0
    %6474 = vmatprep.subr.bf16.mxu0 0
    %6475 = vmatpush2.bf16.msra.mxu0 0
    %6476 = vmatprep.subr.bf16.mxu0 0
    %6477 = vmatpush2.bf16.msra.mxu0 0
    %6478 = vmatprep.mubr.bf16.mxu0 0
    %6479 = vmatmul.mubr.bf16.gmra.mxu0 %v6156
    %v6480 = vpop.f32.mrf.mxu0
    %v6481 = vadd.f32 %v6352, %v6480
    %v6482 = vpop.f32.mrf.mxu0
    %v6483 = vadd.f32 %v6356, %v6482
    %v6484 = vpop.f32.mrf.mxu0
    %v6485 = vadd.f32 %v6352, %v6484
    %v6486 = vpop.f32.mrf.mxu0
    %v6487 = vadd.f32 %v6356, %v6486
    %6488 = vdwg.mxu0
    %v6489 = vmax.f32 %v6438, 0.0
    %v6490 = vmax.f32 %v6440, 0.0
    %v6491 = vmax.f32 %v6481, 0.0
    %v6492 = vmax.f32 %v6483, 0.0
    %v6493 = vmax.f32 %v6442, 0.0
    %v6494 = vmax.f32 %v6444, 0.0
    %v6495 = vmax.f32 %v6485, 0.0
    %v6496 = vmax.f32 %v6487, 0.0
    %v6497 = vpack.c.bf16 %v6493, %v6489
    %v6498 = vpack.c.bf16 %v6494, %v6490
    %v6499 = vpack.c.bf16 %v6495, %v6491
    %v6500 = vpack.c.bf16 %v6496, %v6492
    %v6501 = vld [vmem:[%s6268 + $0x100] sm:$0xf]
    %v6502 = vld [vmem:[%s6268 + $0x104] sm:$0xf]
    %v6503 = vld [vmem:[%s6268 + $0x108] sm:$0xf]
    %v6504 = vld [vmem:[%s6268 + $0x10c] sm:$0xf]
    %v6505 = vld [vmem:[%s6268 + $0x110] sm:$0xf]
    %v6506 = vld [vmem:[%s6268 + $0x114] sm:$0xf]
    %v6507 = vld [vmem:[%s6268 + $0x118] sm:$0xf]
    %v6508 = vld [vmem:[%s6268 + $0x11c] sm:$0xf]
    %v6509 = vld [vmem:[%s6268 + $0x120] sm:$0xf]
    %v6510 = vld [vmem:[%s6268 + $0x124] sm:$0xf]
    %v6511 = vld [vmem:[%s6268 + $0x128] sm:$0xf]
    %v6512 = vld [vmem:[%s6268 + $0x12c] sm:$0xf]
    %v6513 = vld [vmem:[%s6268 + $0x130] sm:$0xf]
    %v6514 = vld [vmem:[%s6268 + $0x134] sm:$0xf]
    %v6515 = vld [vmem:[%s6268 + $0x138] sm:$0xf]
    %v6516 = vld [vmem:[%s6268 + $0x13c] sm:$0xf]
    %v6517 = vld [vmem:[%s6268 + $0x140] sm:$0xf]
    %v6518 = vld [vmem:[%s6268 + $0x144] sm:$0xf]
    %v6519 = vld [vmem:[%s6268 + $0x148] sm:$0xf]
    %v6520 = vld [vmem:[%s6268 + $0x14c] sm:$0xf]
    %v6521 = vld [vmem:[%s6268 + $0x150] sm:$0xf]
    %v6522 = vld [vmem:[%s6268 + $0x154] sm:$0xf]
    %v6523 = vld [vmem:[%s6268 + $0x158] sm:$0xf]
    %v6524 = vld [vmem:[%s6268 + $0x15c] sm:$0xf]
    %v6525 = vld [vmem:[%s6268 + $0x160] sm:$0xf]
    %v6526 = vld [vmem:[%s6268 + $0x164] sm:$0xf]
    %v6527 = vld [vmem:[%s6268 + $0x168] sm:$0xf]
    %v6528 = vld [vmem:[%s6268 + $0x16c] sm:$0xf]
    %v6529 = vld [vmem:[%s6268 + $0x170] sm:$0xf]
    %v6530 = vld [vmem:[%s6268 + $0x174] sm:$0xf]
    %v6531 = vld [vmem:[%s6268 + $0x178] sm:$0xf]
    %v6532 = vld [vmem:[%s6268 + $0x17c] sm:$0xf]
    %v6533 = vld [vmem:[%s6268 + $0x180] sm:$0xf]
    %v6534 = vld [vmem:[%s6268 + $0x184] sm:$0xf]
    %v6535 = vld [vmem:[%s6268 + $0x188] sm:$0xf]
    %v6536 = vld [vmem:[%s6268 + $0x18c] sm:$0xf]
    %v6537 = vld [vmem:[%s6268 + $0x190] sm:$0xf]
    %v6538 = vld [vmem:[%s6268 + $0x194] sm:$0xf]
    %v6539 = vld [vmem:[%s6268 + $0x198] sm:$0xf]
    %v6540 = vld [vmem:[%s6268 + $0x19c] sm:$0xf]
    %v6541 = vld [vmem:[%s6268 + $0x1a0] sm:$0xf]
    %v6542 = vld [vmem:[%s6268 + $0x1a4] sm:$0xf]
    %v6543 = vld [vmem:[%s6268 + $0x1a8] sm:$0xf]
    %v6544 = vld [vmem:[%s6268 + $0x1ac] sm:$0xf]
    %v6545 = vld [vmem:[%s6268 + $0x1b0] sm:$0xf]
    %v6546 = vld [vmem:[%s6268 + $0x1b4] sm:$0xf]
    %v6547 = vld [vmem:[%s6268 + $0x1b8] sm:$0xf]
    %v6548 = vld [vmem:[%s6268 + $0x1bc] sm:$0xf]
    %v6549 = vld [vmem:[%s6268 + $0x1c0] sm:$0xf]
    %v6550 = vld [vmem:[%s6268 + $0x1c4] sm:$0xf]
    %v6551 = vld [vmem:[%s6268 + $0x1c8] sm:$0xf]
    %v6552 = vld [vmem:[%s6268 + $0x1cc] sm:$0xf]
    %v6553 = vld [vmem:[%s6268 + $0x1d0] sm:$0xf]
    %v6554 = vld [vmem:[%s6268 + $0x1d4] sm:$0xf]
    %v6555 = vld [vmem:[%s6268 + $0x1d8] sm:$0xf]
    %v6556 = vld [vmem:[%s6268 + $0x1dc] sm:$0xf]
    %v6557 = vld [vmem:[%s6268 + $0x1e0] sm:$0xf]
    %v6558 = vld [vmem:[%s6268 + $0x1e4] sm:$0xf]
    %v6559 = vld [vmem:[%s6268 + $0x1e8] sm:$0xf]
    %v6560 = vld [vmem:[%s6268 + $0x1ec] sm:$0xf]
    %v6561 = vld [vmem:[%s6268 + $0x1f0] sm:$0xf]
    %v6562 = vld [vmem:[%s6268 + $0x1f4] sm:$0xf]
    %v6563 = vld [vmem:[%s6268 + $0x1f8] sm:$0xf]
    %v6564 = vld [vmem:[%s6268 + $0x1fc] sm:$0xf]
    %v6629 = vunpack.c.l.b16 %v6501
    %v6630 = vunpack.c.l.b16 %v6502
    %v6631 = vunpack.c.l.b16 %v6503
    %v6632 = vunpack.c.l.b16 %v6504
    %v6633 = vunpack.c.l.b16 %v6505
    %v6634 = vunpack.c.l.b16 %v6506
    %v6635 = vunpack.c.l.b16 %v6507
    %v6636 = vunpack.c.l.b16 %v6508
    %v6637 = vunpack.c.l.b16 %v6509
    %v6638 = vunpack.c.l.b16 %v6510
    %v6639 = vunpack.c.l.b16 %v6511
    %v6640 = vunpack.c.l.b16 %v6512
    %v6641 = vunpack.c.l.b16 %v6513
    %v6642 = vunpack.c.l.b16 %v6514
    %v6643 = vunpack.c.l.b16 %v6515
    %v6644 = vunpack.c.l.b16 %v6516
    %v6645 = vunpack.c.l.b16 %v6517
    %v6646 = vunpack.c.l.b16 %v6518
    %v6647 = vunpack.c.l.b16 %v6519
    %v6648 = vunpack.c.l.b16 %v6520
    %v6649 = vunpack.c.l.b16 %v6521
    %v6650 = vunpack.c.l.b16 %v6522
    %v6651 = vunpack.c.l.b16 %v6523
    %v6652 = vunpack.c.l.b16 %v6524
    %v6653 = vunpack.c.l.b16 %v6525
    %v6654 = vunpack.c.l.b16 %v6526
    %v6655 = vunpack.c.l.b16 %v6527
    %v6656 = vunpack.c.l.b16 %v6528
    %v6657 = vunpack.c.l.b16 %v6529
    %v6658 = vunpack.c.l.b16 %v6530
    %v6659 = vunpack.c.l.b16 %v6531
    %v6660 = vunpack.c.l.b16 %v6532
    %v6661 = vunpack.c.l.b16 %v6533
    %v6662 = vunpack.c.l.b16 %v6534
    %v6663 = vunpack.c.l.b16 %v6535
    %v6664 = vunpack.c.l.b16 %v6536
    %v6665 = vunpack.c.l.b16 %v6537
    %v6666 = vunpack.c.l.b16 %v6538
    %v6667 = vunpack.c.l.b16 %v6539
    %v6668 = vunpack.c.l.b16 %v6540
    %v6669 = vunpack.c.l.b16 %v6541
    %v6670 = vunpack.c.l.b16 %v6542
    %v6671 = vunpack.c.l.b16 %v6543
    %v6672 = vunpack.c.l.b16 %v6544
    %v6673 = vunpack.c.l.b16 %v6545
    %v6674 = vunpack.c.l.b16 %v6546
    %v6675 = vunpack.c.l.b16 %v6547
    %v6676 = vunpack.c.l.b16 %v6548
    %v6677 = vunpack.c.l.b16 %v6549
    %v6678 = vunpack.c.l.b16 %v6550
    %v6679 = vunpack.c.l.b16 %v6551
    %v6680 = vunpack.c.l.b16 %v6552
    %v6681 = vunpack.c.l.b16 %v6553
    %v6682 = vunpack.c.l.b16 %v6554
    %v6683 = vunpack.c.l.b16 %v6555
    %v6684 = vunpack.c.l.b16 %v6556
    %v6685 = vunpack.c.l.b16 %v6557
    %v6686 = vunpack.c.l.b16 %v6558
    %v6687 = vunpack.c.l.b16 %v6559
    %v6688 = vunpack.c.l.b16 %v6560
    %v6689 = vunpack.c.l.b16 %v6561
    %v6690 = vunpack.c.l.b16 %v6562
    %v6691 = vunpack.c.l.b16 %v6563
    %v6692 = vunpack.c.l.b16 %v6564
    %v6693 = vpack.c.b16 %v6630, %v6629
    %v6694 = vpack.c.b16 %v6632, %v6631
    %v6695 = vpack.c.b16 %v6634, %v6633
    %v6696 = vpack.c.b16 %v6636, %v6635
    %v6697 = vpack.c.b16 %v6638, %v6637
    %v6698 = vpack.c.b16 %v6640, %v6639
    %v6699 = vpack.c.b16 %v6642, %v6641
    %v6700 = vpack.c.b16 %v6644, %v6643
    %v6701 = vpack.c.b16 %v6646, %v6645
    %v6702 = vpack.c.b16 %v6648, %v6647
    %v6703 = vpack.c.b16 %v6650, %v6649
    %v6704 = vpack.c.b16 %v6652, %v6651
    %v6705 = vpack.c.b16 %v6654, %v6653
    %v6706 = vpack.c.b16 %v6656, %v6655
    %v6707 = vpack.c.b16 %v6658, %v6657
    %v6708 = vpack.c.b16 %v6660, %v6659
    %v6709 = vpack.c.b16 %v6662, %v6661
    %v6710 = vpack.c.b16 %v6664, %v6663
    %v6711 = vpack.c.b16 %v6666, %v6665
    %v6712 = vpack.c.b16 %v6668, %v6667
    %v6713 = vpack.c.b16 %v6670, %v6669
    %v6714 = vpack.c.b16 %v6672, %v6671
    %v6715 = vpack.c.b16 %v6674, %v6673
    %v6716 = vpack.c.b16 %v6676, %v6675
    %v6717 = vpack.c.b16 %v6678, %v6677
    %v6718 = vpack.c.b16 %v6680, %v6679
    %v6719 = vpack.c.b16 %v6682, %v6681
    %v6720 = vpack.c.b16 %v6684, %v6683
    %v6721 = vpack.c.b16 %v6686, %v6685
    %v6722 = vpack.c.b16 %v6688, %v6687
    %v6723 = vpack.c.b16 %v6690, %v6689
    %v6724 = vpack.c.b16 %v6692, %v6691
    %6757 = vmatprep.subr.bf16.mxu0 0
    %6758 = vmatpush1.bf16.msra.mxu0 %v6700
    %6759 = vmatprep.subr.bf16.mxu0 0
    %6760 = vmatpush1.bf16.msra.mxu0 %v6699
    %6761 = vmatprep.subr.bf16.mxu0 0
    %6762 = vmatpush1.bf16.msra.mxu0 %v6698
    %6763 = vmatprep.subr.bf16.mxu0 0
    %6764 = vmatpush1.bf16.msra.mxu0 %v6697
    %6765 = vmatprep.subr.bf16.mxu0 0
    %6766 = vmatpush1.bf16.msra.mxu0 %v6696
    %6767 = vmatprep.subr.bf16.mxu0 0
    %6768 = vmatpush1.bf16.msra.mxu0 %v6695
    %6769 = vmatprep.subr.bf16.mxu0 0
    %6770 = vmatpush1.bf16.msra.mxu0 %v6694
    %6771 = vmatprep.subr.bf16.mxu0 0
    %6772 = vmatpush1.bf16.msra.mxu0 %v6693
    %6773 = vmatprep.subr.bf16.mxu0 0
    %6774 = vmatpush2.bf16.msra.mxu0 %v6708
    %6775 = vmatprep.subr.bf16.mxu0 0
    %6776 = vmatpush2.bf16.msra.mxu0 %v6707
    %6777 = vmatprep.subr.bf16.mxu0 0
    %6778 = vmatpush2.bf16.msra.mxu0 %v6706
    %6779 = vmatprep.subr.bf16.mxu0 0
    %6780 = vmatpush2.bf16.msra.mxu0 %v6705
    %6781 = vmatprep.subr.bf16.mxu0 0
    %6782 = vmatpush2.bf16.msra.mxu0 %v6704
    %6783 = vmatprep.subr.bf16.mxu0 0
    %6784 = vmatpush2.bf16.msra.mxu0 %v6703
    %6785 = vmatprep.subr.bf16.mxu0 0
    %6786 = vmatpush2.bf16.msra.mxu0 %v6702
    %6787 = vmatprep.subr.bf16.mxu0 0
    %6788 = vmatpush2.bf16.msra.mxu0 %v6701
    %6789 = vmatprep.mubr.bf16.mxu0 %v6498
    %6790 = vmatmul.mubr.bf16.gmra.mxu0 %v6497
    %v6791 = vpop.f32.mrf.mxu0
    %v6792 = vadd.f32 0.0, %v6791
    %v6793 = vpop.f32.mrf.mxu0
    %v6794 = vpop.f32.mrf.mxu0
    %v6795 = vadd.f32 0.0, %v6794
    %v6796 = vpop.f32.mrf.mxu0
    %6797 = vdwg.mxu0
    %6798 = vmatprep.subr.bf16.mxu0 0
    %6799 = vmatpush1.bf16.msra.mxu0 %v6716
    %6800 = vmatprep.subr.bf16.mxu0 0
    %6801 = vmatpush1.bf16.msra.mxu0 %v6715
    %6802 = vmatprep.subr.bf16.mxu0 0
    %6803 = vmatpush1.bf16.msra.mxu0 %v6714
    %6804 = vmatprep.subr.bf16.mxu0 0
    %6805 = vmatpush1.bf16.msra.mxu0 %v6713
    %6806 = vmatprep.subr.bf16.mxu0 0
    %6807 = vmatpush1.bf16.msra.mxu0 %v6712
    %6808 = vmatprep.subr.bf16.mxu0 0
    %6809 = vmatpush1.bf16.msra.mxu0 %v6711
    %6810 = vmatprep.subr.bf16.mxu0 0
    %6811 = vmatpush1.bf16.msra.mxu0 %v6710
    %6812 = vmatprep.subr.bf16.mxu0 0
    %6813 = vmatpush1.bf16.msra.mxu0 %v6709
    %6814 = vmatprep.subr.bf16.mxu0 0
    %6815 = vmatpush2.bf16.msra.mxu0 %v6724
    %6816 = vmatprep.subr.bf16.mxu0 0
    %6817 = vmatpush2.bf16.msra.mxu0 %v6723
    %6818 = vmatprep.subr.bf16.mxu0 0
    %6819 = vmatpush2.bf16.msra.mxu0 %v6722
    %6820 = vmatprep.subr.bf16.mxu0 0
    %6821 = vmatpush2.bf16.msra.mxu0 %v6721
    %6822 = vmatprep.subr.bf16.mxu0 0
    %6823 = vmatpush2.bf16.msra.mxu0 %v6720
    %6824 = vmatprep.subr.bf16.mxu0 0
    %6825 = vmatpush2.bf16.msra.mxu0 %v6719
    %6826 = vmatprep.subr.bf16.mxu0 0
    %6827 = vmatpush2.bf16.msra.mxu0 %v6718
    %6828 = vmatprep.subr.bf16.mxu0 0
    %6829 = vmatpush2.bf16.msra.mxu0 %v6717
    %6830 = vmatprep.mubr.bf16.mxu0 %v6500
    %6831 = vmatmul.mubr.bf16.gmra.mxu0 %v6499
    %v6832 = vpop.f32.mrf.mxu0
    %v6833 = vadd.f32 %v6792, %v6832
    %v6834 = vpop.f32.mrf.mxu0
    %v6835 = vpop.f32.mrf.mxu0
    %v6836 = vadd.f32 %v6795, %v6835
    %v6837 = vpop.f32.mrf.mxu0
    %6838 = vdwg.mxu0
    %v6903 = vunpack.c.l.b16 %v6269
    %v6904 = vunpack.c.l.b16 %v6270
    %v6905 = vunpack.c.l.b16 %v6271
    %v6906 = vunpack.c.l.b16 %v6272
    %v6907 = vunpack.c.l.b16 %v6273
    %v6908 = vunpack.c.l.b16 %v6274
    %v6909 = vunpack.c.l.b16 %v6275
    %v6910 = vunpack.c.l.b16 %v6276
    %v6911 = vunpack.c.l.b16 %v6277
    %v6912 = vunpack.c.l.b16 %v6278
    %v6913 = vunpack.c.l.b16 %v6279
    %v6914 = vunpack.c.l.b16 %v6280
    %v6915 = vunpack.c.l.b16 %v6281
    %v6916 = vunpack.c.l.b16 %v6282
    %v6917 = vunpack.c.l.b16 %v6283
    %v6918 = vunpack.c.l.b16 %v6284
    %v6919 = vunpack.c.l.b16 %v6285
    %v6920 = vunpack.c.l.b16 %v6286
    %v6921 = vunpack.c.l.b16 %v6287
    %v6922 = vunpack.c.l.b16 %v6288
    %v6923 = vunpack.c.l.b16 %v6289
    %v6924 = vunpack.c.l.b16 %v6290
    %v6925 = vunpack.c.l.b16 %v6291
    %v6926 = vunpack.c.l.b16 %v6292
    %v6927 = vunpack.c.l.b16 %v6293
    %v6928 = vunpack.c.l.b16 %v6294
    %v6929 = vunpack.c.l.b16 %v6295
    %v6930 = vunpack.c.l.b16 %v6296
    %v6931 = vunpack.c.l.b16 %v6297
    %v6932 = vunpack.c.l.b16 %v6298
    %v6933 = vunpack.c.l.b16 %v6299
    %v6934 = vunpack.c.l.b16 %v6300
    %v6935 = vunpack.c.l.b16 %v6301
    %v6936 = vunpack.c.l.b16 %v6302
    %v6937 = vunpack.c.l.b16 %v6303
    %v6938 = vunpack.c.l.b16 %v6304
    %v6939 = vunpack.c.l.b16 %v6305
    %v6940 = vunpack.c.l.b16 %v6306
    %v6941 = vunpack.c.l.b16 %v6307
    %v6942 = vunpack.c.l.b16 %v6308
    %v6943 = vunpack.c.l.b16 %v6309
    %v6944 = vunpack.c.l.b16 %v6310
    %v6945 = vunpack.c.l.b16 %v6311
    %v6946 = vunpack.c.l.b16 %v6312
    %v6947 = vunpack.c.l.b16 %v6313
    %v6948 = vunpack.c.l.b16 %v6314
    %v6949 = vunpack.c.l.b16 %v6315
    %v6950 = vunpack.c.l.b16 %v6316
    %v6951 = vunpack.c.l.b16 %v6317
    %v6952 = vunpack.c.l.b16 %v6318
    %v6953 = vunpack.c.l.b16 %v6319
    %v6954 = vunpack.c.l.b16 %v6320
    %v6955 = vunpack.c.l.b16 %v6321
    %v6956 = vunpack.c.l.b16 %v6322
    %v6957 = vunpack.c.l.b16 %v6323
    %v6958 = vunpack.c.l.b16 %v6324
    %v6959 = vunpack.c.l.b16 %v6325
    %v6960 = vunpack.c.l.b16 %v6326
    %v6961 = vunpack.c.l.b16 %v6327
    %v6962 = vunpack.c.l.b16 %v6328
    %v6963 = vunpack.c.l.b16 %v6329
    %v6964 = vunpack.c.l.b16 %v6330
    %v6965 = vunpack.c.l.b16 %v6331
    %v6966 = vunpack.c.l.b16 %v6332
    %v6967 = vpack.c.b16 %v6904, %v6903
    %v6968 = vpack.c.b16 %v6906, %v6905
    %v6969 = vpack.c.b16 %v6908, %v6907
    %v6970 = vpack.c.b16 %v6910, %v6909
    %v6971 = vpack.c.b16 %v6912, %v6911
    %v6972 = vpack.c.b16 %v6914, %v6913
    %v6973 = vpack.c.b16 %v6916, %v6915
    %v6974 = vpack.c.b16 %v6918, %v6917
    %v6975 = vpack.c.b16 %v6920, %v6919
    %v6976 = vpack.c.b16 %v6922, %v6921
    %v6977 = vpack.c.b16 %v6924, %v6923
    %v6978 = vpack.c.b16 %v6926, %v6925
    %v6979 = vpack.c.b16 %v6928, %v6927
    %v6980 = vpack.c.b16 %v6930, %v6929
    %v6981 = vpack.c.b16 %v6932, %v6931
    %v6982 = vpack.c.b16 %v6934, %v6933
    %v6983 = vpack.c.b16 %v6936, %v6935
    %v6984 = vpack.c.b16 %v6938, %v6937
    %v6985 = vpack.c.b16 %v6940, %v6939
    %v6986 = vpack.c.b16 %v6942, %v6941
    %v6987 = vpack.c.b16 %v6944, %v6943
    %v6988 = vpack.c.b16 %v6946, %v6945
    %v6989 = vpack.c.b16 %v6948, %v6947
    %v6990 = vpack.c.b16 %v6950, %v6949
    %v6991 = vpack.c.b16 %v6952, %v6951
    %v6992 = vpack.c.b16 %v6954, %v6953
    %v6993 = vpack.c.b16 %v6956, %v6955
    %v6994 = vpack.c.b16 %v6958, %v6957
    %v6995 = vpack.c.b16 %v6960, %v6959
    %v6996 = vpack.c.b16 %v6962, %v6961
    %v6997 = vpack.c.b16 %v6964, %v6963
    %v6998 = vpack.c.b16 %v6966, %v6965
    %7031 = vmatprep.subr.bf16.mxu0 0
    %7032 = vmatpush1.bf16.msra.mxu0 %v6974
    %7033 = vmatprep.subr.bf16.mxu0 0
    %7034 = vmatpush1.bf16.msra.mxu0 %v6973
    %7035 = vmatprep.subr.bf16.mxu0 0
    %7036 = vmatpush1.bf16.msra.mxu0 %v6972
    %7037 = vmatprep.subr.bf16.mxu0 0
    %7038 = vmatpush1.bf16.msra.mxu0 %v6971
    %7039 = vmatprep.subr.bf16.mxu0 0
    %7040 = vmatpush1.bf16.msra.mxu0 %v6970
    %7041 = vmatprep.subr.bf16.mxu0 0
    %7042 = vmatpush1.bf16.msra.mxu0 %v6969
    %7043 = vmatprep.subr.bf16.mxu0 0
    %7044 = vmatpush1.bf16.msra.mxu0 %v6968
    %7045 = vmatprep.subr.bf16.mxu0 0
    %7046 = vmatpush1.bf16.msra.mxu0 %v6967
    %7047 = vmatprep.subr.bf16.mxu0 0
    %7048 = vmatpush2.bf16.msra.mxu0 %v6982
    %7049 = vmatprep.subr.bf16.mxu0 0
    %7050 = vmatpush2.bf16.msra.mxu0 %v6981
    %7051 = vmatprep.subr.bf16.mxu0 0
    %7052 = vmatpush2.bf16.msra.mxu0 %v6980
    %7053 = vmatprep.subr.bf16.mxu0 0
    %7054 = vmatpush2.bf16.msra.mxu0 %v6979
    %7055 = vmatprep.subr.bf16.mxu0 0
    %7056 = vmatpush2.bf16.msra.mxu0 %v6978
    %7057 = vmatprep.subr.bf16.mxu0 0
    %7058 = vmatpush2.bf16.msra.mxu0 %v6977
    %7059 = vmatprep.subr.bf16.mxu0 0
    %7060 = vmatpush2.bf16.msra.mxu0 %v6976
    %7061 = vmatprep.subr.bf16.mxu0 0
    %7062 = vmatpush2.bf16.msra.mxu0 %v6975
    %7063 = vmatprep.mubr.bf16.mxu0 %v6265
    %7064 = vmatmul.mubr.bf16.gmra.mxu0 %v6264
    %v7065 = vpop.f32.mrf.mxu0
    %v7066 = vadd.f32 %v6833, %v7065
    %v7067 = vpop.f32.mrf.mxu0
    %v7068 = vpop.f32.mrf.mxu0
    %v7069 = vadd.f32 %v6836, %v7068
    %v7070 = vpop.f32.mrf.mxu0
    %7071 = vdwg.mxu0
    %7072 = vmatprep.subr.bf16.mxu0 0
    %7073 = vmatpush1.bf16.msra.mxu0 %v6990
    %7074 = vmatprep.subr.bf16.mxu0 0
    %7075 = vmatpush1.bf16.msra.mxu0 %v6989
    %7076 = vmatprep.subr.bf16.mxu0 0
    %7077 = vmatpush1.bf16.msra.mxu0 %v6988
    %7078 = vmatprep.subr.bf16.mxu0 0
    %7079 = vmatpush1.bf16.msra.mxu0 %v6987
    %7080 = vmatprep.subr.bf16.mxu0 0
    %7081 = vmatpush1.bf16.msra.mxu0 %v6986
    %7082 = vmatprep.subr.bf16.mxu0 0
    %7083 = vmatpush1.bf16.msra.mxu0 %v6985
    %7084 = vmatprep.subr.bf16.mxu0 0
    %7085 = vmatpush1.bf16.msra.mxu0 %v6984
    %7086 = vmatprep.subr.bf16.mxu0 0
    %7087 = vmatpush1.bf16.msra.mxu0 %v6983
    %7088 = vmatprep.subr.bf16.mxu0 0
    %7089 = vmatpush2.bf16.msra.mxu0 %v6998
    %7090 = vmatprep.subr.bf16.mxu0 0
    %7091 = vmatpush2.bf16.msra.mxu0 %v6997
    %7092 = vmatprep.subr.bf16.mxu0 0
    %7093 = vmatpush2.bf16.msra.mxu0 %v6996
    %7094 = vmatprep.subr.bf16.mxu0 0
    %7095 = vmatpush2.bf16.msra.mxu0 %v6995
    %7096 = vmatprep.subr.bf16.mxu0 0
    %7097 = vmatpush2.bf16.msra.mxu0 %v6994
    %7098 = vmatprep.subr.bf16.mxu0 0
    %7099 = vmatpush2.bf16.msra.mxu0 %v6993
    %7100 = vmatprep.subr.bf16.mxu0 0
    %7101 = vmatpush2.bf16.msra.mxu0 %v6992
    %7102 = vmatprep.subr.bf16.mxu0 0
    %7103 = vmatpush2.bf16.msra.mxu0 %v6991
    %7104 = vmatprep.mubr.bf16.mxu0 %v6267
    %7105 = vmatmul.mubr.bf16.gmra.mxu0 %v6266
    %v7106 = vpop.f32.mrf.mxu0
    %v7107 = vadd.f32 %v7066, %v7106
    %v7108 = vpop.f32.mrf.mxu0
    %v7109 = vpop.f32.mrf.mxu0
    %v7110 = vadd.f32 %v7069, %v7109
    %v7111 = vpop.f32.mrf.mxu0
    %7112 = vdwg.mxu0
    %v7113 = vld [vmem:[%s6095 + $0x20] sm:$0xff]
    %v7114 = vld [vmem:[%s6095 + $0x28] sm:$0xff]
    %v7115 = vld [vmem:[%s6095 + $0x60] sm:$0xff]
    %v7116 = vld [vmem:[%s6095 + $0x68] sm:$0xff]
    %v7117 = vld [vmem:[%s6095 + $0xa0] sm:$0xff]
    %v7118 = vld [vmem:[%s6095 + $0xa8] sm:$0xff]
    %v7119 = vld [vmem:[%s6102 + $0x8] sm:$0xf]
    %v7121 = vlaneseq
    %v7122 = vshrl.u32 %v7121, 7
    %v7123 = vsub.s32 0, %v7122
    %v7124 = vrot.slane %v7119, %v7123
    %v7125 = vlaneseq
    %v7126 = vshrl.u32 %v7125, 7
    %v7127 = vsub.s32 1, %v7126
    %v7128 = vrot.slane %v7119, %v7127
    %v7129 = vlaneseq
    %v7130 = vshrl.u32 %v7129, 7
    %v7131 = vsub.s32 2, %v7130
    %v7132 = vrot.slane %v7119, %v7131
    %v7133 = vlaneseq
    %v7134 = vshrl.u32 %v7133, 7
    %v7135 = vsub.s32 3, %v7134
    %v7136 = vrot.slane %v7119, %v7135
    %v7147 = vunpack.c.l.b16 %v7113
    %v7148 = vunpack.c.h.b16 %v7113
    %v7149 = vunpack.c.l.b16 %v7114
    %v7150 = vunpack.c.h.b16 %v7114
    %v7151 = vunpack.c.l.b16 %v7115
    %v7152 = vunpack.c.h.b16 %v7115
    %v7153 = vunpack.c.l.b16 %v7116
    %v7154 = vunpack.c.h.b16 %v7116
    %v7155 = vunpack.c.l.b16 %v7117
    %v7156 = vunpack.c.h.b16 %v7117
    %v7157 = vunpack.c.l.b16 %v7118
    %v7158 = vunpack.c.h.b16 %v7118
    %v7159 = vpack.c.b16 %v7151, %v7147
    %v7160 = vpack.c.b16 %v7152, %v7148
    %v7161 = vpack.c.b16 %v7153, %v7149
    %v7162 = vpack.c.b16 %v7154, %v7150
    %v7163 = vpack.c.b16 %v7155, %v7155
    %v7164 = vpack.c.b16 %v7156, %v7156
    %v7165 = vpack.c.b16 %v7157, %v7157
    %v7166 = vpack.c.b16 %v7158, %v7158
    %v7172 = vsel %vm66, %v7163, 0
    %v7175 = vsel %vm66, %v7164, 0
    %v7178 = vsel %vm66, %v7165, 0
    %v7181 = vsel %vm66, %v7166, 0
    %7183 = vmatprep.subr.bf16.mxu0 0
    %7184 = vmatpush1.bf16.msra.mxu0 0
    %7185 = vmatprep.subr.bf16.mxu0 0
    %7186 = vmatpush1.bf16.msra.mxu0 0
    %7187 = vmatprep.subr.bf16.mxu0 0
    %7188 = vmatpush1.bf16.msra.mxu0 0
    %7189 = vmatprep.subr.bf16.mxu0 0
    %7190 = vmatpush1.bf16.msra.mxu0 0
    %7191 = vmatprep.subr.bf16.mxu0 0
    %7192 = vmatpush1.bf16.msra.mxu0 0
    %7193 = vmatprep.subr.bf16.mxu0 0
    %7194 = vmatpush1.bf16.msra.mxu0 0
    %7195 = vmatprep.subr.bf16.mxu0 %v7175
    %7196 = vmatpush1.bf16.msra.mxu0 %v7172
    %7197 = vmatprep.subr.bf16.mxu0 %v7160
    %7198 = vmatpush1.bf16.msra.mxu0 %v7159
    %7199 = vmatprep.subr.bf16.mxu0 0
    %7200 = vmatpush2.bf16.msra.mxu0 0
    %7201 = vmatprep.subr.bf16.mxu0 0
    %7202 = vmatpush2.bf16.msra.mxu0 0
    %7203 = vmatprep.subr.bf16.mxu0 0
    %7204 = vmatpush2.bf16.msra.mxu0 0
    %7205 = vmatprep.subr.bf16.mxu0 0
    %7206 = vmatpush2.bf16.msra.mxu0 0
    %7207 = vmatprep.subr.bf16.mxu0 0
    %7208 = vmatpush2.bf16.msra.mxu0 0
    %7209 = vmatprep.subr.bf16.mxu0 0
    %7210 = vmatpush2.bf16.msra.mxu0 0
    %7211 = vmatprep.subr.bf16.mxu0 0
    %7212 = vmatpush2.bf16.msra.mxu0 0
    %7213 = vmatprep.subr.bf16.mxu0 0
    %7214 = vmatpush2.bf16.msra.mxu0 0
    %7215 = vmatprep.mubr.bf16.mxu0 0
    %7216 = vmatmul.mubr.bf16.gmra.mxu0 %v6156
    %v7217 = vpop.f32.mrf.mxu0
    %v7218 = vadd.f32 %v7124, %v7217
    %v7219 = vpop.f32.mrf.mxu0
    %v7220 = vadd.f32 %v7128, %v7219
    %v7221 = vpop.f32.mrf.mxu0
    %v7222 = vadd.f32 %v7124, %v7221
    %v7223 = vpop.f32.mrf.mxu0
    %v7224 = vadd.f32 %v7128, %v7223
    %7225 = vdwg.mxu0
    %7226 = vmatprep.subr.bf16.mxu0 0
    %7227 = vmatpush1.bf16.msra.mxu0 0
    %7228 = vmatprep.subr.bf16.mxu0 0
    %7229 = vmatpush1.bf16.msra.mxu0 0
    %7230 = vmatprep.subr.bf16.mxu0 0
    %7231 = vmatpush1.bf16.msra.mxu0 0
    %7232 = vmatprep.subr.bf16.mxu0 0
    %7233 = vmatpush1.bf16.msra.mxu0 0
    %7234 = vmatprep.subr.bf16.mxu0 0
    %7235 = vmatpush1.bf16.msra.mxu0 0
    %7236 = vmatprep.subr.bf16.mxu0 0
    %7237 = vmatpush1.bf16.msra.mxu0 0
    %7238 = vmatprep.subr.bf16.mxu0 %v7181
    %7239 = vmatpush1.bf16.msra.mxu0 %v7178
    %7240 = vmatprep.subr.bf16.mxu0 %v7162
    %7241 = vmatpush1.bf16.msra.mxu0 %v7161
    %7242 = vmatprep.subr.bf16.mxu0 0
    %7243 = vmatpush2.bf16.msra.mxu0 0
    %7244 = vmatprep.subr.bf16.mxu0 0
    %7245 = vmatpush2.bf16.msra.mxu0 0
    %7246 = vmatprep.subr.bf16.mxu0 0
    %7247 = vmatpush2.bf16.msra.mxu0 0
    %7248 = vmatprep.subr.bf16.mxu0 0
    %7249 = vmatpush2.bf16.msra.mxu0 0
    %7250 = vmatprep.subr.bf16.mxu0 0
    %7251 = vmatpush2.bf16.msra.mxu0 0
    %7252 = vmatprep.subr.bf16.mxu0 0
    %7253 = vmatpush2.bf16.msra.mxu0 0
    %7254 = vmatprep.subr.bf16.mxu0 0
    %7255 = vmatpush2.bf16.msra.mxu0 0
    %7256 = vmatprep.subr.bf16.mxu0 0
    %7257 = vmatpush2.bf16.msra.mxu0 0
    %7258 = vmatprep.mubr.bf16.mxu0 0
    %7259 = vmatmul.mubr.bf16.gmra.mxu0 %v6156
    %v7260 = vpop.f32.mrf.mxu0
    %v7261 = vadd.f32 %v7132, %v7260
    %v7262 = vpop.f32.mrf.mxu0
    %v7263 = vadd.f32 %v7136, %v7262
    %v7264 = vpop.f32.mrf.mxu0
    %v7265 = vadd.f32 %v7132, %v7264
    %v7266 = vpop.f32.mrf.mxu0
    %v7267 = vadd.f32 %v7136, %v7266
    %7268 = vdwg.mxu0
    %v7269 = vmax.f32 %v7218, 0.0
    %v7270 = vmax.f32 %v7220, 0.0
    %v7271 = vmax.f32 %v7261, 0.0
    %v7272 = vmax.f32 %v7263, 0.0
    %v7273 = vmax.f32 %v7222, 0.0
    %v7274 = vmax.f32 %v7224, 0.0
    %v7275 = vmax.f32 %v7265, 0.0
    %v7276 = vmax.f32 %v7267, 0.0
    %v7277 = vpack.c.bf16 %v7273, %v7269
    %v7278 = vpack.c.bf16 %v7274, %v7270
    %v7279 = vpack.c.bf16 %v7275, %v7271
    %v7280 = vpack.c.bf16 %v7276, %v7272
    %v7281 = vld [vmem:[%s6268 + $0x200] sm:$0xf]
    %v7282 = vld [vmem:[%s6268 + $0x204] sm:$0xf]
    %v7283 = vld [vmem:[%s6268 + $0x208] sm:$0xf]
    %v7284 = vld [vmem:[%s6268 + $0x20c] sm:$0xf]
    %v7285 = vld [vmem:[%s6268 + $0x210] sm:$0xf]
    %v7286 = vld [vmem:[%s6268 + $0x214] sm:$0xf]
    %v7287 = vld [vmem:[%s6268 + $0x218] sm:$0xf]
    %v7288 = vld [vmem:[%s6268 + $0x21c] sm:$0xf]
    %v7289 = vld [vmem:[%s6268 + $0x220] sm:$0xf]
    %v7290 = vld [vmem:[%s6268 + $0x224] sm:$0xf]
    %v7291 = vld [vmem:[%s6268 + $0x228] sm:$0xf]
    %v7292 = vld [vmem:[%s6268 + $0x22c] sm:$0xf]
    %v7293 = vld [vmem:[%s6268 + $0x230] sm:$0xf]
    %v7294 = vld [vmem:[%s6268 + $0x234] sm:$0xf]
    %v7295 = vld [vmem:[%s6268 + $0x238] sm:$0xf]
    %v7296 = vld [vmem:[%s6268 + $0x23c] sm:$0xf]
    %v7297 = vld [vmem:[%s6268 + $0x240] sm:$0xf]
    %v7298 = vld [vmem:[%s6268 + $0x244] sm:$0xf]
    %v7299 = vld [vmem:[%s6268 + $0x248] sm:$0xf]
    %v7300 = vld [vmem:[%s6268 + $0x24c] sm:$0xf]
    %v7301 = vld [vmem:[%s6268 + $0x250] sm:$0xf]
    %v7302 = vld [vmem:[%s6268 + $0x254] sm:$0xf]
    %v7303 = vld [vmem:[%s6268 + $0x258] sm:$0xf]
    %v7304 = vld [vmem:[%s6268 + $0x25c] sm:$0xf]
    %v7305 = vld [vmem:[%s6268 + $0x260] sm:$0xf]
    %v7306 = vld [vmem:[%s6268 + $0x264] sm:$0xf]
    %v7307 = vld [vmem:[%s6268 + $0x268] sm:$0xf]
    %v7308 = vld [vmem:[%s6268 + $0x26c] sm:$0xf]
    %v7309 = vld [vmem:[%s6268 + $0x270] sm:$0xf]
    %v7310 = vld [vmem:[%s6268 + $0x274] sm:$0xf]
    %v7311 = vld [vmem:[%s6268 + $0x278] sm:$0xf]
    %v7312 = vld [vmem:[%s6268 + $0x27c] sm:$0xf]
    %v7313 = vld [vmem:[%s6268 + $0x280] sm:$0xf]
    %v7314 = vld [vmem:[%s6268 + $0x284] sm:$0xf]
    %v7315 = vld [vmem:[%s6268 + $0x288] sm:$0xf]
    %v7316 = vld [vmem:[%s6268 + $0x28c] sm:$0xf]
    %v7317 = vld [vmem:[%s6268 + $0x290] sm:$0xf]
    %v7318 = vld [vmem:[%s6268 + $0x294] sm:$0xf]
    %v7319 = vld [vmem:[%s6268 + $0x298] sm:$0xf]
    %v7320 = vld [vmem:[%s6268 + $0x29c] sm:$0xf]
    %v7321 = vld [vmem:[%s6268 + $0x2a0] sm:$0xf]
    %v7322 = vld [vmem:[%s6268 + $0x2a4] sm:$0xf]
    %v7323 = vld [vmem:[%s6268 + $0x2a8] sm:$0xf]
    %v7324 = vld [vmem:[%s6268 + $0x2ac] sm:$0xf]
    %v7325 = vld [vmem:[%s6268 + $0x2b0] sm:$0xf]
    %v7326 = vld [vmem:[%s6268 + $0x2b4] sm:$0xf]
    %v7327 = vld [vmem:[%s6268 + $0x2b8] sm:$0xf]
    %v7328 = vld [vmem:[%s6268 + $0x2bc] sm:$0xf]
    %v7329 = vld [vmem:[%s6268 + $0x2c0] sm:$0xf]
    %v7330 = vld [vmem:[%s6268 + $0x2c4] sm:$0xf]
    %v7331 = vld [vmem:[%s6268 + $0x2c8] sm:$0xf]
    %v7332 = vld [vmem:[%s6268 + $0x2cc] sm:$0xf]
    %v7333 = vld [vmem:[%s6268 + $0x2d0] sm:$0xf]
    %v7334 = vld [vmem:[%s6268 + $0x2d4] sm:$0xf]
    %v7335 = vld [vmem:[%s6268 + $0x2d8] sm:$0xf]
    %v7336 = vld [vmem:[%s6268 + $0x2dc] sm:$0xf]
    %v7337 = vld [vmem:[%s6268 + $0x2e0] sm:$0xf]
    %v7338 = vld [vmem:[%s6268 + $0x2e4] sm:$0xf]
    %v7339 = vld [vmem:[%s6268 + $0x2e8] sm:$0xf]
    %v7340 = vld [vmem:[%s6268 + $0x2ec] sm:$0xf]
    %v7341 = vld [vmem:[%s6268 + $0x2f0] sm:$0xf]
    %v7342 = vld [vmem:[%s6268 + $0x2f4] sm:$0xf]
    %v7343 = vld [vmem:[%s6268 + $0x2f8] sm:$0xf]
    %v7344 = vld [vmem:[%s6268 + $0x2fc] sm:$0xf]
    %v7409 = vunpack.c.l.b16 %v7281
    %v7410 = vunpack.c.l.b16 %v7282
    %v7411 = vunpack.c.l.b16 %v7283
    %v7412 = vunpack.c.l.b16 %v7284
    %v7413 = vunpack.c.l.b16 %v7285
    %v7414 = vunpack.c.l.b16 %v7286
    %v7415 = vunpack.c.l.b16 %v7287
    %v7416 = vunpack.c.l.b16 %v7288
    %v7417 = vunpack.c.l.b16 %v7289
    %v7418 = vunpack.c.l.b16 %v7290
    %v7419 = vunpack.c.l.b16 %v7291
    %v7420 = vunpack.c.l.b16 %v7292
    %v7421 = vunpack.c.l.b16 %v7293
    %v7422 = vunpack.c.l.b16 %v7294
    %v7423 = vunpack.c.l.b16 %v7295
    %v7424 = vunpack.c.l.b16 %v7296
    %v7425 = vunpack.c.l.b16 %v7297
    %v7426 = vunpack.c.l.b16 %v7298
    %v7427 = vunpack.c.l.b16 %v7299
    %v7428 = vunpack.c.l.b16 %v7300
    %v7429 = vunpack.c.l.b16 %v7301
    %v7430 = vunpack.c.l.b16 %v7302
    %v7431 = vunpack.c.l.b16 %v7303
    %v7432 = vunpack.c.l.b16 %v7304
    %v7433 = vunpack.c.l.b16 %v7305
    %v7434 = vunpack.c.l.b16 %v7306
    %v7435 = vunpack.c.l.b16 %v7307
    %v7436 = vunpack.c.l.b16 %v7308
    %v7437 = vunpack.c.l.b16 %v7309
    %v7438 = vunpack.c.l.b16 %v7310
    %v7439 = vunpack.c.l.b16 %v7311
    %v7440 = vunpack.c.l.b16 %v7312
    %v7441 = vunpack.c.l.b16 %v7313
    %v7442 = vunpack.c.l.b16 %v7314
    %v7443 = vunpack.c.l.b16 %v7315
    %v7444 = vunpack.c.l.b16 %v7316
    %v7445 = vunpack.c.l.b16 %v7317
    %v7446 = vunpack.c.l.b16 %v7318
    %v7447 = vunpack.c.l.b16 %v7319
    %v7448 = vunpack.c.l.b16 %v7320
    %v7449 = vunpack.c.l.b16 %v7321
    %v7450 = vunpack.c.l.b16 %v7322
    %v7451 = vunpack.c.l.b16 %v7323
    %v7452 = vunpack.c.l.b16 %v7324
    %v7453 = vunpack.c.l.b16 %v7325
    %v7454 = vunpack.c.l.b16 %v7326
    %v7455 = vunpack.c.l.b16 %v7327
    %v7456 = vunpack.c.l.b16 %v7328
    %v7457 = vunpack.c.l.b16 %v7329
    %v7458 = vunpack.c.l.b16 %v7330
    %v7459 = vunpack.c.l.b16 %v7331
    %v7460 = vunpack.c.l.b16 %v7332
    %v7461 = vunpack.c.l.b16 %v7333
    %v7462 = vunpack.c.l.b16 %v7334
    %v7463 = vunpack.c.l.b16 %v7335
    %v7464 = vunpack.c.l.b16 %v7336
    %v7465 = vunpack.c.l.b16 %v7337
    %v7466 = vunpack.c.l.b16 %v7338
    %v7467 = vunpack.c.l.b16 %v7339
    %v7468 = vunpack.c.l.b16 %v7340
    %v7469 = vunpack.c.l.b16 %v7341
    %v7470 = vunpack.c.l.b16 %v7342
    %v7471 = vunpack.c.l.b16 %v7343
    %v7472 = vunpack.c.l.b16 %v7344
    %v7473 = vpack.c.b16 %v7410, %v7409
    %v7474 = vpack.c.b16 %v7412, %v7411
    %v7475 = vpack.c.b16 %v7414, %v7413
    %v7476 = vpack.c.b16 %v7416, %v7415
    %v7477 = vpack.c.b16 %v7418, %v7417
    %v7478 = vpack.c.b16 %v7420, %v7419
    %v7479 = vpack.c.b16 %v7422, %v7421
    %v7480 = vpack.c.b16 %v7424, %v7423
    %v7481 = vpack.c.b16 %v7426, %v7425
    %v7482 = vpack.c.b16 %v7428, %v7427
    %v7483 = vpack.c.b16 %v7430, %v7429
    %v7484 = vpack.c.b16 %v7432, %v7431
    %v7485 = vpack.c.b16 %v7434, %v7433
    %v7486 = vpack.c.b16 %v7436, %v7435
    %v7487 = vpack.c.b16 %v7438, %v7437
    %v7488 = vpack.c.b16 %v7440, %v7439
    %v7489 = vpack.c.b16 %v7442, %v7441
    %v7490 = vpack.c.b16 %v7444, %v7443
    %v7491 = vpack.c.b16 %v7446, %v7445
    %v7492 = vpack.c.b16 %v7448, %v7447
    %v7493 = vpack.c.b16 %v7450, %v7449
    %v7494 = vpack.c.b16 %v7452, %v7451
    %v7495 = vpack.c.b16 %v7454, %v7453
    %v7496 = vpack.c.b16 %v7456, %v7455
    %v7497 = vpack.c.b16 %v7458, %v7457
    %v7498 = vpack.c.b16 %v7460, %v7459
    %v7499 = vpack.c.b16 %v7462, %v7461
    %v7500 = vpack.c.b16 %v7464, %v7463
    %v7501 = vpack.c.b16 %v7466, %v7465
    %v7502 = vpack.c.b16 %v7468, %v7467
    %v7503 = vpack.c.b16 %v7470, %v7469
    %v7504 = vpack.c.b16 %v7472, %v7471
    %7537 = vmatprep.subr.bf16.mxu0 0
    %7538 = vmatpush1.bf16.msra.mxu0 %v7480
    %7539 = vmatprep.subr.bf16.mxu0 0
    %7540 = vmatpush1.bf16.msra.mxu0 %v7479
    %7541 = vmatprep.subr.bf16.mxu0 0
    %7542 = vmatpush1.bf16.msra.mxu0 %v7478
    %7543 = vmatprep.subr.bf16.mxu0 0
    %7544 = vmatpush1.bf16.msra.mxu0 %v7477
    %7545 = vmatprep.subr.bf16.mxu0 0
    %7546 = vmatpush1.bf16.msra.mxu0 %v7476
    %7547 = vmatprep.subr.bf16.mxu0 0
    %7548 = vmatpush1.bf16.msra.mxu0 %v7475
    %7549 = vmatprep.subr.bf16.mxu0 0
    %7550 = vmatpush1.bf16.msra.mxu0 %v7474
    %7551 = vmatprep.subr.bf16.mxu0 0
    %7552 = vmatpush1.bf16.msra.mxu0 %v7473
    %7553 = vmatprep.subr.bf16.mxu0 0
    %7554 = vmatpush2.bf16.msra.mxu0 %v7488
    %7555 = vmatprep.subr.bf16.mxu0 0
    %7556 = vmatpush2.bf16.msra.mxu0 %v7487
    %7557 = vmatprep.subr.bf16.mxu0 0
    %7558 = vmatpush2.bf16.msra.mxu0 %v7486
    %7559 = vmatprep.subr.bf16.mxu0 0
    %7560 = vmatpush2.bf16.msra.mxu0 %v7485
    %7561 = vmatprep.subr.bf16.mxu0 0
    %7562 = vmatpush2.bf16.msra.mxu0 %v7484
    %7563 = vmatprep.subr.bf16.mxu0 0
    %7564 = vmatpush2.bf16.msra.mxu0 %v7483
    %7565 = vmatprep.subr.bf16.mxu0 0
    %7566 = vmatpush2.bf16.msra.mxu0 %v7482
    %7567 = vmatprep.subr.bf16.mxu0 0
    %7568 = vmatpush2.bf16.msra.mxu0 %v7481
    %7569 = vmatprep.mubr.bf16.mxu0 %v7278
    %7570 = vmatmul.mubr.bf16.gmra.mxu0 %v7277
    %v7571 = vpop.f32.mrf.mxu0
    %v7572 = vadd.f32 0.0, %v7571
    %v7573 = vpop.f32.mrf.mxu0
    %v7574 = vpop.f32.mrf.mxu0
    %v7575 = vadd.f32 0.0, %v7574
    %v7576 = vpop.f32.mrf.mxu0
    %7577 = vdwg.mxu0
    %7578 = vmatprep.subr.bf16.mxu0 0
    %7579 = vmatpush1.bf16.msra.mxu0 %v7496
    %7580 = vmatprep.subr.bf16.mxu0 0
    %7581 = vmatpush1.bf16.msra.mxu0 %v7495
    %7582 = vmatprep.subr.bf16.mxu0 0
    %7583 = vmatpush1.bf16.msra.mxu0 %v7494
    %7584 = vmatprep.subr.bf16.mxu0 0
    %7585 = vmatpush1.bf16.msra.mxu0 %v7493
    %7586 = vmatprep.subr.bf16.mxu0 0
    %7587 = vmatpush1.bf16.msra.mxu0 %v7492
    %7588 = vmatprep.subr.bf16.mxu0 0
    %7589 = vmatpush1.bf16.msra.mxu0 %v7491
    %7590 = vmatprep.subr.bf16.mxu0 0
    %7591 = vmatpush1.bf16.msra.mxu0 %v7490
    %7592 = vmatprep.subr.bf16.mxu0 0
    %7593 = vmatpush1.bf16.msra.mxu0 %v7489
    %7594 = vmatprep.subr.bf16.mxu0 0
    %7595 = vmatpush2.bf16.msra.mxu0 %v7504
    %7596 = vmatprep.subr.bf16.mxu0 0
    %7597 = vmatpush2.bf16.msra.mxu0 %v7503
    %7598 = vmatprep.subr.bf16.mxu0 0
    %7599 = vmatpush2.bf16.msra.mxu0 %v7502
    %7600 = vmatprep.subr.bf16.mxu0 0
    %7601 = vmatpush2.bf16.msra.mxu0 %v7501
    %7602 = vmatprep.subr.bf16.mxu0 0
    %7603 = vmatpush2.bf16.msra.mxu0 %v7500
    %7604 = vmatprep.subr.bf16.mxu0 0
    %7605 = vmatpush2.bf16.msra.mxu0 %v7499
    %7606 = vmatprep.subr.bf16.mxu0 0
    %7607 = vmatpush2.bf16.msra.mxu0 %v7498
    %7608 = vmatprep.subr.bf16.mxu0 0
    %7609 = vmatpush2.bf16.msra.mxu0 %v7497
    %7610 = vmatprep.mubr.bf16.mxu0 %v7280
    %7611 = vmatmul.mubr.bf16.gmra.mxu0 %v7279
    %v7612 = vpop.f32.mrf.mxu0
    %v7613 = vadd.f32 %v7572, %v7612
    %v7614 = vpop.f32.mrf.mxu0
    %v7615 = vpop.f32.mrf.mxu0
    %v7616 = vadd.f32 %v7575, %v7615
    %v7617 = vpop.f32.mrf.mxu0
    %7618 = vdwg.mxu0
    %v7619 = vadd.f32 %v7107, %v7613
    %v7620 = vadd.f32 %v7110, %v7616
    %v7621 = vld [vmem:[%s6095 + $0x30] sm:$0xff]
    %v7622 = vld [vmem:[%s6095 + $0x38] sm:$0xff]
    %v7623 = vld [vmem:[%s6095 + $0x70] sm:$0xff]
    %v7624 = vld [vmem:[%s6095 + $0x78] sm:$0xff]
    %v7625 = vld [vmem:[%s6095 + $0xb0] sm:$0xff]
    %v7626 = vld [vmem:[%s6095 + $0xb8] sm:$0xff]
    %v7627 = vld [vmem:[%s6102 + $0xc] sm:$0xf]
    %v7629 = vlaneseq
    %v7630 = vshrl.u32 %v7629, 7
    %v7631 = vsub.s32 0, %v7630
    %v7632 = vrot.slane %v7627, %v7631
    %v7633 = vlaneseq
    %v7634 = vshrl.u32 %v7633, 7
    %v7635 = vsub.s32 1, %v7634
    %v7636 = vrot.slane %v7627, %v7635
    %v7637 = vlaneseq
    %v7638 = vshrl.u32 %v7637, 7
    %v7639 = vsub.s32 2, %v7638
    %v7640 = vrot.slane %v7627, %v7639
    %v7641 = vlaneseq
    %v7642 = vshrl.u32 %v7641, 7
    %v7643 = vsub.s32 3, %v7642
    %v7644 = vrot.slane %v7627, %v7643
    %v7655 = vunpack.c.l.b16 %v7621
    %v7656 = vunpack.c.h.b16 %v7621
    %v7657 = vunpack.c.l.b16 %v7622
    %v7658 = vunpack.c.h.b16 %v7622
    %v7659 = vunpack.c.l.b16 %v7623
    %v7660 = vunpack.c.h.b16 %v7623
    %v7661 = vunpack.c.l.b16 %v7624
    %v7662 = vunpack.c.h.b16 %v7624
    %v7663 = vunpack.c.l.b16 %v7625
    %v7664 = vunpack.c.h.b16 %v7625
    %v7665 = vunpack.c.l.b16 %v7626
    %v7666 = vunpack.c.h.b16 %v7626
    %v7667 = vpack.c.b16 %v7659, %v7655
    %v7668 = vpack.c.b16 %v7660, %v7656
    %v7669 = vpack.c.b16 %v7661, %v7657
    %v7670 = vpack.c.b16 %v7662, %v7658
    %v7671 = vpack.c.b16 %v7663, %v7663
    %v7672 = vpack.c.b16 %v7664, %v7664
    %v7673 = vpack.c.b16 %v7665, %v7665
    %v7674 = vpack.c.b16 %v7666, %v7666
    %v7680 = vsel %vm66, %v7671, 0
    %v7683 = vsel %vm66, %v7672, 0
    %v7686 = vsel %vm66, %v7673, 0
    %v7689 = vsel %vm66, %v7674, 0
    %7691 = vmatprep.subr.bf16.mxu0 0
    %7692 = vmatpush1.bf16.msra.mxu0 0
    %7693 = vmatprep.subr.bf16.mxu0 0
    %7694 = vmatpush1.bf16.msra.mxu0 0
    %7695 = vmatprep.subr.bf16.mxu0 0
    %7696 = vmatpush1.bf16.msra.mxu0 0
    %7697 = vmatprep.subr.bf16.mxu0 0
    %7698 = vmatpush1.bf16.msra.mxu0 0
    %7699 = vmatprep.subr.bf16.mxu0 0
    %7700 = vmatpush1.bf16.msra.mxu0 0
    %7701 = vmatprep.subr.bf16.mxu0 0
    %7702 = vmatpush1.bf16.msra.mxu0 0
    %7703 = vmatprep.subr.bf16.mxu0 %v7683
    %7704 = vmatpush1.bf16.msra.mxu0 %v7680
    %7705 = vmatprep.subr.bf16.mxu0 %v7668
    %7706 = vmatpush1.bf16.msra.mxu0 %v7667
    %7707 = vmatprep.subr.bf16.mxu0 0
    %7708 = vmatpush2.bf16.msra.mxu0 0
    %7709 = vmatprep.subr.bf16.mxu0 0
    %7710 = vmatpush2.bf16.msra.mxu0 0
    %7711 = vmatprep.subr.bf16.mxu0 0
    %7712 = vmatpush2.bf16.msra.mxu0 0
    %7713 = vmatprep.subr.bf16.mxu0 0
    %7714 = vmatpush2.bf16.msra.mxu0 0
    %7715 = vmatprep.subr.bf16.mxu0 0
    %7716 = vmatpush2.bf16.msra.mxu0 0
    %7717 = vmatprep.subr.bf16.mxu0 0
    %7718 = vmatpush2.bf16.msra.mxu0 0
    %7719 = vmatprep.subr.bf16.mxu0 0
    %7720 = vmatpush2.bf16.msra.mxu0 0
    %7721 = vmatprep.subr.bf16.mxu0 0
    %7722 = vmatpush2.bf16.msra.mxu0 0
    %7723 = vmatprep.mubr.bf16.mxu0 0
    %7724 = vmatmul.mubr.bf16.gmra.mxu0 %v6156
    %v7725 = vpop.f32.mrf.mxu0
    %v7726 = vadd.f32 %v7632, %v7725
    %v7727 = vpop.f32.mrf.mxu0
    %v7728 = vadd.f32 %v7636, %v7727
    %v7729 = vpop.f32.mrf.mxu0
    %v7730 = vadd.f32 %v7632, %v7729
    %v7731 = vpop.f32.mrf.mxu0
    %v7732 = vadd.f32 %v7636, %v7731
    %7733 = vdwg.mxu0
    %7734 = vmatprep.subr.bf16.mxu0 0
    %7735 = vmatpush1.bf16.msra.mxu0 0
    %7736 = vmatprep.subr.bf16.mxu0 0
    %7737 = vmatpush1.bf16.msra.mxu0 0
    %7738 = vmatprep.subr.bf16.mxu0 0
    %7739 = vmatpush1.bf16.msra.mxu0 0
    %7740 = vmatprep.subr.bf16.mxu0 0
    %7741 = vmatpush1.bf16.msra.mxu0 0
    %7742 = vmatprep.subr.bf16.mxu0 0
    %7743 = vmatpush1.bf16.msra.mxu0 0
    %7744 = vmatprep.subr.bf16.mxu0 0
    %7745 = vmatpush1.bf16.msra.mxu0 0
    %7746 = vmatprep.subr.bf16.mxu0 %v7689
    %7747 = vmatpush1.bf16.msra.mxu0 %v7686
    %7748 = vmatprep.subr.bf16.mxu0 %v7670
    %7749 = vmatpush1.bf16.msra.mxu0 %v7669
    %7750 = vmatprep.subr.bf16.mxu0 0
    %7751 = vmatpush2.bf16.msra.mxu0 0
    %7752 = vmatprep.subr.bf16.mxu0 0
    %7753 = vmatpush2.bf16.msra.mxu0 0
    %7754 = vmatprep.subr.bf16.mxu0 0
    %7755 = vmatpush2.bf16.msra.mxu0 0
    %7756 = vmatprep.subr.bf16.mxu0 0
    %7757 = vmatpush2.bf16.msra.mxu0 0
    %7758 = vmatprep.subr.bf16.mxu0 0
    %7759 = vmatpush2.bf16.msra.mxu0 0
    %7760 = vmatprep.subr.bf16.mxu0 0
    %7761 = vmatpush2.bf16.msra.mxu0 0
    %7762 = vmatprep.subr.bf16.mxu0 0
    %7763 = vmatpush2.bf16.msra.mxu0 0
    %7764 = vmatprep.subr.bf16.mxu0 0
    %7765 = vmatpush2.bf16.msra.mxu0 0
    %7766 = vmatprep.mubr.bf16.mxu0 0
    %7767 = vmatmul.mubr.bf16.gmra.mxu0 %v6156
    %v7768 = vpop.f32.mrf.mxu0
    %v7769 = vadd.f32 %v7640, %v7768
    %v7770 = vpop.f32.mrf.mxu0
    %v7771 = vadd.f32 %v7644, %v7770
    %v7772 = vpop.f32.mrf.mxu0
    %v7773 = vadd.f32 %v7640, %v7772
    %v7774 = vpop.f32.mrf.mxu0
    %v7775 = vadd.f32 %v7644, %v7774
    %7776 = vdwg.mxu0
    %v7777 = vmax.f32 %v7726, 0.0
    %v7778 = vmax.f32 %v7728, 0.0
    %v7779 = vmax.f32 %v7769, 0.0
    %v7780 = vmax.f32 %v7771, 0.0
    %v7781 = vmax.f32 %v7730, 0.0
    %v7782 = vmax.f32 %v7732, 0.0
    %v7783 = vmax.f32 %v7773, 0.0
    %v7784 = vmax.f32 %v7775, 0.0
    %v7785 = vpack.c.bf16 %v7781, %v7777
    %v7786 = vpack.c.bf16 %v7782, %v7778
    %v7787 = vpack.c.bf16 %v7783, %v7779
    %v7788 = vpack.c.bf16 %v7784, %v7780
    %v7789 = vld [vmem:[%s6268 + $0x300] sm:$0xf]
    %v7790 = vld [vmem:[%s6268 + $0x304] sm:$0xf]
    %v7791 = vld [vmem:[%s6268 + $0x308] sm:$0xf]
    %v7792 = vld [vmem:[%s6268 + $0x30c] sm:$0xf]
    %v7793 = vld [vmem:[%s6268 + $0x310] sm:$0xf]
    %v7794 = vld [vmem:[%s6268 + $0x314] sm:$0xf]
    %v7795 = vld [vmem:[%s6268 + $0x318] sm:$0xf]
    %v7796 = vld [vmem:[%s6268 + $0x31c] sm:$0xf]
    %v7797 = vld [vmem:[%s6268 + $0x320] sm:$0xf]
    %v7798 = vld [vmem:[%s6268 + $0x324] sm:$0xf]
    %v7799 = vld [vmem:[%s6268 + $0x328] sm:$0xf]
    %v7800 = vld [vmem:[%s6268 + $0x32c] sm:$0xf]
    %v7801 = vld [vmem:[%s6268 + $0x330] sm:$0xf]
    %v7802 = vld [vmem:[%s6268 + $0x334] sm:$0xf]
    %v7803 = vld [vmem:[%s6268 + $0x338] sm:$0xf]
    %v7804 = vld [vmem:[%s6268 + $0x33c] sm:$0xf]
    %v7805 = vld [vmem:[%s6268 + $0x340] sm:$0xf]
    %v7806 = vld [vmem:[%s6268 + $0x344] sm:$0xf]
    %v7807 = vld [vmem:[%s6268 + $0x348] sm:$0xf]
    %v7808 = vld [vmem:[%s6268 + $0x34c] sm:$0xf]
    %v7809 = vld [vmem:[%s6268 + $0x350] sm:$0xf]
    %v7810 = vld [vmem:[%s6268 + $0x354] sm:$0xf]
    %v7811 = vld [vmem:[%s6268 + $0x358] sm:$0xf]
    %v7812 = vld [vmem:[%s6268 + $0x35c] sm:$0xf]
    %v7813 = vld [vmem:[%s6268 + $0x360] sm:$0xf]
    %v7814 = vld [vmem:[%s6268 + $0x364] sm:$0xf]
    %v7815 = vld [vmem:[%s6268 + $0x368] sm:$0xf]
    %v7816 = vld [vmem:[%s6268 + $0x36c] sm:$0xf]
    %v7817 = vld [vmem:[%s6268 + $0x370] sm:$0xf]
    %v7818 = vld [vmem:[%s6268 + $0x374] sm:$0xf]
    %v7819 = vld [vmem:[%s6268 + $0x378] sm:$0xf]
    %v7820 = vld [vmem:[%s6268 + $0x37c] sm:$0xf]
    %v7821 = vld [vmem:[%s6268 + $0x380] sm:$0xf]
    %v7822 = vld [vmem:[%s6268 + $0x384] sm:$0xf]
    %v7823 = vld [vmem:[%s6268 + $0x388] sm:$0xf]
    %v7824 = vld [vmem:[%s6268 + $0x38c] sm:$0xf]
    %v7825 = vld [vmem:[%s6268 + $0x390] sm:$0xf]
    %v7826 = vld [vmem:[%s6268 + $0x394] sm:$0xf]
    %v7827 = vld [vmem:[%s6268 + $0x398] sm:$0xf]
    %v7828 = vld [vmem:[%s6268 + $0x39c] sm:$0xf]
    %v7829 = vld [vmem:[%s6268 + $0x3a0] sm:$0xf]
    %v7830 = vld [vmem:[%s6268 + $0x3a4] sm:$0xf]
    %v7831 = vld [vmem:[%s6268 + $0x3a8] sm:$0xf]
    %v7832 = vld [vmem:[%s6268 + $0x3ac] sm:$0xf]
    %v7833 = vld [vmem:[%s6268 + $0x3b0] sm:$0xf]
    %v7834 = vld [vmem:[%s6268 + $0x3b4] sm:$0xf]
    %v7835 = vld [vmem:[%s6268 + $0x3b8] sm:$0xf]
    %v7836 = vld [vmem:[%s6268 + $0x3bc] sm:$0xf]
    %v7837 = vld [vmem:[%s6268 + $0x3c0] sm:$0xf]
    %v7838 = vld [vmem:[%s6268 + $0x3c4] sm:$0xf]
    %v7839 = vld [vmem:[%s6268 + $0x3c8] sm:$0xf]
    %v7840 = vld [vmem:[%s6268 + $0x3cc] sm:$0xf]
    %v7841 = vld [vmem:[%s6268 + $0x3d0] sm:$0xf]
    %v7842 = vld [vmem:[%s6268 + $0x3d4] sm:$0xf]
    %v7843 = vld [vmem:[%s6268 + $0x3d8] sm:$0xf]
    %v7844 = vld [vmem:[%s6268 + $0x3dc] sm:$0xf]
    %v7845 = vld [vmem:[%s6268 + $0x3e0] sm:$0xf]
    %v7846 = vld [vmem:[%s6268 + $0x3e4] sm:$0xf]
    %v7847 = vld [vmem:[%s6268 + $0x3e8] sm:$0xf]
    %v7848 = vld [vmem:[%s6268 + $0x3ec] sm:$0xf]
    %v7849 = vld [vmem:[%s6268 + $0x3f0] sm:$0xf]
    %v7850 = vld [vmem:[%s6268 + $0x3f4] sm:$0xf]
    %v7851 = vld [vmem:[%s6268 + $0x3f8] sm:$0xf]
    %v7852 = vld [vmem:[%s6268 + $0x3fc] sm:$0xf]
    %v7917 = vunpack.c.l.b16 %v7789
    %v7918 = vunpack.c.l.b16 %v7790
    %v7919 = vunpack.c.l.b16 %v7791
    %v7920 = vunpack.c.l.b16 %v7792
    %v7921 = vunpack.c.l.b16 %v7793
    %v7922 = vunpack.c.l.b16 %v7794
    %v7923 = vunpack.c.l.b16 %v7795
    %v7924 = vunpack.c.l.b16 %v7796
    %v7925 = vunpack.c.l.b16 %v7797
    %v7926 = vunpack.c.l.b16 %v7798
    %v7927 = vunpack.c.l.b16 %v7799
    %v7928 = vunpack.c.l.b16 %v7800
    %v7929 = vunpack.c.l.b16 %v7801
    %v7930 = vunpack.c.l.b16 %v7802
    %v7931 = vunpack.c.l.b16 %v7803
    %v7932 = vunpack.c.l.b16 %v7804
    %v7933 = vunpack.c.l.b16 %v7805
    %v7934 = vunpack.c.l.b16 %v7806
    %v7935 = vunpack.c.l.b16 %v7807
    %v7936 = vunpack.c.l.b16 %v7808
    %v7937 = vunpack.c.l.b16 %v7809
    %v7938 = vunpack.c.l.b16 %v7810
    %v7939 = vunpack.c.l.b16 %v7811
    %v7940 = vunpack.c.l.b16 %v7812
    %v7941 = vunpack.c.l.b16 %v7813
    %v7942 = vunpack.c.l.b16 %v7814
    %v7943 = vunpack.c.l.b16 %v7815
    %v7944 = vunpack.c.l.b16 %v7816
    %v7945 = vunpack.c.l.b16 %v7817
    %v7946 = vunpack.c.l.b16 %v7818
    %v7947 = vunpack.c.l.b16 %v7819
    %v7948 = vunpack.c.l.b16 %v7820
    %v7949 = vunpack.c.l.b16 %v7821
    %v7950 = vunpack.c.l.b16 %v7822
    %v7951 = vunpack.c.l.b16 %v7823
    %v7952 = vunpack.c.l.b16 %v7824
    %v7953 = vunpack.c.l.b16 %v7825
    %v7954 = vunpack.c.l.b16 %v7826
    %v7955 = vunpack.c.l.b16 %v7827
    %v7956 = vunpack.c.l.b16 %v7828
    %v7957 = vunpack.c.l.b16 %v7829
    %v7958 = vunpack.c.l.b16 %v7830
    %v7959 = vunpack.c.l.b16 %v7831
    %v7960 = vunpack.c.l.b16 %v7832
    %v7961 = vunpack.c.l.b16 %v7833
    %v7962 = vunpack.c.l.b16 %v7834
    %v7963 = vunpack.c.l.b16 %v7835
    %v7964 = vunpack.c.l.b16 %v7836
    %v7965 = vunpack.c.l.b16 %v7837
    %v7966 = vunpack.c.l.b16 %v7838
    %v7967 = vunpack.c.l.b16 %v7839
    %v7968 = vunpack.c.l.b16 %v7840
    %v7969 = vunpack.c.l.b16 %v7841
    %v7970 = vunpack.c.l.b16 %v7842
    %v7971 = vunpack.c.l.b16 %v7843
    %v7972 = vunpack.c.l.b16 %v7844
    %v7973 = vunpack.c.l.b16 %v7845
    %v7974 = vunpack.c.l.b16 %v7846
    %v7975 = vunpack.c.l.b16 %v7847
    %v7976 = vunpack.c.l.b16 %v7848
    %v7977 = vunpack.c.l.b16 %v7849
    %v7978 = vunpack.c.l.b16 %v7850
    %v7979 = vunpack.c.l.b16 %v7851
    %v7980 = vunpack.c.l.b16 %v7852
    %v7981 = vpack.c.b16 %v7918, %v7917
    %v7982 = vpack.c.b16 %v7920, %v7919
    %v7983 = vpack.c.b16 %v7922, %v7921
    %v7984 = vpack.c.b16 %v7924, %v7923
    %v7985 = vpack.c.b16 %v7926, %v7925
    %v7986 = vpack.c.b16 %v7928, %v7927
    %v7987 = vpack.c.b16 %v7930, %v7929
    %v7988 = vpack.c.b16 %v7932, %v7931
    %v7989 = vpack.c.b16 %v7934, %v7933
    %v7990 = vpack.c.b16 %v7936, %v7935
    %v7991 = vpack.c.b16 %v7938, %v7937
    %v7992 = vpack.c.b16 %v7940, %v7939
    %v7993 = vpack.c.b16 %v7942, %v7941
    %v7994 = vpack.c.b16 %v7944, %v7943
    %v7995 = vpack.c.b16 %v7946, %v7945
    %v7996 = vpack.c.b16 %v7948, %v7947
    %v7997 = vpack.c.b16 %v7950, %v7949
    %v7998 = vpack.c.b16 %v7952, %v7951
    %v7999 = vpack.c.b16 %v7954, %v7953
    %v8000 = vpack.c.b16 %v7956, %v7955
    %v8001 = vpack.c.b16 %v7958, %v7957
    %v8002 = vpack.c.b16 %v7960, %v7959
    %v8003 = vpack.c.b16 %v7962, %v7961
    %v8004 = vpack.c.b16 %v7964, %v7963
    %v8005 = vpack.c.b16 %v7966, %v7965
    %v8006 = vpack.c.b16 %v7968, %v7967
    %v8007 = vpack.c.b16 %v7970, %v7969
    %v8008 = vpack.c.b16 %v7972, %v7971
    %v8009 = vpack.c.b16 %v7974, %v7973
    %v8010 = vpack.c.b16 %v7976, %v7975
    %v8011 = vpack.c.b16 %v7978, %v7977
    %v8012 = vpack.c.b16 %v7980, %v7979
    %8045 = vmatprep.subr.bf16.mxu0 0
    %8046 = vmatpush1.bf16.msra.mxu0 %v7988
    %8047 = vmatprep.subr.bf16.mxu0 0
    %8048 = vmatpush1.bf16.msra.mxu0 %v7987
    %8049 = vmatprep.subr.bf16.mxu0 0
    %8050 = vmatpush1.bf16.msra.mxu0 %v7986
    %8051 = vmatprep.subr.bf16.mxu0 0
    %8052 = vmatpush1.bf16.msra.mxu0 %v7985
    %8053 = vmatprep.subr.bf16.mxu0 0
    %8054 = vmatpush1.bf16.msra.mxu0 %v7984
    %8055 = vmatprep.subr.bf16.mxu0 0
    %8056 = vmatpush1.bf16.msra.mxu0 %v7983
    %8057 = vmatprep.subr.bf16.mxu0 0
    %8058 = vmatpush1.bf16.msra.mxu0 %v7982
    %8059 = vmatprep.subr.bf16.mxu0 0
    %8060 = vmatpush1.bf16.msra.mxu0 %v7981
    %8061 = vmatprep.subr.bf16.mxu0 0
    %8062 = vmatpush2.bf16.msra.mxu0 %v7996
    %8063 = vmatprep.subr.bf16.mxu0 0
    %8064 = vmatpush2.bf16.msra.mxu0 %v7995
    %8065 = vmatprep.subr.bf16.mxu0 0
    %8066 = vmatpush2.bf16.msra.mxu0 %v7994
    %8067 = vmatprep.subr.bf16.mxu0 0
    %8068 = vmatpush2.bf16.msra.mxu0 %v7993
    %8069 = vmatprep.subr.bf16.mxu0 0
    %8070 = vmatpush2.bf16.msra.mxu0 %v7992
    %8071 = vmatprep.subr.bf16.mxu0 0
    %8072 = vmatpush2.bf16.msra.mxu0 %v7991
    %8073 = vmatprep.subr.bf16.mxu0 0
    %8074 = vmatpush2.bf16.msra.mxu0 %v7990
    %8075 = vmatprep.subr.bf16.mxu0 0
    %8076 = vmatpush2.bf16.msra.mxu0 %v7989
    %8077 = vmatprep.mubr.bf16.mxu0 %v7786
    %8078 = vmatmul.mubr.bf16.gmra.mxu0 %v7785
    %v8079 = vpop.f32.mrf.mxu0
    %v8080 = vadd.f32 0.0, %v8079
    %v8081 = vpop.f32.mrf.mxu0
    %v8082 = vpop.f32.mrf.mxu0
    %v8083 = vadd.f32 0.0, %v8082
    %v8084 = vpop.f32.mrf.mxu0
    %8085 = vdwg.mxu0
    %8086 = vmatprep.subr.bf16.mxu0 0
    %8087 = vmatpush1.bf16.msra.mxu0 %v8004
    %8088 = vmatprep.subr.bf16.mxu0 0
    %8089 = vmatpush1.bf16.msra.mxu0 %v8003
    %8090 = vmatprep.subr.bf16.mxu0 0
    %8091 = vmatpush1.bf16.msra.mxu0 %v8002
    %8092 = vmatprep.subr.bf16.mxu0 0
    %8093 = vmatpush1.bf16.msra.mxu0 %v8001
    %8094 = vmatprep.subr.bf16.mxu0 0
    %8095 = vmatpush1.bf16.msra.mxu0 %v8000
    %8096 = vmatprep.subr.bf16.mxu0 0
    %8097 = vmatpush1.bf16.msra.mxu0 %v7999
    %8098 = vmatprep.subr.bf16.mxu0 0
    %8099 = vmatpush1.bf16.msra.mxu0 %v7998
    %8100 = vmatprep.subr.bf16.mxu0 0
    %8101 = vmatpush1.bf16.msra.mxu0 %v7997
    %8102 = vmatprep.subr.bf16.mxu0 0
    %8103 = vmatpush2.bf16.msra.mxu0 %v8012
    %8104 = vmatprep.subr.bf16.mxu0 0
    %8105 = vmatpush2.bf16.msra.mxu0 %v8011
    %8106 = vmatprep.subr.bf16.mxu0 0
    %8107 = vmatpush2.bf16.msra.mxu0 %v8010
    %8108 = vmatprep.subr.bf16.mxu0 0
    %8109 = vmatpush2.bf16.msra.mxu0 %v8009
    %8110 = vmatprep.subr.bf16.mxu0 0
    %8111 = vmatpush2.bf16.msra.mxu0 %v8008
    %8112 = vmatprep.subr.bf16.mxu0 0
    %8113 = vmatpush2.bf16.msra.mxu0 %v8007
    %8114 = vmatprep.subr.bf16.mxu0 0
    %8115 = vmatpush2.bf16.msra.mxu0 %v8006
    %8116 = vmatprep.subr.bf16.mxu0 0
    %8117 = vmatpush2.bf16.msra.mxu0 %v8005
    %8118 = vmatprep.mubr.bf16.mxu0 %v7788
    %8119 = vmatmul.mubr.bf16.gmra.mxu0 %v7787
    %v8120 = vpop.f32.mrf.mxu0
    %v8121 = vadd.f32 %v8080, %v8120
    %v8122 = vpop.f32.mrf.mxu0
    %v8123 = vpop.f32.mrf.mxu0
    %v8124 = vadd.f32 %v8083, %v8123
    %v8125 = vpop.f32.mrf.mxu0
    %8126 = vdwg.mxu0
    %v8127 = vadd.f32 %v7619, %v8121
    %v8128 = vadd.f32 %v7620, %v8124
    %v8129 = vlaneseq
    %v8130 = vshrl.u32 %v8129, 7
    %v8131 = vsub.s32 5, %v8130
    %v8132 = vrot.slane %v5540, %v8131
    %v8133 = vadd.f32 %v8127, %v8132
    %v8134 = vadd.f32 %v8128, %v8132
    %v8135 = vadd.f32 %v6092, %v8133
    %v8136 = vadd.f32 %v6093, %v8134
    %v8137 = vsel %vm180, %v8135, 0.0
    %8138 = vadd.xlane.f32.xlu0 %v8137
    %v8139 = vpop.xlane.xlu0 %8138
    %v8140 = vsel %vm180, %v8136, 0.0
    %8141 = vadd.xlane.f32.xlu0 %v8140
    %v8142 = vpop.xlane.xlu0 %8141
    %v8143 = vmul.f32 %v8139, %v792
    %v8144 = vmul.f32 %v8142, %v792
    %v8145 = vsub.f32 %v8135, %v8143
    %v8146 = vsub.f32 %v8136, %v8144
    %v8147 = vmul.f32 %v8145, %v8145
    %v8148 = vmul.f32 %v8146, %v8146
    %v8149 = vsel %vm180, %v8147, 0.0
    %8150 = vadd.xlane.f32.xlu0 %v8149
    %v8151 = vpop.xlane.xlu0 %8150
    %v8152 = vsel %vm180, %v8148, 0.0
    %8153 = vadd.xlane.f32.xlu0 %v8152
    %v8154 = vpop.xlane.xlu0 %8153
    %v8155 = vmul.f32 %v8151, %v792
    %v8156 = vmul.f32 %v8154, %v792
    %v8157 = vadd.f32 %v8155, 1e-05
    %v8158 = vadd.f32 %v8156, 1e-05
    %v8159 = vrsqrt.pop %v8157
    %v8160 = vrsqrt.pop %v8158
    %v8161 = vmul.f32 %v8145, %v8159
    %v8162 = vmul.f32 %v8146, %v8160
    %v8163 = vlaneseq
    %v8164 = vshrl.u32 %v8163, 7
    %v8165 = vsub.s32 3, %v8164
    %v8166 = vrot.slane %v5540, %v8165
    %v8167 = vmul.f32 %v8161, %v8166
    %v8168 = vmul.f32 %v8162, %v8166
    %v8169 = vlaneseq
    %v8170 = vshrl.u32 %v8169, 7
    %v8171 = vsub.s32 4, %v8170
    %v8172 = vrot.slane %v5540, %v8171
    %v8173 = vadd.f32 %v8167, %v8172
    %v8174 = vadd.f32 %v8168, %v8172
    %s8175 = scalar_lea.vmem %s9, 24
    %v8176 = vld [vmem:[%s8175] sm:$0xff]
    %s8177 = scalar_lea.vmem %s6, 216
    %v8178 = vld [vmem:[%s8177] sm:$0xff]
    %v8179 = vld [vmem:[%s8177 + $0x8] sm:$0xff]
    %v8180 = vld [vmem:[%s8177 + $0x10] sm:$0xff]
    %v8181 = vld [vmem:[%s8177 + $0x18] sm:$0xff]
    %v8182 = vld [vmem:[%s8177 + $0x20] sm:$0xff]
    %v8183 = vld [vmem:[%s8177 + $0x28] sm:$0xff]
    %v8184 = vld [vmem:[%s8177 + $0x30] sm:$0xff]
    %v8185 = vld [vmem:[%s8177 + $0x38] sm:$0xff]
    %v8186 = vld [vmem:[%s8177 + $0x40] sm:$0xff]
    %s8187 = scalar_lea.vmem %s7, 9
    %v8188 = vld [vmem:[%s8187] sm:$0x7]
    %v8190 = vlaneseq
    %v8191 = vshrl.u32 %v8190, 7
    %v8192 = vsub.s32 0, %v8191
    %v8193 = vrot.slane %v8188, %v8192
    %v8194 = vlaneseq
    %v8195 = vshrl.u32 %v8194, 7
    %v8196 = vsub.s32 1, %v8195
    %v8197 = vrot.slane %v8188, %v8196
    %v8198 = vlaneseq
    %v8199 = vshrl.u32 %v8198, 7
    %v8200 = vsub.s32 2, %v8199
    %v8201 = vrot.slane %v8188, %v8200
    %v8206 = vsel %vm180, %v8173, 0
    %v8209 = vsel %vm180, %v8174, 0
    %8211 = vmatprep.subr.mxu0 0.0
    %8212 = vmatpush1.msra.mxu0 0.0
    %8213 = vmatprep.subr.mxu0 0.0
    %8214 = vmatpush1.msra.mxu0 0.0
    %8215 = vmatprep.subr.mxu0 0.0
    %8216 = vmatpush1.msra.mxu0 0.0
    %8217 = vmatprep.subr.mxu0 0.0
    %8218 = vmatpush1.msra.mxu0 0.0
    %8219 = vmatprep.subr.mxu0 0.0
    %8220 = vmatpush1.msra.mxu0 0.0
    %8221 = vmatprep.subr.mxu0 0.0
    %8222 = vmatpush1.msra.mxu0 0.0
    %8223 = vmatprep.subr.mxu0 0.0
    %8224 = vmatpush1.msra.mxu0 0.0
    %8225 = vmatprep.subr.mxu0 0.0
    %8226 = vmatpush1.msra.mxu0 0.0
    %8227 = vmatprep.subr.mxu0 0.0
    %8228 = vmatpush1.msra.mxu0 0.0
    %8229 = vmatprep.subr.mxu0 0.0
    %8230 = vmatpush1.msra.mxu0 0.0
    %8231 = vmatprep.subr.mxu0 0.0
    %8232 = vmatpush1.msra.mxu0 0.0
    %8233 = vmatprep.subr.mxu0 0.0
    %8234 = vmatpush1.msra.mxu0 0.0
    %8235 = vmatprep.subr.mxu0 0.0
    %8236 = vmatpush1.msra.mxu0 0.0
    %8237 = vmatprep.subr.mxu0 %v8185
    %8238 = vmatpush1.msra.mxu0 %v8184
    %8239 = vmatprep.subr.mxu0 %v8182
    %8240 = vmatpush1.msra.mxu0 %v8181
    %8241 = vmatprep.subr.mxu0 %v8179
    %8242 = vmatpush1.msra.mxu0 %v8178
    %8243 = vmatprep.subr.mxu0 0.0
    %8244 = vmatpush2.msra.mxu0 0.0
    %8245 = vmatprep.subr.mxu0 0.0
    %8246 = vmatpush2.msra.mxu0 0.0
    %8247 = vmatprep.subr.mxu0 0.0
    %8248 = vmatpush2.msra.mxu0 0.0
    %8249 = vmatprep.subr.mxu0 0.0
    %8250 = vmatpush2.msra.mxu0 0.0
    %8251 = vmatprep.subr.mxu0 0.0
    %8252 = vmatpush2.msra.mxu0 0.0
    %8253 = vmatprep.subr.mxu0 0.0
    %8254 = vmatpush2.msra.mxu0 0.0
    %8255 = vmatprep.subr.mxu0 0.0
    %8256 = vmatpush2.msra.mxu0 0.0
    %8257 = vmatprep.subr.mxu0 0.0
    %8258 = vmatpush2.msra.mxu0 0.0
    %8259 = vmatprep.subr.mxu0 0.0
    %8260 = vmatpush2.msra.mxu0 0.0
    %8261 = vmatprep.subr.mxu0 0.0
    %8262 = vmatpush2.msra.mxu0 0.0
    %8263 = vmatprep.subr.mxu0 0.0
    %8264 = vmatpush2.msra.mxu0 0.0
    %8265 = vmatprep.subr.mxu0 0.0
    %8266 = vmatpush2.msra.mxu0 0.0
    %8267 = vmatprep.subr.mxu0 0.0
    %8268 = vmatpush2.msra.mxu0 0.0
    %8269 = vmatprep.subr.mxu0 0.0
    %8270 = vmatpush2.msra.mxu0 0.0
    %8271 = vmatprep.subr.mxu0 0.0
    %8272 = vmatpush2.msra.mxu0 0.0
    %8273 = vmatprep.subr.mxu0 0.0
    %8274 = vmatpush2.msra.mxu0 0.0
    %8275 = vmatprep.mubr.f32.mxu0 0.0
    %8276 = vmatmul.mubr.f32.gmra.mxu0 %v8206
    %v8277 = vpop.f32.mrf.mxu0
    %v8278 = vadd.f32 %v8193, %v8277
    %v8279 = vpop.f32.mrf.mxu0
    %v8280 = vadd.f32 %v8197, %v8279
    %8281 = vmatprep.mubr.f32.mxu0 0.0
    %8282 = vmatmul.mubr.f32.gmra.mxu0 %v8209
    %v8283 = vpop.f32.mrf.mxu0
    %v8284 = vadd.f32 %v8193, %v8283
    %v8285 = vpop.f32.mrf.mxu0
    %v8286 = vadd.f32 %v8197, %v8285
    %8287 = vdwg.mxu0
    %8288 = vmatprep.subr.mxu0 0.0
    %8289 = vmatpush1.msra.mxu0 0.0
    %8290 = vmatprep.subr.mxu0 0.0
    %8291 = vmatpush1.msra.mxu0 0.0
    %8292 = vmatprep.subr.mxu0 0.0
    %8293 = vmatpush1.msra.mxu0 0.0
    %8294 = vmatprep.subr.mxu0 0.0
    %8295 = vmatpush1.msra.mxu0 0.0
    %8296 = vmatprep.subr.mxu0 0.0
    %8297 = vmatpush1.msra.mxu0 0.0
    %8298 = vmatprep.subr.mxu0 0.0
    %8299 = vmatpush1.msra.mxu0 0.0
    %8300 = vmatprep.subr.mxu0 0.0
    %8301 = vmatpush1.msra.mxu0 0.0
    %8302 = vmatprep.subr.mxu0 0.0
    %8303 = vmatpush1.msra.mxu0 0.0
    %8304 = vmatprep.subr.mxu0 0.0
    %8305 = vmatpush1.msra.mxu0 0.0
    %8306 = vmatprep.subr.mxu0 0.0
    %8307 = vmatpush1.msra.mxu0 0.0
    %8308 = vmatprep.subr.mxu0 0.0
    %8309 = vmatpush1.msra.mxu0 0.0
    %8310 = vmatprep.subr.mxu0 0.0
    %8311 = vmatpush1.msra.mxu0 0.0
    %8312 = vmatprep.subr.mxu0 0.0
    %8313 = vmatpush1.msra.mxu0 0.0
    %8314 = vmatprep.subr.mxu0 0.0
    %8315 = vmatpush1.msra.mxu0 %v8186
    %8316 = vmatprep.subr.mxu0 0.0
    %8317 = vmatpush1.msra.mxu0 %v8183
    %8318 = vmatprep.subr.mxu0 0.0
    %8319 = vmatpush1.msra.mxu0 %v8180
    %8320 = vmatprep.subr.mxu0 0.0
    %8321 = vmatpush2.msra.mxu0 0.0
    %8322 = vmatprep.subr.mxu0 0.0
    %8323 = vmatpush2.msra.mxu0 0.0
    %8324 = vmatprep.subr.mxu0 0.0
    %8325 = vmatpush2.msra.mxu0 0.0
    %8326 = vmatprep.subr.mxu0 0.0
    %8327 = vmatpush2.msra.mxu0 0.0
    %8328 = vmatprep.subr.mxu0 0.0
    %8329 = vmatpush2.msra.mxu0 0.0
    %8330 = vmatprep.subr.mxu0 0.0
    %8331 = vmatpush2.msra.mxu0 0.0
    %8332 = vmatprep.subr.mxu0 0.0
    %8333 = vmatpush2.msra.mxu0 0.0
    %8334 = vmatprep.subr.mxu0 0.0
    %8335 = vmatpush2.msra.mxu0 0.0
    %8336 = vmatprep.subr.mxu0 0.0
    %8337 = vmatpush2.msra.mxu0 0.0
    %8338 = vmatprep.subr.mxu0 0.0
    %8339 = vmatpush2.msra.mxu0 0.0
    %8340 = vmatprep.subr.mxu0 0.0
    %8341 = vmatpush2.msra.mxu0 0.0
    %8342 = vmatprep.subr.mxu0 0.0
    %8343 = vmatpush2.msra.mxu0 0.0
    %8344 = vmatprep.subr.mxu0 0.0
    %8345 = vmatpush2.msra.mxu0 0.0
    %8346 = vmatprep.subr.mxu0 0.0
    %8347 = vmatpush2.msra.mxu0 0.0
    %8348 = vmatprep.subr.mxu0 0.0
    %8349 = vmatpush2.msra.mxu0 0.0
    %8350 = vmatprep.subr.mxu0 0.0
    %8351 = vmatpush2.msra.mxu0 0.0
    %8352 = vmatprep.mubr.f32.mxu0 0.0
    %8353 = vmatmul.mubr.f32.gmra.mxu0 %v8206
    %v8354 = vpop.f32.mrf.mxu0
    %v8355 = vadd.f32 %v8201, %v8354
    %v8356 = vpop.f32.mrf.mxu0
    %8357 = vmatprep.mubr.f32.mxu0 0.0
    %8358 = vmatmul.mubr.f32.gmra.mxu0 %v8209
    %v8359 = vpop.f32.mrf.mxu0
    %v8360 = vadd.f32 %v8201, %v8359
    %v8361 = vpop.f32.mrf.mxu0
    %8362 = vdwg.mxu0
    %v8363 = vmul.f32 %v8278, %v8280
    %v8364 = vmul.f32 %v8278, %v8286
    %v8365 = vmul.f32 %v8284, %v8280
    %v8366 = vmul.f32 %v8284, %v8286
    %v8368 = vsel %vm180, %v8363, 0
    %v8371 = vsel %vm180, %v8364, 0
    %v8374 = vsel %vm180, %v8365, 0
    %v8377 = vsel %vm180, %v8366, 0
    %8379 = vmatprep.subr.mxu0 0.0
    %8380 = vmatpush1.msra.mxu0 0.0
    %8381 = vmatprep.subr.mxu0 0.0
    %8382 = vmatpush1.msra.mxu0 0.0
    %8383 = vmatprep.subr.mxu0 0.0
    %8384 = vmatpush1.msra.mxu0 0.0
    %8385 = vmatprep.subr.mxu0 0.0
    %8386 = vmatpush1.msra.mxu0 0.0
    %8387 = vmatprep.subr.mxu0 0.0
    %8388 = vmatpush1.msra.mxu0 0.0
    %8389 = vmatprep.subr.mxu0 0.0
    %8390 = vmatpush1.msra.mxu0 0.0
    %8391 = vmatprep.subr.mxu0 0.0
    %8392 = vmatpush1.msra.mxu0 0.0
    %8393 = vmatprep.subr.mxu0 0.0
    %8394 = vmatpush1.msra.mxu0 0.0
    %8395 = vmatprep.subr.mxu0 0.0
    %8396 = vmatpush1.msra.mxu0 0.0
    %8397 = vmatprep.subr.mxu0 0.0
    %8398 = vmatpush1.msra.mxu0 0.0
    %8399 = vmatprep.subr.mxu0 0.0
    %8400 = vmatpush1.msra.mxu0 0.0
    %8401 = vmatprep.subr.mxu0 0.0
    %8402 = vmatpush1.msra.mxu0 0.0
    %8403 = vmatprep.subr.mxu0 0.0
    %8404 = vmatpush1.msra.mxu0 0.0
    %8405 = vmatprep.subr.mxu0 0.0
    %8406 = vmatpush1.msra.mxu0 %v266
    %8407 = vmatprep.subr.mxu0 0.0
    %8408 = vmatpush1.msra.mxu0 %v265
    %8409 = vmatprep.subr.mxu0 0.0
    %8410 = vmatpush1.msra.mxu0 %v264
    %8411 = vmatprep.subr.mxu0 0.0
    %8412 = vmatpush2.msra.mxu0 0.0
    %8413 = vmatprep.subr.mxu0 0.0
    %8414 = vmatpush2.msra.mxu0 0.0
    %8415 = vmatprep.subr.mxu0 0.0
    %8416 = vmatpush2.msra.mxu0 0.0
    %8417 = vmatprep.subr.mxu0 0.0
    %8418 = vmatpush2.msra.mxu0 0.0
    %8419 = vmatprep.subr.mxu0 0.0
    %8420 = vmatpush2.msra.mxu0 0.0
    %8421 = vmatprep.subr.mxu0 0.0
    %8422 = vmatpush2.msra.mxu0 0.0
    %8423 = vmatprep.subr.mxu0 0.0
    %8424 = vmatpush2.msra.mxu0 0.0
    %8425 = vmatprep.subr.mxu0 0.0
    %8426 = vmatpush2.msra.mxu0 0.0
    %8427 = vmatprep.subr.mxu0 0.0
    %8428 = vmatpush2.msra.mxu0 0.0
    %8429 = vmatprep.subr.mxu0 0.0
    %8430 = vmatpush2.msra.mxu0 0.0
    %8431 = vmatprep.subr.mxu0 0.0
    %8432 = vmatpush2.msra.mxu0 0.0
    %8433 = vmatprep.subr.mxu0 0.0
    %8434 = vmatpush2.msra.mxu0 0.0
    %8435 = vmatprep.subr.mxu0 0.0
    %8436 = vmatpush2.msra.mxu0 0.0
    %8437 = vmatprep.subr.mxu0 0.0
    %8438 = vmatpush2.msra.mxu0 0.0
    %8439 = vmatprep.subr.mxu0 0.0
    %8440 = vmatpush2.msra.mxu0 0.0
    %8441 = vmatprep.subr.mxu0 0.0
    %8442 = vmatpush2.msra.mxu0 0.0
    %8443 = vmatprep.mubr.f32.mxu0 0.0
    %8444 = vmatmul.mubr.f32.gmra.mxu0 %v8368
    %v8445 = vpop.f32.mrf.mxu0
    %v8446 = vadd.f32 0.0, %v8445
    %v8447 = vpop.f32.mrf.mxu0
    %8448 = vmatprep.mubr.f32.mxu0 0.0
    %8449 = vmatmul.mubr.f32.gmra.mxu0 %v8371
    %v8450 = vpop.f32.mrf.mxu0
    %v8451 = vadd.f32 0.0, %v8450
    %v8452 = vpop.f32.mrf.mxu0
    %8453 = vmatprep.mubr.f32.mxu0 0.0
    %8454 = vmatmul.mubr.f32.gmra.mxu0 %v8374
    %v8455 = vpop.f32.mrf.mxu0
    %v8456 = vadd.f32 0.0, %v8455
    %v8457 = vpop.f32.mrf.mxu0
    %8458 = vmatprep.mubr.f32.mxu0 0.0
    %8459 = vmatmul.mubr.f32.gmra.mxu0 %v8377
    %v8460 = vpop.f32.mrf.mxu0
    %v8461 = vadd.f32 0.0, %v8460
    %v8462 = vpop.f32.mrf.mxu0
    %8463 = vdwg.mxu0
    %v8464 = vsel %vm554, %v8446, -inf
    %v8465 = vsel %vm554, %v8451, -inf
    %v8466 = vmax.f32 %v8464, %v8465
    %v8467 = vsel %vm554, %v8456, -inf
    %v8468 = vsel %vm554, %v8461, -inf
    %v8469 = vmax.f32 %v8467, %v8468
    %v8470 = vsub.f32 %v8446, %v8466
    %v8471 = vsub.f32 %v8451, %v8466
    %v8472 = vsub.f32 %v8456, %v8469
    %v8473 = vsub.f32 %v8461, %v8469
    %v8474 = vmul.f32 %v8470, 1.442695
    %v8475 = vpow.pop %v8474
    %v8476 = vmul.f32 %v8471, 1.442695
    %v8477 = vpow.pop %v8476
    %v8478 = vmul.f32 %v8472, 1.442695
    %v8479 = vpow.pop %v8478
    %v8480 = vmul.f32 %v8473, 1.442695
    %v8481 = vpow.pop %v8480
    %v8482 = vsel %vm554, %v8475, 0.0
    %v8483 = vsel %vm554, %v8477, 0.0
    %v8484 = vadd.f32 %v8482, %v8483
    %v8485 = vsel %vm554, %v8479, 0.0
    %v8486 = vsel %vm554, %v8481, 0.0
    %v8487 = vadd.f32 %v8485, %v8486
    %v8488 = vrcp.pop %v8484
    %v8489 = vrcp.pop %v8487
    %v8490 = vmul.f32 %v8475, %v8488
    %v8491 = vmul.f32 %v8477, %v8488
    %v8492 = vmul.f32 %v8479, %v8489
    %v8493 = vmul.f32 %v8481, %v8489
    %v8495 = vsel %vm554, %v8490, 0
    %v8498 = vsel %vm554, %v8491, 0
    %v8501 = vsel %vm554, %v8492, 0
    %v8504 = vsel %vm554, %v8493, 0
    %8506 = vmatprep.subr.mxu0 0.0
    %8507 = vmatpush1.msra.mxu0 0.0
    %8508 = vmatprep.subr.mxu0 0.0
    %8509 = vmatpush1.msra.mxu0 0.0
    %8510 = vmatprep.subr.mxu0 0.0
    %8511 = vmatpush1.msra.mxu0 0.0
    %8512 = vmatprep.subr.mxu0 0.0
    %8513 = vmatpush1.msra.mxu0 0.0
    %8514 = vmatprep.subr.mxu0 0.0
    %8515 = vmatpush1.msra.mxu0 0.0
    %8516 = vmatprep.subr.mxu0 0.0
    %8517 = vmatpush1.msra.mxu0 0.0
    %8518 = vmatprep.subr.mxu0 0.0
    %8519 = vmatpush1.msra.mxu0 0.0
    %8520 = vmatprep.subr.mxu0 0.0
    %8521 = vmatpush1.msra.mxu0 0.0
    %8522 = vmatprep.subr.mxu0 0.0
    %8523 = vmatpush1.msra.mxu0 0.0
    %8524 = vmatprep.subr.mxu0 0.0
    %8525 = vmatpush1.msra.mxu0 0.0
    %8526 = vmatprep.subr.mxu0 0.0
    %8527 = vmatpush1.msra.mxu0 0.0
    %8528 = vmatprep.subr.mxu0 0.0
    %8529 = vmatpush1.msra.mxu0 0.0
    %8530 = vmatprep.subr.mxu0 0.0
    %8531 = vmatpush1.msra.mxu0 0.0
    %8532 = vmatprep.subr.mxu0 0.0
    %8533 = vmatpush1.msra.mxu0 0.0
    %8534 = vmatprep.subr.mxu0 0.0
    %8535 = vmatpush1.msra.mxu0 0.0
    %8536 = vmatprep.subr.mxu0 0.0
    %8537 = vmatpush1.msra.mxu0 %v599
    %8538 = vmatprep.subr.mxu0 0.0
    %8539 = vmatpush2.msra.mxu0 0.0
    %8540 = vmatprep.subr.mxu0 0.0
    %8541 = vmatpush2.msra.mxu0 0.0
    %8542 = vmatprep.subr.mxu0 0.0
    %8543 = vmatpush2.msra.mxu0 0.0
    %8544 = vmatprep.subr.mxu0 0.0
    %8545 = vmatpush2.msra.mxu0 0.0
    %8546 = vmatprep.subr.mxu0 0.0
    %8547 = vmatpush2.msra.mxu0 0.0
    %8548 = vmatprep.subr.mxu0 0.0
    %8549 = vmatpush2.msra.mxu0 0.0
    %8550 = vmatprep.subr.mxu0 0.0
    %8551 = vmatpush2.msra.mxu0 0.0
    %8552 = vmatprep.subr.mxu0 0.0
    %8553 = vmatpush2.msra.mxu0 0.0
    %8554 = vmatprep.subr.mxu0 0.0
    %8555 = vmatpush2.msra.mxu0 0.0
    %8556 = vmatprep.subr.mxu0 0.0
    %8557 = vmatpush2.msra.mxu0 0.0
    %8558 = vmatprep.subr.mxu0 0.0
    %8559 = vmatpush2.msra.mxu0 0.0
    %8560 = vmatprep.subr.mxu0 0.0
    %8561 = vmatpush2.msra.mxu0 0.0
    %8562 = vmatprep.subr.mxu0 0.0
    %8563 = vmatpush2.msra.mxu0 0.0
    %8564 = vmatprep.subr.mxu0 0.0
    %8565 = vmatpush2.msra.mxu0 0.0
    %8566 = vmatprep.subr.mxu0 0.0
    %8567 = vmatpush2.msra.mxu0 0.0
    %8568 = vmatprep.subr.mxu0 0.0
    %8569 = vmatpush2.msra.mxu0 0.0
    %8570 = vmatprep.mubr.f32.mxu0 0.0
    %8571 = vmatmul.mubr.f32.gmra.mxu0 %v8495
    %v8572 = vpop.f32.mrf.mxu0
    %v8573 = vadd.f32 0.0, %v8572
    %v8574 = vpop.f32.mrf.mxu0
    %8575 = vmatprep.mubr.f32.mxu0 0.0
    %8576 = vmatmul.mubr.f32.gmra.mxu0 %v8498
    %v8577 = vpop.f32.mrf.mxu0
    %v8578 = vadd.f32 0.0, %v8577
    %v8579 = vpop.f32.mrf.mxu0
    %8580 = vmatprep.mubr.f32.mxu0 0.0
    %8581 = vmatmul.mubr.f32.gmra.mxu0 %v8501
    %v8582 = vpop.f32.mrf.mxu0
    %v8583 = vadd.f32 0.0, %v8582
    %v8584 = vpop.f32.mrf.mxu0
    %8585 = vmatprep.mubr.f32.mxu0 0.0
    %8586 = vmatmul.mubr.f32.gmra.mxu0 %v8504
    %v8587 = vpop.f32.mrf.mxu0
    %v8588 = vadd.f32 0.0, %v8587
    %v8589 = vpop.f32.mrf.mxu0
    %8590 = vdwg.mxu0
    %v8591 = vmul.f32 %v8573, %v8355
    %v8592 = vmul.f32 %v8578, %v8360
    %v8593 = vmul.f32 %v8583, %v8355
    %v8594 = vmul.f32 %v8588, %v8360
    %v8595 = vsel %vm180, %v8591, 0.0
    %v8596 = vsel %vm180, %v8592, 0.0
    %v8597 = vadd.f32 %v8595, %v8596
    %v8598 = vsel %vm180, %v8593, 0.0
    %v8599 = vsel %vm180, %v8594, 0.0
    %v8600 = vadd.f32 %v8598, %v8599
    %s8601 = scalar_lea.vmem %s8, 72
    %v8602 = vld [vmem:[%s8601] sm:$0xff]
    %v8603 = vld [vmem:[%s8601 + $0x8] sm:$0xff]
    %v8604 = vld [vmem:[%s8601 + $0x10] sm:$0xff]
    %v8605 = vlaneseq
    %v8606 = vshrl.u32 %v8605, 7
    %v8607 = vsub.s32 0, %v8606
    %v8608 = vrot.slane %v8176, %v8607
    %v8610 = vsel %vm180, %v8597, 0
    %v8613 = vsel %vm180, %v8600, 0
    %8615 = vmatprep.subr.mxu0 0.0
    %8616 = vmatpush1.msra.mxu0 0.0
    %8617 = vmatprep.subr.mxu0 0.0
    %8618 = vmatpush1.msra.mxu0 0.0
    %8619 = vmatprep.subr.mxu0 0.0
    %8620 = vmatpush1.msra.mxu0 0.0
    %8621 = vmatprep.subr.mxu0 0.0
    %8622 = vmatpush1.msra.mxu0 0.0
    %8623 = vmatprep.subr.mxu0 0.0
    %8624 = vmatpush1.msra.mxu0 0.0
    %8625 = vmatprep.subr.mxu0 0.0
    %8626 = vmatpush1.msra.mxu0 0.0
    %8627 = vmatprep.subr.mxu0 0.0
    %8628 = vmatpush1.msra.mxu0 0.0
    %8629 = vmatprep.subr.mxu0 0.0
    %8630 = vmatpush1.msra.mxu0 0.0
    %8631 = vmatprep.subr.mxu0 0.0
    %8632 = vmatpush1.msra.mxu0 0.0
    %8633 = vmatprep.subr.mxu0 0.0
    %8634 = vmatpush1.msra.mxu0 0.0
    %8635 = vmatprep.subr.mxu0 0.0
    %8636 = vmatpush1.msra.mxu0 0.0
    %8637 = vmatprep.subr.mxu0 0.0
    %8638 = vmatpush1.msra.mxu0 0.0
    %8639 = vmatprep.subr.mxu0 0.0
    %8640 = vmatpush1.msra.mxu0 0.0
    %8641 = vmatprep.subr.mxu0 0.0
    %8642 = vmatpush1.msra.mxu0 %v8604
    %8643 = vmatprep.subr.mxu0 0.0
    %8644 = vmatpush1.msra.mxu0 %v8603
    %8645 = vmatprep.subr.mxu0 0.0
    %8646 = vmatpush1.msra.mxu0 %v8602
    %8647 = vmatprep.subr.mxu0 0.0
    %8648 = vmatpush2.msra.mxu0 0.0
    %8649 = vmatprep.subr.mxu0 0.0
    %8650 = vmatpush2.msra.mxu0 0.0
    %8651 = vmatprep.subr.mxu0 0.0
    %8652 = vmatpush2.msra.mxu0 0.0
    %8653 = vmatprep.subr.mxu0 0.0
    %8654 = vmatpush2.msra.mxu0 0.0
    %8655 = vmatprep.subr.mxu0 0.0
    %8656 = vmatpush2.msra.mxu0 0.0
    %8657 = vmatprep.subr.mxu0 0.0
    %8658 = vmatpush2.msra.mxu0 0.0
    %8659 = vmatprep.subr.mxu0 0.0
    %8660 = vmatpush2.msra.mxu0 0.0
    %8661 = vmatprep.subr.mxu0 0.0
    %8662 = vmatpush2.msra.mxu0 0.0
    %8663 = vmatprep.subr.mxu0 0.0
    %8664 = vmatpush2.msra.mxu0 0.0
    %8665 = vmatprep.subr.mxu0 0.0
    %8666 = vmatpush2.msra.mxu0 0.0
    %8667 = vmatprep.subr.mxu0 0.0
    %8668 = vmatpush2.msra.mxu0 0.0
    %8669 = vmatprep.subr.mxu0 0.0
    %8670 = vmatpush2.msra.mxu0 0.0
    %8671 = vmatprep.subr.mxu0 0.0
    %8672 = vmatpush2.msra.mxu0 0.0
    %8673 = vmatprep.subr.mxu0 0.0
    %8674 = vmatpush2.msra.mxu0 0.0
    %8675 = vmatprep.subr.mxu0 0.0
    %8676 = vmatpush2.msra.mxu0 0.0
    %8677 = vmatprep.subr.mxu0 0.0
    %8678 = vmatpush2.msra.mxu0 0.0
    %8679 = vmatprep.mubr.f32.mxu0 0.0
    %8680 = vmatmul.mubr.f32.gmra.mxu0 %v8610
    %v8681 = vpop.f32.mrf.mxu0
    %v8682 = vadd.f32 %v8608, %v8681
    %v8683 = vpop.f32.mrf.mxu0
    %8684 = vmatprep.mubr.f32.mxu0 0.0
    %8685 = vmatmul.mubr.f32.gmra.mxu0 %v8613
    %v8686 = vpop.f32.mrf.mxu0
    %v8687 = vadd.f32 %v8608, %v8686
    %v8688 = vpop.f32.mrf.mxu0
    %8689 = vdwg.mxu0
    %v8690 = vadd.f32 %v8173, %v8682
    %v8691 = vadd.f32 %v8174, %v8687
    %v8692 = vsel %vm180, %v8690, 0.0
    %8693 = vadd.xlane.f32.xlu0 %v8692
    %v8694 = vpop.xlane.xlu0 %8693
    %v8695 = vsel %vm180, %v8691, 0.0
    %8696 = vadd.xlane.f32.xlu0 %v8695
    %v8697 = vpop.xlane.xlu0 %8696
    %v8698 = vmul.f32 %v8694, %v792
    %v8699 = vmul.f32 %v8697, %v792
    %v8700 = vsub.f32 %v8690, %v8698
    %v8701 = vsub.f32 %v8691, %v8699
    %v8702 = vmul.f32 %v8700, %v8700
    %v8703 = vmul.f32 %v8701, %v8701
    %v8704 = vsel %vm180, %v8702, 0.0
    %8705 = vadd.xlane.f32.xlu0 %v8704
    %v8706 = vpop.xlane.xlu0 %8705
    %v8707 = vsel %vm180, %v8703, 0.0
    %8708 = vadd.xlane.f32.xlu0 %v8707
    %v8709 = vpop.xlane.xlu0 %8708
    %v8710 = vmul.f32 %v8706, %v792
    %v8711 = vmul.f32 %v8709, %v792
    %v8712 = vadd.f32 %v8710, 1e-05
    %v8713 = vadd.f32 %v8711, 1e-05
    %v8714 = vrsqrt.pop %v8712
    %v8715 = vrsqrt.pop %v8713
    %v8716 = vmul.f32 %v8700, %v8714
    %v8717 = vmul.f32 %v8701, %v8715
    %v8718 = vlaneseq
    %v8719 = vshrl.u32 %v8718, 7
    %v8720 = vsub.s32 1, %v8719
    %v8721 = vrot.slane %v8176, %v8720
    %v8722 = vmul.f32 %v8716, %v8721
    %v8723 = vmul.f32 %v8717, %v8721
    %v8724 = vlaneseq
    %v8725 = vshrl.u32 %v8724, 7
    %v8726 = vsub.s32 2, %v8725
    %v8727 = vrot.slane %v8176, %v8726
    %v8728 = vadd.f32 %v8722, %v8727
    %v8729 = vadd.f32 %v8723, %v8727
    %v8730 = vpack.c.bf16 %v8729, %v8728
    %s8731 = scalar_lea.vmem %s10, 576
    %v8732 = vld [vmem:[%s8731] sm:$0xff]
    %v8733 = vld [vmem:[%s8731 + $0x8] sm:$0xff]
    %v8734 = vld [vmem:[%s8731 + $0x40] sm:$0xff]
    %v8735 = vld [vmem:[%s8731 + $0x48] sm:$0xff]
    %v8736 = vld [vmem:[%s8731 + $0x80] sm:$0xff]
    %v8737 = vld [vmem:[%s8731 + $0x88] sm:$0xff]
    %s8738 = scalar_lea.vmem %s11, 48
    %v8739 = vld [vmem:[%s8738] sm:$0xf]
    %v8741 = vlaneseq
    %v8742 = vshrl.u32 %v8741, 7
    %v8743 = vsub.s32 0, %v8742
    %v8744 = vrot.slane %v8739, %v8743
    %v8745 = vlaneseq
    %v8746 = vshrl.u32 %v8745, 7
    %v8747 = vsub.s32 1, %v8746
    %v8748 = vrot.slane %v8739, %v8747
    %v8749 = vlaneseq
    %v8750 = vshrl.u32 %v8749, 7
    %v8751 = vsub.s32 2, %v8750
    %v8752 = vrot.slane %v8739, %v8751
    %v8753 = vlaneseq
    %v8754 = vshrl.u32 %v8753, 7
    %v8755 = vsub.s32 3, %v8754
    %v8756 = vrot.slane %v8739, %v8755
    %v8767 = vunpack.c.l.b16 %v8732
    %v8768 = vunpack.c.h.b16 %v8732
    %v8769 = vunpack.c.l.b16 %v8733
    %v8770 = vunpack.c.h.b16 %v8733
    %v8771 = vunpack.c.l.b16 %v8734
    %v8772 = vunpack.c.h.b16 %v8734
    %v8773 = vunpack.c.l.b16 %v8735
    %v8774 = vunpack.c.h.b16 %v8735
    %v8775 = vunpack.c.l.b16 %v8736
    %v8776 = vunpack.c.h.b16 %v8736
    %v8777 = vunpack.c.l.b16 %v8737
    %v8778 = vunpack.c.h.b16 %v8737
    %v8779 = vpack.c.b16 %v8771, %v8767
    %v8780 = vpack.c.b16 %v8772, %v8768
    %v8781 = vpack.c.b16 %v8773, %v8769
    %v8782 = vpack.c.b16 %v8774, %v8770
    %v8783 = vpack.c.b16 %v8775, %v8775
    %v8784 = vpack.c.b16 %v8776, %v8776
    %v8785 = vpack.c.b16 %v8777, %v8777
    %v8786 = vpack.c.b16 %v8778, %v8778
    %v8792 = vsel %vm180, %v8730, 0
    %v8795 = vsel %vm66, %v8783, 0
    %v8798 = vsel %vm66, %v8784, 0
    %v8801 = vsel %vm66, %v8785, 0
    %v8804 = vsel %vm66, %v8786, 0
    %8806 = vmatprep.subr.bf16.mxu0 0
    %8807 = vmatpush1.bf16.msra.mxu0 0
    %8808 = vmatprep.subr.bf16.mxu0 0
    %8809 = vmatpush1.bf16.msra.mxu0 0
    %8810 = vmatprep.subr.bf16.mxu0 0
    %8811 = vmatpush1.bf16.msra.mxu0 0
    %8812 = vmatprep.subr.bf16.mxu0 0
    %8813 = vmatpush1.bf16.msra.mxu0 0
    %8814 = vmatprep.subr.bf16.mxu0 0
    %8815 = vmatpush1.bf16.msra.mxu0 0
    %8816 = vmatprep.subr.bf16.mxu0 0
    %8817 = vmatpush1.bf16.msra.mxu0 0
    %8818 = vmatprep.subr.bf16.mxu0 %v8798
    %8819 = vmatpush1.bf16.msra.mxu0 %v8795
    %8820 = vmatprep.subr.bf16.mxu0 %v8780
    %8821 = vmatpush1.bf16.msra.mxu0 %v8779
    %8822 = vmatprep.subr.bf16.mxu0 0
    %8823 = vmatpush2.bf16.msra.mxu0 0
    %8824 = vmatprep.subr.bf16.mxu0 0
    %8825 = vmatpush2.bf16.msra.mxu0 0
    %8826 = vmatprep.subr.bf16.mxu0 0
    %8827 = vmatpush2.bf16.msra.mxu0 0
    %8828 = vmatprep.subr.bf16.mxu0 0
    %8829 = vmatpush2.bf16.msra.mxu0 0
    %8830 = vmatprep.subr.bf16.mxu0 0
    %8831 = vmatpush2.bf16.msra.mxu0 0
    %8832 = vmatprep.subr.bf16.mxu0 0
    %8833 = vmatpush2.bf16.msra.mxu0 0
    %8834 = vmatprep.subr.bf16.mxu0 0
    %8835 = vmatpush2.bf16.msra.mxu0 0
    %8836 = vmatprep.subr.bf16.mxu0 0
    %8837 = vmatpush2.bf16.msra.mxu0 0
    %8838 = vmatprep.mubr.bf16.mxu0 0
    %8839 = vmatmul.mubr.bf16.gmra.mxu0 %v8792
    %v8840 = vpop.f32.mrf.mxu0
    %v8841 = vadd.f32 %v8744, %v8840
    %v8842 = vpop.f32.mrf.mxu0
    %v8843 = vadd.f32 %v8748, %v8842
    %v8844 = vpop.f32.mrf.mxu0
    %v8845 = vadd.f32 %v8744, %v8844
    %v8846 = vpop.f32.mrf.mxu0
    %v8847 = vadd.f32 %v8748, %v8846
    %8848 = vdwg.mxu0
    %8849 = vmatprep.subr.bf16.mxu0 0
    %8850 = vmatpush1.bf16.msra.mxu0 0
    %8851 = vmatprep.subr.bf16.mxu0 0
    %8852 = vmatpush1.bf16.msra.mxu0 0
    %8853 = vmatprep.subr.bf16.mxu0 0
    %8854 = vmatpush1.bf16.msra.mxu0 0
    %8855 = vmatprep.subr.bf16.mxu0 0
    %8856 = vmatpush1.bf16.msra.mxu0 0
    %8857 = vmatprep.subr.bf16.mxu0 0
    %8858 = vmatpush1.bf16.msra.mxu0 0
    %8859 = vmatprep.subr.bf16.mxu0 0
    %8860 = vmatpush1.bf16.msra.mxu0 0
    %8861 = vmatprep.subr.bf16.mxu0 %v8804
    %8862 = vmatpush1.bf16.msra.mxu0 %v8801
    %8863 = vmatprep.subr.bf16.mxu0 %v8782
    %8864 = vmatpush1.bf16.msra.mxu0 %v8781
    %8865 = vmatprep.subr.bf16.mxu0 0
    %8866 = vmatpush2.bf16.msra.mxu0 0
    %8867 = vmatprep.subr.bf16.mxu0 0
    %8868 = vmatpush2.bf16.msra.mxu0 0
    %8869 = vmatprep.subr.bf16.mxu0 0
    %8870 = vmatpush2.bf16.msra.mxu0 0
    %8871 = vmatprep.subr.bf16.mxu0 0
    %8872 = vmatpush2.bf16.msra.mxu0 0
    %8873 = vmatprep.subr.bf16.mxu0 0
    %8874 = vmatpush2.bf16.msra.mxu0 0
    %8875 = vmatprep.subr.bf16.mxu0 0
    %8876 = vmatpush2.bf16.msra.mxu0 0
    %8877 = vmatprep.subr.bf16.mxu0 0
    %8878 = vmatpush2.bf16.msra.mxu0 0
    %8879 = vmatprep.subr.bf16.mxu0 0
    %8880 = vmatpush2.bf16.msra.mxu0 0
    %8881 = vmatprep.mubr.bf16.mxu0 0
    %8882 = vmatmul.mubr.bf16.gmra.mxu0 %v8792
    %v8883 = vpop.f32.mrf.mxu0
    %v8884 = vadd.f32 %v8752, %v8883
    %v8885 = vpop.f32.mrf.mxu0
    %v8886 = vadd.f32 %v8756, %v8885
    %v8887 = vpop.f32.mrf.mxu0
    %v8888 = vadd.f32 %v8752, %v8887
    %v8889 = vpop.f32.mrf.mxu0
    %v8890 = vadd.f32 %v8756, %v8889
    %8891 = vdwg.mxu0
    %v8892 = vmax.f32 %v8841, 0.0
    %v8893 = vmax.f32 %v8843, 0.0
    %v8894 = vmax.f32 %v8884, 0.0
    %v8895 = vmax.f32 %v8886, 0.0
    %v8896 = vmax.f32 %v8845, 0.0
    %v8897 = vmax.f32 %v8847, 0.0
    %v8898 = vmax.f32 %v8888, 0.0
    %v8899 = vmax.f32 %v8890, 0.0
    %v8900 = vpack.c.bf16 %v8896, %v8892
    %v8901 = vpack.c.bf16 %v8897, %v8893
    %v8902 = vpack.c.bf16 %v8898, %v8894
    %v8903 = vpack.c.bf16 %v8899, %v8895
    %s8904 = scalar_lea.vmem %s12, 3072
    %v8905 = vld [vmem:[%s8904] sm:$0xf]
    %v8906 = vld [vmem:[%s8904 + $0x4] sm:$0xf]
    %v8907 = vld [vmem:[%s8904 + $0x8] sm:$0xf]
    %v8908 = vld [vmem:[%s8904 + $0xc] sm:$0xf]
    %v8909 = vld [vmem:[%s8904 + $0x10] sm:$0xf]
    %v8910 = vld [vmem:[%s8904 + $0x14] sm:$0xf]
    %v8911 = vld [vmem:[%s8904 + $0x18] sm:$0xf]
    %v8912 = vld [vmem:[%s8904 + $0x1c] sm:$0xf]
    %v8913 = vld [vmem:[%s8904 + $0x20] sm:$0xf]
    %v8914 = vld [vmem:[%s8904 + $0x24] sm:$0xf]
    %v8915 = vld [vmem:[%s8904 + $0x28] sm:$0xf]
    %v8916 = vld [vmem:[%s8904 + $0x2c] sm:$0xf]
    %v8917 = vld [vmem:[%s8904 + $0x30] sm:$0xf]
    %v8918 = vld [vmem:[%s8904 + $0x34] sm:$0xf]
    %v8919 = vld [vmem:[%s8904 + $0x38] sm:$0xf]
    %v8920 = vld [vmem:[%s8904 + $0x3c] sm:$0xf]
    %v8921 = vld [vmem:[%s8904 + $0x40] sm:$0xf]
    %v8922 = vld [vmem:[%s8904 + $0x44] sm:$0xf]
    %v8923 = vld [vmem:[%s8904 + $0x48] sm:$0xf]
    %v8924 = vld [vmem:[%s8904 + $0x4c] sm:$0xf]
    %v8925 = vld [vmem:[%s8904 + $0x50] sm:$0xf]
    %v8926 = vld [vmem:[%s8904 + $0x54] sm:$0xf]
    %v8927 = vld [vmem:[%s8904 + $0x58] sm:$0xf]
    %v8928 = vld [vmem:[%s8904 + $0x5c] sm:$0xf]
    %v8929 = vld [vmem:[%s8904 + $0x60] sm:$0xf]
    %v8930 = vld [vmem:[%s8904 + $0x64] sm:$0xf]
    %v8931 = vld [vmem:[%s8904 + $0x68] sm:$0xf]
    %v8932 = vld [vmem:[%s8904 + $0x6c] sm:$0xf]
    %v8933 = vld [vmem:[%s8904 + $0x70] sm:$0xf]
    %v8934 = vld [vmem:[%s8904 + $0x74] sm:$0xf]
    %v8935 = vld [vmem:[%s8904 + $0x78] sm:$0xf]
    %v8936 = vld [vmem:[%s8904 + $0x7c] sm:$0xf]
    %v8937 = vld [vmem:[%s8904 + $0x80] sm:$0xf]
    %v8938 = vld [vmem:[%s8904 + $0x84] sm:$0xf]
    %v8939 = vld [vmem:[%s8904 + $0x88] sm:$0xf]
    %v8940 = vld [vmem:[%s8904 + $0x8c] sm:$0xf]
    %v8941 = vld [vmem:[%s8904 + $0x90] sm:$0xf]
    %v8942 = vld [vmem:[%s8904 + $0x94] sm:$0xf]
    %v8943 = vld [vmem:[%s8904 + $0x98] sm:$0xf]
    %v8944 = vld [vmem:[%s8904 + $0x9c] sm:$0xf]
    %v8945 = vld [vmem:[%s8904 + $0xa0] sm:$0xf]
    %v8946 = vld [vmem:[%s8904 + $0xa4] sm:$0xf]
    %v8947 = vld [vmem:[%s8904 + $0xa8] sm:$0xf]
    %v8948 = vld [vmem:[%s8904 + $0xac] sm:$0xf]
    %v8949 = vld [vmem:[%s8904 + $0xb0] sm:$0xf]
    %v8950 = vld [vmem:[%s8904 + $0xb4] sm:$0xf]
    %v8951 = vld [vmem:[%s8904 + $0xb8] sm:$0xf]
    %v8952 = vld [vmem:[%s8904 + $0xbc] sm:$0xf]
    %v8953 = vld [vmem:[%s8904 + $0xc0] sm:$0xf]
    %v8954 = vld [vmem:[%s8904 + $0xc4] sm:$0xf]
    %v8955 = vld [vmem:[%s8904 + $0xc8] sm:$0xf]
    %v8956 = vld [vmem:[%s8904 + $0xcc] sm:$0xf]
    %v8957 = vld [vmem:[%s8904 + $0xd0] sm:$0xf]
    %v8958 = vld [vmem:[%s8904 + $0xd4] sm:$0xf]
    %v8959 = vld [vmem:[%s8904 + $0xd8] sm:$0xf]
    %v8960 = vld [vmem:[%s8904 + $0xdc] sm:$0xf]
    %v8961 = vld [vmem:[%s8904 + $0xe0] sm:$0xf]
    %v8962 = vld [vmem:[%s8904 + $0xe4] sm:$0xf]
    %v8963 = vld [vmem:[%s8904 + $0xe8] sm:$0xf]
    %v8964 = vld [vmem:[%s8904 + $0xec] sm:$0xf]
    %v8965 = vld [vmem:[%s8904 + $0xf0] sm:$0xf]
    %v8966 = vld [vmem:[%s8904 + $0xf4] sm:$0xf]
    %v8967 = vld [vmem:[%s8904 + $0xf8] sm:$0xf]
    %v8968 = vld [vmem:[%s8904 + $0xfc] sm:$0xf]
    %v8969 = vld [vmem:[%s8731 + $0x10] sm:$0xff]
    %v8970 = vld [vmem:[%s8731 + $0x18] sm:$0xff]
    %v8971 = vld [vmem:[%s8731 + $0x50] sm:$0xff]
    %v8972 = vld [vmem:[%s8731 + $0x58] sm:$0xff]
    %v8973 = vld [vmem:[%s8731 + $0x90] sm:$0xff]
    %v8974 = vld [vmem:[%s8731 + $0x98] sm:$0xff]
    %v8975 = vld [vmem:[%s8738 + $0x4] sm:$0xf]
    %v8977 = vlaneseq
    %v8978 = vshrl.u32 %v8977, 7
    %v8979 = vsub.s32 0, %v8978
    %v8980 = vrot.slane %v8975, %v8979
    %v8981 = vlaneseq
    %v8982 = vshrl.u32 %v8981, 7
    %v8983 = vsub.s32 1, %v8982
    %v8984 = vrot.slane %v8975, %v8983
    %v8985 = vlaneseq
    %v8986 = vshrl.u32 %v8985, 7
    %v8987 = vsub.s32 2, %v8986
    %v8988 = vrot.slane %v8975, %v8987
    %v8989 = vlaneseq
    %v8990 = vshrl.u32 %v8989, 7
    %v8991 = vsub.s32 3, %v8990
    %v8992 = vrot.slane %v8975, %v8991
    %v9003 = vunpack.c.l.b16 %v8969
    %v9004 = vunpack.c.h.b16 %v8969
    %v9005 = vunpack.c.l.b16 %v8970
    %v9006 = vunpack.c.h.b16 %v8970
    %v9007 = vunpack.c.l.b16 %v8971
    %v9008 = vunpack.c.h.b16 %v8971
    %v9009 = vunpack.c.l.b16 %v8972
    %v9010 = vunpack.c.h.b16 %v8972
    %v9011 = vunpack.c.l.b16 %v8973
    %v9012 = vunpack.c.h.b16 %v8973
    %v9013 = vunpack.c.l.b16 %v8974
    %v9014 = vunpack.c.h.b16 %v8974
    %v9015 = vpack.c.b16 %v9007, %v9003
    %v9016 = vpack.c.b16 %v9008, %v9004
    %v9017 = vpack.c.b16 %v9009, %v9005
    %v9018 = vpack.c.b16 %v9010, %v9006
    %v9019 = vpack.c.b16 %v9011, %v9011
    %v9020 = vpack.c.b16 %v9012, %v9012
    %v9021 = vpack.c.b16 %v9013, %v9013
    %v9022 = vpack.c.b16 %v9014, %v9014
    %v9028 = vsel %vm66, %v9019, 0
    %v9031 = vsel %vm66, %v9020, 0
    %v9034 = vsel %vm66, %v9021, 0
    %v9037 = vsel %vm66, %v9022, 0
    %9039 = vmatprep.subr.bf16.mxu0 0
    %9040 = vmatpush1.bf16.msra.mxu0 0
    %9041 = vmatprep.subr.bf16.mxu0 0
    %9042 = vmatpush1.bf16.msra.mxu0 0
    %9043 = vmatprep.subr.bf16.mxu0 0
    %9044 = vmatpush1.bf16.msra.mxu0 0
    %9045 = vmatprep.subr.bf16.mxu0 0
    %9046 = vmatpush1.bf16.msra.mxu0 0
    %9047 = vmatprep.subr.bf16.mxu0 0
    %9048 = vmatpush1.bf16.msra.mxu0 0
    %9049 = vmatprep.subr.bf16.mxu0 0
    %9050 = vmatpush1.bf16.msra.mxu0 0
    %9051 = vmatprep.subr.bf16.mxu0 %v9031
    %9052 = vmatpush1.bf16.msra.mxu0 %v9028
    %9053 = vmatprep.subr.bf16.mxu0 %v9016
    %9054 = vmatpush1.bf16.msra.mxu0 %v9015
    %9055 = vmatprep.subr.bf16.mxu0 0
    %9056 = vmatpush2.bf16.msra.mxu0 0
    %9057 = vmatprep.subr.bf16.mxu0 0
    %9058 = vmatpush2.bf16.msra.mxu0 0
    %9059 = vmatprep.subr.bf16.mxu0 0
    %9060 = vmatpush2.bf16.msra.mxu0 0
    %9061 = vmatprep.subr.bf16.mxu0 0
    %9062 = vmatpush2.bf16.msra.mxu0 0
    %9063 = vmatprep.subr.bf16.mxu0 0
    %9064 = vmatpush2.bf16.msra.mxu0 0
    %9065 = vmatprep.subr.bf16.mxu0 0
    %9066 = vmatpush2.bf16.msra.mxu0 0
    %9067 = vmatprep.subr.bf16.mxu0 0
    %9068 = vmatpush2.bf16.msra.mxu0 0
    %9069 = vmatprep.subr.bf16.mxu0 0
    %9070 = vmatpush2.bf16.msra.mxu0 0
    %9071 = vmatprep.mubr.bf16.mxu0 0
    %9072 = vmatmul.mubr.bf16.gmra.mxu0 %v8792
    %v9073 = vpop.f32.mrf.mxu0
    %v9074 = vadd.f32 %v8980, %v9073
    %v9075 = vpop.f32.mrf.mxu0
    %v9076 = vadd.f32 %v8984, %v9075
    %v9077 = vpop.f32.mrf.mxu0
    %v9078 = vadd.f32 %v8980, %v9077
    %v9079 = vpop.f32.mrf.mxu0
    %v9080 = vadd.f32 %v8984, %v9079
    %9081 = vdwg.mxu0
    %9082 = vmatprep.subr.bf16.mxu0 0
    %9083 = vmatpush1.bf16.msra.mxu0 0
    %9084 = vmatprep.subr.bf16.mxu0 0
    %9085 = vmatpush1.bf16.msra.mxu0 0
    %9086 = vmatprep.subr.bf16.mxu0 0
    %9087 = vmatpush1.bf16.msra.mxu0 0
    %9088 = vmatprep.subr.bf16.mxu0 0
    %9089 = vmatpush1.bf16.msra.mxu0 0
    %9090 = vmatprep.subr.bf16.mxu0 0
    %9091 = vmatpush1.bf16.msra.mxu0 0
    %9092 = vmatprep.subr.bf16.mxu0 0
    %9093 = vmatpush1.bf16.msra.mxu0 0
    %9094 = vmatprep.subr.bf16.mxu0 %v9037
    %9095 = vmatpush1.bf16.msra.mxu0 %v9034
    %9096 = vmatprep.subr.bf16.mxu0 %v9018
    %9097 = vmatpush1.bf16.msra.mxu0 %v9017
    %9098 = vmatprep.subr.bf16.mxu0 0
    %9099 = vmatpush2.bf16.msra.mxu0 0
    %9100 = vmatprep.subr.bf16.mxu0 0
    %9101 = vmatpush2.bf16.msra.mxu0 0
    %9102 = vmatprep.subr.bf16.mxu0 0
    %9103 = vmatpush2.bf16.msra.mxu0 0
    %9104 = vmatprep.subr.bf16.mxu0 0
    %9105 = vmatpush2.bf16.msra.mxu0 0
    %9106 = vmatprep.subr.bf16.mxu0 0
    %9107 = vmatpush2.bf16.msra.mxu0 0
    %9108 = vmatprep.subr.bf16.mxu0 0
    %9109 = vmatpush2.bf16.msra.mxu0 0
    %9110 = vmatprep.subr.bf16.mxu0 0
    %9111 = vmatpush2.bf16.msra.mxu0 0
    %9112 = vmatprep.subr.bf16.mxu0 0
    %9113 = vmatpush2.bf16.msra.mxu0 0
    %9114 = vmatprep.mubr.bf16.mxu0 0
    %9115 = vmatmul.mubr.bf16.gmra.mxu0 %v8792
    %v9116 = vpop.f32.mrf.mxu0
    %v9117 = vadd.f32 %v8988, %v9116
    %v9118 = vpop.f32.mrf.mxu0
    %v9119 = vadd.f32 %v8992, %v9118
    %v9120 = vpop.f32.mrf.mxu0
    %v9121 = vadd.f32 %v8988, %v9120
    %v9122 = vpop.f32.mrf.mxu0
    %v9123 = vadd.f32 %v8992, %v9122
    %9124 = vdwg.mxu0
    %v9125 = vmax.f32 %v9074, 0.0
    %v9126 = vmax.f32 %v9076, 0.0
    %v9127 = vmax.f32 %v9117, 0.0
    %v9128 = vmax.f32 %v9119, 0.0
    %v9129 = vmax.f32 %v9078, 0.0
    %v9130 = vmax.f32 %v9080, 0.0
    %v9131 = vmax.f32 %v9121, 0.0
    %v9132 = vmax.f32 %v9123, 0.0
    %v9133 = vpack.c.bf16 %v9129, %v9125
    %v9134 = vpack.c.bf16 %v9130, %v9126
    %v9135 = vpack.c.bf16 %v9131, %v9127
    %v9136 = vpack.c.bf16 %v9132, %v9128
    %v9137 = vld [vmem:[%s8904 + $0x100] sm:$0xf]
    %v9138 = vld [vmem:[%s8904 + $0x104] sm:$0xf]
    %v9139 = vld [vmem:[%s8904 + $0x108] sm:$0xf]
    %v9140 = vld [vmem:[%s8904 + $0x10c] sm:$0xf]
    %v9141 = vld [vmem:[%s8904 + $0x110] sm:$0xf]
    %v9142 = vld [vmem:[%s8904 + $0x114] sm:$0xf]
    %v9143 = vld [vmem:[%s8904 + $0x118] sm:$0xf]
    %v9144 = vld [vmem:[%s8904 + $0x11c] sm:$0xf]
    %v9145 = vld [vmem:[%s8904 + $0x120] sm:$0xf]
    %v9146 = vld [vmem:[%s8904 + $0x124] sm:$0xf]
    %v9147 = vld [vmem:[%s8904 + $0x128] sm:$0xf]
    %v9148 = vld [vmem:[%s8904 + $0x12c] sm:$0xf]
    %v9149 = vld [vmem:[%s8904 + $0x130] sm:$0xf]
    %v9150 = vld [vmem:[%s8904 + $0x134] sm:$0xf]
    %v9151 = vld [vmem:[%s8904 + $0x138] sm:$0xf]
    %v9152 = vld [vmem:[%s8904 + $0x13c] sm:$0xf]
    %v9153 = vld [vmem:[%s8904 + $0x140] sm:$0xf]
    %v9154 = vld [vmem:[%s8904 + $0x144] sm:$0xf]
    %v9155 = vld [vmem:[%s8904 + $0x148] sm:$0xf]
    %v9156 = vld [vmem:[%s8904 + $0x14c] sm:$0xf]
    %v9157 = vld [vmem:[%s8904 + $0x150] sm:$0xf]
    %v9158 = vld [vmem:[%s8904 + $0x154] sm:$0xf]
    %v9159 = vld [vmem:[%s8904 + $0x158] sm:$0xf]
    %v9160 = vld [vmem:[%s8904 + $0x15c] sm:$0xf]
    %v9161 = vld [vmem:[%s8904 + $0x160] sm:$0xf]
    %v9162 = vld [vmem:[%s8904 + $0x164] sm:$0xf]
    %v9163 = vld [vmem:[%s8904 + $0x168] sm:$0xf]
    %v9164 = vld [vmem:[%s8904 + $0x16c] sm:$0xf]
    %v9165 = vld [vmem:[%s8904 + $0x170] sm:$0xf]
    %v9166 = vld [vmem:[%s8904 + $0x174] sm:$0xf]
    %v9167 = vld [vmem:[%s8904 + $0x178] sm:$0xf]
    %v9168 = vld [vmem:[%s8904 + $0x17c] sm:$0xf]
    %v9169 = vld [vmem:[%s8904 + $0x180] sm:$0xf]
    %v9170 = vld [vmem:[%s8904 + $0x184] sm:$0xf]
    %v9171 = vld [vmem:[%s8904 + $0x188] sm:$0xf]
    %v9172 = vld [vmem:[%s8904 + $0x18c] sm:$0xf]
    %v9173 = vld [vmem:[%s8904 + $0x190] sm:$0xf]
    %v9174 = vld [vmem:[%s8904 + $0x194] sm:$0xf]
    %v9175 = vld [vmem:[%s8904 + $0x198] sm:$0xf]
    %v9176 = vld [vmem:[%s8904 + $0x19c] sm:$0xf]
    %v9177 = vld [vmem:[%s8904 + $0x1a0] sm:$0xf]
    %v9178 = vld [vmem:[%s8904 + $0x1a4] sm:$0xf]
    %v9179 = vld [vmem:[%s8904 + $0x1a8] sm:$0xf]
    %v9180 = vld [vmem:[%s8904 + $0x1ac] sm:$0xf]
    %v9181 = vld [vmem:[%s8904 + $0x1b0] sm:$0xf]
    %v9182 = vld [vmem:[%s8904 + $0x1b4] sm:$0xf]
    %v9183 = vld [vmem:[%s8904 + $0x1b8] sm:$0xf]
    %v9184 = vld [vmem:[%s8904 + $0x1bc] sm:$0xf]
    %v9185 = vld [vmem:[%s8904 + $0x1c0] sm:$0xf]
    %v9186 = vld [vmem:[%s8904 + $0x1c4] sm:$0xf]
    %v9187 = vld [vmem:[%s8904 + $0x1c8] sm:$0xf]
    %v9188 = vld [vmem:[%s8904 + $0x1cc] sm:$0xf]
    %v9189 = vld [vmem:[%s8904 + $0x1d0] sm:$0xf]
    %v9190 = vld [vmem:[%s8904 + $0x1d4] sm:$0xf]
    %v9191 = vld [vmem:[%s8904 + $0x1d8] sm:$0xf]
    %v9192 = vld [vmem:[%s8904 + $0x1dc] sm:$0xf]
    %v9193 = vld [vmem:[%s8904 + $0x1e0] sm:$0xf]
    %v9194 = vld [vmem:[%s8904 + $0x1e4] sm:$0xf]
    %v9195 = vld [vmem:[%s8904 + $0x1e8] sm:$0xf]
    %v9196 = vld [vmem:[%s8904 + $0x1ec] sm:$0xf]
    %v9197 = vld [vmem:[%s8904 + $0x1f0] sm:$0xf]
    %v9198 = vld [vmem:[%s8904 + $0x1f4] sm:$0xf]
    %v9199 = vld [vmem:[%s8904 + $0x1f8] sm:$0xf]
    %v9200 = vld [vmem:[%s8904 + $0x1fc] sm:$0xf]
    %v9265 = vunpack.c.l.b16 %v9137
    %v9266 = vunpack.c.l.b16 %v9138
    %v9267 = vunpack.c.l.b16 %v9139
    %v9268 = vunpack.c.l.b16 %v9140
    %v9269 = vunpack.c.l.b16 %v9141
    %v9270 = vunpack.c.l.b16 %v9142
    %v9271 = vunpack.c.l.b16 %v9143
    %v9272 = vunpack.c.l.b16 %v9144
    %v9273 = vunpack.c.l.b16 %v9145
    %v9274 = vunpack.c.l.b16 %v9146
    %v9275 = vunpack.c.l.b16 %v9147
    %v9276 = vunpack.c.l.b16 %v9148
    %v9277 = vunpack.c.l.b16 %v9149
    %v9278 = vunpack.c.l.b16 %v9150
    %v9279 = vunpack.c.l.b16 %v9151
    %v9280 = vunpack.c.l.b16 %v9152
    %v9281 = vunpack.c.l.b16 %v9153
    %v9282 = vunpack.c.l.b16 %v9154
    %v9283 = vunpack.c.l.b16 %v9155
    %v9284 = vunpack.c.l.b16 %v9156
    %v9285 = vunpack.c.l.b16 %v9157
    %v9286 = vunpack.c.l.b16 %v9158
    %v9287 = vunpack.c.l.b16 %v9159
    %v9288 = vunpack.c.l.b16 %v9160
    %v9289 = vunpack.c.l.b16 %v9161
    %v9290 = vunpack.c.l.b16 %v9162
    %v9291 = vunpack.c.l.b16 %v9163
    %v9292 = vunpack.c.l.b16 %v9164
    %v9293 = vunpack.c.l.b16 %v9165
    %v9294 = vunpack.c.l.b16 %v9166
    %v9295 = vunpack.c.l.b16 %v9167
    %v9296 = vunpack.c.l.b16 %v9168
    %v9297 = vunpack.c.l.b16 %v9169
    %v9298 = vunpack.c.l.b16 %v9170
    %v9299 = vunpack.c.l.b16 %v9171
    %v9300 = vunpack.c.l.b16 %v9172
    %v9301 = vunpack.c.l.b16 %v9173
    %v9302 = vunpack.c.l.b16 %v9174
    %v9303 = vunpack.c.l.b16 %v9175
    %v9304 = vunpack.c.l.b16 %v9176
    %v9305 = vunpack.c.l.b16 %v9177
    %v9306 = vunpack.c.l.b16 %v9178
    %v9307 = vunpack.c.l.b16 %v9179
    %v9308 = vunpack.c.l.b16 %v9180
    %v9309 = vunpack.c.l.b16 %v9181
    %v9310 = vunpack.c.l.b16 %v9182
    %v9311 = vunpack.c.l.b16 %v9183
    %v9312 = vunpack.c.l.b16 %v9184
    %v9313 = vunpack.c.l.b16 %v9185
    %v9314 = vunpack.c.l.b16 %v9186
    %v9315 = vunpack.c.l.b16 %v9187
    %v9316 = vunpack.c.l.b16 %v9188
    %v9317 = vunpack.c.l.b16 %v9189
    %v9318 = vunpack.c.l.b16 %v9190
    %v9319 = vunpack.c.l.b16 %v9191
    %v9320 = vunpack.c.l.b16 %v9192
    %v9321 = vunpack.c.l.b16 %v9193
    %v9322 = vunpack.c.l.b16 %v9194
    %v9323 = vunpack.c.l.b16 %v9195
    %v9324 = vunpack.c.l.b16 %v9196
    %v9325 = vunpack.c.l.b16 %v9197
    %v9326 = vunpack.c.l.b16 %v9198
    %v9327 = vunpack.c.l.b16 %v9199
    %v9328 = vunpack.c.l.b16 %v9200
    %v9329 = vpack.c.b16 %v9266, %v9265
    %v9330 = vpack.c.b16 %v9268, %v9267
    %v9331 = vpack.c.b16 %v9270, %v9269
    %v9332 = vpack.c.b16 %v9272, %v9271
    %v9333 = vpack.c.b16 %v9274, %v9273
    %v9334 = vpack.c.b16 %v9276, %v9275
    %v9335 = vpack.c.b16 %v9278, %v9277
    %v9336 = vpack.c.b16 %v9280, %v9279
    %v9337 = vpack.c.b16 %v9282, %v9281
    %v9338 = vpack.c.b16 %v9284, %v9283
    %v9339 = vpack.c.b16 %v9286, %v9285
    %v9340 = vpack.c.b16 %v9288, %v9287
    %v9341 = vpack.c.b16 %v9290, %v9289
    %v9342 = vpack.c.b16 %v9292, %v9291
    %v9343 = vpack.c.b16 %v9294, %v9293
    %v9344 = vpack.c.b16 %v9296, %v9295
    %v9345 = vpack.c.b16 %v9298, %v9297
    %v9346 = vpack.c.b16 %v9300, %v9299
    %v9347 = vpack.c.b16 %v9302, %v9301
    %v9348 = vpack.c.b16 %v9304, %v9303
    %v9349 = vpack.c.b16 %v9306, %v9305
    %v9350 = vpack.c.b16 %v9308, %v9307
    %v9351 = vpack.c.b16 %v9310, %v9309
    %v9352 = vpack.c.b16 %v9312, %v9311
    %v9353 = vpack.c.b16 %v9314, %v9313
    %v9354 = vpack.c.b16 %v9316, %v9315
    %v9355 = vpack.c.b16 %v9318, %v9317
    %v9356 = vpack.c.b16 %v9320, %v9319
    %v9357 = vpack.c.b16 %v9322, %v9321
    %v9358 = vpack.c.b16 %v9324, %v9323
    %v9359 = vpack.c.b16 %v9326, %v9325
    %v9360 = vpack.c.b16 %v9328, %v9327
    %9393 = vmatprep.subr.bf16.mxu0 0
    %9394 = vmatpush1.bf16.msra.mxu0 %v9336
    %9395 = vmatprep.subr.bf16.mxu0 0
    %9396 = vmatpush1.bf16.msra.mxu0 %v9335
    %9397 = vmatprep.subr.bf16.mxu0 0
    %9398 = vmatpush1.bf16.msra.mxu0 %v9334
    %9399 = vmatprep.subr.bf16.mxu0 0
    %9400 = vmatpush1.bf16.msra.mxu0 %v9333
    %9401 = vmatprep.subr.bf16.mxu0 0
    %9402 = vmatpush1.bf16.msra.mxu0 %v9332
    %9403 = vmatprep.subr.bf16.mxu0 0
    %9404 = vmatpush1.bf16.msra.mxu0 %v9331
    %9405 = vmatprep.subr.bf16.mxu0 0
    %9406 = vmatpush1.bf16.msra.mxu0 %v9330
    %9407 = vmatprep.subr.bf16.mxu0 0
    %9408 = vmatpush1.bf16.msra.mxu0 %v9329
    %9409 = vmatprep.subr.bf16.mxu0 0
    %9410 = vmatpush2.bf16.msra.mxu0 %v9344
    %9411 = vmatprep.subr.bf16.mxu0 0
    %9412 = vmatpush2.bf16.msra.mxu0 %v9343
    %9413 = vmatprep.subr.bf16.mxu0 0
    %9414 = vmatpush2.bf16.msra.mxu0 %v9342
    %9415 = vmatprep.subr.bf16.mxu0 0
    %9416 = vmatpush2.bf16.msra.mxu0 %v9341
    %9417 = vmatprep.subr.bf16.mxu0 0
    %9418 = vmatpush2.bf16.msra.mxu0 %v9340
    %9419 = vmatprep.subr.bf16.mxu0 0
    %9420 = vmatpush2.bf16.msra.mxu0 %v9339
    %9421 = vmatprep.subr.bf16.mxu0 0
    %9422 = vmatpush2.bf16.msra.mxu0 %v9338
    %9423 = vmatprep.subr.bf16.mxu0 0
    %9424 = vmatpush2.bf16.msra.mxu0 %v9337
    %9425 = vmatprep.mubr.bf16.mxu0 %v9134
    %9426 = vmatmul.mubr.bf16.gmra.mxu0 %v9133
    %v9427 = vpop.f32.mrf.mxu0
    %v9428 = vadd.f32 0.0, %v9427
    %v9429 = vpop.f32.mrf.mxu0
    %v9430 = vpop.f32.mrf.mxu0
    %v9431 = vadd.f32 0.0, %v9430
    %v9432 = vpop.f32.mrf.mxu0
    %9433 = vdwg.mxu0
    %9434 = vmatprep.subr.bf16.mxu0 0
    %9435 = vmatpush1.bf16.msra.mxu0 %v9352
    %9436 = vmatprep.subr.bf16.mxu0 0
    %9437 = vmatpush1.bf16.msra.mxu0 %v9351
    %9438 = vmatprep.subr.bf16.mxu0 0
    %9439 = vmatpush1.bf16.msra.mxu0 %v9350
    %9440 = vmatprep.subr.bf16.mxu0 0
    %9441 = vmatpush1.bf16.msra.mxu0 %v9349
    %9442 = vmatprep.subr.bf16.mxu0 0
    %9443 = vmatpush1.bf16.msra.mxu0 %v9348
    %9444 = vmatprep.subr.bf16.mxu0 0
    %9445 = vmatpush1.bf16.msra.mxu0 %v9347
    %9446 = vmatprep.subr.bf16.mxu0 0
    %9447 = vmatpush1.bf16.msra.mxu0 %v9346
    %9448 = vmatprep.subr.bf16.mxu0 0
    %9449 = vmatpush1.bf16.msra.mxu0 %v9345
    %9450 = vmatprep.subr.bf16.mxu0 0
    %9451 = vmatpush2.bf16.msra.mxu0 %v9360
    %9452 = vmatprep.subr.bf16.mxu0 0
    %9453 = vmatpush2.bf16.msra.mxu0 %v9359
    %9454 = vmatprep.subr.bf16.mxu0 0
    %9455 = vmatpush2.bf16.msra.mxu0 %v9358
    %9456 = vmatprep.subr.bf16.mxu0 0
    %9457 = vmatpush2.bf16.msra.mxu0 %v9357
    %9458 = vmatprep.subr.bf16.mxu0 0
    %9459 = vmatpush2.bf16.msra.mxu0 %v9356
    %9460 = vmatprep.subr.bf16.mxu0 0
    %9461 = vmatpush2.bf16.msra.mxu0 %v9355
    %9462 = vmatprep.subr.bf16.mxu0 0
    %9463 = vmatpush2.bf16.msra.mxu0 %v9354
    %9464 = vmatprep.subr.bf16.mxu0 0
    %9465 = vmatpush2.bf16.msra.mxu0 %v9353
    %9466 = vmatprep.mubr.bf16.mxu0 %v9136
    %9467 = vmatmul.mubr.bf16.gmra.mxu0 %v9135
    %v9468 = vpop.f32.mrf.mxu0
    %v9469 = vadd.f32 %v9428, %v9468
    %v9470 = vpop.f32.mrf.mxu0
    %v9471 = vpop.f32.mrf.mxu0
    %v9472 = vadd.f32 %v9431, %v9471
    %v9473 = vpop.f32.mrf.mxu0
    %9474 = vdwg.mxu0
    %v9539 = vunpack.c.l.b16 %v8905
    %v9540 = vunpack.c.l.b16 %v8906
    %v9541 = vunpack.c.l.b16 %v8907
    %v9542 = vunpack.c.l.b16 %v8908
    %v9543 = vunpack.c.l.b16 %v8909
    %v9544 = vunpack.c.l.b16 %v8910
    %v9545 = vunpack.c.l.b16 %v8911
    %v9546 = vunpack.c.l.b16 %v8912
    %v9547 = vunpack.c.l.b16 %v8913
    %v9548 = vunpack.c.l.b16 %v8914
    %v9549 = vunpack.c.l.b16 %v8915
    %v9550 = vunpack.c.l.b16 %v8916
    %v9551 = vunpack.c.l.b16 %v8917
    %v9552 = vunpack.c.l.b16 %v8918
    %v9553 = vunpack.c.l.b16 %v8919
    %v9554 = vunpack.c.l.b16 %v8920
    %v9555 = vunpack.c.l.b16 %v8921
    %v9556 = vunpack.c.l.b16 %v8922
    %v9557 = vunpack.c.l.b16 %v8923
    %v9558 = vunpack.c.l.b16 %v8924
    %v9559 = vunpack.c.l.b16 %v8925
    %v9560 = vunpack.c.l.b16 %v8926
    %v9561 = vunpack.c.l.b16 %v8927
    %v9562 = vunpack.c.l.b16 %v8928
    %v9563 = vunpack.c.l.b16 %v8929
    %v9564 = vunpack.c.l.b16 %v8930
    %v9565 = vunpack.c.l.b16 %v8931
    %v9566 = vunpack.c.l.b16 %v8932
    %v9567 = vunpack.c.l.b16 %v8933
    %v9568 = vunpack.c.l.b16 %v8934
    %v9569 = vunpack.c.l.b16 %v8935
    %v9570 = vunpack.c.l.b16 %v8936
    %v9571 = vunpack.c.l.b16 %v8937
    %v9572 = vunpack.c.l.b16 %v8938
    %v9573 = vunpack.c.l.b16 %v8939
    %v9574 = vunpack.c.l.b16 %v8940
    %v9575 = vunpack.c.l.b16 %v8941
    %v9576 = vunpack.c.l.b16 %v8942
    %v9577 = vunpack.c.l.b16 %v8943
    %v9578 = vunpack.c.l.b16 %v8944
    %v9579 = vunpack.c.l.b16 %v8945
    %v9580 = vunpack.c.l.b16 %v8946
    %v9581 = vunpack.c.l.b16 %v8947
    %v9582 = vunpack.c.l.b16 %v8948
    %v9583 = vunpack.c.l.b16 %v8949
    %v9584 = vunpack.c.l.b16 %v8950
    %v9585 = vunpack.c.l.b16 %v8951
    %v9586 = vunpack.c.l.b16 %v8952
    %v9587 = vunpack.c.l.b16 %v8953
    %v9588 = vunpack.c.l.b16 %v8954
    %v9589 = vunpack.c.l.b16 %v8955
    %v9590 = vunpack.c.l.b16 %v8956
    %v9591 = vunpack.c.l.b16 %v8957
    %v9592 = vunpack.c.l.b16 %v8958
    %v9593 = vunpack.c.l.b16 %v8959
    %v9594 = vunpack.c.l.b16 %v8960
    %v9595 = vunpack.c.l.b16 %v8961
    %v9596 = vunpack.c.l.b16 %v8962
    %v9597 = vunpack.c.l.b16 %v8963
    %v9598 = vunpack.c.l.b16 %v8964
    %v9599 = vunpack.c.l.b16 %v8965
    %v9600 = vunpack.c.l.b16 %v8966
    %v9601 = vunpack.c.l.b16 %v8967
    %v9602 = vunpack.c.l.b16 %v8968
    %v9603 = vpack.c.b16 %v9540, %v9539
    %v9604 = vpack.c.b16 %v9542, %v9541
    %v9605 = vpack.c.b16 %v9544, %v9543
    %v9606 = vpack.c.b16 %v9546, %v9545
    %v9607 = vpack.c.b16 %v9548, %v9547
    %v9608 = vpack.c.b16 %v9550, %v9549
    %v9609 = vpack.c.b16 %v9552, %v9551
    %v9610 = vpack.c.b16 %v9554, %v9553
    %v9611 = vpack.c.b16 %v9556, %v9555
    %v9612 = vpack.c.b16 %v9558, %v9557
    %v9613 = vpack.c.b16 %v9560, %v9559
    %v9614 = vpack.c.b16 %v9562, %v9561
    %v9615 = vpack.c.b16 %v9564, %v9563
    %v9616 = vpack.c.b16 %v9566, %v9565
    %v9617 = vpack.c.b16 %v9568, %v9567
    %v9618 = vpack.c.b16 %v9570, %v9569
    %v9619 = vpack.c.b16 %v9572, %v9571
    %v9620 = vpack.c.b16 %v9574, %v9573
    %v9621 = vpack.c.b16 %v9576, %v9575
    %v9622 = vpack.c.b16 %v9578, %v9577
    %v9623 = vpack.c.b16 %v9580, %v9579
    %v9624 = vpack.c.b16 %v9582, %v9581
    %v9625 = vpack.c.b16 %v9584, %v9583
    %v9626 = vpack.c.b16 %v9586, %v9585
    %v9627 = vpack.c.b16 %v9588, %v9587
    %v9628 = vpack.c.b16 %v9590, %v9589
    %v9629 = vpack.c.b16 %v9592, %v9591
    %v9630 = vpack.c.b16 %v9594, %v9593
    %v9631 = vpack.c.b16 %v9596, %v9595
    %v9632 = vpack.c.b16 %v9598, %v9597
    %v9633 = vpack.c.b16 %v9600, %v9599
    %v9634 = vpack.c.b16 %v9602, %v9601
    %9667 = vmatprep.subr.bf16.mxu0 0
    %9668 = vmatpush1.bf16.msra.mxu0 %v9610
    %9669 = vmatprep.subr.bf16.mxu0 0
    %9670 = vmatpush1.bf16.msra.mxu0 %v9609
    %9671 = vmatprep.subr.bf16.mxu0 0
    %9672 = vmatpush1.bf16.msra.mxu0 %v9608
    %9673 = vmatprep.subr.bf16.mxu0 0
    %9674 = vmatpush1.bf16.msra.mxu0 %v9607
    %9675 = vmatprep.subr.bf16.mxu0 0
    %9676 = vmatpush1.bf16.msra.mxu0 %v9606
    %9677 = vmatprep.subr.bf16.mxu0 0
    %9678 = vmatpush1.bf16.msra.mxu0 %v9605
    %9679 = vmatprep.subr.bf16.mxu0 0
    %9680 = vmatpush1.bf16.msra.mxu0 %v9604
    %9681 = vmatprep.subr.bf16.mxu0 0
    %9682 = vmatpush1.bf16.msra.mxu0 %v9603
    %9683 = vmatprep.subr.bf16.mxu0 0
    %9684 = vmatpush2.bf16.msra.mxu0 %v9618
    %9685 = vmatprep.subr.bf16.mxu0 0
    %9686 = vmatpush2.bf16.msra.mxu0 %v9617
    %9687 = vmatprep.subr.bf16.mxu0 0
    %9688 = vmatpush2.bf16.msra.mxu0 %v9616
    %9689 = vmatprep.subr.bf16.mxu0 0
    %9690 = vmatpush2.bf16.msra.mxu0 %v9615
    %9691 = vmatprep.subr.bf16.mxu0 0
    %9692 = vmatpush2.bf16.msra.mxu0 %v9614
    %9693 = vmatprep.subr.bf16.mxu0 0
    %9694 = vmatpush2.bf16.msra.mxu0 %v9613
    %9695 = vmatprep.subr.bf16.mxu0 0
    %9696 = vmatpush2.bf16.msra.mxu0 %v9612
    %9697 = vmatprep.subr.bf16.mxu0 0
    %9698 = vmatpush2.bf16.msra.mxu0 %v9611
    %9699 = vmatprep.mubr.bf16.mxu0 %v8901
    %9700 = vmatmul.mubr.bf16.gmra.mxu0 %v8900
    %v9701 = vpop.f32.mrf.mxu0
    %v9702 = vadd.f32 %v9469, %v9701
    %v9703 = vpop.f32.mrf.mxu0
    %v9704 = vpop.f32.mrf.mxu0
    %v9705 = vadd.f32 %v9472, %v9704
    %v9706 = vpop.f32.mrf.mxu0
    %9707 = vdwg.mxu0
    %9708 = vmatprep.subr.bf16.mxu0 0
    %9709 = vmatpush1.bf16.msra.mxu0 %v9626
    %9710 = vmatprep.subr.bf16.mxu0 0
    %9711 = vmatpush1.bf16.msra.mxu0 %v9625
    %9712 = vmatprep.subr.bf16.mxu0 0
    %9713 = vmatpush1.bf16.msra.mxu0 %v9624
    %9714 = vmatprep.subr.bf16.mxu0 0
    %9715 = vmatpush1.bf16.msra.mxu0 %v9623
    %9716 = vmatprep.subr.bf16.mxu0 0
    %9717 = vmatpush1.bf16.msra.mxu0 %v9622
    %9718 = vmatprep.subr.bf16.mxu0 0
    %9719 = vmatpush1.bf16.msra.mxu0 %v9621
    %9720 = vmatprep.subr.bf16.mxu0 0
    %9721 = vmatpush1.bf16.msra.mxu0 %v9620
    %9722 = vmatprep.subr.bf16.mxu0 0
    %9723 = vmatpush1.bf16.msra.mxu0 %v9619
    %9724 = vmatprep.subr.bf16.mxu0 0
    %9725 = vmatpush2.bf16.msra.mxu0 %v9634
    %9726 = vmatprep.subr.bf16.mxu0 0
    %9727 = vmatpush2.bf16.msra.mxu0 %v9633
    %9728 = vmatprep.subr.bf16.mxu0 0
    %9729 = vmatpush2.bf16.msra.mxu0 %v9632
    %9730 = vmatprep.subr.bf16.mxu0 0
    %9731 = vmatpush2.bf16.msra.mxu0 %v9631
    %9732 = vmatprep.subr.bf16.mxu0 0
    %9733 = vmatpush2.bf16.msra.mxu0 %v9630
    %9734 = vmatprep.subr.bf16.mxu0 0
    %9735 = vmatpush2.bf16.msra.mxu0 %v9629
    %9736 = vmatprep.subr.bf16.mxu0 0
    %9737 = vmatpush2.bf16.msra.mxu0 %v9628
    %9738 = vmatprep.subr.bf16.mxu0 0
    %9739 = vmatpush2.bf16.msra.mxu0 %v9627
    %9740 = vmatprep.mubr.bf16.mxu0 %v8903
    %9741 = vmatmul.mubr.bf16.gmra.mxu0 %v8902
    %v9742 = vpop.f32.mrf.mxu0
    %v9743 = vadd.f32 %v9702, %v9742
    %v9744 = vpop.f32.mrf.mxu0
    %v9745 = vpop.f32.mrf.mxu0
    %v9746 = vadd.f32 %v9705, %v9745
    %v9747 = vpop.f32.mrf.mxu0
    %9748 = vdwg.mxu0
    %v9749 = vld [vmem:[%s8731 + $0x20] sm:$0xff]
    %v9750 = vld [vmem:[%s8731 + $0x28] sm:$0xff]
    %v9751 = vld [vmem:[%s8731 + $0x60] sm:$0xff]
    %v9752 = vld [vmem:[%s8731 + $0x68] sm:$0xff]
    %v9753 = vld [vmem:[%s8731 + $0xa0] sm:$0xff]
    %v9754 = vld [vmem:[%s8731 + $0xa8] sm:$0xff]
    %v9755 = vld [vmem:[%s8738 + $0x8] sm:$0xf]
    %v9757 = vlaneseq
    %v9758 = vshrl.u32 %v9757, 7
    %v9759 = vsub.s32 0, %v9758
    %v9760 = vrot.slane %v9755, %v9759
    %v9761 = vlaneseq
    %v9762 = vshrl.u32 %v9761, 7
    %v9763 = vsub.s32 1, %v9762
    %v9764 = vrot.slane %v9755, %v9763
    %v9765 = vlaneseq
    %v9766 = vshrl.u32 %v9765, 7
    %v9767 = vsub.s32 2, %v9766
    %v9768 = vrot.slane %v9755, %v9767
    %v9769 = vlaneseq
    %v9770 = vshrl.u32 %v9769, 7
    %v9771 = vsub.s32 3, %v9770
    %v9772 = vrot.slane %v9755, %v9771
    %v9783 = vunpack.c.l.b16 %v9749
    %v9784 = vunpack.c.h.b16 %v9749
    %v9785 = vunpack.c.l.b16 %v9750
    %v9786 = vunpack.c.h.b16 %v9750
    %v9787 = vunpack.c.l.b16 %v9751
    %v9788 = vunpack.c.h.b16 %v9751
    %v9789 = vunpack.c.l.b16 %v9752
    %v9790 = vunpack.c.h.b16 %v9752
    %v9791 = vunpack.c.l.b16 %v9753
    %v9792 = vunpack.c.h.b16 %v9753
    %v9793 = vunpack.c.l.b16 %v9754
    %v9794 = vunpack.c.h.b16 %v9754
    %v9795 = vpack.c.b16 %v9787, %v9783
    %v9796 = vpack.c.b16 %v9788, %v9784
    %v9797 = vpack.c.b16 %v9789, %v9785
    %v9798 = vpack.c.b16 %v9790, %v9786
    %v9799 = vpack.c.b16 %v9791, %v9791
    %v9800 = vpack.c.b16 %v9792, %v9792
    %v9801 = vpack.c.b16 %v9793, %v9793
    %v9802 = vpack.c.b16 %v9794, %v9794
    %v9808 = vsel %vm66, %v9799, 0
    %v9811 = vsel %vm66, %v9800, 0
    %v9814 = vsel %vm66, %v9801, 0
    %v9817 = vsel %vm66, %v9802, 0
    %9819 = vmatprep.subr.bf16.mxu0 0
    %9820 = vmatpush1.bf16.msra.mxu0 0
    %9821 = vmatprep.subr.bf16.mxu0 0
    %9822 = vmatpush1.bf16.msra.mxu0 0
    %9823 = vmatprep.subr.bf16.mxu0 0
    %9824 = vmatpush1.bf16.msra.mxu0 0
    %9825 = vmatprep.subr.bf16.mxu0 0
    %9826 = vmatpush1.bf16.msra.mxu0 0
    %9827 = vmatprep.subr.bf16.mxu0 0
    %9828 = vmatpush1.bf16.msra.mxu0 0
    %9829 = vmatprep.subr.bf16.mxu0 0
    %9830 = vmatpush1.bf16.msra.mxu0 0
    %9831 = vmatprep.subr.bf16.mxu0 %v9811
    %9832 = vmatpush1.bf16.msra.mxu0 %v9808
    %9833 = vmatprep.subr.bf16.mxu0 %v9796
    %9834 = vmatpush1.bf16.msra.mxu0 %v9795
    %9835 = vmatprep.subr.bf16.mxu0 0
    %9836 = vmatpush2.bf16.msra.mxu0 0
    %9837 = vmatprep.subr.bf16.mxu0 0
    %9838 = vmatpush2.bf16.msra.mxu0 0
    %9839 = vmatprep.subr.bf16.mxu0 0
    %9840 = vmatpush2.bf16.msra.mxu0 0
    %9841 = vmatprep.subr.bf16.mxu0 0
    %9842 = vmatpush2.bf16.msra.mxu0 0
    %9843 = vmatprep.subr.bf16.mxu0 0
    %9844 = vmatpush2.bf16.msra.mxu0 0
    %9845 = vmatprep.subr.bf16.mxu0 0
    %9846 = vmatpush2.bf16.msra.mxu0 0
    %9847 = vmatprep.subr.bf16.mxu0 0
    %9848 = vmatpush2.bf16.msra.mxu0 0
    %9849 = vmatprep.subr.bf16.mxu0 0
    %9850 = vmatpush2.bf16.msra.mxu0 0
    %9851 = vmatprep.mubr.bf16.mxu0 0
    %9852 = vmatmul.mubr.bf16.gmra.mxu0 %v8792
    %v9853 = vpop.f32.mrf.mxu0
    %v9854 = vadd.f32 %v9760, %v9853
    %v9855 = vpop.f32.mrf.mxu0
    %v9856 = vadd.f32 %v9764, %v9855
    %v9857 = vpop.f32.mrf.mxu0
    %v9858 = vadd.f32 %v9760, %v9857
    %v9859 = vpop.f32.mrf.mxu0
    %v9860 = vadd.f32 %v9764, %v9859
    %9861 = vdwg.mxu0
    %9862 = vmatprep.subr.bf16.mxu0 0
    %9863 = vmatpush1.bf16.msra.mxu0 0
    %9864 = vmatprep.subr.bf16.mxu0 0
    %9865 = vmatpush1.bf16.msra.mxu0 0
    %9866 = vmatprep.subr.bf16.mxu0 0
    %9867 = vmatpush1.bf16.msra.mxu0 0
    %9868 = vmatprep.subr.bf16.mxu0 0
    %9869 = vmatpush1.bf16.msra.mxu0 0
    %9870 = vmatprep.subr.bf16.mxu0 0
    %9871 = vmatpush1.bf16.msra.mxu0 0
    %9872 = vmatprep.subr.bf16.mxu0 0
    %9873 = vmatpush1.bf16.msra.mxu0 0
    %9874 = vmatprep.subr.bf16.mxu0 %v9817
    %9875 = vmatpush1.bf16.msra.mxu0 %v9814
    %9876 = vmatprep.subr.bf16.mxu0 %v9798
    %9877 = vmatpush1.bf16.msra.mxu0 %v9797
    %9878 = vmatprep.subr.bf16.mxu0 0
    %9879 = vmatpush2.bf16.msra.mxu0 0
    %9880 = vmatprep.subr.bf16.mxu0 0
    %9881 = vmatpush2.bf16.msra.mxu0 0
    %9882 = vmatprep.subr.bf16.mxu0 0
    %9883 = vmatpush2.bf16.msra.mxu0 0
    %9884 = vmatprep.subr.bf16.mxu0 0
    %9885 = vmatpush2.bf16.msra.mxu0 0
    %9886 = vmatprep.subr.bf16.mxu0 0
    %9887 = vmatpush2.bf16.msra.mxu0 0
    %9888 = vmatprep.subr.bf16.mxu0 0
    %9889 = vmatpush2.bf16.msra.mxu0 0
    %9890 = vmatprep.subr.bf16.mxu0 0
    %9891 = vmatpush2.bf16.msra.mxu0 0
    %9892 = vmatprep.subr.bf16.mxu0 0
    %9893 = vmatpush2.bf16.msra.mxu0 0
    %9894 = vmatprep.mubr.bf16.mxu0 0
    %9895 = vmatmul.mubr.bf16.gmra.mxu0 %v8792
    %v9896 = vpop.f32.mrf.mxu0
    %v9897 = vadd.f32 %v9768, %v9896
    %v9898 = vpop.f32.mrf.mxu0
    %v9899 = vadd.f32 %v9772, %v9898
    %v9900 = vpop.f32.mrf.mxu0
    %v9901 = vadd.f32 %v9768, %v9900
    %v9902 = vpop.f32.mrf.mxu0
    %v9903 = vadd.f32 %v9772, %v9902
    %9904 = vdwg.mxu0
    %v9905 = vmax.f32 %v9854, 0.0
    %v9906 = vmax.f32 %v9856, 0.0
    %v9907 = vmax.f32 %v9897, 0.0
    %v9908 = vmax.f32 %v9899, 0.0
    %v9909 = vmax.f32 %v9858, 0.0
    %v9910 = vmax.f32 %v9860, 0.0
    %v9911 = vmax.f32 %v9901, 0.0
    %v9912 = vmax.f32 %v9903, 0.0
    %v9913 = vpack.c.bf16 %v9909, %v9905
    %v9914 = vpack.c.bf16 %v9910, %v9906
    %v9915 = vpack.c.bf16 %v9911, %v9907
    %v9916 = vpack.c.bf16 %v9912, %v9908
    %v9917 = vld [vmem:[%s8904 + $0x200] sm:$0xf]
    %v9918 = vld [vmem:[%s8904 + $0x204] sm:$0xf]
    %v9919 = vld [vmem:[%s8904 + $0x208] sm:$0xf]
    %v9920 = vld [vmem:[%s8904 + $0x20c] sm:$0xf]
    %v9921 = vld [vmem:[%s8904 + $0x210] sm:$0xf]
    %v9922 = vld [vmem:[%s8904 + $0x214] sm:$0xf]
    %v9923 = vld [vmem:[%s8904 + $0x218] sm:$0xf]
    %v9924 = vld [vmem:[%s8904 + $0x21c] sm:$0xf]
    %v9925 = vld [vmem:[%s8904 + $0x220] sm:$0xf]
    %v9926 = vld [vmem:[%s8904 + $0x224] sm:$0xf]
    %v9927 = vld [vmem:[%s8904 + $0x228] sm:$0xf]
    %v9928 = vld [vmem:[%s8904 + $0x22c] sm:$0xf]
    %v9929 = vld [vmem:[%s8904 + $0x230] sm:$0xf]
    %v9930 = vld [vmem:[%s8904 + $0x234] sm:$0xf]
    %v9931 = vld [vmem:[%s8904 + $0x238] sm:$0xf]
    %v9932 = vld [vmem:[%s8904 + $0x23c] sm:$0xf]
    %v9933 = vld [vmem:[%s8904 + $0x240] sm:$0xf]
    %v9934 = vld [vmem:[%s8904 + $0x244] sm:$0xf]
    %v9935 = vld [vmem:[%s8904 + $0x248] sm:$0xf]
    %v9936 = vld [vmem:[%s8904 + $0x24c] sm:$0xf]
    %v9937 = vld [vmem:[%s8904 + $0x250] sm:$0xf]
    %v9938 = vld [vmem:[%s8904 + $0x254] sm:$0xf]
    %v9939 = vld [vmem:[%s8904 + $0x258] sm:$0xf]
    %v9940 = vld [vmem:[%s8904 + $0x25c] sm:$0xf]
    %v9941 = vld [vmem:[%s8904 + $0x260] sm:$0xf]
    %v9942 = vld [vmem:[%s8904 + $0x264] sm:$0xf]
    %v9943 = vld [vmem:[%s8904 + $0x268] sm:$0xf]
    %v9944 = vld [vmem:[%s8904 + $0x26c] sm:$0xf]
    %v9945 = vld [vmem:[%s8904 + $0x270] sm:$0xf]
    %v9946 = vld [vmem:[%s8904 + $0x274] sm:$0xf]
    %v9947 = vld [vmem:[%s8904 + $0x278] sm:$0xf]
    %v9948 = vld [vmem:[%s8904 + $0x27c] sm:$0xf]
    %v9949 = vld [vmem:[%s8904 + $0x280] sm:$0xf]
    %v9950 = vld [vmem:[%s8904 + $0x284] sm:$0xf]
    %v9951 = vld [vmem:[%s8904 + $0x288] sm:$0xf]
    %v9952 = vld [vmem:[%s8904 + $0x28c] sm:$0xf]
    %v9953 = vld [vmem:[%s8904 + $0x290] sm:$0xf]
    %v9954 = vld [vmem:[%s8904 + $0x294] sm:$0xf]
    %v9955 = vld [vmem:[%s8904 + $0x298] sm:$0xf]
    %v9956 = vld [vmem:[%s8904 + $0x29c] sm:$0xf]
    %v9957 = vld [vmem:[%s8904 + $0x2a0] sm:$0xf]
    %v9958 = vld [vmem:[%s8904 + $0x2a4] sm:$0xf]
    %v9959 = vld [vmem:[%s8904 + $0x2a8] sm:$0xf]
    %v9960 = vld [vmem:[%s8904 + $0x2ac] sm:$0xf]
    %v9961 = vld [vmem:[%s8904 + $0x2b0] sm:$0xf]
    %v9962 = vld [vmem:[%s8904 + $0x2b4] sm:$0xf]
    %v9963 = vld [vmem:[%s8904 + $0x2b8] sm:$0xf]
    %v9964 = vld [vmem:[%s8904 + $0x2bc] sm:$0xf]
    %v9965 = vld [vmem:[%s8904 + $0x2c0] sm:$0xf]
    %v9966 = vld [vmem:[%s8904 + $0x2c4] sm:$0xf]
    %v9967 = vld [vmem:[%s8904 + $0x2c8] sm:$0xf]
    %v9968 = vld [vmem:[%s8904 + $0x2cc] sm:$0xf]
    %v9969 = vld [vmem:[%s8904 + $0x2d0] sm:$0xf]
    %v9970 = vld [vmem:[%s8904 + $0x2d4] sm:$0xf]
    %v9971 = vld [vmem:[%s8904 + $0x2d8] sm:$0xf]
    %v9972 = vld [vmem:[%s8904 + $0x2dc] sm:$0xf]
    %v9973 = vld [vmem:[%s8904 + $0x2e0] sm:$0xf]
    %v9974 = vld [vmem:[%s8904 + $0x2e4] sm:$0xf]
    %v9975 = vld [vmem:[%s8904 + $0x2e8] sm:$0xf]
    %v9976 = vld [vmem:[%s8904 + $0x2ec] sm:$0xf]
    %v9977 = vld [vmem:[%s8904 + $0x2f0] sm:$0xf]
    %v9978 = vld [vmem:[%s8904 + $0x2f4] sm:$0xf]
    %v9979 = vld [vmem:[%s8904 + $0x2f8] sm:$0xf]
    %v9980 = vld [vmem:[%s8904 + $0x2fc] sm:$0xf]
    %v10045 = vunpack.c.l.b16 %v9917
    %v10046 = vunpack.c.l.b16 %v9918
    %v10047 = vunpack.c.l.b16 %v9919
    %v10048 = vunpack.c.l.b16 %v9920
    %v10049 = vunpack.c.l.b16 %v9921
    %v10050 = vunpack.c.l.b16 %v9922
    %v10051 = vunpack.c.l.b16 %v9923
    %v10052 = vunpack.c.l.b16 %v9924
    %v10053 = vunpack.c.l.b16 %v9925
    %v10054 = vunpack.c.l.b16 %v9926
    %v10055 = vunpack.c.l.b16 %v9927
    %v10056 = vunpack.c.l.b16 %v9928
    %v10057 = vunpack.c.l.b16 %v9929
    %v10058 = vunpack.c.l.b16 %v9930
    %v10059 = vunpack.c.l.b16 %v9931
    %v10060 = vunpack.c.l.b16 %v9932
    %v10061 = vunpack.c.l.b16 %v9933
    %v10062 = vunpack.c.l.b16 %v9934
    %v10063 = vunpack.c.l.b16 %v9935
    %v10064 = vunpack.c.l.b16 %v9936
    %v10065 = vunpack.c.l.b16 %v9937
    %v10066 = vunpack.c.l.b16 %v9938
    %v10067 = vunpack.c.l.b16 %v9939
    %v10068 = vunpack.c.l.b16 %v9940
    %v10069 = vunpack.c.l.b16 %v9941
    %v10070 = vunpack.c.l.b16 %v9942
    %v10071 = vunpack.c.l.b16 %v9943
    %v10072 = vunpack.c.l.b16 %v9944
    %v10073 = vunpack.c.l.b16 %v9945
    %v10074 = vunpack.c.l.b16 %v9946
    %v10075 = vunpack.c.l.b16 %v9947
    %v10076 = vunpack.c.l.b16 %v9948
    %v10077 = vunpack.c.l.b16 %v9949
    %v10078 = vunpack.c.l.b16 %v9950
    %v10079 = vunpack.c.l.b16 %v9951
    %v10080 = vunpack.c.l.b16 %v9952
    %v10081 = vunpack.c.l.b16 %v9953
    %v10082 = vunpack.c.l.b16 %v9954
    %v10083 = vunpack.c.l.b16 %v9955
    %v10084 = vunpack.c.l.b16 %v9956
    %v10085 = vunpack.c.l.b16 %v9957
    %v10086 = vunpack.c.l.b16 %v9958
    %v10087 = vunpack.c.l.b16 %v9959
    %v10088 = vunpack.c.l.b16 %v9960
    %v10089 = vunpack.c.l.b16 %v9961
    %v10090 = vunpack.c.l.b16 %v9962
    %v10091 = vunpack.c.l.b16 %v9963
    %v10092 = vunpack.c.l.b16 %v9964
    %v10093 = vunpack.c.l.b16 %v9965
    %v10094 = vunpack.c.l.b16 %v9966
    %v10095 = vunpack.c.l.b16 %v9967
    %v10096 = vunpack.c.l.b16 %v9968
    %v10097 = vunpack.c.l.b16 %v9969
    %v10098 = vunpack.c.l.b16 %v9970
    %v10099 = vunpack.c.l.b16 %v9971
    %v10100 = vunpack.c.l.b16 %v9972
    %v10101 = vunpack.c.l.b16 %v9973
    %v10102 = vunpack.c.l.b16 %v9974
    %v10103 = vunpack.c.l.b16 %v9975
    %v10104 = vunpack.c.l.b16 %v9976
    %v10105 = vunpack.c.l.b16 %v9977
    %v10106 = vunpack.c.l.b16 %v9978
    %v10107 = vunpack.c.l.b16 %v9979
    %v10108 = vunpack.c.l.b16 %v9980
    %v10109 = vpack.c.b16 %v10046, %v10045
    %v10110 = vpack.c.b16 %v10048, %v10047
    %v10111 = vpack.c.b16 %v10050, %v10049
    %v10112 = vpack.c.b16 %v10052, %v10051
    %v10113 = vpack.c.b16 %v10054, %v10053
    %v10114 = vpack.c.b16 %v10056, %v10055
    %v10115 = vpack.c.b16 %v10058, %v10057
    %v10116 = vpack.c.b16 %v10060, %v10059
    %v10117 = vpack.c.b16 %v10062, %v10061
    %v10118 = vpack.c.b16 %v10064, %v10063
    %v10119 = vpack.c.b16 %v10066, %v10065
    %v10120 = vpack.c.b16 %v10068, %v10067
    %v10121 = vpack.c.b16 %v10070, %v10069
    %v10122 = vpack.c.b16 %v10072, %v10071
    %v10123 = vpack.c.b16 %v10074, %v10073
    %v10124 = vpack.c.b16 %v10076, %v10075
    %v10125 = vpack.c.b16 %v10078, %v10077
    %v10126 = vpack.c.b16 %v10080, %v10079
    %v10127 = vpack.c.b16 %v10082, %v10081
    %v10128 = vpack.c.b16 %v10084, %v10083
    %v10129 = vpack.c.b16 %v10086, %v10085
    %v10130 = vpack.c.b16 %v10088, %v10087
    %v10131 = vpack.c.b16 %v10090, %v10089
    %v10132 = vpack.c.b16 %v10092, %v10091
    %v10133 = vpack.c.b16 %v10094, %v10093
    %v10134 = vpack.c.b16 %v10096, %v10095
    %v10135 = vpack.c.b16 %v10098, %v10097
    %v10136 = vpack.c.b16 %v10100, %v10099
    %v10137 = vpack.c.b16 %v10102, %v10101
    %v10138 = vpack.c.b16 %v10104, %v10103
    %v10139 = vpack.c.b16 %v10106, %v10105
    %v10140 = vpack.c.b16 %v10108, %v10107
    %10173 = vmatprep.subr.bf16.mxu0 0
    %10174 = vmatpush1.bf16.msra.mxu0 %v10116
    %10175 = vmatprep.subr.bf16.mxu0 0
    %10176 = vmatpush1.bf16.msra.mxu0 %v10115
    %10177 = vmatprep.subr.bf16.mxu0 0
    %10178 = vmatpush1.bf16.msra.mxu0 %v10114
    %10179 = vmatprep.subr.bf16.mxu0 0
    %10180 = vmatpush1.bf16.msra.mxu0 %v10113
    %10181 = vmatprep.subr.bf16.mxu0 0
    %10182 = vmatpush1.bf16.msra.mxu0 %v10112
    %10183 = vmatprep.subr.bf16.mxu0 0
    %10184 = vmatpush1.bf16.msra.mxu0 %v10111
    %10185 = vmatprep.subr.bf16.mxu0 0
    %10186 = vmatpush1.bf16.msra.mxu0 %v10110
    %10187 = vmatprep.subr.bf16.mxu0 0
    %10188 = vmatpush1.bf16.msra.mxu0 %v10109
    %10189 = vmatprep.subr.bf16.mxu0 0
    %10190 = vmatpush2.bf16.msra.mxu0 %v10124
    %10191 = vmatprep.subr.bf16.mxu0 0
    %10192 = vmatpush2.bf16.msra.mxu0 %v10123
    %10193 = vmatprep.subr.bf16.mxu0 0
    %10194 = vmatpush2.bf16.msra.mxu0 %v10122
    %10195 = vmatprep.subr.bf16.mxu0 0
    %10196 = vmatpush2.bf16.msra.mxu0 %v10121
    %10197 = vmatprep.subr.bf16.mxu0 0
    %10198 = vmatpush2.bf16.msra.mxu0 %v10120
    %10199 = vmatprep.subr.bf16.mxu0 0
    %10200 = vmatpush2.bf16.msra.mxu0 %v10119
    %10201 = vmatprep.subr.bf16.mxu0 0
    %10202 = vmatpush2.bf16.msra.mxu0 %v10118
    %10203 = vmatprep.subr.bf16.mxu0 0
    %10204 = vmatpush2.bf16.msra.mxu0 %v10117
    %10205 = vmatprep.mubr.bf16.mxu0 %v9914
    %10206 = vmatmul.mubr.bf16.gmra.mxu0 %v9913
    %v10207 = vpop.f32.mrf.mxu0
    %v10208 = vadd.f32 0.0, %v10207
    %v10209 = vpop.f32.mrf.mxu0
    %v10210 = vpop.f32.mrf.mxu0
    %v10211 = vadd.f32 0.0, %v10210
    %v10212 = vpop.f32.mrf.mxu0
    %10213 = vdwg.mxu0
    %10214 = vmatprep.subr.bf16.mxu0 0
    %10215 = vmatpush1.bf16.msra.mxu0 %v10132
    %10216 = vmatprep.subr.bf16.mxu0 0
    %10217 = vmatpush1.bf16.msra.mxu0 %v10131
    %10218 = vmatprep.subr.bf16.mxu0 0
    %10219 = vmatpush1.bf16.msra.mxu0 %v10130
    %10220 = vmatprep.subr.bf16.mxu0 0
    %10221 = vmatpush1.bf16.msra.mxu0 %v10129
    %10222 = vmatprep.subr.bf16.mxu0 0
    %10223 = vmatpush1.bf16.msra.mxu0 %v10128
    %10224 = vmatprep.subr.bf16.mxu0 0
    %10225 = vmatpush1.bf16.msra.mxu0 %v10127
    %10226 = vmatprep.subr.bf16.mxu0 0
    %10227 = vmatpush1.bf16.msra.mxu0 %v10126
    %10228 = vmatprep.subr.bf16.mxu0 0
    %10229 = vmatpush1.bf16.msra.mxu0 %v10125
    %10230 = vmatprep.subr.bf16.mxu0 0
    %10231 = vmatpush2.bf16.msra.mxu0 %v10140
    %10232 = vmatprep.subr.bf16.mxu0 0
    %10233 = vmatpush2.bf16.msra.mxu0 %v10139
    %10234 = vmatprep.subr.bf16.mxu0 0
    %10235 = vmatpush2.bf16.msra.mxu0 %v10138
    %10236 = vmatprep.subr.bf16.mxu0 0
    %10237 = vmatpush2.bf16.msra.mxu0 %v10137
    %10238 = vmatprep.subr.bf16.mxu0 0
    %10239 = vmatpush2.bf16.msra.mxu0 %v10136
    %10240 = vmatprep.subr.bf16.mxu0 0
    %10241 = vmatpush2.bf16.msra.mxu0 %v10135
    %10242 = vmatprep.subr.bf16.mxu0 0
    %10243 = vmatpush2.bf16.msra.mxu0 %v10134
    %10244 = vmatprep.subr.bf16.mxu0 0
    %10245 = vmatpush2.bf16.msra.mxu0 %v10133
    %10246 = vmatprep.mubr.bf16.mxu0 %v9916
    %10247 = vmatmul.mubr.bf16.gmra.mxu0 %v9915
    %v10248 = vpop.f32.mrf.mxu0
    %v10249 = vadd.f32 %v10208, %v10248
    %v10250 = vpop.f32.mrf.mxu0
    %v10251 = vpop.f32.mrf.mxu0
    %v10252 = vadd.f32 %v10211, %v10251
    %v10253 = vpop.f32.mrf.mxu0
    %10254 = vdwg.mxu0
    %v10255 = vadd.f32 %v9743, %v10249
    %v10256 = vadd.f32 %v9746, %v10252
    %v10257 = vld [vmem:[%s8731 + $0x30] sm:$0xff]
    %v10258 = vld [vmem:[%s8731 + $0x38] sm:$0xff]
    %v10259 = vld [vmem:[%s8731 + $0x70] sm:$0xff]
    %v10260 = vld [vmem:[%s8731 + $0x78] sm:$0xff]
    %v10261 = vld [vmem:[%s8731 + $0xb0] sm:$0xff]
    %v10262 = vld [vmem:[%s8731 + $0xb8] sm:$0xff]
    %v10263 = vld [vmem:[%s8738 + $0xc] sm:$0xf]
    %v10265 = vlaneseq
    %v10266 = vshrl.u32 %v10265, 7
    %v10267 = vsub.s32 0, %v10266
    %v10268 = vrot.slane %v10263, %v10267
    %v10269 = vlaneseq
    %v10270 = vshrl.u32 %v10269, 7
    %v10271 = vsub.s32 1, %v10270
    %v10272 = vrot.slane %v10263, %v10271
    %v10273 = vlaneseq
    %v10274 = vshrl.u32 %v10273, 7
    %v10275 = vsub.s32 2, %v10274
    %v10276 = vrot.slane %v10263, %v10275
    %v10277 = vlaneseq
    %v10278 = vshrl.u32 %v10277, 7
    %v10279 = vsub.s32 3, %v10278
    %v10280 = vrot.slane %v10263, %v10279
    %v10291 = vunpack.c.l.b16 %v10257
    %v10292 = vunpack.c.h.b16 %v10257
    %v10293 = vunpack.c.l.b16 %v10258
    %v10294 = vunpack.c.h.b16 %v10258
    %v10295 = vunpack.c.l.b16 %v10259
    %v10296 = vunpack.c.h.b16 %v10259
    %v10297 = vunpack.c.l.b16 %v10260
    %v10298 = vunpack.c.h.b16 %v10260
    %v10299 = vunpack.c.l.b16 %v10261
    %v10300 = vunpack.c.h.b16 %v10261
    %v10301 = vunpack.c.l.b16 %v10262
    %v10302 = vunpack.c.h.b16 %v10262
    %v10303 = vpack.c.b16 %v10295, %v10291
    %v10304 = vpack.c.b16 %v10296, %v10292
    %v10305 = vpack.c.b16 %v10297, %v10293
    %v10306 = vpack.c.b16 %v10298, %v10294
    %v10307 = vpack.c.b16 %v10299, %v10299
    %v10308 = vpack.c.b16 %v10300, %v10300
    %v10309 = vpack.c.b16 %v10301, %v10301
    %v10310 = vpack.c.b16 %v10302, %v10302
    %v10316 = vsel %vm66, %v10307, 0
    %v10319 = vsel %vm66, %v10308, 0
    %v10322 = vsel %vm66, %v10309, 0
    %v10325 = vsel %vm66, %v10310, 0
    %10327 = vmatprep.subr.bf16.mxu0 0
    %10328 = vmatpush1.bf16.msra.mxu0 0
    %10329 = vmatprep.subr.bf16.mxu0 0
    %10330 = vmatpush1.bf16.msra.mxu0 0
    %10331 = vmatprep.subr.bf16.mxu0 0
    %10332 = vmatpush1.bf16.msra.mxu0 0
    %10333 = vmatprep.subr.bf16.mxu0 0
    %10334 = vmatpush1.bf16.msra.mxu0 0
    %10335 = vmatprep.subr.bf16.mxu0 0
    %10336 = vmatpush1.bf16.msra.mxu0 0
    %10337 = vmatprep.subr.bf16.mxu0 0
    %10338 = vmatpush1.bf16.msra.mxu0 0
    %10339 = vmatprep.subr.bf16.mxu0 %v10319
    %10340 = vmatpush1.bf16.msra.mxu0 %v10316
    %10341 = vmatprep.subr.bf16.mxu0 %v10304
    %10342 = vmatpush1.bf16.msra.mxu0 %v10303
    %10343 = vmatprep.subr.bf16.mxu0 0
    %10344 = vmatpush2.bf16.msra.mxu0 0
    %10345 = vmatprep.subr.bf16.mxu0 0
    %10346 = vmatpush2.bf16.msra.mxu0 0
    %10347 = vmatprep.subr.bf16.mxu0 0
    %10348 = vmatpush2.bf16.msra.mxu0 0
    %10349 = vmatprep.subr.bf16.mxu0 0
    %10350 = vmatpush2.bf16.msra.mxu0 0
    %10351 = vmatprep.subr.bf16.mxu0 0
    %10352 = vmatpush2.bf16.msra.mxu0 0
    %10353 = vmatprep.subr.bf16.mxu0 0
    %10354 = vmatpush2.bf16.msra.mxu0 0
    %10355 = vmatprep.subr.bf16.mxu0 0
    %10356 = vmatpush2.bf16.msra.mxu0 0
    %10357 = vmatprep.subr.bf16.mxu0 0
    %10358 = vmatpush2.bf16.msra.mxu0 0
    %10359 = vmatprep.mubr.bf16.mxu0 0
    %10360 = vmatmul.mubr.bf16.gmra.mxu0 %v8792
    %v10361 = vpop.f32.mrf.mxu0
    %v10362 = vadd.f32 %v10268, %v10361
    %v10363 = vpop.f32.mrf.mxu0
    %v10364 = vadd.f32 %v10272, %v10363
    %v10365 = vpop.f32.mrf.mxu0
    %v10366 = vadd.f32 %v10268, %v10365
    %v10367 = vpop.f32.mrf.mxu0
    %v10368 = vadd.f32 %v10272, %v10367
    %10369 = vdwg.mxu0
    %10370 = vmatprep.subr.bf16.mxu0 0
    %10371 = vmatpush1.bf16.msra.mxu0 0
    %10372 = vmatprep.subr.bf16.mxu0 0
    %10373 = vmatpush1.bf16.msra.mxu0 0
    %10374 = vmatprep.subr.bf16.mxu0 0
    %10375 = vmatpush1.bf16.msra.mxu0 0
    %10376 = vmatprep.subr.bf16.mxu0 0
    %10377 = vmatpush1.bf16.msra.mxu0 0
    %10378 = vmatprep.subr.bf16.mxu0 0
    %10379 = vmatpush1.bf16.msra.mxu0 0
    %10380 = vmatprep.subr.bf16.mxu0 0
    %10381 = vmatpush1.bf16.msra.mxu0 0
    %10382 = vmatprep.subr.bf16.mxu0 %v10325
    %10383 = vmatpush1.bf16.msra.mxu0 %v10322
    %10384 = vmatprep.subr.bf16.mxu0 %v10306
    %10385 = vmatpush1.bf16.msra.mxu0 %v10305
    %10386 = vmatprep.subr.bf16.mxu0 0
    %10387 = vmatpush2.bf16.msra.mxu0 0
    %10388 = vmatprep.subr.bf16.mxu0 0
    %10389 = vmatpush2.bf16.msra.mxu0 0
    %10390 = vmatprep.subr.bf16.mxu0 0
    %10391 = vmatpush2.bf16.msra.mxu0 0
    %10392 = vmatprep.subr.bf16.mxu0 0
    %10393 = vmatpush2.bf16.msra.mxu0 0
    %10394 = vmatprep.subr.bf16.mxu0 0
    %10395 = vmatpush2.bf16.msra.mxu0 0
    %10396 = vmatprep.subr.bf16.mxu0 0
    %10397 = vmatpush2.bf16.msra.mxu0 0
    %10398 = vmatprep.subr.bf16.mxu0 0
    %10399 = vmatpush2.bf16.msra.mxu0 0
    %10400 = vmatprep.subr.bf16.mxu0 0
    %10401 = vmatpush2.bf16.msra.mxu0 0
    %10402 = vmatprep.mubr.bf16.mxu0 0
    %10403 = vmatmul.mubr.bf16.gmra.mxu0 %v8792
    %v10404 = vpop.f32.mrf.mxu0
    %v10405 = vadd.f32 %v10276, %v10404
    %v10406 = vpop.f32.mrf.mxu0
    %v10407 = vadd.f32 %v10280, %v10406
    %v10408 = vpop.f32.mrf.mxu0
    %v10409 = vadd.f32 %v10276, %v10408
    %v10410 = vpop.f32.mrf.mxu0
    %v10411 = vadd.f32 %v10280, %v10410
    %10412 = vdwg.mxu0
    %v10413 = vmax.f32 %v10362, 0.0
    %v10414 = vmax.f32 %v10364, 0.0
    %v10415 = vmax.f32 %v10405, 0.0
    %v10416 = vmax.f32 %v10407, 0.0
    %v10417 = vmax.f32 %v10366, 0.0
    %v10418 = vmax.f32 %v10368, 0.0
    %v10419 = vmax.f32 %v10409, 0.0
    %v10420 = vmax.f32 %v10411, 0.0
    %v10421 = vpack.c.bf16 %v10417, %v10413
    %v10422 = vpack.c.bf16 %v10418, %v10414
    %v10423 = vpack.c.bf16 %v10419, %v10415
    %v10424 = vpack.c.bf16 %v10420, %v10416
    %v10425 = vld [vmem:[%s8904 + $0x300] sm:$0xf]
    %v10426 = vld [vmem:[%s8904 + $0x304] sm:$0xf]
    %v10427 = vld [vmem:[%s8904 + $0x308] sm:$0xf]
    %v10428 = vld [vmem:[%s8904 + $0x30c] sm:$0xf]
    %v10429 = vld [vmem:[%s8904 + $0x310] sm:$0xf]
    %v10430 = vld [vmem:[%s8904 + $0x314] sm:$0xf]
    %v10431 = vld [vmem:[%s8904 + $0x318] sm:$0xf]
    %v10432 = vld [vmem:[%s8904 + $0x31c] sm:$0xf]
    %v10433 = vld [vmem:[%s8904 + $0x320] sm:$0xf]
    %v10434 = vld [vmem:[%s8904 + $0x324] sm:$0xf]
    %v10435 = vld [vmem:[%s8904 + $0x328] sm:$0xf]
    %v10436 = vld [vmem:[%s8904 + $0x32c] sm:$0xf]
    %v10437 = vld [vmem:[%s8904 + $0x330] sm:$0xf]
    %v10438 = vld [vmem:[%s8904 + $0x334] sm:$0xf]
    %v10439 = vld [vmem:[%s8904 + $0x338] sm:$0xf]
    %v10440 = vld [vmem:[%s8904 + $0x33c] sm:$0xf]
    %v10441 = vld [vmem:[%s8904 + $0x340] sm:$0xf]
    %v10442 = vld [vmem:[%s8904 + $0x344] sm:$0xf]
    %v10443 = vld [vmem:[%s8904 + $0x348] sm:$0xf]
    %v10444 = vld [vmem:[%s8904 + $0x34c] sm:$0xf]
    %v10445 = vld [vmem:[%s8904 + $0x350] sm:$0xf]
    %v10446 = vld [vmem:[%s8904 + $0x354] sm:$0xf]
    %v10447 = vld [vmem:[%s8904 + $0x358] sm:$0xf]
    %v10448 = vld [vmem:[%s8904 + $0x35c] sm:$0xf]
    %v10449 = vld [vmem:[%s8904 + $0x360] sm:$0xf]
    %v10450 = vld [vmem:[%s8904 + $0x364] sm:$0xf]
    %v10451 = vld [vmem:[%s8904 + $0x368] sm:$0xf]
    %v10452 = vld [vmem:[%s8904 + $0x36c] sm:$0xf]
    %v10453 = vld [vmem:[%s8904 + $0x370] sm:$0xf]
    %v10454 = vld [vmem:[%s8904 + $0x374] sm:$0xf]
    %v10455 = vld [vmem:[%s8904 + $0x378] sm:$0xf]
    %v10456 = vld [vmem:[%s8904 + $0x37c] sm:$0xf]
    %v10457 = vld [vmem:[%s8904 + $0x380] sm:$0xf]
    %v10458 = vld [vmem:[%s8904 + $0x384] sm:$0xf]
    %v10459 = vld [vmem:[%s8904 + $0x388] sm:$0xf]
    %v10460 = vld [vmem:[%s8904 + $0x38c] sm:$0xf]
    %v10461 = vld [vmem:[%s8904 + $0x390] sm:$0xf]
    %v10462 = vld [vmem:[%s8904 + $0x394] sm:$0xf]
    %v10463 = vld [vmem:[%s8904 + $0x398] sm:$0xf]
    %v10464 = vld [vmem:[%s8904 + $0x39c] sm:$0xf]
    %v10465 = vld [vmem:[%s8904 + $0x3a0] sm:$0xf]
    %v10466 = vld [vmem:[%s8904 + $0x3a4] sm:$0xf]
    %v10467 = vld [vmem:[%s8904 + $0x3a8] sm:$0xf]
    %v10468 = vld [vmem:[%s8904 + $0x3ac] sm:$0xf]
    %v10469 = vld [vmem:[%s8904 + $0x3b0] sm:$0xf]
    %v10470 = vld [vmem:[%s8904 + $0x3b4] sm:$0xf]
    %v10471 = vld [vmem:[%s8904 + $0x3b8] sm:$0xf]
    %v10472 = vld [vmem:[%s8904 + $0x3bc] sm:$0xf]
    %v10473 = vld [vmem:[%s8904 + $0x3c0] sm:$0xf]
    %v10474 = vld [vmem:[%s8904 + $0x3c4] sm:$0xf]
    %v10475 = vld [vmem:[%s8904 + $0x3c8] sm:$0xf]
    %v10476 = vld [vmem:[%s8904 + $0x3cc] sm:$0xf]
    %v10477 = vld [vmem:[%s8904 + $0x3d0] sm:$0xf]
    %v10478 = vld [vmem:[%s8904 + $0x3d4] sm:$0xf]
    %v10479 = vld [vmem:[%s8904 + $0x3d8] sm:$0xf]
    %v10480 = vld [vmem:[%s8904 + $0x3dc] sm:$0xf]
    %v10481 = vld [vmem:[%s8904 + $0x3e0] sm:$0xf]
    %v10482 = vld [vmem:[%s8904 + $0x3e4] sm:$0xf]
    %v10483 = vld [vmem:[%s8904 + $0x3e8] sm:$0xf]
    %v10484 = vld [vmem:[%s8904 + $0x3ec] sm:$0xf]
    %v10485 = vld [vmem:[%s8904 + $0x3f0] sm:$0xf]
    %v10486 = vld [vmem:[%s8904 + $0x3f4] sm:$0xf]
    %v10487 = vld [vmem:[%s8904 + $0x3f8] sm:$0xf]
    %v10488 = vld [vmem:[%s8904 + $0x3fc] sm:$0xf]
    %v10553 = vunpack.c.l.b16 %v10425
    %v10554 = vunpack.c.l.b16 %v10426
    %v10555 = vunpack.c.l.b16 %v10427
    %v10556 = vunpack.c.l.b16 %v10428
    %v10557 = vunpack.c.l.b16 %v10429
    %v10558 = vunpack.c.l.b16 %v10430
    %v10559 = vunpack.c.l.b16 %v10431
    %v10560 = vunpack.c.l.b16 %v10432
    %v10561 = vunpack.c.l.b16 %v10433
    %v10562 = vunpack.c.l.b16 %v10434
    %v10563 = vunpack.c.l.b16 %v10435
    %v10564 = vunpack.c.l.b16 %v10436
    %v10565 = vunpack.c.l.b16 %v10437
    %v10566 = vunpack.c.l.b16 %v10438
    %v10567 = vunpack.c.l.b16 %v10439
    %v10568 = vunpack.c.l.b16 %v10440
    %v10569 = vunpack.c.l.b16 %v10441
    %v10570 = vunpack.c.l.b16 %v10442
    %v10571 = vunpack.c.l.b16 %v10443
    %v10572 = vunpack.c.l.b16 %v10444
    %v10573 = vunpack.c.l.b16 %v10445
    %v10574 = vunpack.c.l.b16 %v10446
    %v10575 = vunpack.c.l.b16 %v10447
    %v10576 = vunpack.c.l.b16 %v10448
    %v10577 = vunpack.c.l.b16 %v10449
    %v10578 = vunpack.c.l.b16 %v10450
    %v10579 = vunpack.c.l.b16 %v10451
    %v10580 = vunpack.c.l.b16 %v10452
    %v10581 = vunpack.c.l.b16 %v10453
    %v10582 = vunpack.c.l.b16 %v10454
    %v10583 = vunpack.c.l.b16 %v10455
    %v10584 = vunpack.c.l.b16 %v10456
    %v10585 = vunpack.c.l.b16 %v10457
    %v10586 = vunpack.c.l.b16 %v10458
    %v10587 = vunpack.c.l.b16 %v10459
    %v10588 = vunpack.c.l.b16 %v10460
    %v10589 = vunpack.c.l.b16 %v10461
    %v10590 = vunpack.c.l.b16 %v10462
    %v10591 = vunpack.c.l.b16 %v10463
    %v10592 = vunpack.c.l.b16 %v10464
    %v10593 = vunpack.c.l.b16 %v10465
    %v10594 = vunpack.c.l.b16 %v10466
    %v10595 = vunpack.c.l.b16 %v10467
    %v10596 = vunpack.c.l.b16 %v10468
    %v10597 = vunpack.c.l.b16 %v10469
    %v10598 = vunpack.c.l.b16 %v10470
    %v10599 = vunpack.c.l.b16 %v10471
    %v10600 = vunpack.c.l.b16 %v10472
    %v10601 = vunpack.c.l.b16 %v10473
    %v10602 = vunpack.c.l.b16 %v10474
    %v10603 = vunpack.c.l.b16 %v10475
    %v10604 = vunpack.c.l.b16 %v10476
    %v10605 = vunpack.c.l.b16 %v10477
    %v10606 = vunpack.c.l.b16 %v10478
    %v10607 = vunpack.c.l.b16 %v10479
    %v10608 = vunpack.c.l.b16 %v10480
    %v10609 = vunpack.c.l.b16 %v10481
    %v10610 = vunpack.c.l.b16 %v10482
    %v10611 = vunpack.c.l.b16 %v10483
    %v10612 = vunpack.c.l.b16 %v10484
    %v10613 = vunpack.c.l.b16 %v10485
    %v10614 = vunpack.c.l.b16 %v10486
    %v10615 = vunpack.c.l.b16 %v10487
    %v10616 = vunpack.c.l.b16 %v10488
    %v10617 = vpack.c.b16 %v10554, %v10553
    %v10618 = vpack.c.b16 %v10556, %v10555
    %v10619 = vpack.c.b16 %v10558, %v10557
    %v10620 = vpack.c.b16 %v10560, %v10559
    %v10621 = vpack.c.b16 %v10562, %v10561
    %v10622 = vpack.c.b16 %v10564, %v10563
    %v10623 = vpack.c.b16 %v10566, %v10565
    %v10624 = vpack.c.b16 %v10568, %v10567
    %v10625 = vpack.c.b16 %v10570, %v10569
    %v10626 = vpack.c.b16 %v10572, %v10571
    %v10627 = vpack.c.b16 %v10574, %v10573
    %v10628 = vpack.c.b16 %v10576, %v10575
    %v10629 = vpack.c.b16 %v10578, %v10577
    %v10630 = vpack.c.b16 %v10580, %v10579
    %v10631 = vpack.c.b16 %v10582, %v10581
    %v10632 = vpack.c.b16 %v10584, %v10583
    %v10633 = vpack.c.b16 %v10586, %v10585
    %v10634 = vpack.c.b16 %v10588, %v10587
    %v10635 = vpack.c.b16 %v10590, %v10589
    %v10636 = vpack.c.b16 %v10592, %v10591
    %v10637 = vpack.c.b16 %v10594, %v10593
    %v10638 = vpack.c.b16 %v10596, %v10595
    %v10639 = vpack.c.b16 %v10598, %v10597
    %v10640 = vpack.c.b16 %v10600, %v10599
    %v10641 = vpack.c.b16 %v10602, %v10601
    %v10642 = vpack.c.b16 %v10604, %v10603
    %v10643 = vpack.c.b16 %v10606, %v10605
    %v10644 = vpack.c.b16 %v10608, %v10607
    %v10645 = vpack.c.b16 %v10610, %v10609
    %v10646 = vpack.c.b16 %v10612, %v10611
    %v10647 = vpack.c.b16 %v10614, %v10613
    %v10648 = vpack.c.b16 %v10616, %v10615
    %10681 = vmatprep.subr.bf16.mxu0 0
    %10682 = vmatpush1.bf16.msra.mxu0 %v10624
    %10683 = vmatprep.subr.bf16.mxu0 0
    %10684 = vmatpush1.bf16.msra.mxu0 %v10623
    %10685 = vmatprep.subr.bf16.mxu0 0
    %10686 = vmatpush1.bf16.msra.mxu0 %v10622
    %10687 = vmatprep.subr.bf16.mxu0 0
    %10688 = vmatpush1.bf16.msra.mxu0 %v10621
    %10689 = vmatprep.subr.bf16.mxu0 0
    %10690 = vmatpush1.bf16.msra.mxu0 %v10620
    %10691 = vmatprep.subr.bf16.mxu0 0
    %10692 = vmatpush1.bf16.msra.mxu0 %v10619
    %10693 = vmatprep.subr.bf16.mxu0 0
    %10694 = vmatpush1.bf16.msra.mxu0 %v10618
    %10695 = vmatprep.subr.bf16.mxu0 0
    %10696 = vmatpush1.bf16.msra.mxu0 %v10617
    %10697 = vmatprep.subr.bf16.mxu0 0
    %10698 = vmatpush2.bf16.msra.mxu0 %v10632
    %10699 = vmatprep.subr.bf16.mxu0 0
    %10700 = vmatpush2.bf16.msra.mxu0 %v10631
    %10701 = vmatprep.subr.bf16.mxu0 0
    %10702 = vmatpush2.bf16.msra.mxu0 %v10630
    %10703 = vmatprep.subr.bf16.mxu0 0
    %10704 = vmatpush2.bf16.msra.mxu0 %v10629
    %10705 = vmatprep.subr.bf16.mxu0 0
    %10706 = vmatpush2.bf16.msra.mxu0 %v10628
    %10707 = vmatprep.subr.bf16.mxu0 0
    %10708 = vmatpush2.bf16.msra.mxu0 %v10627
    %10709 = vmatprep.subr.bf16.mxu0 0
    %10710 = vmatpush2.bf16.msra.mxu0 %v10626
    %10711 = vmatprep.subr.bf16.mxu0 0
    %10712 = vmatpush2.bf16.msra.mxu0 %v10625
    %10713 = vmatprep.mubr.bf16.mxu0 %v10422
    %10714 = vmatmul.mubr.bf16.gmra.mxu0 %v10421
    %v10715 = vpop.f32.mrf.mxu0
    %v10716 = vadd.f32 0.0, %v10715
    %v10717 = vpop.f32.mrf.mxu0
    %v10718 = vpop.f32.mrf.mxu0
    %v10719 = vadd.f32 0.0, %v10718
    %v10720 = vpop.f32.mrf.mxu0
    %10721 = vdwg.mxu0
    %10722 = vmatprep.subr.bf16.mxu0 0
    %10723 = vmatpush1.bf16.msra.mxu0 %v10640
    %10724 = vmatprep.subr.bf16.mxu0 0
    %10725 = vmatpush1.bf16.msra.mxu0 %v10639
    %10726 = vmatprep.subr.bf16.mxu0 0
    %10727 = vmatpush1.bf16.msra.mxu0 %v10638
    %10728 = vmatprep.subr.bf16.mxu0 0
    %10729 = vmatpush1.bf16.msra.mxu0 %v10637
    %10730 = vmatprep.subr.bf16.mxu0 0
    %10731 = vmatpush1.bf16.msra.mxu0 %v10636
    %10732 = vmatprep.subr.bf16.mxu0 0
    %10733 = vmatpush1.bf16.msra.mxu0 %v10635
    %10734 = vmatprep.subr.bf16.mxu0 0
    %10735 = vmatpush1.bf16.msra.mxu0 %v10634
    %10736 = vmatprep.subr.bf16.mxu0 0
    %10737 = vmatpush1.bf16.msra.mxu0 %v10633
    %10738 = vmatprep.subr.bf16.mxu0 0
    %10739 = vmatpush2.bf16.msra.mxu0 %v10648
    %10740 = vmatprep.subr.bf16.mxu0 0
    %10741 = vmatpush2.bf16.msra.mxu0 %v10647
    %10742 = vmatprep.subr.bf16.mxu0 0
    %10743 = vmatpush2.bf16.msra.mxu0 %v10646
    %10744 = vmatprep.subr.bf16.mxu0 0
    %10745 = vmatpush2.bf16.msra.mxu0 %v10645
    %10746 = vmatprep.subr.bf16.mxu0 0
    %10747 = vmatpush2.bf16.msra.mxu0 %v10644
    %10748 = vmatprep.subr.bf16.mxu0 0
    %10749 = vmatpush2.bf16.msra.mxu0 %v10643
    %10750 = vmatprep.subr.bf16.mxu0 0
    %10751 = vmatpush2.bf16.msra.mxu0 %v10642
    %10752 = vmatprep.subr.bf16.mxu0 0
    %10753 = vmatpush2.bf16.msra.mxu0 %v10641
    %10754 = vmatprep.mubr.bf16.mxu0 %v10424
    %10755 = vmatmul.mubr.bf16.gmra.mxu0 %v10423
    %v10756 = vpop.f32.mrf.mxu0
    %v10757 = vadd.f32 %v10716, %v10756
    %v10758 = vpop.f32.mrf.mxu0
    %v10759 = vpop.f32.mrf.mxu0
    %v10760 = vadd.f32 %v10719, %v10759
    %v10761 = vpop.f32.mrf.mxu0
    %10762 = vdwg.mxu0
    %v10763 = vadd.f32 %v10255, %v10757
    %v10764 = vadd.f32 %v10256, %v10760
    %v10765 = vlaneseq
    %v10766 = vshrl.u32 %v10765, 7
    %v10767 = vsub.s32 5, %v10766
    %v10768 = vrot.slane %v8176, %v10767
    %v10769 = vadd.f32 %v10763, %v10768
    %v10770 = vadd.f32 %v10764, %v10768
    %v10771 = vadd.f32 %v8728, %v10769
    %v10772 = vadd.f32 %v8729, %v10770
    %v10773 = vsel %vm180, %v10771, 0.0
    %10774 = vadd.xlane.f32.xlu0 %v10773
    %v10775 = vpop.xlane.xlu0 %10774
    %v10776 = vsel %vm180, %v10772, 0.0
    %10777 = vadd.xlane.f32.xlu0 %v10776
    %v10778 = vpop.xlane.xlu0 %10777
    %v10779 = vmul.f32 %v10775, %v792
    %v10780 = vmul.f32 %v10778, %v792
    %v10781 = vsub.f32 %v10771, %v10779
    %v10782 = vsub.f32 %v10772, %v10780
    %v10783 = vmul.f32 %v10781, %v10781
    %v10784 = vmul.f32 %v10782, %v10782
    %v10785 = vsel %vm180, %v10783, 0.0
    %10786 = vadd.xlane.f32.xlu0 %v10785
    %v10787 = vpop.xlane.xlu0 %10786
    %v10788 = vsel %vm180, %v10784, 0.0
    %10789 = vadd.xlane.f32.xlu0 %v10788
    %v10790 = vpop.xlane.xlu0 %10789
    %v10791 = vmul.f32 %v10787, %v792
    %v10792 = vmul.f32 %v10790, %v792
    %v10793 = vadd.f32 %v10791, 1e-05
    %v10794 = vadd.f32 %v10792, 1e-05
    %v10795 = vrsqrt.pop %v10793
    %v10796 = vrsqrt.pop %v10794
    %v10797 = vmul.f32 %v10781, %v10795
    %v10798 = vmul.f32 %v10782, %v10796
    %v10799 = vlaneseq
    %v10800 = vshrl.u32 %v10799, 7
    %v10801 = vsub.s32 3, %v10800
    %v10802 = vrot.slane %v8176, %v10801
    %v10803 = vmul.f32 %v10797, %v10802
    %v10804 = vmul.f32 %v10798, %v10802
    %v10805 = vlaneseq
    %v10806 = vshrl.u32 %v10805, 7
    %v10807 = vsub.s32 4, %v10806
    %v10808 = vrot.slane %v8176, %v10807
    %v10809 = vadd.f32 %v10803, %v10808
    %v10810 = vadd.f32 %v10804, %v10808
    %v10811 = vsel %vm180, %v10809, 0.0
    %10812 = vadd.xlane.f32.xlu0 %v10811
    %v10813 = vpop.xlane.xlu0 %10812
    %v10814 = vsel %vm180, %v10810, 0.0
    %10815 = vadd.xlane.f32.xlu0 %v10814
    %v10816 = vpop.xlane.xlu0 %10815
    %v10817 = vmul.f32 %v10813, %v792
    %v10818 = vmul.f32 %v10816, %v792
    %v10819 = vsub.f32 %v10809, %v10817
    %v10820 = vsub.f32 %v10810, %v10818
    %v10821 = vmul.f32 %v10819, %v10819
    %v10822 = vmul.f32 %v10820, %v10820
    %v10823 = vsel %vm180, %v10821, 0.0
    %10824 = vadd.xlane.f32.xlu0 %v10823
    %v10825 = vpop.xlane.xlu0 %10824
    %v10826 = vsel %vm180, %v10822, 0.0
    %10827 = vadd.xlane.f32.xlu0 %v10826
    %v10828 = vpop.xlane.xlu0 %10827
    %v10829 = vmul.f32 %v10825, %v792
    %v10830 = vmul.f32 %v10828, %v792
    %v10831 = vadd.f32 %v10829, 1e-05
    %v10832 = vadd.f32 %v10830, 1e-05
    %v10833 = vrsqrt.pop %v10831
    %v10834 = vrsqrt.pop %v10832
    %v10835 = vmul.f32 %v10819, %v10833
    %v10836 = vmul.f32 %v10820, %v10834
    %v10837 = vlaneseq
    %v10838 = vshrl.u32 %v10837, 7
    %v10839 = vsub.s32 6, %v10838
    %v10840 = vrot.slane %v46, %v10839
    %v10841 = vmul.f32 %v10835, %v10840
    %v10842 = vmul.f32 %v10836, %v10840
    %v10843 = vlaneseq
    %v10844 = vshrl.u32 %v10843, 7
    %v10845 = vsub.s32 7, %v10844
    %v10846 = vrot.slane %v46, %v10845
    %v10847 = vadd.f32 %v10841, %v10846
    %v10848 = vadd.f32 %v10842, %v10846
    %v10849 = vsel %vm180, %v10847, 0.0
    %v10850 = vrot.slane %v10849, 4
    %v10851 = vadd.f32 %v10849, %v10850
    %v10852 = vrot.slane %v10851, 2
    %v10853 = vadd.f32 %v10851, %v10852
    %v10854 = vrot.slane %v10853, 1
    %v10855 = vadd.f32 %v10853, %v10854
    %v10856 = vsel %vm180, %v10848, 0.0
    %v10857 = vrot.slane %v10856, 4
    %v10858 = vadd.f32 %v10856, %v10857
    %v10859 = vrot.slane %v10858, 2
    %v10860 = vadd.f32 %v10858, %v10859
    %v10861 = vrot.slane %v10860, 1
    %v10862 = vadd.f32 %v10860, %v10861
    %v10863 = vrcp.pop 8.0
    %v10864 = vmul.f32 %v10855, %v10863
    %v10865 = vmul.f32 %v10862, %v10863
    %v10866 = vsel %vm180, %v10847, -inf
    %v10867 = vrot.slane %v10866, 4
    %v10868 = vmax.f32 %v10866, %v10867
    %v10869 = vrot.slane %v10868, 2
    %v10870 = vmax.f32 %v10868, %v10869
    %v10871 = vrot.slane %v10870, 1
    %v10872 = vmax.f32 %v10870, %v10871
    %v10873 = vsel %vm180, %v10848, -inf
    %v10874 = vrot.slane %v10873, 4
    %v10875 = vmax.f32 %v10873, %v10874
    %v10876 = vrot.slane %v10875, 2
    %v10877 = vmax.f32 %v10875, %v10876
    %v10878 = vrot.slane %v10877, 1
    %v10879 = vmax.f32 %v10877, %v10878
    %v10880 = vld [vmem:[%s4 + $0x18] sm:$0xff]
    %v10881 = vld [vmem:[%s4 + $0x20] sm:$0xff]
    %v10882 = vld [vmem:[%s4 + $0x28] sm:$0xff]
    %v10883 = vld [vmem:[%s4 + $0x30] sm:$0xff]
    %v10884 = vld [vmem:[%s4 + $0x38] sm:$0xff]
    %v10885 = vld [vmem:[%s4 + $0x40] sm:$0xff]
    %vm10888 = vcmask 1041409
    %v10889 = vsel %vm10888, %v10879, %v10872
    %v10890 = vsel %vm180, %v10889, 0
    %10892 = vmatprep.subr.mxu0 0.0
    %10893 = vmatpush1.msra.mxu0 0.0
    %10894 = vmatprep.subr.mxu0 0.0
    %10895 = vmatpush1.msra.mxu0 0.0
    %10896 = vmatprep.subr.mxu0 0.0
    %10897 = vmatpush1.msra.mxu0 0.0
    %10898 = vmatprep.subr.mxu0 0.0
    %10899 = vmatpush1.msra.mxu0 0.0
    %10900 = vmatprep.subr.mxu0 0.0
    %10901 = vmatpush1.msra.mxu0 0.0
    %10902 = vmatprep.subr.mxu0 0.0
    %10903 = vmatpush1.msra.mxu0 0.0
    %10904 = vmatprep.subr.mxu0 0.0
    %10905 = vmatpush1.msra.mxu0 0.0
    %10906 = vmatprep.subr.mxu0 0.0
    %10907 = vmatpush1.msra.mxu0 0.0
    %10908 = vmatprep.subr.mxu0 0.0
    %10909 = vmatpush1.msra.mxu0 0.0
    %10910 = vmatprep.subr.mxu0 0.0
    %10911 = vmatpush1.msra.mxu0 0.0
    %10912 = vmatprep.subr.mxu0 0.0
    %10913 = vmatpush1.msra.mxu0 0.0
    %10914 = vmatprep.subr.mxu0 0.0
    %10915 = vmatpush1.msra.mxu0 0.0
    %10916 = vmatprep.subr.mxu0 0.0
    %10917 = vmatpush1.msra.mxu0 0.0
    %10918 = vmatprep.subr.mxu0 0.0
    %10919 = vmatpush1.msra.mxu0 %v10885
    %10920 = vmatprep.subr.mxu0 0.0
    %10921 = vmatpush1.msra.mxu0 %v10884
    %10922 = vmatprep.subr.mxu0 0.0
    %10923 = vmatpush1.msra.mxu0 %v10883
    %10924 = vmatprep.subr.mxu0 0.0
    %10925 = vmatpush2.msra.mxu0 0.0
    %10926 = vmatprep.subr.mxu0 0.0
    %10927 = vmatpush2.msra.mxu0 0.0
    %10928 = vmatprep.subr.mxu0 0.0
    %10929 = vmatpush2.msra.mxu0 0.0
    %10930 = vmatprep.subr.mxu0 0.0
    %10931 = vmatpush2.msra.mxu0 0.0
    %10932 = vmatprep.subr.mxu0 0.0
    %10933 = vmatpush2.msra.mxu0 0.0
    %10934 = vmatprep.subr.mxu0 0.0
    %10935 = vmatpush2.msra.mxu0 0.0
    %10936 = vmatprep.subr.mxu0 0.0
    %10937 = vmatpush2.msra.mxu0 0.0
    %10938 = vmatprep.subr.mxu0 0.0
    %10939 = vmatpush2.msra.mxu0 0.0
    %10940 = vmatprep.subr.mxu0 0.0
    %10941 = vmatpush2.msra.mxu0 0.0
    %10942 = vmatprep.subr.mxu0 0.0
    %10943 = vmatpush2.msra.mxu0 0.0
    %10944 = vmatprep.subr.mxu0 0.0
    %10945 = vmatpush2.msra.mxu0 0.0
    %10946 = vmatprep.subr.mxu0 0.0
    %10947 = vmatpush2.msra.mxu0 0.0
    %10948 = vmatprep.subr.mxu0 0.0
    %10949 = vmatpush2.msra.mxu0 0.0
    %10950 = vmatprep.subr.mxu0 0.0
    %10951 = vmatpush2.msra.mxu0 0.0
    %10952 = vmatprep.subr.mxu0 0.0
    %10953 = vmatpush2.msra.mxu0 0.0
    %10954 = vmatprep.subr.mxu0 0.0
    %10955 = vmatpush2.msra.mxu0 0.0
    %10956 = vmatprep.mubr.f32.mxu0 0.0
    %10957 = vmatmul.mubr.f32.gmra.mxu0 %v10890
    %v10958 = vpop.f32.mrf.mxu0
    %v10959 = vadd.f32 0.0, %v10958
    %v10960 = vpop.f32.mrf.mxu0
    %10961 = vdwg.mxu0
    %v10964 = vsel %vm10888, %v10865, %v10864
    %v10965 = vsel %vm180, %v10964, 0
    %10967 = vmatprep.subr.mxu0 0.0
    %10968 = vmatpush1.msra.mxu0 0.0
    %10969 = vmatprep.subr.mxu0 0.0
    %10970 = vmatpush1.msra.mxu0 0.0
    %10971 = vmatprep.subr.mxu0 0.0
    %10972 = vmatpush1.msra.mxu0 0.0
    %10973 = vmatprep.subr.mxu0 0.0
    %10974 = vmatpush1.msra.mxu0 0.0
    %10975 = vmatprep.subr.mxu0 0.0
    %10976 = vmatpush1.msra.mxu0 0.0
    %10977 = vmatprep.subr.mxu0 0.0
    %10978 = vmatpush1.msra.mxu0 0.0
    %10979 = vmatprep.subr.mxu0 0.0
    %10980 = vmatpush1.msra.mxu0 0.0
    %10981 = vmatprep.subr.mxu0 0.0
    %10982 = vmatpush1.msra.mxu0 0.0
    %10983 = vmatprep.subr.mxu0 0.0
    %10984 = vmatpush1.msra.mxu0 0.0
    %10985 = vmatprep.subr.mxu0 0.0
    %10986 = vmatpush1.msra.mxu0 0.0
    %10987 = vmatprep.subr.mxu0 0.0
    %10988 = vmatpush1.msra.mxu0 0.0
    %10989 = vmatprep.subr.mxu0 0.0
    %10990 = vmatpush1.msra.mxu0 0.0
    %10991 = vmatprep.subr.mxu0 0.0
    %10992 = vmatpush1.msra.mxu0 0.0
    %10993 = vmatprep.subr.mxu0 0.0
    %10994 = vmatpush1.msra.mxu0 %v10882
    %10995 = vmatprep.subr.mxu0 0.0
    %10996 = vmatpush1.msra.mxu0 %v10881
    %10997 = vmatprep.subr.mxu0 0.0
    %10998 = vmatpush1.msra.mxu0 %v10880
    %10999 = vmatprep.subr.mxu0 0.0
    %11000 = vmatpush2.msra.mxu0 0.0
    %11001 = vmatprep.subr.mxu0 0.0
    %11002 = vmatpush2.msra.mxu0 0.0
    %11003 = vmatprep.subr.mxu0 0.0
    %11004 = vmatpush2.msra.mxu0 0.0
    %11005 = vmatprep.subr.mxu0 0.0
    %11006 = vmatpush2.msra.mxu0 0.0
    %11007 = vmatprep.subr.mxu0 0.0
    %11008 = vmatpush2.msra.mxu0 0.0
    %11009 = vmatprep.subr.mxu0 0.0
    %11010 = vmatpush2.msra.mxu0 0.0
    %11011 = vmatprep.subr.mxu0 0.0
    %11012 = vmatpush2.msra.mxu0 0.0
    %11013 = vmatprep.subr.mxu0 0.0
    %11014 = vmatpush2.msra.mxu0 0.0
    %11015 = vmatprep.subr.mxu0 0.0
    %11016 = vmatpush2.msra.mxu0 0.0
    %11017 = vmatprep.subr.mxu0 0.0
    %11018 = vmatpush2.msra.mxu0 0.0
    %11019 = vmatprep.subr.mxu0 0.0
    %11020 = vmatpush2.msra.mxu0 0.0
    %11021 = vmatprep.subr.mxu0 0.0
    %11022 = vmatpush2.msra.mxu0 0.0
    %11023 = vmatprep.subr.mxu0 0.0
    %11024 = vmatpush2.msra.mxu0 0.0
    %11025 = vmatprep.subr.mxu0 0.0
    %11026 = vmatpush2.msra.mxu0 0.0
    %11027 = vmatprep.subr.mxu0 0.0
    %11028 = vmatpush2.msra.mxu0 0.0
    %11029 = vmatprep.subr.mxu0 0.0
    %11030 = vmatpush2.msra.mxu0 0.0
    %11031 = vmatprep.mubr.f32.mxu0 0.0
    %11032 = vmatmul.mubr.f32.gmra.mxu0 %v10965
    %v11033 = vpop.f32.mrf.mxu0
    %v11034 = vadd.f32 %v10959, %v11033
    %v11035 = vpop.f32.mrf.mxu0
    %11036 = vdwg.mxu0
    %v11037 = vlaneseq
    %v11038 = vshrl.u32 %v11037, 7
    %v11039 = vsub.s32 0, %v11038
    %v11040 = vrot.slane %v47, %v11039
    %v11041 = vadd.f32 %v11034, %v11040
    %v11042 = vmax.f32 %v11041, 0.0
    %v11043 = vld [vmem:[%s4 + $0x48] sm:$0xff]
    %v11044 = vld [vmem:[%s4 + $0x50] sm:$0xff]
    %v11045 = vld [vmem:[%s4 + $0x58] sm:$0xff]
    %v11046 = vlaneseq
    %v11047 = vshrl.u32 %v11046, 7
    %v11048 = vsub.s32 1, %v11047
    %v11049 = vrot.slane %v47, %v11048
    %v11051 = vsel %vm180, %v11042, 0
    %11053 = vmatprep.subr.mxu0 0.0
    %11054 = vmatpush1.msra.mxu0 0.0
    %11055 = vmatprep.subr.mxu0 0.0
    %11056 = vmatpush1.msra.mxu0 0.0
    %11057 = vmatprep.subr.mxu0 0.0
    %11058 = vmatpush1.msra.mxu0 0.0
    %11059 = vmatprep.subr.mxu0 0.0
    %11060 = vmatpush1.msra.mxu0 0.0
    %11061 = vmatprep.subr.mxu0 0.0
    %11062 = vmatpush1.msra.mxu0 0.0
    %11063 = vmatprep.subr.mxu0 0.0
    %11064 = vmatpush1.msra.mxu0 0.0
    %11065 = vmatprep.subr.mxu0 0.0
    %11066 = vmatpush1.msra.mxu0 0.0
    %11067 = vmatprep.subr.mxu0 0.0
    %11068 = vmatpush1.msra.mxu0 0.0
    %11069 = vmatprep.subr.mxu0 0.0
    %11070 = vmatpush1.msra.mxu0 0.0
    %11071 = vmatprep.subr.mxu0 0.0
    %11072 = vmatpush1.msra.mxu0 0.0
    %11073 = vmatprep.subr.mxu0 0.0
    %11074 = vmatpush1.msra.mxu0 0.0
    %11075 = vmatprep.subr.mxu0 0.0
    %11076 = vmatpush1.msra.mxu0 0.0
    %11077 = vmatprep.subr.mxu0 0.0
    %11078 = vmatpush1.msra.mxu0 0.0
    %11079 = vmatprep.subr.mxu0 0.0
    %11080 = vmatpush1.msra.mxu0 %v11045
    %11081 = vmatprep.subr.mxu0 0.0
    %11082 = vmatpush1.msra.mxu0 %v11044
    %11083 = vmatprep.subr.mxu0 0.0
    %11084 = vmatpush1.msra.mxu0 %v11043
    %11085 = vmatprep.subr.mxu0 0.0
    %11086 = vmatpush2.msra.mxu0 0.0
    %11087 = vmatprep.subr.mxu0 0.0
    %11088 = vmatpush2.msra.mxu0 0.0
    %11089 = vmatprep.subr.mxu0 0.0
    %11090 = vmatpush2.msra.mxu0 0.0
    %11091 = vmatprep.subr.mxu0 0.0
    %11092 = vmatpush2.msra.mxu0 0.0
    %11093 = vmatprep.subr.mxu0 0.0
    %11094 = vmatpush2.msra.mxu0 0.0
    %11095 = vmatprep.subr.mxu0 0.0
    %11096 = vmatpush2.msra.mxu0 0.0
    %11097 = vmatprep.subr.mxu0 0.0
    %11098 = vmatpush2.msra.mxu0 0.0
    %11099 = vmatprep.subr.mxu0 0.0
    %11100 = vmatpush2.msra.mxu0 0.0
    %11101 = vmatprep.subr.mxu0 0.0
    %11102 = vmatpush2.msra.mxu0 0.0
    %11103 = vmatprep.subr.mxu0 0.0
    %11104 = vmatpush2.msra.mxu0 0.0
    %11105 = vmatprep.subr.mxu0 0.0
    %11106 = vmatpush2.msra.mxu0 0.0
    %11107 = vmatprep.subr.mxu0 0.0
    %11108 = vmatpush2.msra.mxu0 0.0
    %11109 = vmatprep.subr.mxu0 0.0
    %11110 = vmatpush2.msra.mxu0 0.0
    %11111 = vmatprep.subr.mxu0 0.0
    %11112 = vmatpush2.msra.mxu0 0.0
    %11113 = vmatprep.subr.mxu0 0.0
    %11114 = vmatpush2.msra.mxu0 0.0
    %11115 = vmatprep.subr.mxu0 0.0
    %11116 = vmatpush2.msra.mxu0 0.0
    %11117 = vmatprep.mubr.f32.mxu0 0.0
    %11118 = vmatmul.mubr.f32.gmra.mxu0 %v11051
    %v11119 = vpop.f32.mrf.mxu0
    %v11120 = vadd.f32 %v11049, %v11119
    %v11121 = vpop.f32.mrf.mxu0
    %11122 = vdwg.mxu0
    %vm11123 = vcmask 9216
    %v11124 = vsel %vm11123, %v11120, -inf
    %11125 = vmax.xlane.f32.xlu0 %v11124
    %v11126 = vpop.xlane.xlu0 %11125
    %v11127 = vsub.f32 %v11120, %v11126
    %v11128 = vmul.f32 %v11127, 1.442695
    %v11129 = vpow.pop %v11128
    %v11130 = vsel %vm11123, %v11129, 0.0
    %11131 = vadd.xlane.f32.xlu0 %v11130
    %v11132 = vpop.xlane.xlu0 %11131
    %v11133 = vrcp.pop %v11132
    %v11134 = vmul.f32 %v11129, %v11133
    %11135 = vst.msk [vmem:[#allocation2] sm:$0x3] %vm11123, %v11134
    // Predicated region
    $region54: #{transformer_forward.1} parent=1 // pred_check
      _
    $region55: #{transformer_forward.1} parent=1 // pred_check_branch
      %11137 = sbr.rel (0) target = $region57
    $region56: #{transformer_forward.1} parent=1 // pred_region
      %s11139 = ssub.s32 32, 32
      %11140 = vsyncadd [#allocation3], %s11139
      %s11142 = sshll.u32 [#allocation2], 4
      %s11143 = int_to_ptr.vmem [resolvable:$true] %s11142
      %11145 = dma.vmem_to_hbm [thread:$0]  %s11143, 32, %s13, [#allocation3]
    $region57: #{transformer_forward.1} parent=1 // pred_fallthru
      _
    // Predicated region
    $region58: #{transformer_forward.1} parent=1 // pred_check
      _
    $region59: #{transformer_forward.1} parent=1 // pred_check_branch
      %11147 = sbr.rel (0) target = $region61
    $region60: #{transformer_forward.1} parent=1 // pred_region
      %11148 = dma.done [#allocation3], 32
    $region61: #{transformer_forward.1} parent=1 // pred_fallthru
      _
    %11149 = vsyncpa [#allocation3], 1

</llo_original>
